<compile_context>
chip_gen: v7x
topology: tpu7x:2x2x1
jax: 0.10.0
libtpu: 0.0.40
codegen_flags: <defaults>
</compile_context>

<pallas_src>
import jax
import jax.numpy as jnp
from jax.experimental import pallas as pl
from jax.experimental.pallas import tpu as pltpu

KSIZE = 7   # depthwise kernel size (nn.Conv2d(dim, dim, 7, padding=3, groups=dim))
PAD = 3


def _dwblock_kernel(xp_ref, dww_ref, dwb_ref, lnw_ref, lnb_ref,
                    w1_ref, b1_ref, g_ref, bt_ref, w2_ref, b2_ref, o_ref):
    H, W, C = o_ref.shape                       # leading batch dim is squeezed

    xp = xp_ref[...].astype(jnp.float32)        # (H+6, W+6, C), zero-padded
    dww = dww_ref[...].astype(jnp.float32)      # (7, 7, C)

    # ---- depthwise 7x7 conv (fused; 49 shifted multiply-accumulates) -------
    acc = jnp.zeros((H, W, C), jnp.float32)
    for dy in range(KSIZE):
        for dx in range(KSIZE):
            acc = acc + xp[dy:dy + H, dx:dx + W, :] * dww[dy, dx, :]
    acc = acc + dwb_ref[0]

    # ---- LayerNorm over channels (channels_last, eps=1e-6) ------------------
    mean = jnp.mean(acc, axis=-1, keepdims=True)
    var = jnp.mean((acc - mean) ** 2, axis=-1, keepdims=True)
    xn = (acc - mean) * jax.lax.rsqrt(var + 1e-6)
    xn = xn * lnw_ref[0] + lnb_ref[0]

    # ---- pwconv1 (MXU) + GELU epilogue --------------------------------------
    t = xn.reshape(H * W, C)
    h = jnp.dot(t, w1_ref[...], preferred_element_type=jnp.float32) + b1_ref[0]
    # TODO(synk): PyTorch nn.GELU() is exact-erf; tanh-approx GELU used here.
    h = jax.nn.gelu(h, approximate=True)

    # ---- GRN: global response norm over all H*W tokens of this image -------
    gx = jnp.sqrt(jnp.sum(h * h, axis=0, keepdims=True))           # (1, 4C)
    nx = gx / (jnp.mean(gx, axis=-1, keepdims=True) + 1e-6)
    h = g_ref[0] * (h * nx) + bt_ref[0] + h

    # ---- pwconv2 (MXU) + residual epilogue ----------------------------------
    y = jnp.dot(h, w2_ref[...], preferred_element_type=jnp.float32) + b2_ref[0]
    res = xp[PAD:PAD + H, PAD:PAD + W, :]       # original (un-conv'd) input
    o_ref[...] = (res + y.reshape(H, W, C)).astype(o_ref.dtype)


def _const_spec(shape):
    """Whole-array (weight) block, same block for every grid step."""
    zeros = (0,) * len(shape)
    return pl.BlockSpec(shape, lambda b, zeros=zeros: zeros)


def dwblock_forward(x_nchw: jax.Array, params: dict) -> jax.Array:
    """DWBlock forward on an NCHW tensor via one fused Pallas TPU kernel."""
    B, C, H, W = x_nchw.shape
    hid = params["w1"].shape[1]

    # channels-last, lane-dense layout; pad spatially for the 7x7 dw conv.
    x_nhwc = jnp.transpose(x_nchw, (0, 2, 3, 1))
    xp = jnp.pad(x_nhwc, ((0, 0), (PAD, PAD), (PAD, PAD), (0, 0)))

    row = lambda a: a.reshape(1, -1)            # 1-D params -> lane-dense (1, n)
    args = (xp,
            params["dw_w"], row(params["dw_b"]),
            row(params["ln_w"]), row(params["ln_b"]),
            params["w1"], row(params["b1"]),
            row(params["gamma"]), row(params["beta"]),
            params["w2"], row(params["b2"]))

    in_specs = [pl.BlockSpec((None, H + 2 * PAD, W + 2 * PAD, C),
                             lambda b: (b, 0, 0, 0))]
    in_specs += [_const_spec(a.shape) for a in args[1:]]
    out_spec = pl.BlockSpec((None, H, W, C), lambda b: (b, 0, 0, 0))

    flops = B * (2 * H * W * C * KSIZE * KSIZE          # depthwise conv
                 + 2 * 2 * H * W * C * hid              # two pointwise matmuls
                 + 12 * H * W * (C + hid))              # LN / GELU / GRN / adds
    bytes_accessed = 4 * (xp.size + B * H * W * C + sum(a.size for a in args[1:]))
    cost = pl.CostEstimate(flops=flops,
                           transcendentals=B * H * W * hid,
                           bytes_accessed=bytes_accessed)

    out_nhwc = pl.pallas_call(
        _dwblock_kernel,
        out_shape=jax.ShapeDtypeStruct((B, H, W, C), x_nchw.dtype),
        grid_spec=pltpu.PrefetchScalarGridSpec(
            num_scalar_prefetch=0,
            grid=(B,),                      # one image per step; 2 even steps
            in_specs=in_specs,
            out_specs=out_spec,
        ),
        compiler_params=pltpu.CompilerParams(
            dimension_semantics=("parallel",),
        ),
        cost_estimate=cost,
    )(*args)

    return jnp.transpose(out_nhwc, (0, 3, 1, 2))


def dwblock_reference(x_nchw: jax.Array, p: dict) -> jax.Array:
    """Pure-JAX reference (same math as the PyTorch DWBlock forward)."""
    x = jnp.transpose(x_nchw, (0, 2, 3, 1))
    _, H, W, _ = x.shape
    xp = jnp.pad(x, ((0, 0), (PAD, PAD), (PAD, PAD), (0, 0)))
    acc = jnp.zeros_like(x)
    for dy in range(KSIZE):
        for dx in range(KSIZE):
            acc = acc + xp[:, dy:dy + H, dx:dx + W, :] * p["dw_w"][dy, dx, :]
    acc = acc + p["dw_b"]
    mean = acc.mean(-1, keepdims=True)
    var = ((acc - mean) ** 2).mean(-1, keepdims=True)
    h = (acc - mean) * jax.lax.rsqrt(var + 1e-6) * p["ln_w"] + p["ln_b"]
    h = h @ p["w1"] + p["b1"]
    h = jax.nn.gelu(h, approximate=True)
    gx = jnp.sqrt(jnp.sum(h * h, axis=(1, 2), keepdims=True))
    nx = gx / (gx.mean(-1, keepdims=True) + 1e-6)
    h = p["gamma"] * (h * nx) + p["beta"] + h
    y = h @ p["w2"] + p["b2"]
    return jnp.transpose(x + y, (0, 3, 1, 2))


if __name__ == "__main__":
    key = jax.random.PRNGKey(0)
    B, C, H, W = 2, 32, 16, 16          # DWBlock(dim=32): hidden = 4*dim = 128
    hid = 4 * C
    ks = jax.random.split(key, 11)

    x = jax.random.normal(ks[0], (B, C, H, W), dtype=jnp.float32)
    params = {
        "dw_w":  0.1 * jax.random.normal(ks[1], (KSIZE, KSIZE, C), jnp.float32),
        "dw_b":  0.1 * jax.random.normal(ks[2], (C,), jnp.float32),
        "ln_w":  1.0 + 0.1 * jax.random.normal(ks[3], (C,), jnp.float32),
        "ln_b":  0.1 * jax.random.normal(ks[4], (C,), jnp.float32),
        "w1":    0.05 * jax.random.normal(ks[5], (C, hid), jnp.float32),
        "b1":    0.1 * jax.random.normal(ks[6], (hid,), jnp.float32),
        "gamma": 0.1 * jax.random.normal(ks[7], (hid,), jnp.float32),
        "beta":  0.1 * jax.random.normal(ks[8], (hid,), jnp.float32),
        "w2":    0.05 * jax.random.normal(ks[9], (hid, C), jnp.float32),
        "b2":    0.1 * jax.random.normal(ks[10], (C,), jnp.float32),
    }

    y = jax.block_until_ready(dwblock_forward(x, params))
    y_ref = jax.block_until_ready(dwblock_reference(x, params))

    assert y.shape == x.shape and y.dtype == x.dtype
    # Tolerance covers possible MXU f32 precision-path differences (bf16-pass
    # vs multi-pass) between the Pallas matmuls and the XLA reference matmuls.
    max_err = float(jnp.max(jnp.abs(y - y_ref)))
    assert jnp.allclose(y, y_ref, atol=1e-2, rtol=1e-2), f"max abs err {max_err}"
    print("KERNEL_OK")
</pallas_src>

<mosaic_0001>
module attributes {stable_mosaic.version = 11 : i64} {
  func.func @_dwblock_kernel(%arg0: i32, %arg1: memref<1x22x22x32xf32, #tpu.memory_space<vmem>>, %arg2: memref<7x7x32xf32, #tpu.memory_space<vmem>>, %arg3: memref<1x32xf32, #tpu.memory_space<vmem>>, %arg4: memref<1x32xf32, #tpu.memory_space<vmem>>, %arg5: memref<1x32xf32, #tpu.memory_space<vmem>>, %arg6: memref<32x128xf32, #tpu.memory_space<vmem>>, %arg7: memref<1x128xf32, #tpu.memory_space<vmem>>, %arg8: memref<1x128xf32, #tpu.memory_space<vmem>>, %arg9: memref<1x128xf32, #tpu.memory_space<vmem>>, %arg10: memref<128x32xf32, #tpu.memory_space<vmem>>, %arg11: memref<1x32xf32, #tpu.memory_space<vmem>>, %arg12: memref<1x16x16x32xf32, #tpu.memory_space<vmem>>) attributes {dimension_semantics = [#tpu.dimension_semantics<parallel>], iteration_bounds = array<i64: 2>, scalar_prefetch = 0 : i64, scratch_operands = 0 : i64, tpu.core_type = #tpu.core_type<tc>, window_params = [{transform_indices = @transform_0, window_bounds = array<i64: 1, 22, 22, 32>}, {pipeline_mode = #tpu.pipeline_mode<synchronous>, transform_indices = @transform_1, window_bounds = array<i64: 7, 7, 32>}, {pipeline_mode = #tpu.pipeline_mode<synchronous>, transform_indices = @transform_2, window_bounds = array<i64: 1, 32>}, {pipeline_mode = #tpu.pipeline_mode<synchronous>, transform_indices = @transform_3, window_bounds = array<i64: 1, 32>}, {pipeline_mode = #tpu.pipeline_mode<synchronous>, transform_indices = @transform_4, window_bounds = array<i64: 1, 32>}, {pipeline_mode = #tpu.pipeline_mode<synchronous>, transform_indices = @transform_5, window_bounds = array<i64: 32, 128>}, {pipeline_mode = #tpu.pipeline_mode<synchronous>, transform_indices = @transform_6, window_bounds = array<i64: 1, 128>}, {pipeline_mode = #tpu.pipeline_mode<synchronous>, transform_indices = @transform_7, window_bounds = array<i64: 1, 128>}, {pipeline_mode = #tpu.pipeline_mode<synchronous>, transform_indices = @transform_8, window_bounds = array<i64: 1, 128>}, {pipeline_mode = #tpu.pipeline_mode<synchronous>, transform_indices = @transform_9, window_bounds = array<i64: 128, 32>}, {pipeline_mode = #tpu.pipeline_mode<synchronous>, transform_indices = @transform_10, window_bounds = array<i64: 1, 32>}, {transform_indices = @transform_11, window_bounds = array<i64: 1, 16, 16, 32>}]} {
    %c0 = arith.constant 0 : index
    %c0_0 = arith.constant 0 : index
    %c0_1 = arith.constant 0 : index
    %c0_2 = arith.constant 0 : index
    %0 = vector.load %arg1[%c0, %c0_0, %c0_1, %c0_2] : memref<1x22x22x32xf32, #tpu.memory_space<vmem>>, vector<1x22x22x32xf32>
    %1 = vector.shape_cast %0 : vector<1x22x22x32xf32> to vector<22x22x32xf32>
    %c0_3 = arith.constant 0 : index
    %c0_4 = arith.constant 0 : index
    %c0_5 = arith.constant 0 : index
    %2 = vector.load %arg2[%c0_3, %c0_4, %c0_5] : memref<7x7x32xf32, #tpu.memory_space<vmem>>, vector<7x7x32xf32>
    %cst = arith.constant 0.000000e+00 : f32
    %3 = vector.broadcast %cst : f32 to vector<16x16x32xf32>
    %4 = vector.extract_strided_slice %1 {offsets = [0, 0, 0], sizes = [16, 16, 32], strides = [1, 1, 1]} : vector<22x22x32xf32> to vector<16x16x32xf32>
    %5 = vector.extract_strided_slice %2 {offsets = [0, 0, 0], sizes = [1, 1, 32], strides = [1, 1, 1]} : vector<7x7x32xf32> to vector<1x1x32xf32>
    %6 = vector.shape_cast %5 : vector<1x1x32xf32> to vector<32xf32>
    %7 = vector.shape_cast %6 : vector<32xf32> to vector<1x1x32xf32>
    %8 = vector.broadcast %7 : vector<1x1x32xf32> to vector<16x16x32xf32>
    %9 = arith.mulf %4, %8 : vector<16x16x32xf32>
    %10 = arith.addf %3, %9 : vector<16x16x32xf32>
    %11 = vector.extract_strided_slice %1 {offsets = [0, 1, 0], sizes = [16, 16, 32], strides = [1, 1, 1]} : vector<22x22x32xf32> to vector<16x16x32xf32>
    %12 = vector.extract_strided_slice %2 {offsets = [0, 1, 0], sizes = [1, 1, 32], strides = [1, 1, 1]} : vector<7x7x32xf32> to vector<1x1x32xf32>
    %13 = vector.shape_cast %12 : vector<1x1x32xf32> to vector<32xf32>
    %14 = vector.shape_cast %13 : vector<32xf32> to vector<1x1x32xf32>
    %15 = vector.broadcast %14 : vector<1x1x32xf32> to vector<16x16x32xf32>
    %16 = arith.mulf %11, %15 : vector<16x16x32xf32>
    %17 = arith.addf %10, %16 : vector<16x16x32xf32>
    %18 = vector.extract_strided_slice %1 {offsets = [0, 2, 0], sizes = [16, 16, 32], strides = [1, 1, 1]} : vector<22x22x32xf32> to vector<16x16x32xf32>
    %19 = vector.extract_strided_slice %2 {offsets = [0, 2, 0], sizes = [1, 1, 32], strides = [1, 1, 1]} : vector<7x7x32xf32> to vector<1x1x32xf32>
    %20 = vector.shape_cast %19 : vector<1x1x32xf32> to vector<32xf32>
    %21 = vector.shape_cast %20 : vector<32xf32> to vector<1x1x32xf32>
    %22 = vector.broadcast %21 : vector<1x1x32xf32> to vector<16x16x32xf32>
    %23 = arith.mulf %18, %22 : vector<16x16x32xf32>
    %24 = arith.addf %17, %23 : vector<16x16x32xf32>
    %25 = vector.extract_strided_slice %1 {offsets = [0, 3, 0], sizes = [16, 16, 32], strides = [1, 1, 1]} : vector<22x22x32xf32> to vector<16x16x32xf32>
    %26 = vector.extract_strided_slice %2 {offsets = [0, 3, 0], sizes = [1, 1, 32], strides = [1, 1, 1]} : vector<7x7x32xf32> to vector<1x1x32xf32>
    %27 = vector.shape_cast %26 : vector<1x1x32xf32> to vector<32xf32>
    %28 = vector.shape_cast %27 : vector<32xf32> to vector<1x1x32xf32>
    %29 = vector.broadcast %28 : vector<1x1x32xf32> to vector<16x16x32xf32>
    %30 = arith.mulf %25, %29 : vector<16x16x32xf32>
    %31 = arith.addf %24, %30 : vector<16x16x32xf32>
    %32 = vector.extract_strided_slice %1 {offsets = [0, 4, 0], sizes = [16, 16, 32], strides = [1, 1, 1]} : vector<22x22x32xf32> to vector<16x16x32xf32>
    %33 = vector.extract_strided_slice %2 {offsets = [0, 4, 0], sizes = [1, 1, 32], strides = [1, 1, 1]} : vector<7x7x32xf32> to vector<1x1x32xf32>
    %34 = vector.shape_cast %33 : vector<1x1x32xf32> to vector<32xf32>
    %35 = vector.shape_cast %34 : vector<32xf32> to vector<1x1x32xf32>
    %36 = vector.broadcast %35 : vector<1x1x32xf32> to vector<16x16x32xf32>
    %37 = arith.mulf %32, %36 : vector<16x16x32xf32>
    %38 = arith.addf %31, %37 : vector<16x16x32xf32>
    %39 = vector.extract_strided_slice %1 {offsets = [0, 5, 0], sizes = [16, 16, 32], strides = [1, 1, 1]} : vector<22x22x32xf32> to vector<16x16x32xf32>
    %40 = vector.extract_strided_slice %2 {offsets = [0, 5, 0], sizes = [1, 1, 32], strides = [1, 1, 1]} : vector<7x7x32xf32> to vector<1x1x32xf32>
    %41 = vector.shape_cast %40 : vector<1x1x32xf32> to vector<32xf32>
    %42 = vector.shape_cast %41 : vector<32xf32> to vector<1x1x32xf32>
    %43 = vector.broadcast %42 : vector<1x1x32xf32> to vector<16x16x32xf32>
    %44 = arith.mulf %39, %43 : vector<16x16x32xf32>
    %45 = arith.addf %38, %44 : vector<16x16x32xf32>
    %46 = vector.extract_strided_slice %1 {offsets = [0, 6, 0], sizes = [16, 16, 32], strides = [1, 1, 1]} : vector<22x22x32xf32> to vector<16x16x32xf32>
    %47 = vector.extract_strided_slice %2 {offsets = [0, 6, 0], sizes = [1, 1, 32], strides = [1, 1, 1]} : vector<7x7x32xf32> to vector<1x1x32xf32>
    %48 = vector.shape_cast %47 : vector<1x1x32xf32> to vector<32xf32>
    %49 = vector.shape_cast %48 : vector<32xf32> to vector<1x1x32xf32>
    %50 = vector.broadcast %49 : vector<1x1x32xf32> to vector<16x16x32xf32>
    %51 = arith.mulf %46, %50 : vector<16x16x32xf32>
    %52 = arith.addf %45, %51 : vector<16x16x32xf32>
    %53 = vector.extract_strided_slice %1 {offsets = [1, 0, 0], sizes = [16, 16, 32], strides = [1, 1, 1]} : vector<22x22x32xf32> to vector<16x16x32xf32>
    %54 = vector.extract_strided_slice %2 {offsets = [1, 0, 0], sizes = [1, 1, 32], strides = [1, 1, 1]} : vector<7x7x32xf32> to vector<1x1x32xf32>
    %55 = vector.shape_cast %54 : vector<1x1x32xf32> to vector<32xf32>
    %56 = vector.shape_cast %55 : vector<32xf32> to vector<1x1x32xf32>
    %57 = vector.broadcast %56 : vector<1x1x32xf32> to vector<16x16x32xf32>
    %58 = arith.mulf %53, %57 : vector<16x16x32xf32>
    %59 = arith.addf %52, %58 : vector<16x16x32xf32>
    %60 = vector.extract_strided_slice %1 {offsets = [1, 1, 0], sizes = [16, 16, 32], strides = [1, 1, 1]} : vector<22x22x32xf32> to vector<16x16x32xf32>
    %61 = vector.extract_strided_slice %2 {offsets = [1, 1, 0], sizes = [1, 1, 32], strides = [1, 1, 1]} : vector<7x7x32xf32> to vector<1x1x32xf32>
    %62 = vector.shape_cast %61 : vector<1x1x32xf32> to vector<32xf32>
    %63 = vector.shape_cast %62 : vector<32xf32> to vector<1x1x32xf32>
    %64 = vector.broadcast %63 : vector<1x1x32xf32> to vector<16x16x32xf32>
    %65 = arith.mulf %60, %64 : vector<16x16x32xf32>
    %66 = arith.addf %59, %65 : vector<16x16x32xf32>
    %67 = vector.extract_strided_slice %1 {offsets = [1, 2, 0], sizes = [16, 16, 32], strides = [1, 1, 1]} : vector<22x22x32xf32> to vector<16x16x32xf32>
    %68 = vector.extract_strided_slice %2 {offsets = [1, 2, 0], sizes = [1, 1, 32], strides = [1, 1, 1]} : vector<7x7x32xf32> to vector<1x1x32xf32>
    %69 = vector.shape_cast %68 : vector<1x1x32xf32> to vector<32xf32>
    %70 = vector.shape_cast %69 : vector<32xf32> to vector<1x1x32xf32>
    %71 = vector.broadcast %70 : vector<1x1x32xf32> to vector<16x16x32xf32>
    %72 = arith.mulf %67, %71 : vector<16x16x32xf32>
    %73 = arith.addf %66, %72 : vector<16x16x32xf32>
    %74 = vector.extract_strided_slice %1 {offsets = [1, 3, 0], sizes = [16, 16, 32], strides = [1, 1, 1]} : vector<22x22x32xf32> to vector<16x16x32xf32>
    %75 = vector.extract_strided_slice %2 {offsets = [1, 3, 0], sizes = [1, 1, 32], strides = [1, 1, 1]} : vector<7x7x32xf32> to vector<1x1x32xf32>
    %76 = vector.shape_cast %75 : vector<1x1x32xf32> to vector<32xf32>
    %77 = vector.shape_cast %76 : vector<32xf32> to vector<1x1x32xf32>
    %78 = vector.broadcast %77 : vector<1x1x32xf32> to vector<16x16x32xf32>
    %79 = arith.mulf %74, %78 : vector<16x16x32xf32>
    %80 = arith.addf %73, %79 : vector<16x16x32xf32>
    %81 = vector.extract_strided_slice %1 {offsets = [1, 4, 0], sizes = [16, 16, 32], strides = [1, 1, 1]} : vector<22x22x32xf32> to vector<16x16x32xf32>
    %82 = vector.extract_strided_slice %2 {offsets = [1, 4, 0], sizes = [1, 1, 32], strides = [1, 1, 1]} : vector<7x7x32xf32> to vector<1x1x32xf32>
    %83 = vector.shape_cast %82 : vector<1x1x32xf32> to vector<32xf32>
    %84 = vector.shape_cast %83 : vector<32xf32> to vector<1x1x32xf32>
    %85 = vector.broadcast %84 : vector<1x1x32xf32> to vector<16x16x32xf32>
    %86 = arith.mulf %81, %85 : vector<16x16x32xf32>
    %87 = arith.addf %80, %86 : vector<16x16x32xf32>
    %88 = vector.extract_strided_slice %1 {offsets = [1, 5, 0], sizes = [16, 16, 32], strides = [1, 1, 1]} : vector<22x22x32xf32> to vector<16x16x32xf32>
    %89 = vector.extract_strided_slice %2 {offsets = [1, 5, 0], sizes = [1, 1, 32], strides = [1, 1, 1]} : vector<7x7x32xf32> to vector<1x1x32xf32>
    %90 = vector.shape_cast %89 : vector<1x1x32xf32> to vector<32xf32>
    %91 = vector.shape_cast %90 : vector<32xf32> to vector<1x1x32xf32>
    %92 = vector.broadcast %91 : vector<1x1x32xf32> to vector<16x16x32xf32>
    %93 = arith.mulf %88, %92 : vector<16x16x32xf32>
    %94 = arith.addf %87, %93 : vector<16x16x32xf32>
    %95 = vector.extract_strided_slice %1 {offsets = [1, 6, 0], sizes = [16, 16, 32], strides = [1, 1, 1]} : vector<22x22x32xf32> to vector<16x16x32xf32>
    %96 = vector.extract_strided_slice %2 {offsets = [1, 6, 0], sizes = [1, 1, 32], strides = [1, 1, 1]} : vector<7x7x32xf32> to vector<1x1x32xf32>
    %97 = vector.shape_cast %96 : vector<1x1x32xf32> to vector<32xf32>
    %98 = vector.shape_cast %97 : vector<32xf32> to vector<1x1x32xf32>
    %99 = vector.broadcast %98 : vector<1x1x32xf32> to vector<16x16x32xf32>
    %100 = arith.mulf %95, %99 : vector<16x16x32xf32>
    %101 = arith.addf %94, %100 : vector<16x16x32xf32>
    %102 = vector.extract_strided_slice %1 {offsets = [2, 0, 0], sizes = [16, 16, 32], strides = [1, 1, 1]} : vector<22x22x32xf32> to vector<16x16x32xf32>
    %103 = vector.extract_strided_slice %2 {offsets = [2, 0, 0], sizes = [1, 1, 32], strides = [1, 1, 1]} : vector<7x7x32xf32> to vector<1x1x32xf32>
    %104 = vector.shape_cast %103 : vector<1x1x32xf32> to vector<32xf32>
    %105 = vector.shape_cast %104 : vector<32xf32> to vector<1x1x32xf32>
    %106 = vector.broadcast %105 : vector<1x1x32xf32> to vector<16x16x32xf32>
    %107 = arith.mulf %102, %106 : vector<16x16x32xf32>
    %108 = arith.addf %101, %107 : vector<16x16x32xf32>
    %109 = vector.extract_strided_slice %1 {offsets = [2, 1, 0], sizes = [16, 16, 32], strides = [1, 1, 1]} : vector<22x22x32xf32> to vector<16x16x32xf32>
    %110 = vector.extract_strided_slice %2 {offsets = [2, 1, 0], sizes = [1, 1, 32], strides = [1, 1, 1]} : vector<7x7x32xf32> to vector<1x1x32xf32>
    %111 = vector.shape_cast %110 : vector<1x1x32xf32> to vector<32xf32>
    %112 = vector.shape_cast %111 : vector<32xf32> to vector<1x1x32xf32>
    %113 = vector.broadcast %112 : vector<1x1x32xf32> to vector<16x16x32xf32>
    %114 = arith.mulf %109, %113 : vector<16x16x32xf32>
    %115 = arith.addf %108, %114 : vector<16x16x32xf32>
    %116 = vector.extract_strided_slice %1 {offsets = [2, 2, 0], sizes = [16, 16, 32], strides = [1, 1, 1]} : vector<22x22x32xf32> to vector<16x16x32xf32>
    %117 = vector.extract_strided_slice %2 {offsets = [2, 2, 0], sizes = [1, 1, 32], strides = [1, 1, 1]} : vector<7x7x32xf32> to vector<1x1x32xf32>
    %118 = vector.shape_cast %117 : vector<1x1x32xf32> to vector<32xf32>
    %119 = vector.shape_cast %118 : vector<32xf32> to vector<1x1x32xf32>
    %120 = vector.broadcast %119 : vector<1x1x32xf32> to vector<16x16x32xf32>
    %121 = arith.mulf %116, %120 : vector<16x16x32xf32>
    %122 = arith.addf %115, %121 : vector<16x16x32xf32>
    %123 = vector.extract_strided_slice %1 {offsets = [2, 3, 0], sizes = [16, 16, 32], strides = [1, 1, 1]} : vector<22x22x32xf32> to vector<16x16x32xf32>
    %124 = vector.extract_strided_slice %2 {offsets = [2, 3, 0], sizes = [1, 1, 32], strides = [1, 1, 1]} : vector<7x7x32xf32> to vector<1x1x32xf32>
    %125 = vector.shape_cast %124 : vector<1x1x32xf32> to vector<32xf32>
    %126 = vector.shape_cast %125 : vector<32xf32> to vector<1x1x32xf32>
    %127 = vector.broadcast %126 : vector<1x1x32xf32> to vector<16x16x32xf32>
    %128 = arith.mulf %123, %127 : vector<16x16x32xf32>
    %129 = arith.addf %122, %128 : vector<16x16x32xf32>
    %130 = vector.extract_strided_slice %1 {offsets = [2, 4, 0], sizes = [16, 16, 32], strides = [1, 1, 1]} : vector<22x22x32xf32> to vector<16x16x32xf32>
    %131 = vector.extract_strided_slice %2 {offsets = [2, 4, 0], sizes = [1, 1, 32], strides = [1, 1, 1]} : vector<7x7x32xf32> to vector<1x1x32xf32>
    %132 = vector.shape_cast %131 : vector<1x1x32xf32> to vector<32xf32>
    %133 = vector.shape_cast %132 : vector<32xf32> to vector<1x1x32xf32>
    %134 = vector.broadcast %133 : vector<1x1x32xf32> to vector<16x16x32xf32>
    %135 = arith.mulf %130, %134 : vector<16x16x32xf32>
    %136 = arith.addf %129, %135 : vector<16x16x32xf32>
    %137 = vector.extract_strided_slice %1 {offsets = [2, 5, 0], sizes = [16, 16, 32], strides = [1, 1, 1]} : vector<22x22x32xf32> to vector<16x16x32xf32>
    %138 = vector.extract_strided_slice %2 {offsets = [2, 5, 0], sizes = [1, 1, 32], strides = [1, 1, 1]} : vector<7x7x32xf32> to vector<1x1x32xf32>
    %139 = vector.shape_cast %138 : vector<1x1x32xf32> to vector<32xf32>
    %140 = vector.shape_cast %139 : vector<32xf32> to vector<1x1x32xf32>
    %141 = vector.broadcast %140 : vector<1x1x32xf32> to vector<16x16x32xf32>
    %142 = arith.mulf %137, %141 : vector<16x16x32xf32>
    %143 = arith.addf %136, %142 : vector<16x16x32xf32>
    %144 = vector.extract_strided_slice %1 {offsets = [2, 6, 0], sizes = [16, 16, 32], strides = [1, 1, 1]} : vector<22x22x32xf32> to vector<16x16x32xf32>
    %145 = vector.extract_strided_slice %2 {offsets = [2, 6, 0], sizes = [1, 1, 32], strides = [1, 1, 1]} : vector<7x7x32xf32> to vector<1x1x32xf32>
    %146 = vector.shape_cast %145 : vector<1x1x32xf32> to vector<32xf32>
    %147 = vector.shape_cast %146 : vector<32xf32> to vector<1x1x32xf32>
    %148 = vector.broadcast %147 : vector<1x1x32xf32> to vector<16x16x32xf32>
    %149 = arith.mulf %144, %148 : vector<16x16x32xf32>
    %150 = arith.addf %143, %149 : vector<16x16x32xf32>
    %151 = vector.extract_strided_slice %1 {offsets = [3, 0, 0], sizes = [16, 16, 32], strides = [1, 1, 1]} : vector<22x22x32xf32> to vector<16x16x32xf32>
    %152 = vector.extract_strided_slice %2 {offsets = [3, 0, 0], sizes = [1, 1, 32], strides = [1, 1, 1]} : vector<7x7x32xf32> to vector<1x1x32xf32>
    %153 = vector.shape_cast %152 : vector<1x1x32xf32> to vector<32xf32>
    %154 = vector.shape_cast %153 : vector<32xf32> to vector<1x1x32xf32>
    %155 = vector.broadcast %154 : vector<1x1x32xf32> to vector<16x16x32xf32>
    %156 = arith.mulf %151, %155 : vector<16x16x32xf32>
    %157 = arith.addf %150, %156 : vector<16x16x32xf32>
    %158 = vector.extract_strided_slice %1 {offsets = [3, 1, 0], sizes = [16, 16, 32], strides = [1, 1, 1]} : vector<22x22x32xf32> to vector<16x16x32xf32>
    %159 = vector.extract_strided_slice %2 {offsets = [3, 1, 0], sizes = [1, 1, 32], strides = [1, 1, 1]} : vector<7x7x32xf32> to vector<1x1x32xf32>
    %160 = vector.shape_cast %159 : vector<1x1x32xf32> to vector<32xf32>
    %161 = vector.shape_cast %160 : vector<32xf32> to vector<1x1x32xf32>
    %162 = vector.broadcast %161 : vector<1x1x32xf32> to vector<16x16x32xf32>
    %163 = arith.mulf %158, %162 : vector<16x16x32xf32>
    %164 = arith.addf %157, %163 : vector<16x16x32xf32>
    %165 = vector.extract_strided_slice %1 {offsets = [3, 2, 0], sizes = [16, 16, 32], strides = [1, 1, 1]} : vector<22x22x32xf32> to vector<16x16x32xf32>
    %166 = vector.extract_strided_slice %2 {offsets = [3, 2, 0], sizes = [1, 1, 32], strides = [1, 1, 1]} : vector<7x7x32xf32> to vector<1x1x32xf32>
    %167 = vector.shape_cast %166 : vector<1x1x32xf32> to vector<32xf32>
    %168 = vector.shape_cast %167 : vector<32xf32> to vector<1x1x32xf32>
    %169 = vector.broadcast %168 : vector<1x1x32xf32> to vector<16x16x32xf32>
    %170 = arith.mulf %165, %169 : vector<16x16x32xf32>
    %171 = arith.addf %164, %170 : vector<16x16x32xf32>
    %172 = vector.extract_strided_slice %1 {offsets = [3, 3, 0], sizes = [16, 16, 32], strides = [1, 1, 1]} : vector<22x22x32xf32> to vector<16x16x32xf32>
    %173 = vector.extract_strided_slice %2 {offsets = [3, 3, 0], sizes = [1, 1, 32], strides = [1, 1, 1]} : vector<7x7x32xf32> to vector<1x1x32xf32>
    %174 = vector.shape_cast %173 : vector<1x1x32xf32> to vector<32xf32>
    %175 = vector.shape_cast %174 : vector<32xf32> to vector<1x1x32xf32>
    %176 = vector.broadcast %175 : vector<1x1x32xf32> to vector<16x16x32xf32>
    %177 = arith.mulf %172, %176 : vector<16x16x32xf32>
    %178 = arith.addf %171, %177 : vector<16x16x32xf32>
    %179 = vector.extract_strided_slice %1 {offsets = [3, 4, 0], sizes = [16, 16, 32], strides = [1, 1, 1]} : vector<22x22x32xf32> to vector<16x16x32xf32>
    %180 = vector.extract_strided_slice %2 {offsets = [3, 4, 0], sizes = [1, 1, 32], strides = [1, 1, 1]} : vector<7x7x32xf32> to vector<1x1x32xf32>
    %181 = vector.shape_cast %180 : vector<1x1x32xf32> to vector<32xf32>
    %182 = vector.shape_cast %181 : vector<32xf32> to vector<1x1x32xf32>
    %183 = vector.broadcast %182 : vector<1x1x32xf32> to vector<16x16x32xf32>
    %184 = arith.mulf %179, %183 : vector<16x16x32xf32>
    %185 = arith.addf %178, %184 : vector<16x16x32xf32>
    %186 = vector.extract_strided_slice %1 {offsets = [3, 5, 0], sizes = [16, 16, 32], strides = [1, 1, 1]} : vector<22x22x32xf32> to vector<16x16x32xf32>
    %187 = vector.extract_strided_slice %2 {offsets = [3, 5, 0], sizes = [1, 1, 32], strides = [1, 1, 1]} : vector<7x7x32xf32> to vector<1x1x32xf32>
    %188 = vector.shape_cast %187 : vector<1x1x32xf32> to vector<32xf32>
    %189 = vector.shape_cast %188 : vector<32xf32> to vector<1x1x32xf32>
    %190 = vector.broadcast %189 : vector<1x1x32xf32> to vector<16x16x32xf32>
    %191 = arith.mulf %186, %190 : vector<16x16x32xf32>
    %192 = arith.addf %185, %191 : vector<16x16x32xf32>
    %193 = vector.extract_strided_slice %1 {offsets = [3, 6, 0], sizes = [16, 16, 32], strides = [1, 1, 1]} : vector<22x22x32xf32> to vector<16x16x32xf32>
    %194 = vector.extract_strided_slice %2 {offsets = [3, 6, 0], sizes = [1, 1, 32], strides = [1, 1, 1]} : vector<7x7x32xf32> to vector<1x1x32xf32>
    %195 = vector.shape_cast %194 : vector<1x1x32xf32> to vector<32xf32>
    %196 = vector.shape_cast %195 : vector<32xf32> to vector<1x1x32xf32>
    %197 = vector.broadcast %196 : vector<1x1x32xf32> to vector<16x16x32xf32>
    %198 = arith.mulf %193, %197 : vector<16x16x32xf32>
    %199 = arith.addf %192, %198 : vector<16x16x32xf32>
    %200 = vector.extract_strided_slice %1 {offsets = [4, 0, 0], sizes = [16, 16, 32], strides = [1, 1, 1]} : vector<22x22x32xf32> to vector<16x16x32xf32>
    %201 = vector.extract_strided_slice %2 {offsets = [4, 0, 0], sizes = [1, 1, 32], strides = [1, 1, 1]} : vector<7x7x32xf32> to vector<1x1x32xf32>
    %202 = vector.shape_cast %201 : vector<1x1x32xf32> to vector<32xf32>
    %203 = vector.shape_cast %202 : vector<32xf32> to vector<1x1x32xf32>
    %204 = vector.broadcast %203 : vector<1x1x32xf32> to vector<16x16x32xf32>
    %205 = arith.mulf %200, %204 : vector<16x16x32xf32>
    %206 = arith.addf %199, %205 : vector<16x16x32xf32>
    %207 = vector.extract_strided_slice %1 {offsets = [4, 1, 0], sizes = [16, 16, 32], strides = [1, 1, 1]} : vector<22x22x32xf32> to vector<16x16x32xf32>
    %208 = vector.extract_strided_slice %2 {offsets = [4, 1, 0], sizes = [1, 1, 32], strides = [1, 1, 1]} : vector<7x7x32xf32> to vector<1x1x32xf32>
    %209 = vector.shape_cast %208 : vector<1x1x32xf32> to vector<32xf32>
    %210 = vector.shape_cast %209 : vector<32xf32> to vector<1x1x32xf32>
    %211 = vector.broadcast %210 : vector<1x1x32xf32> to vector<16x16x32xf32>
    %212 = arith.mulf %207, %211 : vector<16x16x32xf32>
    %213 = arith.addf %206, %212 : vector<16x16x32xf32>
    %214 = vector.extract_strided_slice %1 {offsets = [4, 2, 0], sizes = [16, 16, 32], strides = [1, 1, 1]} : vector<22x22x32xf32> to vector<16x16x32xf32>
    %215 = vector.extract_strided_slice %2 {offsets = [4, 2, 0], sizes = [1, 1, 32], strides = [1, 1, 1]} : vector<7x7x32xf32> to vector<1x1x32xf32>
    %216 = vector.shape_cast %215 : vector<1x1x32xf32> to vector<32xf32>
    %217 = vector.shape_cast %216 : vector<32xf32> to vector<1x1x32xf32>
    %218 = vector.broadcast %217 : vector<1x1x32xf32> to vector<16x16x32xf32>
    %219 = arith.mulf %214, %218 : vector<16x16x32xf32>
    %220 = arith.addf %213, %219 : vector<16x16x32xf32>
    %221 = vector.extract_strided_slice %1 {offsets = [4, 3, 0], sizes = [16, 16, 32], strides = [1, 1, 1]} : vector<22x22x32xf32> to vector<16x16x32xf32>
    %222 = vector.extract_strided_slice %2 {offsets = [4, 3, 0], sizes = [1, 1, 32], strides = [1, 1, 1]} : vector<7x7x32xf32> to vector<1x1x32xf32>
    %223 = vector.shape_cast %222 : vector<1x1x32xf32> to vector<32xf32>
    %224 = vector.shape_cast %223 : vector<32xf32> to vector<1x1x32xf32>
    %225 = vector.broadcast %224 : vector<1x1x32xf32> to vector<16x16x32xf32>
    %226 = arith.mulf %221, %225 : vector<16x16x32xf32>
    %227 = arith.addf %220, %226 : vector<16x16x32xf32>
    %228 = vector.extract_strided_slice %1 {offsets = [4, 4, 0], sizes = [16, 16, 32], strides = [1, 1, 1]} : vector<22x22x32xf32> to vector<16x16x32xf32>
    %229 = vector.extract_strided_slice %2 {offsets = [4, 4, 0], sizes = [1, 1, 32], strides = [1, 1, 1]} : vector<7x7x32xf32> to vector<1x1x32xf32>
    %230 = vector.shape_cast %229 : vector<1x1x32xf32> to vector<32xf32>
    %231 = vector.shape_cast %230 : vector<32xf32> to vector<1x1x32xf32>
    %232 = vector.broadcast %231 : vector<1x1x32xf32> to vector<16x16x32xf32>
    %233 = arith.mulf %228, %232 : vector<16x16x32xf32>
    %234 = arith.addf %227, %233 : vector<16x16x32xf32>
    %235 = vector.extract_strided_slice %1 {offsets = [4, 5, 0], sizes = [16, 16, 32], strides = [1, 1, 1]} : vector<22x22x32xf32> to vector<16x16x32xf32>
    %236 = vector.extract_strided_slice %2 {offsets = [4, 5, 0], sizes = [1, 1, 32], strides = [1, 1, 1]} : vector<7x7x32xf32> to vector<1x1x32xf32>
    %237 = vector.shape_cast %236 : vector<1x1x32xf32> to vector<32xf32>
    %238 = vector.shape_cast %237 : vector<32xf32> to vector<1x1x32xf32>
    %239 = vector.broadcast %238 : vector<1x1x32xf32> to vector<16x16x32xf32>
    %240 = arith.mulf %235, %239 : vector<16x16x32xf32>
    %241 = arith.addf %234, %240 : vector<16x16x32xf32>
    %242 = vector.extract_strided_slice %1 {offsets = [4, 6, 0], sizes = [16, 16, 32], strides = [1, 1, 1]} : vector<22x22x32xf32> to vector<16x16x32xf32>
    %243 = vector.extract_strided_slice %2 {offsets = [4, 6, 0], sizes = [1, 1, 32], strides = [1, 1, 1]} : vector<7x7x32xf32> to vector<1x1x32xf32>
    %244 = vector.shape_cast %243 : vector<1x1x32xf32> to vector<32xf32>
    %245 = vector.shape_cast %244 : vector<32xf32> to vector<1x1x32xf32>
    %246 = vector.broadcast %245 : vector<1x1x32xf32> to vector<16x16x32xf32>
    %247 = arith.mulf %242, %246 : vector<16x16x32xf32>
    %248 = arith.addf %241, %247 : vector<16x16x32xf32>
    %249 = vector.extract_strided_slice %1 {offsets = [5, 0, 0], sizes = [16, 16, 32], strides = [1, 1, 1]} : vector<22x22x32xf32> to vector<16x16x32xf32>
    %250 = vector.extract_strided_slice %2 {offsets = [5, 0, 0], sizes = [1, 1, 32], strides = [1, 1, 1]} : vector<7x7x32xf32> to vector<1x1x32xf32>
    %251 = vector.shape_cast %250 : vector<1x1x32xf32> to vector<32xf32>
    %252 = vector.shape_cast %251 : vector<32xf32> to vector<1x1x32xf32>
    %253 = vector.broadcast %252 : vector<1x1x32xf32> to vector<16x16x32xf32>
    %254 = arith.mulf %249, %253 : vector<16x16x32xf32>
    %255 = arith.addf %248, %254 : vector<16x16x32xf32>
    %256 = vector.extract_strided_slice %1 {offsets = [5, 1, 0], sizes = [16, 16, 32], strides = [1, 1, 1]} : vector<22x22x32xf32> to vector<16x16x32xf32>
    %257 = vector.extract_strided_slice %2 {offsets = [5, 1, 0], sizes = [1, 1, 32], strides = [1, 1, 1]} : vector<7x7x32xf32> to vector<1x1x32xf32>
    %258 = vector.shape_cast %257 : vector<1x1x32xf32> to vector<32xf32>
    %259 = vector.shape_cast %258 : vector<32xf32> to vector<1x1x32xf32>
    %260 = vector.broadcast %259 : vector<1x1x32xf32> to vector<16x16x32xf32>
    %261 = arith.mulf %256, %260 : vector<16x16x32xf32>
    %262 = arith.addf %255, %261 : vector<16x16x32xf32>
    %263 = vector.extract_strided_slice %1 {offsets = [5, 2, 0], sizes = [16, 16, 32], strides = [1, 1, 1]} : vector<22x22x32xf32> to vector<16x16x32xf32>
    %264 = vector.extract_strided_slice %2 {offsets = [5, 2, 0], sizes = [1, 1, 32], strides = [1, 1, 1]} : vector<7x7x32xf32> to vector<1x1x32xf32>
    %265 = vector.shape_cast %264 : vector<1x1x32xf32> to vector<32xf32>
    %266 = vector.shape_cast %265 : vector<32xf32> to vector<1x1x32xf32>
    %267 = vector.broadcast %266 : vector<1x1x32xf32> to vector<16x16x32xf32>
    %268 = arith.mulf %263, %267 : vector<16x16x32xf32>
    %269 = arith.addf %262, %268 : vector<16x16x32xf32>
    %270 = vector.extract_strided_slice %1 {offsets = [5, 3, 0], sizes = [16, 16, 32], strides = [1, 1, 1]} : vector<22x22x32xf32> to vector<16x16x32xf32>
    %271 = vector.extract_strided_slice %2 {offsets = [5, 3, 0], sizes = [1, 1, 32], strides = [1, 1, 1]} : vector<7x7x32xf32> to vector<1x1x32xf32>
    %272 = vector.shape_cast %271 : vector<1x1x32xf32> to vector<32xf32>
    %273 = vector.shape_cast %272 : vector<32xf32> to vector<1x1x32xf32>
    %274 = vector.broadcast %273 : vector<1x1x32xf32> to vector<16x16x32xf32>
    %275 = arith.mulf %270, %274 : vector<16x16x32xf32>
    %276 = arith.addf %269, %275 : vector<16x16x32xf32>
    %277 = vector.extract_strided_slice %1 {offsets = [5, 4, 0], sizes = [16, 16, 32], strides = [1, 1, 1]} : vector<22x22x32xf32> to vector<16x16x32xf32>
    %278 = vector.extract_strided_slice %2 {offsets = [5, 4, 0], sizes = [1, 1, 32], strides = [1, 1, 1]} : vector<7x7x32xf32> to vector<1x1x32xf32>
    %279 = vector.shape_cast %278 : vector<1x1x32xf32> to vector<32xf32>
    %280 = vector.shape_cast %279 : vector<32xf32> to vector<1x1x32xf32>
    %281 = vector.broadcast %280 : vector<1x1x32xf32> to vector<16x16x32xf32>
    %282 = arith.mulf %277, %281 : vector<16x16x32xf32>
    %283 = arith.addf %276, %282 : vector<16x16x32xf32>
    %284 = vector.extract_strided_slice %1 {offsets = [5, 5, 0], sizes = [16, 16, 32], strides = [1, 1, 1]} : vector<22x22x32xf32> to vector<16x16x32xf32>
    %285 = vector.extract_strided_slice %2 {offsets = [5, 5, 0], sizes = [1, 1, 32], strides = [1, 1, 1]} : vector<7x7x32xf32> to vector<1x1x32xf32>
    %286 = vector.shape_cast %285 : vector<1x1x32xf32> to vector<32xf32>
    %287 = vector.shape_cast %286 : vector<32xf32> to vector<1x1x32xf32>
    %288 = vector.broadcast %287 : vector<1x1x32xf32> to vector<16x16x32xf32>
    %289 = arith.mulf %284, %288 : vector<16x16x32xf32>
    %290 = arith.addf %283, %289 : vector<16x16x32xf32>
    %291 = vector.extract_strided_slice %1 {offsets = [5, 6, 0], sizes = [16, 16, 32], strides = [1, 1, 1]} : vector<22x22x32xf32> to vector<16x16x32xf32>
    %292 = vector.extract_strided_slice %2 {offsets = [5, 6, 0], sizes = [1, 1, 32], strides = [1, 1, 1]} : vector<7x7x32xf32> to vector<1x1x32xf32>
    %293 = vector.shape_cast %292 : vector<1x1x32xf32> to vector<32xf32>
    %294 = vector.shape_cast %293 : vector<32xf32> to vector<1x1x32xf32>
    %295 = vector.broadcast %294 : vector<1x1x32xf32> to vector<16x16x32xf32>
    %296 = arith.mulf %291, %295 : vector<16x16x32xf32>
    %297 = arith.addf %290, %296 : vector<16x16x32xf32>
    %298 = vector.extract_strided_slice %1 {offsets = [6, 0, 0], sizes = [16, 16, 32], strides = [1, 1, 1]} : vector<22x22x32xf32> to vector<16x16x32xf32>
    %299 = vector.extract_strided_slice %2 {offsets = [6, 0, 0], sizes = [1, 1, 32], strides = [1, 1, 1]} : vector<7x7x32xf32> to vector<1x1x32xf32>
    %300 = vector.shape_cast %299 : vector<1x1x32xf32> to vector<32xf32>
    %301 = vector.shape_cast %300 : vector<32xf32> to vector<1x1x32xf32>
    %302 = vector.broadcast %301 : vector<1x1x32xf32> to vector<16x16x32xf32>
    %303 = arith.mulf %298, %302 : vector<16x16x32xf32>
    %304 = arith.addf %297, %303 : vector<16x16x32xf32>
    %305 = vector.extract_strided_slice %1 {offsets = [6, 1, 0], sizes = [16, 16, 32], strides = [1, 1, 1]} : vector<22x22x32xf32> to vector<16x16x32xf32>
    %306 = vector.extract_strided_slice %2 {offsets = [6, 1, 0], sizes = [1, 1, 32], strides = [1, 1, 1]} : vector<7x7x32xf32> to vector<1x1x32xf32>
    %307 = vector.shape_cast %306 : vector<1x1x32xf32> to vector<32xf32>
    %308 = vector.shape_cast %307 : vector<32xf32> to vector<1x1x32xf32>
    %309 = vector.broadcast %308 : vector<1x1x32xf32> to vector<16x16x32xf32>
    %310 = arith.mulf %305, %309 : vector<16x16x32xf32>
    %311 = arith.addf %304, %310 : vector<16x16x32xf32>
    %312 = vector.extract_strided_slice %1 {offsets = [6, 2, 0], sizes = [16, 16, 32], strides = [1, 1, 1]} : vector<22x22x32xf32> to vector<16x16x32xf32>
    %313 = vector.extract_strided_slice %2 {offsets = [6, 2, 0], sizes = [1, 1, 32], strides = [1, 1, 1]} : vector<7x7x32xf32> to vector<1x1x32xf32>
    %314 = vector.shape_cast %313 : vector<1x1x32xf32> to vector<32xf32>
    %315 = vector.shape_cast %314 : vector<32xf32> to vector<1x1x32xf32>
    %316 = vector.broadcast %315 : vector<1x1x32xf32> to vector<16x16x32xf32>
    %317 = arith.mulf %312, %316 : vector<16x16x32xf32>
    %318 = arith.addf %311, %317 : vector<16x16x32xf32>
    %319 = vector.extract_strided_slice %1 {offsets = [6, 3, 0], sizes = [16, 16, 32], strides = [1, 1, 1]} : vector<22x22x32xf32> to vector<16x16x32xf32>
    %320 = vector.extract_strided_slice %2 {offsets = [6, 3, 0], sizes = [1, 1, 32], strides = [1, 1, 1]} : vector<7x7x32xf32> to vector<1x1x32xf32>
    %321 = vector.shape_cast %320 : vector<1x1x32xf32> to vector<32xf32>
    %322 = vector.shape_cast %321 : vector<32xf32> to vector<1x1x32xf32>
    %323 = vector.broadcast %322 : vector<1x1x32xf32> to vector<16x16x32xf32>
    %324 = arith.mulf %319, %323 : vector<16x16x32xf32>
    %325 = arith.addf %318, %324 : vector<16x16x32xf32>
    %326 = vector.extract_strided_slice %1 {offsets = [6, 4, 0], sizes = [16, 16, 32], strides = [1, 1, 1]} : vector<22x22x32xf32> to vector<16x16x32xf32>
    %327 = vector.extract_strided_slice %2 {offsets = [6, 4, 0], sizes = [1, 1, 32], strides = [1, 1, 1]} : vector<7x7x32xf32> to vector<1x1x32xf32>
    %328 = vector.shape_cast %327 : vector<1x1x32xf32> to vector<32xf32>
    %329 = vector.shape_cast %328 : vector<32xf32> to vector<1x1x32xf32>
    %330 = vector.broadcast %329 : vector<1x1x32xf32> to vector<16x16x32xf32>
    %331 = arith.mulf %326, %330 : vector<16x16x32xf32>
    %332 = arith.addf %325, %331 : vector<16x16x32xf32>
    %333 = vector.extract_strided_slice %1 {offsets = [6, 5, 0], sizes = [16, 16, 32], strides = [1, 1, 1]} : vector<22x22x32xf32> to vector<16x16x32xf32>
    %334 = vector.extract_strided_slice %2 {offsets = [6, 5, 0], sizes = [1, 1, 32], strides = [1, 1, 1]} : vector<7x7x32xf32> to vector<1x1x32xf32>
    %335 = vector.shape_cast %334 : vector<1x1x32xf32> to vector<32xf32>
    %336 = vector.shape_cast %335 : vector<32xf32> to vector<1x1x32xf32>
    %337 = vector.broadcast %336 : vector<1x1x32xf32> to vector<16x16x32xf32>
    %338 = arith.mulf %333, %337 : vector<16x16x32xf32>
    %339 = arith.addf %332, %338 : vector<16x16x32xf32>
    %340 = vector.extract_strided_slice %1 {offsets = [6, 6, 0], sizes = [16, 16, 32], strides = [1, 1, 1]} : vector<22x22x32xf32> to vector<16x16x32xf32>
    %341 = vector.extract_strided_slice %2 {offsets = [6, 6, 0], sizes = [1, 1, 32], strides = [1, 1, 1]} : vector<7x7x32xf32> to vector<1x1x32xf32>
    %342 = vector.shape_cast %341 : vector<1x1x32xf32> to vector<32xf32>
    %343 = vector.shape_cast %342 : vector<32xf32> to vector<1x1x32xf32>
    %344 = vector.broadcast %343 : vector<1x1x32xf32> to vector<16x16x32xf32>
    %345 = arith.mulf %340, %344 : vector<16x16x32xf32>
    %346 = arith.addf %339, %345 : vector<16x16x32xf32>
    %c0_6 = arith.constant 0 : index
    %c0_7 = arith.constant 0 : index
    %347 = vector.load %arg3[%c0_6, %c0_7] : memref<1x32xf32, #tpu.memory_space<vmem>>, vector<1x32xf32>
    %348 = vector.shape_cast %347 : vector<1x32xf32> to vector<32xf32>
    %349 = vector.shape_cast %348 : vector<32xf32> to vector<1x1x32xf32>
    %350 = vector.broadcast %349 : vector<1x1x32xf32> to vector<16x16x32xf32>
    %351 = arith.addf %346, %350 : vector<16x16x32xf32>
    %cst_8 = arith.constant dense<0.000000e+00> : vector<16x16xf32>
    %352 = vector.multi_reduction <add>, %351, %cst_8 [2] : vector<16x16x32xf32> to vector<16x16xf32>
    %353 = vector.shape_cast %352 : vector<16x16xf32> to vector<16x16x1xf32>
    %cst_9 = arith.constant 3.200000e+01 : f32
    %354 = vector.broadcast %cst_9 : f32 to vector<16x16x1xf32>
    %355 = arith.divf %353, %354 : vector<16x16x1xf32>
    %356 = vector.broadcast %355 : vector<16x16x1xf32> to vector<16x16x32xf32>
    %357 = arith.subf %351, %356 : vector<16x16x32xf32>
    %358 = arith.mulf %357, %357 : vector<16x16x32xf32>
    %cst_10 = arith.constant dense<0.000000e+00> : vector<16x16xf32>
    %359 = vector.multi_reduction <add>, %358, %cst_10 [2] : vector<16x16x32xf32> to vector<16x16xf32>
    %360 = vector.shape_cast %359 : vector<16x16xf32> to vector<16x16x1xf32>
    %cst_11 = arith.constant 3.200000e+01 : f32
    %361 = vector.broadcast %cst_11 : f32 to vector<16x16x1xf32>
    %362 = arith.divf %360, %361 : vector<16x16x1xf32>
    %363 = vector.broadcast %355 : vector<16x16x1xf32> to vector<16x16x32xf32>
    %364 = arith.subf %351, %363 : vector<16x16x32xf32>
    %cst_12 = arith.constant 9.99999997E-7 : f32
    %365 = vector.broadcast %cst_12 : f32 to vector<16x16x1xf32>
    %366 = arith.addf %362, %365 : vector<16x16x1xf32>
    %367 = math.rsqrt %366 : vector<16x16x1xf32>
    %368 = vector.broadcast %367 : vector<16x16x1xf32> to vector<16x16x32xf32>
    %369 = arith.mulf %364, %368 : vector<16x16x32xf32>
    %c0_13 = arith.constant 0 : index
    %c0_14 = arith.constant 0 : index
    %370 = vector.load %arg4[%c0_13, %c0_14] : memref<1x32xf32, #tpu.memory_space<vmem>>, vector<1x32xf32>
    %371 = vector.shape_cast %370 : vector<1x32xf32> to vector<32xf32>
    %372 = vector.shape_cast %371 : vector<32xf32> to vector<1x1x32xf32>
    %373 = vector.broadcast %372 : vector<1x1x32xf32> to vector<16x16x32xf32>
    %374 = arith.mulf %369, %373 : vector<16x16x32xf32>
    %c0_15 = arith.constant 0 : index
    %c0_16 = arith.constant 0 : index
    %375 = vector.load %arg5[%c0_15, %c0_16] : memref<1x32xf32, #tpu.memory_space<vmem>>, vector<1x32xf32>
    %376 = vector.shape_cast %375 : vector<1x32xf32> to vector<32xf32>
    %377 = vector.shape_cast %376 : vector<32xf32> to vector<1x1x32xf32>
    %378 = vector.broadcast %377 : vector<1x1x32xf32> to vector<16x16x32xf32>
    %379 = arith.addf %374, %378 : vector<16x16x32xf32>
    %380 = vector.shape_cast %379 : vector<16x16x32xf32> to vector<256x32xf32>
    %c0_17 = arith.constant 0 : index
    %c0_18 = arith.constant 0 : index
    %381 = vector.load %arg6[%c0_17, %c0_18] : memref<32x128xf32, #tpu.memory_space<vmem>>, vector<32x128xf32>
    %cst_19 = arith.constant dense<0.000000e+00> : vector<256x128xf32>
    %382 = tpu.matmul %380, %381, %cst_19 {dimension_numbers = #tpu.dot_dimension_numbers<[1], [0], [0], [1], [0, 0, 1, 1], [], []>} : vector<256x32xf32>, vector<32x128xf32>, vector<256x128xf32> -> vector<256x128xf32>
    %c0_20 = arith.constant 0 : index
    %c0_21 = arith.constant 0 : index
    %383 = vector.load %arg7[%c0_20, %c0_21] : memref<1x128xf32, #tpu.memory_space<vmem>>, vector<1x128xf32>
    %384 = vector.shape_cast %383 : vector<1x128xf32> to vector<128xf32>
    %385 = vector.shape_cast %384 : vector<128xf32> to vector<1x128xf32>
    %386 = vector.broadcast %385 : vector<1x128xf32> to vector<256x128xf32>
    %387 = arith.addf %382, %386 : vector<256x128xf32>
    %388 = arith.mulf %387, %387 : vector<256x128xf32>
    %389 = arith.mulf %387, %388 : vector<256x128xf32>
    %cst_22 = arith.constant 4.471500e-02 : f32
    %390 = vector.broadcast %cst_22 : f32 to vector<256x128xf32>
    %391 = arith.mulf %390, %389 : vector<256x128xf32>
    %392 = arith.addf %387, %391 : vector<256x128xf32>
    %cst_23 = arith.constant 0.797884583 : f32
    %393 = vector.broadcast %cst_23 : f32 to vector<256x128xf32>
    %394 = arith.mulf %393, %392 : vector<256x128xf32>
    %395 = math.tanh %394 : vector<256x128xf32>
    %cst_24 = arith.constant 1.000000e+00 : f32
    %396 = vector.broadcast %cst_24 : f32 to vector<256x128xf32>
    %397 = arith.addf %396, %395 : vector<256x128xf32>
    %cst_25 = arith.constant 5.000000e-01 : f32
    %398 = vector.broadcast %cst_25 : f32 to vector<256x128xf32>
    %399 = arith.mulf %398, %397 : vector<256x128xf32>
    %400 = arith.mulf %387, %399 : vector<256x128xf32>
    %401 = arith.mulf %400, %400 : vector<256x128xf32>
    %cst_26 = arith.constant dense<0.000000e+00> : vector<128xf32>
    %402 = vector.multi_reduction <add>, %401, %cst_26 [0] : vector<256x128xf32> to vector<128xf32>
    %403 = vector.shape_cast %402 : vector<128xf32> to vector<1x128xf32>
    %404 = math.sqrt %403 : vector<1x128xf32>
    %cst_27 = arith.constant dense<0.000000e+00> : vector<1xf32>
    %405 = vector.multi_reduction <add>, %404, %cst_27 [1] : vector<1x128xf32> to vector<1xf32>
    %406 = vector.shape_cast %405 : vector<1xf32> to vector<1x1xf32>
    %cst_28 = arith.constant 1.280000e+02 : f32
    %407 = vector.broadcast %cst_28 : f32 to vector<1x1xf32>
    %408 = arith.divf %406, %407 : vector<1x1xf32>
    %cst_29 = arith.constant 9.99999997E-7 : f32
    %409 = vector.broadcast %cst_29 : f32 to vector<1x1xf32>
    %410 = arith.addf %408, %409 : vector<1x1xf32>
    %411 = vector.broadcast %410 : vector<1x1xf32> to vector<1x128xf32>
    %412 = arith.divf %404, %411 : vector<1x128xf32>
    %c0_30 = arith.constant 0 : index
    %c0_31 = arith.constant 0 : index
    %413 = vector.load %arg8[%c0_30, %c0_31] : memref<1x128xf32, #tpu.memory_space<vmem>>, vector<1x128xf32>
    %414 = vector.shape_cast %413 : vector<1x128xf32> to vector<128xf32>
    %415 = vector.broadcast %412 : vector<1x128xf32> to vector<256x128xf32>
    %416 = arith.mulf %400, %415 : vector<256x128xf32>
    %417 = vector.shape_cast %414 : vector<128xf32> to vector<1x128xf32>
    %418 = vector.broadcast %417 : vector<1x128xf32> to vector<256x128xf32>
    %419 = arith.mulf %418, %416 : vector<256x128xf32>
    %c0_32 = arith.constant 0 : index
    %c0_33 = arith.constant 0 : index
    %420 = vector.load %arg9[%c0_32, %c0_33] : memref<1x128xf32, #tpu.memory_space<vmem>>, vector<1x128xf32>
    %421 = vector.shape_cast %420 : vector<1x128xf32> to vector<128xf32>
    %422 = vector.shape_cast %421 : vector<128xf32> to vector<1x128xf32>
    %423 = vector.broadcast %422 : vector<1x128xf32> to vector<256x128xf32>
    %424 = arith.addf %419, %423 : vector<256x128xf32>
    %425 = arith.addf %424, %400 : vector<256x128xf32>
    %c0_34 = arith.constant 0 : index
    %c0_35 = arith.constant 0 : index
    %426 = vector.load %arg10[%c0_34, %c0_35] : memref<128x32xf32, #tpu.memory_space<vmem>>, vector<128x32xf32>
    %cst_36 = arith.constant dense<0.000000e+00> : vector<256x32xf32>
    %427 = tpu.matmul %425, %426, %cst_36 {dimension_numbers = #tpu.dot_dimension_numbers<[1], [0], [0], [1], [0, 0, 1, 1], [], []>} : vector<256x128xf32>, vector<128x32xf32>, vector<256x32xf32> -> vector<256x32xf32>
    %c0_37 = arith.constant 0 : index
    %c0_38 = arith.constant 0 : index
    %428 = vector.load %arg11[%c0_37, %c0_38] : memref<1x32xf32, #tpu.memory_space<vmem>>, vector<1x32xf32>
    %429 = vector.shape_cast %428 : vector<1x32xf32> to vector<32xf32>
    %430 = vector.shape_cast %429 : vector<32xf32> to vector<1x32xf32>
    %431 = vector.broadcast %430 : vector<1x32xf32> to vector<256x32xf32>
    %432 = arith.addf %427, %431 : vector<256x32xf32>
    %433 = vector.extract_strided_slice %1 {offsets = [3, 3, 0], sizes = [16, 16, 32], strides = [1, 1, 1]} : vector<22x22x32xf32> to vector<16x16x32xf32>
    %434 = vector.shape_cast %432 : vector<256x32xf32> to vector<16x16x32xf32>
    %435 = arith.addf %433, %434 : vector<16x16x32xf32>
    %c0_39 = arith.constant 0 : index
    %c0_40 = arith.constant 0 : index
    %c0_41 = arith.constant 0 : index
    %c0_42 = arith.constant 0 : index
    %436 = vector.load %arg12[%c0_39, %c0_40, %c0_41, %c0_42] : memref<1x16x16x32xf32, #tpu.memory_space<vmem>>, vector<1x16x16x32xf32>
    %437 = vector.shape_cast %436 : vector<1x16x16x32xf32> to vector<16x16x32xf32>
    %438 = vector.shape_cast %435 : vector<16x16x32xf32> to vector<1x16x16x32xf32>
    tpu.vector_store %arg12[%c0_39, %c0_40, %c0_41, %c0_42], %438 {strides = array<i32>} : memref<1x16x16x32xf32, #tpu.memory_space<vmem>>, vector<1x16x16x32xf32>,
    return
  }
  func.func @transform_0(%arg0: i32) -> (i32, i32, i32, i32) {
    %c0_i32 = arith.constant 0 : i32
    %c0_i32_0 = arith.constant 0 : i32
    %c0_i32_1 = arith.constant 0 : i32
    %c0_i32_2 = arith.constant 0 : i32
    return %arg0, %c0_i32, %c0_i32_0, %c0_i32_1 : i32, i32, i32, i32
  }
  func.func @transform_1(%arg0: i32) -> (i32, i32, i32) {
    %c0_i32 = arith.constant 0 : i32
    %c0_i32_0 = arith.constant 0 : i32
    %c0_i32_1 = arith.constant 0 : i32
    %c0_i32_2 = arith.constant 0 : i32
    return %c0_i32, %c0_i32_0, %c0_i32_1 : i32, i32, i32
  }
  func.func @transform_2(%arg0: i32) -> (i32, i32) {
    %c0_i32 = arith.constant 0 : i32
    %c0_i32_0 = arith.constant 0 : i32
    %c0_i32_1 = arith.constant 0 : i32
    return %c0_i32, %c0_i32_0 : i32, i32
  }
  func.func @transform_3(%arg0: i32) -> (i32, i32) {
    %c0_i32 = arith.constant 0 : i32
    %c0_i32_0 = arith.constant 0 : i32
    %c0_i32_1 = arith.constant 0 : i32
    return %c0_i32, %c0_i32_0 : i32, i32
  }
  func.func @transform_4(%arg0: i32) -> (i32, i32) {
    %c0_i32 = arith.constant 0 : i32
    %c0_i32_0 = arith.constant 0 : i32
    %c0_i32_1 = arith.constant 0 : i32
    return %c0_i32, %c0_i32_0 : i32, i32
  }
  func.func @transform_5(%arg0: i32) -> (i32, i32) {
    %c0_i32 = arith.constant 0 : i32
    %c0_i32_0 = arith.constant 0 : i32
    %c0_i32_1 = arith.constant 0 : i32
    return %c0_i32, %c0_i32_0 : i32, i32
  }
  func.func @transform_6(%arg0: i32) -> (i32, i32) {
    %c0_i32 = arith.constant 0 : i32
    %c0_i32_0 = arith.constant 0 : i32
    %c0_i32_1 = arith.constant 0 : i32
    return %c0_i32, %c0_i32_0 : i32, i32
  }
  func.func @transform_7(%arg0: i32) -> (i32, i32) {
    %c0_i32 = arith.constant 0 : i32
    %c0_i32_0 = arith.constant 0 : i32
    %c0_i32_1 = arith.constant 0 : i32
    return %c0_i32, %c0_i32_0 : i32, i32
  }
  func.func @transform_8(%arg0: i32) -> (i32, i32) {
    %c0_i32 = arith.constant 0 : i32
    %c0_i32_0 = arith.constant 0 : i32
    %c0_i32_1 = arith.constant 0 : i32
    return %c0_i32, %c0_i32_0 : i32, i32
  }
  func.func @transform_9(%arg0: i32) -> (i32, i32) {
    %c0_i32 = arith.constant 0 : i32
    %c0_i32_0 = arith.constant 0 : i32
    %c0_i32_1 = arith.constant 0 : i32
    return %c0_i32, %c0_i32_0 : i32, i32
  }
  func.func @transform_10(%arg0: i32) -> (i32, i32) {
    %c0_i32 = arith.constant 0 : i32
    %c0_i32_0 = arith.constant 0 : i32
    %c0_i32_1 = arith.constant 0 : i32
    return %c0_i32, %c0_i32_0 : i32, i32
  }
  func.func @transform_11(%arg0: i32) -> (i32, i32, i32, i32) {
    %c0_i32 = arith.constant 0 : i32
    %c0_i32_0 = arith.constant 0 : i32
    %c0_i32_1 = arith.constant 0 : i32
    %c0_i32_2 = arith.constant 0 : i32
    return %arg0, %c0_i32, %c0_i32_0, %c0_i32_1 : i32, i32, i32, i32
  }
}

</mosaic_0001>

<llo_original>
// kernel: tpu_custom_call.1
$region0: #{tpu_custom_call.1}
  #allocation0 [shape = 'u32[]', space=smem, size = 0x4, offset = 0x4, fixed_abs, tag = 'smem constant byte address 0x4 - core index']
  #allocation1 [shape = 'u32[144,128]{1,0:T(1,128)}', space=vmem, size = 0x12000, scoped, tag = 'internal scratch']
  %s0 = inlined_call_operand.vmem [shape: f32[2,22,22,32], index: 0, kind: input, shape index: {}]
  %s1 = inlined_call_operand.vmem [shape: f32[7,7,32], index: 1, kind: input, shape index: {}]
  %s2 = inlined_call_operand.vmem [shape: f32[1,32], index: 2, kind: input, shape index: {}]
  %s3 = inlined_call_operand.vmem [shape: f32[1,32], index: 3, kind: input, shape index: {}]
  %s4 = inlined_call_operand.vmem [shape: f32[1,32], index: 4, kind: input, shape index: {}]
  %s5 = inlined_call_operand.vmem [shape: f32[32,128], index: 5, kind: input, shape index: {}]
  %s6 = inlined_call_operand.vmem [shape: f32[1,128], index: 6, kind: input, shape index: {}]
  %s7 = inlined_call_operand.vmem [shape: f32[1,128], index: 7, kind: input, shape index: {}]
  %s8 = inlined_call_operand.vmem [shape: f32[1,128], index: 8, kind: input, shape index: {}]
  %s9 = inlined_call_operand.vmem [shape: f32[128,32], index: 9, kind: input, shape index: {}]
  %s10 = inlined_call_operand.vmem [shape: f32[1,32], index: 10, kind: input, shape index: {}]
  %s11 = inlined_call_operand.hbm [shape: f32[2,16,16,32], index: 11, kind: output, shape index: {}]
  %s12 = sld [smem:[#allocation0]]
  $region77: #{tpu_custom_call.1} parent=0
    _
  %s14 = ssub.s32 1, %s12
  %s15 = scalar_select 0, %s14, %s12
  $region1: #{tpu_custom_call.1} parent=0
    #allocation2 [shape = 'u8[262144]{0}', space=vmem, size = 0x40000, scoped, tag = 'output window, operand 0']
    #allocation3 [shape = 's32[2]{0}', space=sflag, size = 0x8, scoped, tag = 'scoped memory for tpu_custom_call.1']
    %16 = vsyncpa [#allocation3], 0
    %s17 = scalar_lea.sflag [#allocation3], 1
    %18 = vsyncpa %s17, 0
    loop: start=0, step=1, limit=4
    $region2: #{tpu_custom_call.1} parent=1 // loop_pre_header
      _
    $region3: #{tpu_custom_call.1} parent=1 // loop_header
      %s20 = sphi 0, %s24
      %p21 = scmp.ge.s32.totalorder %s20, 4
      %s30 = sphi 0, %s32
      %s33 = sphi 0, %s30
      %s34 = sphi 0, %s33
      %s50 = sphi 0, %s34
      %s54 = sphi 0, %s54
      %s56 = sphi 0, %s54
      %s57 = sphi 0, %s56
      %s71 = sphi 0, %s57
      %s75 = sphi 0, %s75
      %s77 = sphi 0, %s75
      %s78 = sphi 0, %s77
      %s92 = sphi 0, %s78
      %s96 = sphi 0, %s96
      %s98 = sphi 0, %s96
      %s99 = sphi 0, %s98
      %s113 = sphi 0, %s99
      %s117 = sphi 0, %s117
      %s119 = sphi 0, %s117
      %s120 = sphi 0, %s119
      %s134 = sphi 0, %s120
      %s138 = sphi 0, %s138
      %s140 = sphi 0, %s138
      %s141 = sphi 0, %s140
      %s155 = sphi 0, %s141
      %s159 = sphi 0, %s159
      %s161 = sphi 0, %s159
      %s162 = sphi 0, %s161
      %s176 = sphi 0, %s162
      %s180 = sphi 0, %s180
      %s182 = sphi 0, %s180
      %s183 = sphi 0, %s182
      %s197 = sphi 0, %s183
      %s201 = sphi 0, %s201
      %s203 = sphi 0, %s201
      %s204 = sphi 0, %s203
      %s218 = sphi 0, %s204
      %s222 = sphi 0, %s222
      %s224 = sphi 0, %s222
      %s225 = sphi 0, %s224
      %s239 = sphi 0, %s225
      %s243 = sphi 0, %s243
      %s245 = sphi 0, %s243
      %s246 = sphi 0, %s245
      %s260 = sphi 0, %s246
      %s266 = sphi 0, %s268
      %s269 = sphi 0, %s266
      %s270 = sphi 0, %s269
      %s286 = sphi 0, %s270
    $region4: #{tpu_custom_call.1} parent=1 // loop_header_branch
      %23 = sbr.rel (%p21) target = $region8
    $region5: #{tpu_custom_call.1} parent=1 // loop_body
      %s25 = ssub.s32 %s20, 1
      %s26 = ssub.s32 %s20, 2
      %s27 = sadd.s32 %s20, 1
      %s28 = ssub.s32 %s20, %s27
      %p29 = scmp.eq.s32.totalorder %s28, 0
      %s31 = sadd.s32 %s30, 1
      %s32 = scalar_select %p29, %s30, %s31
      %p35 = pneg %p29
      %p36 = scmp.eq.s32.totalorder %s20, 1
      %p37 = por %p35, %p36
      %p38 = scmp.ne.s32.totalorder %s30, %s33
      %p39 = scmp.eq.s32.totalorder %s20, 0
      %p40 = por %p38, %p39
      %p41 = scmp.ne.s32.totalorder %s30, %s33
      %p42 = scmp.eq.s32.totalorder %s25, 1
      %p43 = por %p41, %p42
      %p44 = scmp.ne.s32.totalorder %s33, %s34
      %p45 = scmp.eq.s32.totalorder %s25, 0
      %p46 = por %p44, %p45
      %p47 = scmp.ne.s32.totalorder %s33, %s34
      %p48 = scmp.eq.s32.totalorder %s26, 1
      %p49 = por %p47, %p48
      %p51 = scmp.ne.s32.totalorder %s34, %s50
      %p52 = scmp.eq.s32.totalorder %s26, 0
      %p53 = por %p51, %p52
      %s55 = sadd.s32 %s54, 1
      %p58 = scmp.eq.s32.totalorder %s20, 1
      %p59 = scmp.ne.s32.totalorder %s54, %s56
      %p60 = scmp.eq.s32.totalorder %s20, 0
      %p61 = por %p59, %p60
      %p62 = scmp.ne.s32.totalorder %s54, %s56
      %p63 = scmp.eq.s32.totalorder %s25, 1
      %p64 = por %p62, %p63
      %p65 = scmp.ne.s32.totalorder %s56, %s57
      %p66 = scmp.eq.s32.totalorder %s25, 0
      %p67 = por %p65, %p66
      %p68 = scmp.ne.s32.totalorder %s56, %s57
      %p69 = scmp.eq.s32.totalorder %s26, 1
      %p70 = por %p68, %p69
      %p72 = scmp.ne.s32.totalorder %s57, %s71
      %p73 = scmp.eq.s32.totalorder %s26, 0
      %p74 = por %p72, %p73
      %s76 = sadd.s32 %s75, 1
      %p79 = scmp.eq.s32.totalorder %s20, 1
      %p80 = scmp.ne.s32.totalorder %s75, %s77
      %p81 = scmp.eq.s32.totalorder %s20, 0
      %p82 = por %p80, %p81
      %p83 = scmp.ne.s32.totalorder %s75, %s77
      %p84 = scmp.eq.s32.totalorder %s25, 1
      %p85 = por %p83, %p84
      %p86 = scmp.ne.s32.totalorder %s77, %s78
      %p87 = scmp.eq.s32.totalorder %s25, 0
      %p88 = por %p86, %p87
      %p89 = scmp.ne.s32.totalorder %s77, %s78
      %p90 = scmp.eq.s32.totalorder %s26, 1
      %p91 = por %p89, %p90
      %p93 = scmp.ne.s32.totalorder %s78, %s92
      %p94 = scmp.eq.s32.totalorder %s26, 0
      %p95 = por %p93, %p94
      %s97 = sadd.s32 %s96, 1
      %p100 = scmp.eq.s32.totalorder %s20, 1
      %p101 = scmp.ne.s32.totalorder %s96, %s98
      %p102 = scmp.eq.s32.totalorder %s20, 0
      %p103 = por %p101, %p102
      %p104 = scmp.ne.s32.totalorder %s96, %s98
      %p105 = scmp.eq.s32.totalorder %s25, 1
      %p106 = por %p104, %p105
      %p107 = scmp.ne.s32.totalorder %s98, %s99
      %p108 = scmp.eq.s32.totalorder %s25, 0
      %p109 = por %p107, %p108
      %p110 = scmp.ne.s32.totalorder %s98, %s99
      %p111 = scmp.eq.s32.totalorder %s26, 1
      %p112 = por %p110, %p111
      %p114 = scmp.ne.s32.totalorder %s99, %s113
      %p115 = scmp.eq.s32.totalorder %s26, 0
      %p116 = por %p114, %p115
      %s118 = sadd.s32 %s117, 1
      %p121 = scmp.eq.s32.totalorder %s20, 1
      %p122 = scmp.ne.s32.totalorder %s117, %s119
      %p123 = scmp.eq.s32.totalorder %s20, 0
      %p124 = por %p122, %p123
      %p125 = scmp.ne.s32.totalorder %s117, %s119
      %p126 = scmp.eq.s32.totalorder %s25, 1
      %p127 = por %p125, %p126
      %p128 = scmp.ne.s32.totalorder %s119, %s120
      %p129 = scmp.eq.s32.totalorder %s25, 0
      %p130 = por %p128, %p129
      %p131 = scmp.ne.s32.totalorder %s119, %s120
      %p132 = scmp.eq.s32.totalorder %s26, 1
      %p133 = por %p131, %p132
      %p135 = scmp.ne.s32.totalorder %s120, %s134
      %p136 = scmp.eq.s32.totalorder %s26, 0
      %p137 = por %p135, %p136
      %s139 = sadd.s32 %s138, 1
      %p142 = scmp.eq.s32.totalorder %s20, 1
      %p143 = scmp.ne.s32.totalorder %s138, %s140
      %p144 = scmp.eq.s32.totalorder %s20, 0
      %p145 = por %p143, %p144
      %p146 = scmp.ne.s32.totalorder %s138, %s140
      %p147 = scmp.eq.s32.totalorder %s25, 1
      %p148 = por %p146, %p147
      %p149 = scmp.ne.s32.totalorder %s140, %s141
      %p150 = scmp.eq.s32.totalorder %s25, 0
      %p151 = por %p149, %p150
      %p152 = scmp.ne.s32.totalorder %s140, %s141
      %p153 = scmp.eq.s32.totalorder %s26, 1
      %p154 = por %p152, %p153
      %p156 = scmp.ne.s32.totalorder %s141, %s155
      %p157 = scmp.eq.s32.totalorder %s26, 0
      %p158 = por %p156, %p157
      %s160 = sadd.s32 %s159, 1
      %p163 = scmp.eq.s32.totalorder %s20, 1
      %p164 = scmp.ne.s32.totalorder %s159, %s161
      %p165 = scmp.eq.s32.totalorder %s20, 0
      %p166 = por %p164, %p165
      %p167 = scmp.ne.s32.totalorder %s159, %s161
      %p168 = scmp.eq.s32.totalorder %s25, 1
      %p169 = por %p167, %p168
      %p170 = scmp.ne.s32.totalorder %s161, %s162
      %p171 = scmp.eq.s32.totalorder %s25, 0
      %p172 = por %p170, %p171
      %p173 = scmp.ne.s32.totalorder %s161, %s162
      %p174 = scmp.eq.s32.totalorder %s26, 1
      %p175 = por %p173, %p174
      %p177 = scmp.ne.s32.totalorder %s162, %s176
      %p178 = scmp.eq.s32.totalorder %s26, 0
      %p179 = por %p177, %p178
      %s181 = sadd.s32 %s180, 1
      %p184 = scmp.eq.s32.totalorder %s20, 1
      %p185 = scmp.ne.s32.totalorder %s180, %s182
      %p186 = scmp.eq.s32.totalorder %s20, 0
      %p187 = por %p185, %p186
      %p188 = scmp.ne.s32.totalorder %s180, %s182
      %p189 = scmp.eq.s32.totalorder %s25, 1
      %p190 = por %p188, %p189
      %p191 = scmp.ne.s32.totalorder %s182, %s183
      %p192 = scmp.eq.s32.totalorder %s25, 0
      %p193 = por %p191, %p192
      %p194 = scmp.ne.s32.totalorder %s182, %s183
      %p195 = scmp.eq.s32.totalorder %s26, 1
      %p196 = por %p194, %p195
      %p198 = scmp.ne.s32.totalorder %s183, %s197
      %p199 = scmp.eq.s32.totalorder %s26, 0
      %p200 = por %p198, %p199
      %s202 = sadd.s32 %s201, 1
      %p205 = scmp.eq.s32.totalorder %s20, 1
      %p206 = scmp.ne.s32.totalorder %s201, %s203
      %p207 = scmp.eq.s32.totalorder %s20, 0
      %p208 = por %p206, %p207
      %p209 = scmp.ne.s32.totalorder %s201, %s203
      %p210 = scmp.eq.s32.totalorder %s25, 1
      %p211 = por %p209, %p210
      %p212 = scmp.ne.s32.totalorder %s203, %s204
      %p213 = scmp.eq.s32.totalorder %s25, 0
      %p214 = por %p212, %p213
      %p215 = scmp.ne.s32.totalorder %s203, %s204
      %p216 = scmp.eq.s32.totalorder %s26, 1
      %p217 = por %p215, %p216
      %p219 = scmp.ne.s32.totalorder %s204, %s218
      %p220 = scmp.eq.s32.totalorder %s26, 0
      %p221 = por %p219, %p220
      %s223 = sadd.s32 %s222, 1
      %p226 = scmp.eq.s32.totalorder %s20, 1
      %p227 = scmp.ne.s32.totalorder %s222, %s224
      %p228 = scmp.eq.s32.totalorder %s20, 0
      %p229 = por %p227, %p228
      %p230 = scmp.ne.s32.totalorder %s222, %s224
      %p231 = scmp.eq.s32.totalorder %s25, 1
      %p232 = por %p230, %p231
      %p233 = scmp.ne.s32.totalorder %s224, %s225
      %p234 = scmp.eq.s32.totalorder %s25, 0
      %p235 = por %p233, %p234
      %p236 = scmp.ne.s32.totalorder %s224, %s225
      %p237 = scmp.eq.s32.totalorder %s26, 1
      %p238 = por %p236, %p237
      %p240 = scmp.ne.s32.totalorder %s225, %s239
      %p241 = scmp.eq.s32.totalorder %s26, 0
      %p242 = por %p240, %p241
      %s244 = sadd.s32 %s243, 1
      %p247 = scmp.eq.s32.totalorder %s20, 1
      %p248 = scmp.ne.s32.totalorder %s243, %s245
      %p249 = scmp.eq.s32.totalorder %s20, 0
      %p250 = por %p248, %p249
      %p251 = scmp.ne.s32.totalorder %s243, %s245
      %p252 = scmp.eq.s32.totalorder %s25, 1
      %p253 = por %p251, %p252
      %p254 = scmp.ne.s32.totalorder %s245, %s246
      %p255 = scmp.eq.s32.totalorder %s25, 0
      %p256 = por %p254, %p255
      %p257 = scmp.ne.s32.totalorder %s245, %s246
      %p258 = scmp.eq.s32.totalorder %s26, 1
      %p259 = por %p257, %p258
      %p261 = scmp.ne.s32.totalorder %s246, %s260
      %p262 = scmp.eq.s32.totalorder %s26, 0
      %p263 = por %p261, %p262
      %s264 = ssub.s32 %s20, %s27
      %p265 = scmp.eq.s32.totalorder %s264, 0
      %s267 = sadd.s32 %s266, 1
      %s268 = scalar_select %p265, %s266, %s267
      %p271 = pneg %p265
      %p272 = scmp.eq.s32.totalorder %s20, 1
      %p273 = por %p271, %p272
      %p274 = scmp.ne.s32.totalorder %s266, %s269
      %p275 = scmp.eq.s32.totalorder %s20, 0
      %p276 = por %p274, %p275
      %p277 = scmp.ne.s32.totalorder %s266, %s269
      %p278 = scmp.eq.s32.totalorder %s25, 1
      %p279 = por %p277, %p278
      %p280 = scmp.ne.s32.totalorder %s269, %s270
      %p281 = scmp.eq.s32.totalorder %s25, 0
      %p282 = por %p280, %p281
      %p283 = scmp.ne.s32.totalorder %s269, %s270
      %p284 = scmp.eq.s32.totalorder %s26, 1
      %p285 = por %p283, %p284
      %p287 = scmp.ne.s32.totalorder %s270, %s286
      %p288 = scmp.eq.s32.totalorder %s26, 0
      %p289 = por %p287, %p288
      %p290 = scmp.le.s32.totalorder 1, %s20
      %p291 = scmp.lt.s32.totalorder %s20, 3
      %p292 = pnand %p290, %p291
      %p293 = pneg %p292
      // Predicated region
      $region9: #{tpu_custom_call.1} parent=5 // pred_check
        _
      $region10: #{tpu_custom_call.1} parent=5 // pred_check_branch
        %295 = sbr.rel (%p292) target = $region12
      $region11: #{tpu_custom_call.1} parent=5 // pred_region
        %s296 = ssub.s32 %s20, 1
        // Predicated region
        $region13: #{tpu_custom_call.1} parent=11 // pred_check
          %p297 = pneg %p67
        $region14: #{tpu_custom_call.1} parent=11 // pred_check_branch
          %299 = sbr.rel (%p297) target = $region16
        $region15: #{tpu_custom_call.1} parent=11 // pred_region
          _
        $region16: #{tpu_custom_call.1} parent=11 // pred_fallthru
          _
        // Predicated region
        $region17: #{tpu_custom_call.1} parent=11 // pred_check
          %p300 = pneg %p88
        $region18: #{tpu_custom_call.1} parent=11 // pred_check_branch
          %302 = sbr.rel (%p300) target = $region20
        $region19: #{tpu_custom_call.1} parent=11 // pred_region
          _
        $region20: #{tpu_custom_call.1} parent=11 // pred_fallthru
          _
        // Predicated region
        $region21: #{tpu_custom_call.1} parent=11 // pred_check
          %p303 = pneg %p109
        $region22: #{tpu_custom_call.1} parent=11 // pred_check_branch
          %305 = sbr.rel (%p303) target = $region24
        $region23: #{tpu_custom_call.1} parent=11 // pred_region
          _
        $region24: #{tpu_custom_call.1} parent=11 // pred_fallthru
          _
        // Predicated region
        $region25: #{tpu_custom_call.1} parent=11 // pred_check
          %p306 = pneg %p130
        $region26: #{tpu_custom_call.1} parent=11 // pred_check_branch
          %308 = sbr.rel (%p306) target = $region28
        $region27: #{tpu_custom_call.1} parent=11 // pred_region
          _
        $region28: #{tpu_custom_call.1} parent=11 // pred_fallthru
          _
        // Predicated region
        $region29: #{tpu_custom_call.1} parent=11 // pred_check
          %p309 = pneg %p151
        $region30: #{tpu_custom_call.1} parent=11 // pred_check_branch
          %311 = sbr.rel (%p309) target = $region32
        $region31: #{tpu_custom_call.1} parent=11 // pred_region
          _
        $region32: #{tpu_custom_call.1} parent=11 // pred_fallthru
          _
        // Predicated region
        $region33: #{tpu_custom_call.1} parent=11 // pred_check
          %p312 = pneg %p172
        $region34: #{tpu_custom_call.1} parent=11 // pred_check_branch
          %314 = sbr.rel (%p312) target = $region36
        $region35: #{tpu_custom_call.1} parent=11 // pred_region
          _
        $region36: #{tpu_custom_call.1} parent=11 // pred_fallthru
          _
        // Predicated region
        $region37: #{tpu_custom_call.1} parent=11 // pred_check
          %p315 = pneg %p193
        $region38: #{tpu_custom_call.1} parent=11 // pred_check_branch
          %317 = sbr.rel (%p315) target = $region40
        $region39: #{tpu_custom_call.1} parent=11 // pred_region
          _
        $region40: #{tpu_custom_call.1} parent=11 // pred_fallthru
          _
        // Predicated region
        $region41: #{tpu_custom_call.1} parent=11 // pred_check
          %p318 = pneg %p214
        $region42: #{tpu_custom_call.1} parent=11 // pred_check_branch
          %320 = sbr.rel (%p318) target = $region44
        $region43: #{tpu_custom_call.1} parent=11 // pred_region
          _
        $region44: #{tpu_custom_call.1} parent=11 // pred_fallthru
          _
        // Predicated region
        $region45: #{tpu_custom_call.1} parent=11 // pred_check
          %p321 = pneg %p235
        $region46: #{tpu_custom_call.1} parent=11 // pred_check_branch
          %323 = sbr.rel (%p321) target = $region48
        $region47: #{tpu_custom_call.1} parent=11 // pred_region
          _
        $region48: #{tpu_custom_call.1} parent=11 // pred_fallthru
          _
        // Predicated region
        $region49: #{tpu_custom_call.1} parent=11 // pred_check
          %p324 = pneg %p256
        $region50: #{tpu_custom_call.1} parent=11 // pred_check_branch
          %326 = sbr.rel (%p324) target = $region52
        $region51: #{tpu_custom_call.1} parent=11 // pred_region
          _
        $region52: #{tpu_custom_call.1} parent=11 // pred_fallthru
          _
      $region12: #{tpu_custom_call.1} parent=5 // pred_fallthru
        _
      %p327 = scmp.lt.s32.totalorder %s20, 2
      // Predicated region
      $region53: #{tpu_custom_call.1} parent=5 // pred_check
        %p328 = pneg %p327
      $region54: #{tpu_custom_call.1} parent=5 // pred_check_branch
        %330 = sbr.rel (%p328) target = $region56
      $region55: #{tpu_custom_call.1} parent=5 // pred_region
        // Predicated region
        $region57: #{tpu_custom_call.1} parent=55 // pred_check
          %p331 = pneg %p40
        $region58: #{tpu_custom_call.1} parent=55 // pred_check_branch
          %333 = sbr.rel (%p331) target = $region60
        $region59: #{tpu_custom_call.1} parent=55 // pred_region
          %p334 = scmp.lt.s32.totalorder %s20, 1
          %s335 = scalar_select %p334, %s20, 1
          %s336 = smul.addr %s335, 66
          %s337 = smul.addr %s336, 8
          %s338 = scalar_lea.vmem %s0, %s337
        $region60: #{tpu_custom_call.1} parent=55 // pred_fallthru
          _
      $region56: #{tpu_custom_call.1} parent=5 // pred_fallthru
        _
      %p339 = scmp.le.s32.totalorder 1, %s20
      %p340 = scmp.lt.s32.totalorder %s20, 3
      %p341 = pnand %p339, %p340
      %p342 = pneg %p341
      // Predicated region
      $region61: #{tpu_custom_call.1} parent=5 // pred_check
        _
      $region62: #{tpu_custom_call.1} parent=5 // pred_check_branch
        %344 = sbr.rel (%p341) target = $region64
      $region63: #{tpu_custom_call.1} parent=5 // pred_region
        %s345 = ssub.s32 %s20, 1
        %p346 = scmp.lt.s32.totalorder %s25, 1
        %s347 = scalar_select %p346, %s25, 1
        %s348 = smul.addr %s347, 66
        %s349 = smul.addr %s348, 8
        %s350 = scalar_lea.vmem %s0, %s349
        %p351 = pneg %p46
        %p352 = pneg %p43
        %p353 = pneg %p67
        %p354 = pneg %p64
        %p355 = pneg %p88
        %p356 = pneg %p85
        %p357 = pneg %p109
        %p358 = pneg %p106
        %p359 = pneg %p130
        %p360 = pneg %p127
        %p361 = pneg %p151
        %p362 = pneg %p148
        %p363 = pneg %p172
        %p364 = pneg %p169
        %p365 = pneg %p193
        %p366 = pneg %p190
        %p367 = pneg %p214
        %p368 = pneg %p211
        %p369 = pneg %p235
        %p370 = pneg %p232
        %p371 = pneg %p256
        %p372 = pneg %p253
        %p373 = pneg %p282
        %p374 = pneg %p279
        %s375 = sand.u32 %s269, 1
        %s376 = scalar_lea.sflag [#allocation3], %s375
        %s377 = sand.u32 %s269, 1
        %s378 = smul.addr %s377, 256
        %s379 = scalar_lea.vmem [#allocation2], %s378
        %p380 = scmp.lt.s32.totalorder %s25, 1
        %s381 = scalar_select %p380, %s25, 1
        %s382 = smul.addr %s381, 66
        %s383 = smul.addr %s382, 8
        %s384 = scalar_lea.vmem %s0, %s383
        %v385 = vld [vmem:[%s384] sm:$0xff]
        %v386 = vld [vmem:[%s384 + $0x8] sm:$0xff]
        %v387 = vld [vmem:[%s384 + $0x10] sm:$0x3f]
        %v388 = vld [vmem:[%s384 + $0x18] sm:$0xff]
        %v389 = vld [vmem:[%s384 + $0x20] sm:$0xff]
        %v390 = vld [vmem:[%s384 + $0x28] sm:$0x3f]
        %v391 = vld [vmem:[%s384 + $0x30] sm:$0xff]
        %v392 = vld [vmem:[%s384 + $0x38] sm:$0xff]
        %v393 = vld [vmem:[%s384 + $0x40] sm:$0x3f]
        %v394 = vld [vmem:[%s384 + $0x48] sm:$0xff]
        %v395 = vld [vmem:[%s384 + $0x50] sm:$0xff]
        %v396 = vld [vmem:[%s384 + $0x58] sm:$0x3f]
        %v397 = vld [vmem:[%s384 + $0x60] sm:$0xff]
        %v398 = vld [vmem:[%s384 + $0x68] sm:$0xff]
        %v399 = vld [vmem:[%s384 + $0x70] sm:$0x3f]
        %v400 = vld [vmem:[%s384 + $0x78] sm:$0xff]
        %v401 = vld [vmem:[%s384 + $0x80] sm:$0xff]
        %v402 = vld [vmem:[%s384 + $0x88] sm:$0x3f]
        %v403 = vld [vmem:[%s384 + $0x90] sm:$0xff]
        %v404 = vld [vmem:[%s384 + $0x98] sm:$0xff]
        %v405 = vld [vmem:[%s384 + $0xa0] sm:$0x3f]
        %v406 = vld [vmem:[%s384 + $0xa8] sm:$0xff]
        %v407 = vld [vmem:[%s384 + $0xb0] sm:$0xff]
        %v408 = vld [vmem:[%s384 + $0xb8] sm:$0x3f]
        %v409 = vld [vmem:[%s384 + $0xc0] sm:$0xff]
        %v410 = vld [vmem:[%s384 + $0xc8] sm:$0xff]
        %v411 = vld [vmem:[%s384 + $0xd0] sm:$0x3f]
        %v412 = vld [vmem:[%s384 + $0xd8] sm:$0xff]
        %v413 = vld [vmem:[%s384 + $0xe0] sm:$0xff]
        %v414 = vld [vmem:[%s384 + $0xe8] sm:$0x3f]
        %v415 = vld [vmem:[%s384 + $0xf0] sm:$0xff]
        %v416 = vld [vmem:[%s384 + $0xf8] sm:$0xff]
        %v417 = vld [vmem:[%s384 + $0x100] sm:$0x3f]
        %v418 = vld [vmem:[%s384 + $0x108] sm:$0xff]
        %v419 = vld [vmem:[%s384 + $0x110] sm:$0xff]
        %v420 = vld [vmem:[%s384 + $0x118] sm:$0x3f]
        %v421 = vld [vmem:[%s384 + $0x120] sm:$0xff]
        %v422 = vld [vmem:[%s384 + $0x128] sm:$0xff]
        %v423 = vld [vmem:[%s384 + $0x130] sm:$0x3f]
        %v424 = vld [vmem:[%s384 + $0x138] sm:$0xff]
        %v425 = vld [vmem:[%s384 + $0x140] sm:$0xff]
        %v426 = vld [vmem:[%s384 + $0x148] sm:$0x3f]
        %v427 = vld [vmem:[%s384 + $0x150] sm:$0xff]
        %v428 = vld [vmem:[%s384 + $0x158] sm:$0xff]
        %v429 = vld [vmem:[%s384 + $0x160] sm:$0x3f]
        %v430 = vld [vmem:[%s384 + $0x168] sm:$0xff]
        %v431 = vld [vmem:[%s384 + $0x170] sm:$0xff]
        %v432 = vld [vmem:[%s384 + $0x178] sm:$0x3f]
        %v433 = vld [vmem:[%s384 + $0x180] sm:$0xff]
        %v434 = vld [vmem:[%s384 + $0x188] sm:$0xff]
        %v435 = vld [vmem:[%s384 + $0x190] sm:$0x3f]
        %v436 = vld [vmem:[%s384 + $0x198] sm:$0xff]
        %v437 = vld [vmem:[%s384 + $0x1a0] sm:$0xff]
        %v438 = vld [vmem:[%s384 + $0x1a8] sm:$0x3f]
        %v439 = vld [vmem:[%s384 + $0x1b0] sm:$0xff]
        %v440 = vld [vmem:[%s384 + $0x1b8] sm:$0xff]
        %v441 = vld [vmem:[%s384 + $0x1c0] sm:$0x3f]
        %v442 = vld [vmem:[%s384 + $0x1c8] sm:$0xff]
        %v443 = vld [vmem:[%s384 + $0x1d0] sm:$0xff]
        %v444 = vld [vmem:[%s384 + $0x1d8] sm:$0x3f]
        %v445 = vld [vmem:[%s384 + $0x1e0] sm:$0xff]
        %v446 = vld [vmem:[%s384 + $0x1e8] sm:$0xff]
        %v447 = vld [vmem:[%s384 + $0x1f0] sm:$0x3f]
        %v448 = vld [vmem:[%s384 + $0x1f8] sm:$0xff]
        %v449 = vld [vmem:[%s384 + $0x200] sm:$0xff]
        %v450 = vld [vmem:[%s384 + $0x208] sm:$0x3f]
        %v451 = vld [vmem:[%s1] sm:$0x7f]
        %v452 = vld [vmem:[%s1 + $0x8] sm:$0x7f]
        %v453 = vld [vmem:[%s1 + $0x10] sm:$0x7f]
        %v454 = vld [vmem:[%s1 + $0x18] sm:$0x7f]
        %v455 = vld [vmem:[%s1 + $0x20] sm:$0x7f]
        %v456 = vld [vmem:[%s1 + $0x28] sm:$0x7f]
        %v457 = vld [vmem:[%s1 + $0x30] sm:$0x7f]
        %v458 = vlaneseq
        %v459 = vshrl.u32 %v458, 7
        %v460 = vsub.s32 0, %v459
        %v461 = vrot.slane %v451, %v460
        %v462 = vmul.f32 %v385, %v461
        %v463 = vmul.f32 %v386, %v461
        %v464 = vmul.f32 %v388, %v461
        %v465 = vmul.f32 %v389, %v461
        %v466 = vmul.f32 %v391, %v461
        %v467 = vmul.f32 %v392, %v461
        %v468 = vmul.f32 %v394, %v461
        %v469 = vmul.f32 %v395, %v461
        %v470 = vmul.f32 %v397, %v461
        %v471 = vmul.f32 %v398, %v461
        %v472 = vmul.f32 %v400, %v461
        %v473 = vmul.f32 %v401, %v461
        %v474 = vmul.f32 %v403, %v461
        %v475 = vmul.f32 %v404, %v461
        %v476 = vmul.f32 %v406, %v461
        %v477 = vmul.f32 %v407, %v461
        %v478 = vmul.f32 %v409, %v461
        %v479 = vmul.f32 %v410, %v461
        %v480 = vmul.f32 %v412, %v461
        %v481 = vmul.f32 %v413, %v461
        %v482 = vmul.f32 %v415, %v461
        %v483 = vmul.f32 %v416, %v461
        %v484 = vmul.f32 %v418, %v461
        %v485 = vmul.f32 %v419, %v461
        %v486 = vmul.f32 %v421, %v461
        %v487 = vmul.f32 %v422, %v461
        %v488 = vmul.f32 %v424, %v461
        %v489 = vmul.f32 %v425, %v461
        %v490 = vmul.f32 %v427, %v461
        %v491 = vmul.f32 %v428, %v461
        %v492 = vmul.f32 %v430, %v461
        %v493 = vmul.f32 %v431, %v461
        %v494 = vadd.f32 %v462, 0.0
        %v495 = vadd.f32 %v463, 0.0
        %v496 = vadd.f32 %v464, 0.0
        %v497 = vadd.f32 %v465, 0.0
        %v498 = vadd.f32 %v466, 0.0
        %v499 = vadd.f32 %v467, 0.0
        %v500 = vadd.f32 %v468, 0.0
        %v501 = vadd.f32 %v469, 0.0
        %v502 = vadd.f32 %v470, 0.0
        %v503 = vadd.f32 %v471, 0.0
        %v504 = vadd.f32 %v472, 0.0
        %v505 = vadd.f32 %v473, 0.0
        %v506 = vadd.f32 %v474, 0.0
        %v507 = vadd.f32 %v475, 0.0
        %v508 = vadd.f32 %v476, 0.0
        %v509 = vadd.f32 %v477, 0.0
        %v510 = vadd.f32 %v478, 0.0
        %v511 = vadd.f32 %v479, 0.0
        %v512 = vadd.f32 %v480, 0.0
        %v513 = vadd.f32 %v481, 0.0
        %v514 = vadd.f32 %v482, 0.0
        %v515 = vadd.f32 %v483, 0.0
        %v516 = vadd.f32 %v484, 0.0
        %v517 = vadd.f32 %v485, 0.0
        %v518 = vadd.f32 %v486, 0.0
        %v519 = vadd.f32 %v487, 0.0
        %v520 = vadd.f32 %v488, 0.0
        %v521 = vadd.f32 %v489, 0.0
        %v522 = vadd.f32 %v490, 0.0
        %v523 = vadd.f32 %v491, 0.0
        %v524 = vadd.f32 %v492, 0.0
        %v525 = vadd.f32 %v493, 0.0
        %v526 = vlaneseq
        %v527 = vshrl.u32 %v526, 7
        %v528 = vsub.s32 1, %v527
        %v529 = vrot.slane %v451, %v528
        %v530 = vmul.f32 %v385, %v529
        %v531 = vmul.f32 %v386, %v529
        %v532 = vmul.f32 %v387, %v529
        %v533 = vmul.f32 %v388, %v529
        %v534 = vmul.f32 %v389, %v529
        %v535 = vmul.f32 %v390, %v529
        %v536 = vmul.f32 %v391, %v529
        %v537 = vmul.f32 %v392, %v529
        %v538 = vmul.f32 %v393, %v529
        %v539 = vmul.f32 %v394, %v529
        %v540 = vmul.f32 %v395, %v529
        %v541 = vmul.f32 %v396, %v529
        %v542 = vmul.f32 %v397, %v529
        %v543 = vmul.f32 %v398, %v529
        %v544 = vmul.f32 %v399, %v529
        %v545 = vmul.f32 %v400, %v529
        %v546 = vmul.f32 %v401, %v529
        %v547 = vmul.f32 %v402, %v529
        %v548 = vmul.f32 %v403, %v529
        %v549 = vmul.f32 %v404, %v529
        %v550 = vmul.f32 %v405, %v529
        %v551 = vmul.f32 %v406, %v529
        %v552 = vmul.f32 %v407, %v529
        %v553 = vmul.f32 %v408, %v529
        %v554 = vmul.f32 %v409, %v529
        %v555 = vmul.f32 %v410, %v529
        %v556 = vmul.f32 %v411, %v529
        %v557 = vmul.f32 %v412, %v529
        %v558 = vmul.f32 %v413, %v529
        %v559 = vmul.f32 %v414, %v529
        %v560 = vmul.f32 %v415, %v529
        %v561 = vmul.f32 %v416, %v529
        %v562 = vmul.f32 %v417, %v529
        %v563 = vmul.f32 %v418, %v529
        %v564 = vmul.f32 %v419, %v529
        %v565 = vmul.f32 %v420, %v529
        %v566 = vmul.f32 %v421, %v529
        %v567 = vmul.f32 %v422, %v529
        %v568 = vmul.f32 %v423, %v529
        %v569 = vmul.f32 %v424, %v529
        %v570 = vmul.f32 %v425, %v529
        %v571 = vmul.f32 %v426, %v529
        %v572 = vmul.f32 %v427, %v529
        %v573 = vmul.f32 %v428, %v529
        %v574 = vmul.f32 %v429, %v529
        %v575 = vmul.f32 %v430, %v529
        %v576 = vmul.f32 %v431, %v529
        %v577 = vmul.f32 %v432, %v529
        %vm626 = vcmask 1046528
        %v627 = vrot.slane %v530, 1
        %v628 = vrot.slane %v531, 1
        %v629 = vsel %vm626, %v627, %v628
        %v630 = vrot.slane %v532, 1
        %v631 = vsel %vm626, %v628, %v630
        %v632 = vrot.slane %v533, 1
        %v633 = vrot.slane %v534, 1
        %v634 = vsel %vm626, %v632, %v633
        %v635 = vrot.slane %v535, 1
        %v636 = vsel %vm626, %v633, %v635
        %v637 = vrot.slane %v536, 1
        %v638 = vrot.slane %v537, 1
        %v639 = vsel %vm626, %v637, %v638
        %v640 = vrot.slane %v538, 1
        %v641 = vsel %vm626, %v638, %v640
        %v642 = vrot.slane %v539, 1
        %v643 = vrot.slane %v540, 1
        %v644 = vsel %vm626, %v642, %v643
        %v645 = vrot.slane %v541, 1
        %v646 = vsel %vm626, %v643, %v645
        %v647 = vrot.slane %v542, 1
        %v648 = vrot.slane %v543, 1
        %v649 = vsel %vm626, %v647, %v648
        %v650 = vrot.slane %v544, 1
        %v651 = vsel %vm626, %v648, %v650
        %v652 = vrot.slane %v545, 1
        %v653 = vrot.slane %v546, 1
        %v654 = vsel %vm626, %v652, %v653
        %v655 = vrot.slane %v547, 1
        %v656 = vsel %vm626, %v653, %v655
        %v657 = vrot.slane %v548, 1
        %v658 = vrot.slane %v549, 1
        %v659 = vsel %vm626, %v657, %v658
        %v660 = vrot.slane %v550, 1
        %v661 = vsel %vm626, %v658, %v660
        %v662 = vrot.slane %v551, 1
        %v663 = vrot.slane %v552, 1
        %v664 = vsel %vm626, %v662, %v663
        %v665 = vrot.slane %v553, 1
        %v666 = vsel %vm626, %v663, %v665
        %v667 = vrot.slane %v554, 1
        %v668 = vrot.slane %v555, 1
        %v669 = vsel %vm626, %v667, %v668
        %v670 = vrot.slane %v556, 1
        %v671 = vsel %vm626, %v668, %v670
        %v672 = vrot.slane %v557, 1
        %v673 = vrot.slane %v558, 1
        %v674 = vsel %vm626, %v672, %v673
        %v675 = vrot.slane %v559, 1
        %v676 = vsel %vm626, %v673, %v675
        %v677 = vrot.slane %v560, 1
        %v678 = vrot.slane %v561, 1
        %v679 = vsel %vm626, %v677, %v678
        %v680 = vrot.slane %v562, 1
        %v681 = vsel %vm626, %v678, %v680
        %v682 = vrot.slane %v563, 1
        %v683 = vrot.slane %v564, 1
        %v684 = vsel %vm626, %v682, %v683
        %v685 = vrot.slane %v565, 1
        %v686 = vsel %vm626, %v683, %v685
        %v687 = vrot.slane %v566, 1
        %v688 = vrot.slane %v567, 1
        %v689 = vsel %vm626, %v687, %v688
        %v690 = vrot.slane %v568, 1
        %v691 = vsel %vm626, %v688, %v690
        %v692 = vrot.slane %v569, 1
        %v693 = vrot.slane %v570, 1
        %v694 = vsel %vm626, %v692, %v693
        %v695 = vrot.slane %v571, 1
        %v696 = vsel %vm626, %v693, %v695
        %v697 = vrot.slane %v572, 1
        %v698 = vrot.slane %v573, 1
        %v699 = vsel %vm626, %v697, %v698
        %v700 = vrot.slane %v574, 1
        %v701 = vsel %vm626, %v698, %v700
        %v702 = vrot.slane %v575, 1
        %v703 = vrot.slane %v576, 1
        %v704 = vsel %vm626, %v702, %v703
        %v705 = vrot.slane %v577, 1
        %v706 = vsel %vm626, %v703, %v705
        %v739 = vadd.f32 %v494, %v629
        %v740 = vadd.f32 %v495, %v631
        %v741 = vadd.f32 %v496, %v634
        %v742 = vadd.f32 %v497, %v636
        %v743 = vadd.f32 %v498, %v639
        %v744 = vadd.f32 %v499, %v641
        %v745 = vadd.f32 %v500, %v644
        %v746 = vadd.f32 %v501, %v646
        %v747 = vadd.f32 %v502, %v649
        %v748 = vadd.f32 %v503, %v651
        %v749 = vadd.f32 %v504, %v654
        %v750 = vadd.f32 %v505, %v656
        %v751 = vadd.f32 %v506, %v659
        %v752 = vadd.f32 %v507, %v661
        %v753 = vadd.f32 %v508, %v664
        %v754 = vadd.f32 %v509, %v666
        %v755 = vadd.f32 %v510, %v669
        %v756 = vadd.f32 %v511, %v671
        %v757 = vadd.f32 %v512, %v674
        %v758 = vadd.f32 %v513, %v676
        %v759 = vadd.f32 %v514, %v679
        %v760 = vadd.f32 %v515, %v681
        %v761 = vadd.f32 %v516, %v684
        %v762 = vadd.f32 %v517, %v686
        %v763 = vadd.f32 %v518, %v689
        %v764 = vadd.f32 %v519, %v691
        %v765 = vadd.f32 %v520, %v694
        %v766 = vadd.f32 %v521, %v696
        %v767 = vadd.f32 %v522, %v699
        %v768 = vadd.f32 %v523, %v701
        %v769 = vadd.f32 %v524, %v704
        %v770 = vadd.f32 %v525, %v706
        %v771 = vlaneseq
        %v772 = vshrl.u32 %v771, 7
        %v773 = vsub.s32 2, %v772
        %v774 = vrot.slane %v451, %v773
        %v775 = vmul.f32 %v385, %v774
        %v776 = vmul.f32 %v386, %v774
        %v777 = vmul.f32 %v387, %v774
        %v778 = vmul.f32 %v388, %v774
        %v779 = vmul.f32 %v389, %v774
        %v780 = vmul.f32 %v390, %v774
        %v781 = vmul.f32 %v391, %v774
        %v782 = vmul.f32 %v392, %v774
        %v783 = vmul.f32 %v393, %v774
        %v784 = vmul.f32 %v394, %v774
        %v785 = vmul.f32 %v395, %v774
        %v786 = vmul.f32 %v396, %v774
        %v787 = vmul.f32 %v397, %v774
        %v788 = vmul.f32 %v398, %v774
        %v789 = vmul.f32 %v399, %v774
        %v790 = vmul.f32 %v400, %v774
        %v791 = vmul.f32 %v401, %v774
        %v792 = vmul.f32 %v402, %v774
        %v793 = vmul.f32 %v403, %v774
        %v794 = vmul.f32 %v404, %v774
        %v795 = vmul.f32 %v405, %v774
        %v796 = vmul.f32 %v406, %v774
        %v797 = vmul.f32 %v407, %v774
        %v798 = vmul.f32 %v408, %v774
        %v799 = vmul.f32 %v409, %v774
        %v800 = vmul.f32 %v410, %v774
        %v801 = vmul.f32 %v411, %v774
        %v802 = vmul.f32 %v412, %v774
        %v803 = vmul.f32 %v413, %v774
        %v804 = vmul.f32 %v414, %v774
        %v805 = vmul.f32 %v415, %v774
        %v806 = vmul.f32 %v416, %v774
        %v807 = vmul.f32 %v417, %v774
        %v808 = vmul.f32 %v418, %v774
        %v809 = vmul.f32 %v419, %v774
        %v810 = vmul.f32 %v420, %v774
        %v811 = vmul.f32 %v421, %v774
        %v812 = vmul.f32 %v422, %v774
        %v813 = vmul.f32 %v423, %v774
        %v814 = vmul.f32 %v424, %v774
        %v815 = vmul.f32 %v425, %v774
        %v816 = vmul.f32 %v426, %v774
        %v817 = vmul.f32 %v427, %v774
        %v818 = vmul.f32 %v428, %v774
        %v819 = vmul.f32 %v429, %v774
        %v820 = vmul.f32 %v430, %v774
        %v821 = vmul.f32 %v431, %v774
        %v822 = vmul.f32 %v432, %v774
        %vm871 = vcmask 1045504
        %v872 = vrot.slane %v775, 2
        %v873 = vrot.slane %v776, 2
        %v874 = vsel %vm871, %v872, %v873
        %v875 = vrot.slane %v777, 2
        %v876 = vsel %vm871, %v873, %v875
        %v877 = vrot.slane %v778, 2
        %v878 = vrot.slane %v779, 2
        %v879 = vsel %vm871, %v877, %v878
        %v880 = vrot.slane %v780, 2
        %v881 = vsel %vm871, %v878, %v880
        %v882 = vrot.slane %v781, 2
        %v883 = vrot.slane %v782, 2
        %v884 = vsel %vm871, %v882, %v883
        %v885 = vrot.slane %v783, 2
        %v886 = vsel %vm871, %v883, %v885
        %v887 = vrot.slane %v784, 2
        %v888 = vrot.slane %v785, 2
        %v889 = vsel %vm871, %v887, %v888
        %v890 = vrot.slane %v786, 2
        %v891 = vsel %vm871, %v888, %v890
        %v892 = vrot.slane %v787, 2
        %v893 = vrot.slane %v788, 2
        %v894 = vsel %vm871, %v892, %v893
        %v895 = vrot.slane %v789, 2
        %v896 = vsel %vm871, %v893, %v895
        %v897 = vrot.slane %v790, 2
        %v898 = vrot.slane %v791, 2
        %v899 = vsel %vm871, %v897, %v898
        %v900 = vrot.slane %v792, 2
        %v901 = vsel %vm871, %v898, %v900
        %v902 = vrot.slane %v793, 2
        %v903 = vrot.slane %v794, 2
        %v904 = vsel %vm871, %v902, %v903
        %v905 = vrot.slane %v795, 2
        %v906 = vsel %vm871, %v903, %v905
        %v907 = vrot.slane %v796, 2
        %v908 = vrot.slane %v797, 2
        %v909 = vsel %vm871, %v907, %v908
        %v910 = vrot.slane %v798, 2
        %v911 = vsel %vm871, %v908, %v910
        %v912 = vrot.slane %v799, 2
        %v913 = vrot.slane %v800, 2
        %v914 = vsel %vm871, %v912, %v913
        %v915 = vrot.slane %v801, 2
        %v916 = vsel %vm871, %v913, %v915
        %v917 = vrot.slane %v802, 2
        %v918 = vrot.slane %v803, 2
        %v919 = vsel %vm871, %v917, %v918
        %v920 = vrot.slane %v804, 2
        %v921 = vsel %vm871, %v918, %v920
        %v922 = vrot.slane %v805, 2
        %v923 = vrot.slane %v806, 2
        %v924 = vsel %vm871, %v922, %v923
        %v925 = vrot.slane %v807, 2
        %v926 = vsel %vm871, %v923, %v925
        %v927 = vrot.slane %v808, 2
        %v928 = vrot.slane %v809, 2
        %v929 = vsel %vm871, %v927, %v928
        %v930 = vrot.slane %v810, 2
        %v931 = vsel %vm871, %v928, %v930
        %v932 = vrot.slane %v811, 2
        %v933 = vrot.slane %v812, 2
        %v934 = vsel %vm871, %v932, %v933
        %v935 = vrot.slane %v813, 2
        %v936 = vsel %vm871, %v933, %v935
        %v937 = vrot.slane %v814, 2
        %v938 = vrot.slane %v815, 2
        %v939 = vsel %vm871, %v937, %v938
        %v940 = vrot.slane %v816, 2
        %v941 = vsel %vm871, %v938, %v940
        %v942 = vrot.slane %v817, 2
        %v943 = vrot.slane %v818, 2
        %v944 = vsel %vm871, %v942, %v943
        %v945 = vrot.slane %v819, 2
        %v946 = vsel %vm871, %v943, %v945
        %v947 = vrot.slane %v820, 2
        %v948 = vrot.slane %v821, 2
        %v949 = vsel %vm871, %v947, %v948
        %v950 = vrot.slane %v822, 2
        %v951 = vsel %vm871, %v948, %v950
        %v984 = vadd.f32 %v739, %v874
        %v985 = vadd.f32 %v740, %v876
        %v986 = vadd.f32 %v741, %v879
        %v987 = vadd.f32 %v742, %v881
        %v988 = vadd.f32 %v743, %v884
        %v989 = vadd.f32 %v744, %v886
        %v990 = vadd.f32 %v745, %v889
        %v991 = vadd.f32 %v746, %v891
        %v992 = vadd.f32 %v747, %v894
        %v993 = vadd.f32 %v748, %v896
        %v994 = vadd.f32 %v749, %v899
        %v995 = vadd.f32 %v750, %v901
        %v996 = vadd.f32 %v751, %v904
        %v997 = vadd.f32 %v752, %v906
        %v998 = vadd.f32 %v753, %v909
        %v999 = vadd.f32 %v754, %v911
        %v1000 = vadd.f32 %v755, %v914
        %v1001 = vadd.f32 %v756, %v916
        %v1002 = vadd.f32 %v757, %v919
        %v1003 = vadd.f32 %v758, %v921
        %v1004 = vadd.f32 %v759, %v924
        %v1005 = vadd.f32 %v760, %v926
        %v1006 = vadd.f32 %v761, %v929
        %v1007 = vadd.f32 %v762, %v931
        %v1008 = vadd.f32 %v763, %v934
        %v1009 = vadd.f32 %v764, %v936
        %v1010 = vadd.f32 %v765, %v939
        %v1011 = vadd.f32 %v766, %v941
        %v1012 = vadd.f32 %v767, %v944
        %v1013 = vadd.f32 %v768, %v946
        %v1014 = vadd.f32 %v769, %v949
        %v1015 = vadd.f32 %v770, %v951
        %v1016 = vlaneseq
        %v1017 = vshrl.u32 %v1016, 7
        %v1018 = vsub.s32 3, %v1017
        %v1019 = vrot.slane %v451, %v1018
        %v1020 = vmul.f32 %v385, %v1019
        %v1021 = vmul.f32 %v386, %v1019
        %v1022 = vmul.f32 %v387, %v1019
        %v1023 = vmul.f32 %v388, %v1019
        %v1024 = vmul.f32 %v389, %v1019
        %v1025 = vmul.f32 %v390, %v1019
        %v1026 = vmul.f32 %v391, %v1019
        %v1027 = vmul.f32 %v392, %v1019
        %v1028 = vmul.f32 %v393, %v1019
        %v1029 = vmul.f32 %v394, %v1019
        %v1030 = vmul.f32 %v395, %v1019
        %v1031 = vmul.f32 %v396, %v1019
        %v1032 = vmul.f32 %v397, %v1019
        %v1033 = vmul.f32 %v398, %v1019
        %v1034 = vmul.f32 %v399, %v1019
        %v1035 = vmul.f32 %v400, %v1019
        %v1036 = vmul.f32 %v401, %v1019
        %v1037 = vmul.f32 %v402, %v1019
        %v1038 = vmul.f32 %v403, %v1019
        %v1039 = vmul.f32 %v404, %v1019
        %v1040 = vmul.f32 %v405, %v1019
        %v1041 = vmul.f32 %v406, %v1019
        %v1042 = vmul.f32 %v407, %v1019
        %v1043 = vmul.f32 %v408, %v1019
        %v1044 = vmul.f32 %v409, %v1019
        %v1045 = vmul.f32 %v410, %v1019
        %v1046 = vmul.f32 %v411, %v1019
        %v1047 = vmul.f32 %v412, %v1019
        %v1048 = vmul.f32 %v413, %v1019
        %v1049 = vmul.f32 %v414, %v1019
        %v1050 = vmul.f32 %v415, %v1019
        %v1051 = vmul.f32 %v416, %v1019
        %v1052 = vmul.f32 %v417, %v1019
        %v1053 = vmul.f32 %v418, %v1019
        %v1054 = vmul.f32 %v419, %v1019
        %v1055 = vmul.f32 %v420, %v1019
        %v1056 = vmul.f32 %v421, %v1019
        %v1057 = vmul.f32 %v422, %v1019
        %v1058 = vmul.f32 %v423, %v1019
        %v1059 = vmul.f32 %v424, %v1019
        %v1060 = vmul.f32 %v425, %v1019
        %v1061 = vmul.f32 %v426, %v1019
        %v1062 = vmul.f32 %v427, %v1019
        %v1063 = vmul.f32 %v428, %v1019
        %v1064 = vmul.f32 %v429, %v1019
        %v1065 = vmul.f32 %v430, %v1019
        %v1066 = vmul.f32 %v431, %v1019
        %v1067 = vmul.f32 %v432, %v1019
        %vm1116 = vcmask 1044480
        %v1117 = vrot.slane %v1020, 3
        %v1118 = vrot.slane %v1021, 3
        %v1119 = vsel %vm1116, %v1117, %v1118
        %v1120 = vrot.slane %v1022, 3
        %v1121 = vsel %vm1116, %v1118, %v1120
        %v1122 = vrot.slane %v1023, 3
        %v1123 = vrot.slane %v1024, 3
        %v1124 = vsel %vm1116, %v1122, %v1123
        %v1125 = vrot.slane %v1025, 3
        %v1126 = vsel %vm1116, %v1123, %v1125
        %v1127 = vrot.slane %v1026, 3
        %v1128 = vrot.slane %v1027, 3
        %v1129 = vsel %vm1116, %v1127, %v1128
        %v1130 = vrot.slane %v1028, 3
        %v1131 = vsel %vm1116, %v1128, %v1130
        %v1132 = vrot.slane %v1029, 3
        %v1133 = vrot.slane %v1030, 3
        %v1134 = vsel %vm1116, %v1132, %v1133
        %v1135 = vrot.slane %v1031, 3
        %v1136 = vsel %vm1116, %v1133, %v1135
        %v1137 = vrot.slane %v1032, 3
        %v1138 = vrot.slane %v1033, 3
        %v1139 = vsel %vm1116, %v1137, %v1138
        %v1140 = vrot.slane %v1034, 3
        %v1141 = vsel %vm1116, %v1138, %v1140
        %v1142 = vrot.slane %v1035, 3
        %v1143 = vrot.slane %v1036, 3
        %v1144 = vsel %vm1116, %v1142, %v1143
        %v1145 = vrot.slane %v1037, 3
        %v1146 = vsel %vm1116, %v1143, %v1145
        %v1147 = vrot.slane %v1038, 3
        %v1148 = vrot.slane %v1039, 3
        %v1149 = vsel %vm1116, %v1147, %v1148
        %v1150 = vrot.slane %v1040, 3
        %v1151 = vsel %vm1116, %v1148, %v1150
        %v1152 = vrot.slane %v1041, 3
        %v1153 = vrot.slane %v1042, 3
        %v1154 = vsel %vm1116, %v1152, %v1153
        %v1155 = vrot.slane %v1043, 3
        %v1156 = vsel %vm1116, %v1153, %v1155
        %v1157 = vrot.slane %v1044, 3
        %v1158 = vrot.slane %v1045, 3
        %v1159 = vsel %vm1116, %v1157, %v1158
        %v1160 = vrot.slane %v1046, 3
        %v1161 = vsel %vm1116, %v1158, %v1160
        %v1162 = vrot.slane %v1047, 3
        %v1163 = vrot.slane %v1048, 3
        %v1164 = vsel %vm1116, %v1162, %v1163
        %v1165 = vrot.slane %v1049, 3
        %v1166 = vsel %vm1116, %v1163, %v1165
        %v1167 = vrot.slane %v1050, 3
        %v1168 = vrot.slane %v1051, 3
        %v1169 = vsel %vm1116, %v1167, %v1168
        %v1170 = vrot.slane %v1052, 3
        %v1171 = vsel %vm1116, %v1168, %v1170
        %v1172 = vrot.slane %v1053, 3
        %v1173 = vrot.slane %v1054, 3
        %v1174 = vsel %vm1116, %v1172, %v1173
        %v1175 = vrot.slane %v1055, 3
        %v1176 = vsel %vm1116, %v1173, %v1175
        %v1177 = vrot.slane %v1056, 3
        %v1178 = vrot.slane %v1057, 3
        %v1179 = vsel %vm1116, %v1177, %v1178
        %v1180 = vrot.slane %v1058, 3
        %v1181 = vsel %vm1116, %v1178, %v1180
        %v1182 = vrot.slane %v1059, 3
        %v1183 = vrot.slane %v1060, 3
        %v1184 = vsel %vm1116, %v1182, %v1183
        %v1185 = vrot.slane %v1061, 3
        %v1186 = vsel %vm1116, %v1183, %v1185
        %v1187 = vrot.slane %v1062, 3
        %v1188 = vrot.slane %v1063, 3
        %v1189 = vsel %vm1116, %v1187, %v1188
        %v1190 = vrot.slane %v1064, 3
        %v1191 = vsel %vm1116, %v1188, %v1190
        %v1192 = vrot.slane %v1065, 3
        %v1193 = vrot.slane %v1066, 3
        %v1194 = vsel %vm1116, %v1192, %v1193
        %v1195 = vrot.slane %v1067, 3
        %v1196 = vsel %vm1116, %v1193, %v1195
        %v1229 = vadd.f32 %v984, %v1119
        %v1230 = vadd.f32 %v985, %v1121
        %v1231 = vadd.f32 %v986, %v1124
        %v1232 = vadd.f32 %v987, %v1126
        %v1233 = vadd.f32 %v988, %v1129
        %v1234 = vadd.f32 %v989, %v1131
        %v1235 = vadd.f32 %v990, %v1134
        %v1236 = vadd.f32 %v991, %v1136
        %v1237 = vadd.f32 %v992, %v1139
        %v1238 = vadd.f32 %v993, %v1141
        %v1239 = vadd.f32 %v994, %v1144
        %v1240 = vadd.f32 %v995, %v1146
        %v1241 = vadd.f32 %v996, %v1149
        %v1242 = vadd.f32 %v997, %v1151
        %v1243 = vadd.f32 %v998, %v1154
        %v1244 = vadd.f32 %v999, %v1156
        %v1245 = vadd.f32 %v1000, %v1159
        %v1246 = vadd.f32 %v1001, %v1161
        %v1247 = vadd.f32 %v1002, %v1164
        %v1248 = vadd.f32 %v1003, %v1166
        %v1249 = vadd.f32 %v1004, %v1169
        %v1250 = vadd.f32 %v1005, %v1171
        %v1251 = vadd.f32 %v1006, %v1174
        %v1252 = vadd.f32 %v1007, %v1176
        %v1253 = vadd.f32 %v1008, %v1179
        %v1254 = vadd.f32 %v1009, %v1181
        %v1255 = vadd.f32 %v1010, %v1184
        %v1256 = vadd.f32 %v1011, %v1186
        %v1257 = vadd.f32 %v1012, %v1189
        %v1258 = vadd.f32 %v1013, %v1191
        %v1259 = vadd.f32 %v1014, %v1194
        %v1260 = vadd.f32 %v1015, %v1196
        %v1261 = vlaneseq
        %v1262 = vshrl.u32 %v1261, 7
        %v1263 = vsub.s32 4, %v1262
        %v1264 = vrot.slane %v451, %v1263
        %v1265 = vmul.f32 %v385, %v1264
        %v1266 = vmul.f32 %v386, %v1264
        %v1267 = vmul.f32 %v387, %v1264
        %v1268 = vmul.f32 %v388, %v1264
        %v1269 = vmul.f32 %v389, %v1264
        %v1270 = vmul.f32 %v390, %v1264
        %v1271 = vmul.f32 %v391, %v1264
        %v1272 = vmul.f32 %v392, %v1264
        %v1273 = vmul.f32 %v393, %v1264
        %v1274 = vmul.f32 %v394, %v1264
        %v1275 = vmul.f32 %v395, %v1264
        %v1276 = vmul.f32 %v396, %v1264
        %v1277 = vmul.f32 %v397, %v1264
        %v1278 = vmul.f32 %v398, %v1264
        %v1279 = vmul.f32 %v399, %v1264
        %v1280 = vmul.f32 %v400, %v1264
        %v1281 = vmul.f32 %v401, %v1264
        %v1282 = vmul.f32 %v402, %v1264
        %v1283 = vmul.f32 %v403, %v1264
        %v1284 = vmul.f32 %v404, %v1264
        %v1285 = vmul.f32 %v405, %v1264
        %v1286 = vmul.f32 %v406, %v1264
        %v1287 = vmul.f32 %v407, %v1264
        %v1288 = vmul.f32 %v408, %v1264
        %v1289 = vmul.f32 %v409, %v1264
        %v1290 = vmul.f32 %v410, %v1264
        %v1291 = vmul.f32 %v411, %v1264
        %v1292 = vmul.f32 %v412, %v1264
        %v1293 = vmul.f32 %v413, %v1264
        %v1294 = vmul.f32 %v414, %v1264
        %v1295 = vmul.f32 %v415, %v1264
        %v1296 = vmul.f32 %v416, %v1264
        %v1297 = vmul.f32 %v417, %v1264
        %v1298 = vmul.f32 %v418, %v1264
        %v1299 = vmul.f32 %v419, %v1264
        %v1300 = vmul.f32 %v420, %v1264
        %v1301 = vmul.f32 %v421, %v1264
        %v1302 = vmul.f32 %v422, %v1264
        %v1303 = vmul.f32 %v423, %v1264
        %v1304 = vmul.f32 %v424, %v1264
        %v1305 = vmul.f32 %v425, %v1264
        %v1306 = vmul.f32 %v426, %v1264
        %v1307 = vmul.f32 %v427, %v1264
        %v1308 = vmul.f32 %v428, %v1264
        %v1309 = vmul.f32 %v429, %v1264
        %v1310 = vmul.f32 %v430, %v1264
        %v1311 = vmul.f32 %v431, %v1264
        %v1312 = vmul.f32 %v432, %v1264
        %vm1361 = vcmask 1043456
        %v1362 = vrot.slane %v1265, 4
        %v1363 = vrot.slane %v1266, 4
        %v1364 = vsel %vm1361, %v1362, %v1363
        %v1365 = vrot.slane %v1267, 4
        %v1366 = vsel %vm1361, %v1363, %v1365
        %v1367 = vrot.slane %v1268, 4
        %v1368 = vrot.slane %v1269, 4
        %v1369 = vsel %vm1361, %v1367, %v1368
        %v1370 = vrot.slane %v1270, 4
        %v1371 = vsel %vm1361, %v1368, %v1370
        %v1372 = vrot.slane %v1271, 4
        %v1373 = vrot.slane %v1272, 4
        %v1374 = vsel %vm1361, %v1372, %v1373
        %v1375 = vrot.slane %v1273, 4
        %v1376 = vsel %vm1361, %v1373, %v1375
        %v1377 = vrot.slane %v1274, 4
        %v1378 = vrot.slane %v1275, 4
        %v1379 = vsel %vm1361, %v1377, %v1378
        %v1380 = vrot.slane %v1276, 4
        %v1381 = vsel %vm1361, %v1378, %v1380
        %v1382 = vrot.slane %v1277, 4
        %v1383 = vrot.slane %v1278, 4
        %v1384 = vsel %vm1361, %v1382, %v1383
        %v1385 = vrot.slane %v1279, 4
        %v1386 = vsel %vm1361, %v1383, %v1385
        %v1387 = vrot.slane %v1280, 4
        %v1388 = vrot.slane %v1281, 4
        %v1389 = vsel %vm1361, %v1387, %v1388
        %v1390 = vrot.slane %v1282, 4
        %v1391 = vsel %vm1361, %v1388, %v1390
        %v1392 = vrot.slane %v1283, 4
        %v1393 = vrot.slane %v1284, 4
        %v1394 = vsel %vm1361, %v1392, %v1393
        %v1395 = vrot.slane %v1285, 4
        %v1396 = vsel %vm1361, %v1393, %v1395
        %v1397 = vrot.slane %v1286, 4
        %v1398 = vrot.slane %v1287, 4
        %v1399 = vsel %vm1361, %v1397, %v1398
        %v1400 = vrot.slane %v1288, 4
        %v1401 = vsel %vm1361, %v1398, %v1400
        %v1402 = vrot.slane %v1289, 4
        %v1403 = vrot.slane %v1290, 4
        %v1404 = vsel %vm1361, %v1402, %v1403
        %v1405 = vrot.slane %v1291, 4
        %v1406 = vsel %vm1361, %v1403, %v1405
        %v1407 = vrot.slane %v1292, 4
        %v1408 = vrot.slane %v1293, 4
        %v1409 = vsel %vm1361, %v1407, %v1408
        %v1410 = vrot.slane %v1294, 4
        %v1411 = vsel %vm1361, %v1408, %v1410
        %v1412 = vrot.slane %v1295, 4
        %v1413 = vrot.slane %v1296, 4
        %v1414 = vsel %vm1361, %v1412, %v1413
        %v1415 = vrot.slane %v1297, 4
        %v1416 = vsel %vm1361, %v1413, %v1415
        %v1417 = vrot.slane %v1298, 4
        %v1418 = vrot.slane %v1299, 4
        %v1419 = vsel %vm1361, %v1417, %v1418
        %v1420 = vrot.slane %v1300, 4
        %v1421 = vsel %vm1361, %v1418, %v1420
        %v1422 = vrot.slane %v1301, 4
        %v1423 = vrot.slane %v1302, 4
        %v1424 = vsel %vm1361, %v1422, %v1423
        %v1425 = vrot.slane %v1303, 4
        %v1426 = vsel %vm1361, %v1423, %v1425
        %v1427 = vrot.slane %v1304, 4
        %v1428 = vrot.slane %v1305, 4
        %v1429 = vsel %vm1361, %v1427, %v1428
        %v1430 = vrot.slane %v1306, 4
        %v1431 = vsel %vm1361, %v1428, %v1430
        %v1432 = vrot.slane %v1307, 4
        %v1433 = vrot.slane %v1308, 4
        %v1434 = vsel %vm1361, %v1432, %v1433
        %v1435 = vrot.slane %v1309, 4
        %v1436 = vsel %vm1361, %v1433, %v1435
        %v1437 = vrot.slane %v1310, 4
        %v1438 = vrot.slane %v1311, 4
        %v1439 = vsel %vm1361, %v1437, %v1438
        %v1440 = vrot.slane %v1312, 4
        %v1441 = vsel %vm1361, %v1438, %v1440
        %v1474 = vadd.f32 %v1229, %v1364
        %v1475 = vadd.f32 %v1230, %v1366
        %v1476 = vadd.f32 %v1231, %v1369
        %v1477 = vadd.f32 %v1232, %v1371
        %v1478 = vadd.f32 %v1233, %v1374
        %v1479 = vadd.f32 %v1234, %v1376
        %v1480 = vadd.f32 %v1235, %v1379
        %v1481 = vadd.f32 %v1236, %v1381
        %v1482 = vadd.f32 %v1237, %v1384
        %v1483 = vadd.f32 %v1238, %v1386
        %v1484 = vadd.f32 %v1239, %v1389
        %v1485 = vadd.f32 %v1240, %v1391
        %v1486 = vadd.f32 %v1241, %v1394
        %v1487 = vadd.f32 %v1242, %v1396
        %v1488 = vadd.f32 %v1243, %v1399
        %v1489 = vadd.f32 %v1244, %v1401
        %v1490 = vadd.f32 %v1245, %v1404
        %v1491 = vadd.f32 %v1246, %v1406
        %v1492 = vadd.f32 %v1247, %v1409
        %v1493 = vadd.f32 %v1248, %v1411
        %v1494 = vadd.f32 %v1249, %v1414
        %v1495 = vadd.f32 %v1250, %v1416
        %v1496 = vadd.f32 %v1251, %v1419
        %v1497 = vadd.f32 %v1252, %v1421
        %v1498 = vadd.f32 %v1253, %v1424
        %v1499 = vadd.f32 %v1254, %v1426
        %v1500 = vadd.f32 %v1255, %v1429
        %v1501 = vadd.f32 %v1256, %v1431
        %v1502 = vadd.f32 %v1257, %v1434
        %v1503 = vadd.f32 %v1258, %v1436
        %v1504 = vadd.f32 %v1259, %v1439
        %v1505 = vadd.f32 %v1260, %v1441
        %v1506 = vlaneseq
        %v1507 = vshrl.u32 %v1506, 7
        %v1508 = vsub.s32 5, %v1507
        %v1509 = vrot.slane %v451, %v1508
        %v1510 = vmul.f32 %v385, %v1509
        %v1511 = vmul.f32 %v386, %v1509
        %v1512 = vmul.f32 %v387, %v1509
        %v1513 = vmul.f32 %v388, %v1509
        %v1514 = vmul.f32 %v389, %v1509
        %v1515 = vmul.f32 %v390, %v1509
        %v1516 = vmul.f32 %v391, %v1509
        %v1517 = vmul.f32 %v392, %v1509
        %v1518 = vmul.f32 %v393, %v1509
        %v1519 = vmul.f32 %v394, %v1509
        %v1520 = vmul.f32 %v395, %v1509
        %v1521 = vmul.f32 %v396, %v1509
        %v1522 = vmul.f32 %v397, %v1509
        %v1523 = vmul.f32 %v398, %v1509
        %v1524 = vmul.f32 %v399, %v1509
        %v1525 = vmul.f32 %v400, %v1509
        %v1526 = vmul.f32 %v401, %v1509
        %v1527 = vmul.f32 %v402, %v1509
        %v1528 = vmul.f32 %v403, %v1509
        %v1529 = vmul.f32 %v404, %v1509
        %v1530 = vmul.f32 %v405, %v1509
        %v1531 = vmul.f32 %v406, %v1509
        %v1532 = vmul.f32 %v407, %v1509
        %v1533 = vmul.f32 %v408, %v1509
        %v1534 = vmul.f32 %v409, %v1509
        %v1535 = vmul.f32 %v410, %v1509
        %v1536 = vmul.f32 %v411, %v1509
        %v1537 = vmul.f32 %v412, %v1509
        %v1538 = vmul.f32 %v413, %v1509
        %v1539 = vmul.f32 %v414, %v1509
        %v1540 = vmul.f32 %v415, %v1509
        %v1541 = vmul.f32 %v416, %v1509
        %v1542 = vmul.f32 %v417, %v1509
        %v1543 = vmul.f32 %v418, %v1509
        %v1544 = vmul.f32 %v419, %v1509
        %v1545 = vmul.f32 %v420, %v1509
        %v1546 = vmul.f32 %v421, %v1509
        %v1547 = vmul.f32 %v422, %v1509
        %v1548 = vmul.f32 %v423, %v1509
        %v1549 = vmul.f32 %v424, %v1509
        %v1550 = vmul.f32 %v425, %v1509
        %v1551 = vmul.f32 %v426, %v1509
        %v1552 = vmul.f32 %v427, %v1509
        %v1553 = vmul.f32 %v428, %v1509
        %v1554 = vmul.f32 %v429, %v1509
        %v1555 = vmul.f32 %v430, %v1509
        %v1556 = vmul.f32 %v431, %v1509
        %v1557 = vmul.f32 %v432, %v1509
        %vm1606 = vcmask 1042432
        %v1607 = vrot.slane %v1510, 5
        %v1608 = vrot.slane %v1511, 5
        %v1609 = vsel %vm1606, %v1607, %v1608
        %v1610 = vrot.slane %v1512, 5
        %v1611 = vsel %vm1606, %v1608, %v1610
        %v1612 = vrot.slane %v1513, 5
        %v1613 = vrot.slane %v1514, 5
        %v1614 = vsel %vm1606, %v1612, %v1613
        %v1615 = vrot.slane %v1515, 5
        %v1616 = vsel %vm1606, %v1613, %v1615
        %v1617 = vrot.slane %v1516, 5
        %v1618 = vrot.slane %v1517, 5
        %v1619 = vsel %vm1606, %v1617, %v1618
        %v1620 = vrot.slane %v1518, 5
        %v1621 = vsel %vm1606, %v1618, %v1620
        %v1622 = vrot.slane %v1519, 5
        %v1623 = vrot.slane %v1520, 5
        %v1624 = vsel %vm1606, %v1622, %v1623
        %v1625 = vrot.slane %v1521, 5
        %v1626 = vsel %vm1606, %v1623, %v1625
        %v1627 = vrot.slane %v1522, 5
        %v1628 = vrot.slane %v1523, 5
        %v1629 = vsel %vm1606, %v1627, %v1628
        %v1630 = vrot.slane %v1524, 5
        %v1631 = vsel %vm1606, %v1628, %v1630
        %v1632 = vrot.slane %v1525, 5
        %v1633 = vrot.slane %v1526, 5
        %v1634 = vsel %vm1606, %v1632, %v1633
        %v1635 = vrot.slane %v1527, 5
        %v1636 = vsel %vm1606, %v1633, %v1635
        %v1637 = vrot.slane %v1528, 5
        %v1638 = vrot.slane %v1529, 5
        %v1639 = vsel %vm1606, %v1637, %v1638
        %v1640 = vrot.slane %v1530, 5
        %v1641 = vsel %vm1606, %v1638, %v1640
        %v1642 = vrot.slane %v1531, 5
        %v1643 = vrot.slane %v1532, 5
        %v1644 = vsel %vm1606, %v1642, %v1643
        %v1645 = vrot.slane %v1533, 5
        %v1646 = vsel %vm1606, %v1643, %v1645
        %v1647 = vrot.slane %v1534, 5
        %v1648 = vrot.slane %v1535, 5
        %v1649 = vsel %vm1606, %v1647, %v1648
        %v1650 = vrot.slane %v1536, 5
        %v1651 = vsel %vm1606, %v1648, %v1650
        %v1652 = vrot.slane %v1537, 5
        %v1653 = vrot.slane %v1538, 5
        %v1654 = vsel %vm1606, %v1652, %v1653
        %v1655 = vrot.slane %v1539, 5
        %v1656 = vsel %vm1606, %v1653, %v1655
        %v1657 = vrot.slane %v1540, 5
        %v1658 = vrot.slane %v1541, 5
        %v1659 = vsel %vm1606, %v1657, %v1658
        %v1660 = vrot.slane %v1542, 5
        %v1661 = vsel %vm1606, %v1658, %v1660
        %v1662 = vrot.slane %v1543, 5
        %v1663 = vrot.slane %v1544, 5
        %v1664 = vsel %vm1606, %v1662, %v1663
        %v1665 = vrot.slane %v1545, 5
        %v1666 = vsel %vm1606, %v1663, %v1665
        %v1667 = vrot.slane %v1546, 5
        %v1668 = vrot.slane %v1547, 5
        %v1669 = vsel %vm1606, %v1667, %v1668
        %v1670 = vrot.slane %v1548, 5
        %v1671 = vsel %vm1606, %v1668, %v1670
        %v1672 = vrot.slane %v1549, 5
        %v1673 = vrot.slane %v1550, 5
        %v1674 = vsel %vm1606, %v1672, %v1673
        %v1675 = vrot.slane %v1551, 5
        %v1676 = vsel %vm1606, %v1673, %v1675
        %v1677 = vrot.slane %v1552, 5
        %v1678 = vrot.slane %v1553, 5
        %v1679 = vsel %vm1606, %v1677, %v1678
        %v1680 = vrot.slane %v1554, 5
        %v1681 = vsel %vm1606, %v1678, %v1680
        %v1682 = vrot.slane %v1555, 5
        %v1683 = vrot.slane %v1556, 5
        %v1684 = vsel %vm1606, %v1682, %v1683
        %v1685 = vrot.slane %v1557, 5
        %v1686 = vsel %vm1606, %v1683, %v1685
        %v1719 = vadd.f32 %v1474, %v1609
        %v1720 = vadd.f32 %v1475, %v1611
        %v1721 = vadd.f32 %v1476, %v1614
        %v1722 = vadd.f32 %v1477, %v1616
        %v1723 = vadd.f32 %v1478, %v1619
        %v1724 = vadd.f32 %v1479, %v1621
        %v1725 = vadd.f32 %v1480, %v1624
        %v1726 = vadd.f32 %v1481, %v1626
        %v1727 = vadd.f32 %v1482, %v1629
        %v1728 = vadd.f32 %v1483, %v1631
        %v1729 = vadd.f32 %v1484, %v1634
        %v1730 = vadd.f32 %v1485, %v1636
        %v1731 = vadd.f32 %v1486, %v1639
        %v1732 = vadd.f32 %v1487, %v1641
        %v1733 = vadd.f32 %v1488, %v1644
        %v1734 = vadd.f32 %v1489, %v1646
        %v1735 = vadd.f32 %v1490, %v1649
        %v1736 = vadd.f32 %v1491, %v1651
        %v1737 = vadd.f32 %v1492, %v1654
        %v1738 = vadd.f32 %v1493, %v1656
        %v1739 = vadd.f32 %v1494, %v1659
        %v1740 = vadd.f32 %v1495, %v1661
        %v1741 = vadd.f32 %v1496, %v1664
        %v1742 = vadd.f32 %v1497, %v1666
        %v1743 = vadd.f32 %v1498, %v1669
        %v1744 = vadd.f32 %v1499, %v1671
        %v1745 = vadd.f32 %v1500, %v1674
        %v1746 = vadd.f32 %v1501, %v1676
        %v1747 = vadd.f32 %v1502, %v1679
        %v1748 = vadd.f32 %v1503, %v1681
        %v1749 = vadd.f32 %v1504, %v1684
        %v1750 = vadd.f32 %v1505, %v1686
        %v1751 = vlaneseq
        %v1752 = vshrl.u32 %v1751, 7
        %v1753 = vsub.s32 6, %v1752
        %v1754 = vrot.slane %v451, %v1753
        %v1755 = vmul.f32 %v385, %v1754
        %v1756 = vmul.f32 %v386, %v1754
        %v1757 = vmul.f32 %v387, %v1754
        %v1758 = vmul.f32 %v388, %v1754
        %v1759 = vmul.f32 %v389, %v1754
        %v1760 = vmul.f32 %v390, %v1754
        %v1761 = vmul.f32 %v391, %v1754
        %v1762 = vmul.f32 %v392, %v1754
        %v1763 = vmul.f32 %v393, %v1754
        %v1764 = vmul.f32 %v394, %v1754
        %v1765 = vmul.f32 %v395, %v1754
        %v1766 = vmul.f32 %v396, %v1754
        %v1767 = vmul.f32 %v397, %v1754
        %v1768 = vmul.f32 %v398, %v1754
        %v1769 = vmul.f32 %v399, %v1754
        %v1770 = vmul.f32 %v400, %v1754
        %v1771 = vmul.f32 %v401, %v1754
        %v1772 = vmul.f32 %v402, %v1754
        %v1773 = vmul.f32 %v403, %v1754
        %v1774 = vmul.f32 %v404, %v1754
        %v1775 = vmul.f32 %v405, %v1754
        %v1776 = vmul.f32 %v406, %v1754
        %v1777 = vmul.f32 %v407, %v1754
        %v1778 = vmul.f32 %v408, %v1754
        %v1779 = vmul.f32 %v409, %v1754
        %v1780 = vmul.f32 %v410, %v1754
        %v1781 = vmul.f32 %v411, %v1754
        %v1782 = vmul.f32 %v412, %v1754
        %v1783 = vmul.f32 %v413, %v1754
        %v1784 = vmul.f32 %v414, %v1754
        %v1785 = vmul.f32 %v415, %v1754
        %v1786 = vmul.f32 %v416, %v1754
        %v1787 = vmul.f32 %v417, %v1754
        %v1788 = vmul.f32 %v418, %v1754
        %v1789 = vmul.f32 %v419, %v1754
        %v1790 = vmul.f32 %v420, %v1754
        %v1791 = vmul.f32 %v421, %v1754
        %v1792 = vmul.f32 %v422, %v1754
        %v1793 = vmul.f32 %v423, %v1754
        %v1794 = vmul.f32 %v424, %v1754
        %v1795 = vmul.f32 %v425, %v1754
        %v1796 = vmul.f32 %v426, %v1754
        %v1797 = vmul.f32 %v427, %v1754
        %v1798 = vmul.f32 %v428, %v1754
        %v1799 = vmul.f32 %v429, %v1754
        %v1800 = vmul.f32 %v430, %v1754
        %v1801 = vmul.f32 %v431, %v1754
        %v1802 = vmul.f32 %v432, %v1754
        %vm1851 = vcmask 1041408
        %v1852 = vrot.slane %v1755, 6
        %v1853 = vrot.slane %v1756, 6
        %v1854 = vsel %vm1851, %v1852, %v1853
        %v1855 = vrot.slane %v1757, 6
        %v1856 = vsel %vm1851, %v1853, %v1855
        %v1857 = vrot.slane %v1758, 6
        %v1858 = vrot.slane %v1759, 6
        %v1859 = vsel %vm1851, %v1857, %v1858
        %v1860 = vrot.slane %v1760, 6
        %v1861 = vsel %vm1851, %v1858, %v1860
        %v1862 = vrot.slane %v1761, 6
        %v1863 = vrot.slane %v1762, 6
        %v1864 = vsel %vm1851, %v1862, %v1863
        %v1865 = vrot.slane %v1763, 6
        %v1866 = vsel %vm1851, %v1863, %v1865
        %v1867 = vrot.slane %v1764, 6
        %v1868 = vrot.slane %v1765, 6
        %v1869 = vsel %vm1851, %v1867, %v1868
        %v1870 = vrot.slane %v1766, 6
        %v1871 = vsel %vm1851, %v1868, %v1870
        %v1872 = vrot.slane %v1767, 6
        %v1873 = vrot.slane %v1768, 6
        %v1874 = vsel %vm1851, %v1872, %v1873
        %v1875 = vrot.slane %v1769, 6
        %v1876 = vsel %vm1851, %v1873, %v1875
        %v1877 = vrot.slane %v1770, 6
        %v1878 = vrot.slane %v1771, 6
        %v1879 = vsel %vm1851, %v1877, %v1878
        %v1880 = vrot.slane %v1772, 6
        %v1881 = vsel %vm1851, %v1878, %v1880
        %v1882 = vrot.slane %v1773, 6
        %v1883 = vrot.slane %v1774, 6
        %v1884 = vsel %vm1851, %v1882, %v1883
        %v1885 = vrot.slane %v1775, 6
        %v1886 = vsel %vm1851, %v1883, %v1885
        %v1887 = vrot.slane %v1776, 6
        %v1888 = vrot.slane %v1777, 6
        %v1889 = vsel %vm1851, %v1887, %v1888
        %v1890 = vrot.slane %v1778, 6
        %v1891 = vsel %vm1851, %v1888, %v1890
        %v1892 = vrot.slane %v1779, 6
        %v1893 = vrot.slane %v1780, 6
        %v1894 = vsel %vm1851, %v1892, %v1893
        %v1895 = vrot.slane %v1781, 6
        %v1896 = vsel %vm1851, %v1893, %v1895
        %v1897 = vrot.slane %v1782, 6
        %v1898 = vrot.slane %v1783, 6
        %v1899 = vsel %vm1851, %v1897, %v1898
        %v1900 = vrot.slane %v1784, 6
        %v1901 = vsel %vm1851, %v1898, %v1900
        %v1902 = vrot.slane %v1785, 6
        %v1903 = vrot.slane %v1786, 6
        %v1904 = vsel %vm1851, %v1902, %v1903
        %v1905 = vrot.slane %v1787, 6
        %v1906 = vsel %vm1851, %v1903, %v1905
        %v1907 = vrot.slane %v1788, 6
        %v1908 = vrot.slane %v1789, 6
        %v1909 = vsel %vm1851, %v1907, %v1908
        %v1910 = vrot.slane %v1790, 6
        %v1911 = vsel %vm1851, %v1908, %v1910
        %v1912 = vrot.slane %v1791, 6
        %v1913 = vrot.slane %v1792, 6
        %v1914 = vsel %vm1851, %v1912, %v1913
        %v1915 = vrot.slane %v1793, 6
        %v1916 = vsel %vm1851, %v1913, %v1915
        %v1917 = vrot.slane %v1794, 6
        %v1918 = vrot.slane %v1795, 6
        %v1919 = vsel %vm1851, %v1917, %v1918
        %v1920 = vrot.slane %v1796, 6
        %v1921 = vsel %vm1851, %v1918, %v1920
        %v1922 = vrot.slane %v1797, 6
        %v1923 = vrot.slane %v1798, 6
        %v1924 = vsel %vm1851, %v1922, %v1923
        %v1925 = vrot.slane %v1799, 6
        %v1926 = vsel %vm1851, %v1923, %v1925
        %v1927 = vrot.slane %v1800, 6
        %v1928 = vrot.slane %v1801, 6
        %v1929 = vsel %vm1851, %v1927, %v1928
        %v1930 = vrot.slane %v1802, 6
        %v1931 = vsel %vm1851, %v1928, %v1930
        %v1964 = vadd.f32 %v1719, %v1854
        %v1965 = vadd.f32 %v1720, %v1856
        %v1966 = vadd.f32 %v1721, %v1859
        %v1967 = vadd.f32 %v1722, %v1861
        %v1968 = vadd.f32 %v1723, %v1864
        %v1969 = vadd.f32 %v1724, %v1866
        %v1970 = vadd.f32 %v1725, %v1869
        %v1971 = vadd.f32 %v1726, %v1871
        %v1972 = vadd.f32 %v1727, %v1874
        %v1973 = vadd.f32 %v1728, %v1876
        %v1974 = vadd.f32 %v1729, %v1879
        %v1975 = vadd.f32 %v1730, %v1881
        %v1976 = vadd.f32 %v1731, %v1884
        %v1977 = vadd.f32 %v1732, %v1886
        %v1978 = vadd.f32 %v1733, %v1889
        %v1979 = vadd.f32 %v1734, %v1891
        %v1980 = vadd.f32 %v1735, %v1894
        %v1981 = vadd.f32 %v1736, %v1896
        %v1982 = vadd.f32 %v1737, %v1899
        %v1983 = vadd.f32 %v1738, %v1901
        %v1984 = vadd.f32 %v1739, %v1904
        %v1985 = vadd.f32 %v1740, %v1906
        %v1986 = vadd.f32 %v1741, %v1909
        %v1987 = vadd.f32 %v1742, %v1911
        %v1988 = vadd.f32 %v1743, %v1914
        %v1989 = vadd.f32 %v1744, %v1916
        %v1990 = vadd.f32 %v1745, %v1919
        %v1991 = vadd.f32 %v1746, %v1921
        %v1992 = vadd.f32 %v1747, %v1924
        %v1993 = vadd.f32 %v1748, %v1926
        %v1994 = vadd.f32 %v1749, %v1929
        %v1995 = vadd.f32 %v1750, %v1931
        %v1996 = vlaneseq
        %v1997 = vshrl.u32 %v1996, 7
        %v1998 = vsub.s32 0, %v1997
        %v1999 = vrot.slane %v452, %v1998
        %v2000 = vmul.f32 %v388, %v1999
        %v2001 = vmul.f32 %v389, %v1999
        %v2002 = vmul.f32 %v391, %v1999
        %v2003 = vmul.f32 %v392, %v1999
        %v2004 = vmul.f32 %v394, %v1999
        %v2005 = vmul.f32 %v395, %v1999
        %v2006 = vmul.f32 %v397, %v1999
        %v2007 = vmul.f32 %v398, %v1999
        %v2008 = vmul.f32 %v400, %v1999
        %v2009 = vmul.f32 %v401, %v1999
        %v2010 = vmul.f32 %v403, %v1999
        %v2011 = vmul.f32 %v404, %v1999
        %v2012 = vmul.f32 %v406, %v1999
        %v2013 = vmul.f32 %v407, %v1999
        %v2014 = vmul.f32 %v409, %v1999
        %v2015 = vmul.f32 %v410, %v1999
        %v2016 = vmul.f32 %v412, %v1999
        %v2017 = vmul.f32 %v413, %v1999
        %v2018 = vmul.f32 %v415, %v1999
        %v2019 = vmul.f32 %v416, %v1999
        %v2020 = vmul.f32 %v418, %v1999
        %v2021 = vmul.f32 %v419, %v1999
        %v2022 = vmul.f32 %v421, %v1999
        %v2023 = vmul.f32 %v422, %v1999
        %v2024 = vmul.f32 %v424, %v1999
        %v2025 = vmul.f32 %v425, %v1999
        %v2026 = vmul.f32 %v427, %v1999
        %v2027 = vmul.f32 %v428, %v1999
        %v2028 = vmul.f32 %v430, %v1999
        %v2029 = vmul.f32 %v431, %v1999
        %v2030 = vmul.f32 %v433, %v1999
        %v2031 = vmul.f32 %v434, %v1999
        %v2032 = vadd.f32 %v1964, %v2000
        %v2033 = vadd.f32 %v1965, %v2001
        %v2034 = vadd.f32 %v1966, %v2002
        %v2035 = vadd.f32 %v1967, %v2003
        %v2036 = vadd.f32 %v1968, %v2004
        %v2037 = vadd.f32 %v1969, %v2005
        %v2038 = vadd.f32 %v1970, %v2006
        %v2039 = vadd.f32 %v1971, %v2007
        %v2040 = vadd.f32 %v1972, %v2008
        %v2041 = vadd.f32 %v1973, %v2009
        %v2042 = vadd.f32 %v1974, %v2010
        %v2043 = vadd.f32 %v1975, %v2011
        %v2044 = vadd.f32 %v1976, %v2012
        %v2045 = vadd.f32 %v1977, %v2013
        %v2046 = vadd.f32 %v1978, %v2014
        %v2047 = vadd.f32 %v1979, %v2015
        %v2048 = vadd.f32 %v1980, %v2016
        %v2049 = vadd.f32 %v1981, %v2017
        %v2050 = vadd.f32 %v1982, %v2018
        %v2051 = vadd.f32 %v1983, %v2019
        %v2052 = vadd.f32 %v1984, %v2020
        %v2053 = vadd.f32 %v1985, %v2021
        %v2054 = vadd.f32 %v1986, %v2022
        %v2055 = vadd.f32 %v1987, %v2023
        %v2056 = vadd.f32 %v1988, %v2024
        %v2057 = vadd.f32 %v1989, %v2025
        %v2058 = vadd.f32 %v1990, %v2026
        %v2059 = vadd.f32 %v1991, %v2027
        %v2060 = vadd.f32 %v1992, %v2028
        %v2061 = vadd.f32 %v1993, %v2029
        %v2062 = vadd.f32 %v1994, %v2030
        %v2063 = vadd.f32 %v1995, %v2031
        %v2064 = vlaneseq
        %v2065 = vshrl.u32 %v2064, 7
        %v2066 = vsub.s32 1, %v2065
        %v2067 = vrot.slane %v452, %v2066
        %v2068 = vmul.f32 %v388, %v2067
        %v2069 = vmul.f32 %v389, %v2067
        %v2070 = vmul.f32 %v390, %v2067
        %v2071 = vmul.f32 %v391, %v2067
        %v2072 = vmul.f32 %v392, %v2067
        %v2073 = vmul.f32 %v393, %v2067
        %v2074 = vmul.f32 %v394, %v2067
        %v2075 = vmul.f32 %v395, %v2067
        %v2076 = vmul.f32 %v396, %v2067
        %v2077 = vmul.f32 %v397, %v2067
        %v2078 = vmul.f32 %v398, %v2067
        %v2079 = vmul.f32 %v399, %v2067
        %v2080 = vmul.f32 %v400, %v2067
        %v2081 = vmul.f32 %v401, %v2067
        %v2082 = vmul.f32 %v402, %v2067
        %v2083 = vmul.f32 %v403, %v2067
        %v2084 = vmul.f32 %v404, %v2067
        %v2085 = vmul.f32 %v405, %v2067
        %v2086 = vmul.f32 %v406, %v2067
        %v2087 = vmul.f32 %v407, %v2067
        %v2088 = vmul.f32 %v408, %v2067
        %v2089 = vmul.f32 %v409, %v2067
        %v2090 = vmul.f32 %v410, %v2067
        %v2091 = vmul.f32 %v411, %v2067
        %v2092 = vmul.f32 %v412, %v2067
        %v2093 = vmul.f32 %v413, %v2067
        %v2094 = vmul.f32 %v414, %v2067
        %v2095 = vmul.f32 %v415, %v2067
        %v2096 = vmul.f32 %v416, %v2067
        %v2097 = vmul.f32 %v417, %v2067
        %v2098 = vmul.f32 %v418, %v2067
        %v2099 = vmul.f32 %v419, %v2067
        %v2100 = vmul.f32 %v420, %v2067
        %v2101 = vmul.f32 %v421, %v2067
        %v2102 = vmul.f32 %v422, %v2067
        %v2103 = vmul.f32 %v423, %v2067
        %v2104 = vmul.f32 %v424, %v2067
        %v2105 = vmul.f32 %v425, %v2067
        %v2106 = vmul.f32 %v426, %v2067
        %v2107 = vmul.f32 %v427, %v2067
        %v2108 = vmul.f32 %v428, %v2067
        %v2109 = vmul.f32 %v429, %v2067
        %v2110 = vmul.f32 %v430, %v2067
        %v2111 = vmul.f32 %v431, %v2067
        %v2112 = vmul.f32 %v432, %v2067
        %v2113 = vmul.f32 %v433, %v2067
        %v2114 = vmul.f32 %v434, %v2067
        %v2115 = vmul.f32 %v435, %v2067
        %v2164 = vrot.slane %v2068, 1
        %v2165 = vrot.slane %v2069, 1
        %v2166 = vsel %vm626, %v2164, %v2165
        %v2167 = vrot.slane %v2070, 1
        %v2168 = vsel %vm626, %v2165, %v2167
        %v2169 = vrot.slane %v2071, 1
        %v2170 = vrot.slane %v2072, 1
        %v2171 = vsel %vm626, %v2169, %v2170
        %v2172 = vrot.slane %v2073, 1
        %v2173 = vsel %vm626, %v2170, %v2172
        %v2174 = vrot.slane %v2074, 1
        %v2175 = vrot.slane %v2075, 1
        %v2176 = vsel %vm626, %v2174, %v2175
        %v2177 = vrot.slane %v2076, 1
        %v2178 = vsel %vm626, %v2175, %v2177
        %v2179 = vrot.slane %v2077, 1
        %v2180 = vrot.slane %v2078, 1
        %v2181 = vsel %vm626, %v2179, %v2180
        %v2182 = vrot.slane %v2079, 1
        %v2183 = vsel %vm626, %v2180, %v2182
        %v2184 = vrot.slane %v2080, 1
        %v2185 = vrot.slane %v2081, 1
        %v2186 = vsel %vm626, %v2184, %v2185
        %v2187 = vrot.slane %v2082, 1
        %v2188 = vsel %vm626, %v2185, %v2187
        %v2189 = vrot.slane %v2083, 1
        %v2190 = vrot.slane %v2084, 1
        %v2191 = vsel %vm626, %v2189, %v2190
        %v2192 = vrot.slane %v2085, 1
        %v2193 = vsel %vm626, %v2190, %v2192
        %v2194 = vrot.slane %v2086, 1
        %v2195 = vrot.slane %v2087, 1
        %v2196 = vsel %vm626, %v2194, %v2195
        %v2197 = vrot.slane %v2088, 1
        %v2198 = vsel %vm626, %v2195, %v2197
        %v2199 = vrot.slane %v2089, 1
        %v2200 = vrot.slane %v2090, 1
        %v2201 = vsel %vm626, %v2199, %v2200
        %v2202 = vrot.slane %v2091, 1
        %v2203 = vsel %vm626, %v2200, %v2202
        %v2204 = vrot.slane %v2092, 1
        %v2205 = vrot.slane %v2093, 1
        %v2206 = vsel %vm626, %v2204, %v2205
        %v2207 = vrot.slane %v2094, 1
        %v2208 = vsel %vm626, %v2205, %v2207
        %v2209 = vrot.slane %v2095, 1
        %v2210 = vrot.slane %v2096, 1
        %v2211 = vsel %vm626, %v2209, %v2210
        %v2212 = vrot.slane %v2097, 1
        %v2213 = vsel %vm626, %v2210, %v2212
        %v2214 = vrot.slane %v2098, 1
        %v2215 = vrot.slane %v2099, 1
        %v2216 = vsel %vm626, %v2214, %v2215
        %v2217 = vrot.slane %v2100, 1
        %v2218 = vsel %vm626, %v2215, %v2217
        %v2219 = vrot.slane %v2101, 1
        %v2220 = vrot.slane %v2102, 1
        %v2221 = vsel %vm626, %v2219, %v2220
        %v2222 = vrot.slane %v2103, 1
        %v2223 = vsel %vm626, %v2220, %v2222
        %v2224 = vrot.slane %v2104, 1
        %v2225 = vrot.slane %v2105, 1
        %v2226 = vsel %vm626, %v2224, %v2225
        %v2227 = vrot.slane %v2106, 1
        %v2228 = vsel %vm626, %v2225, %v2227
        %v2229 = vrot.slane %v2107, 1
        %v2230 = vrot.slane %v2108, 1
        %v2231 = vsel %vm626, %v2229, %v2230
        %v2232 = vrot.slane %v2109, 1
        %v2233 = vsel %vm626, %v2230, %v2232
        %v2234 = vrot.slane %v2110, 1
        %v2235 = vrot.slane %v2111, 1
        %v2236 = vsel %vm626, %v2234, %v2235
        %v2237 = vrot.slane %v2112, 1
        %v2238 = vsel %vm626, %v2235, %v2237
        %v2239 = vrot.slane %v2113, 1
        %v2240 = vrot.slane %v2114, 1
        %v2241 = vsel %vm626, %v2239, %v2240
        %v2242 = vrot.slane %v2115, 1
        %v2243 = vsel %vm626, %v2240, %v2242
        %v2276 = vadd.f32 %v2032, %v2166
        %v2277 = vadd.f32 %v2033, %v2168
        %v2278 = vadd.f32 %v2034, %v2171
        %v2279 = vadd.f32 %v2035, %v2173
        %v2280 = vadd.f32 %v2036, %v2176
        %v2281 = vadd.f32 %v2037, %v2178
        %v2282 = vadd.f32 %v2038, %v2181
        %v2283 = vadd.f32 %v2039, %v2183
        %v2284 = vadd.f32 %v2040, %v2186
        %v2285 = vadd.f32 %v2041, %v2188
        %v2286 = vadd.f32 %v2042, %v2191
        %v2287 = vadd.f32 %v2043, %v2193
        %v2288 = vadd.f32 %v2044, %v2196
        %v2289 = vadd.f32 %v2045, %v2198
        %v2290 = vadd.f32 %v2046, %v2201
        %v2291 = vadd.f32 %v2047, %v2203
        %v2292 = vadd.f32 %v2048, %v2206
        %v2293 = vadd.f32 %v2049, %v2208
        %v2294 = vadd.f32 %v2050, %v2211
        %v2295 = vadd.f32 %v2051, %v2213
        %v2296 = vadd.f32 %v2052, %v2216
        %v2297 = vadd.f32 %v2053, %v2218
        %v2298 = vadd.f32 %v2054, %v2221
        %v2299 = vadd.f32 %v2055, %v2223
        %v2300 = vadd.f32 %v2056, %v2226
        %v2301 = vadd.f32 %v2057, %v2228
        %v2302 = vadd.f32 %v2058, %v2231
        %v2303 = vadd.f32 %v2059, %v2233
        %v2304 = vadd.f32 %v2060, %v2236
        %v2305 = vadd.f32 %v2061, %v2238
        %v2306 = vadd.f32 %v2062, %v2241
        %v2307 = vadd.f32 %v2063, %v2243
        %v2308 = vlaneseq
        %v2309 = vshrl.u32 %v2308, 7
        %v2310 = vsub.s32 2, %v2309
        %v2311 = vrot.slane %v452, %v2310
        %v2312 = vmul.f32 %v388, %v2311
        %v2313 = vmul.f32 %v389, %v2311
        %v2314 = vmul.f32 %v390, %v2311
        %v2315 = vmul.f32 %v391, %v2311
        %v2316 = vmul.f32 %v392, %v2311
        %v2317 = vmul.f32 %v393, %v2311
        %v2318 = vmul.f32 %v394, %v2311
        %v2319 = vmul.f32 %v395, %v2311
        %v2320 = vmul.f32 %v396, %v2311
        %v2321 = vmul.f32 %v397, %v2311
        %v2322 = vmul.f32 %v398, %v2311
        %v2323 = vmul.f32 %v399, %v2311
        %v2324 = vmul.f32 %v400, %v2311
        %v2325 = vmul.f32 %v401, %v2311
        %v2326 = vmul.f32 %v402, %v2311
        %v2327 = vmul.f32 %v403, %v2311
        %v2328 = vmul.f32 %v404, %v2311
        %v2329 = vmul.f32 %v405, %v2311
        %v2330 = vmul.f32 %v406, %v2311
        %v2331 = vmul.f32 %v407, %v2311
        %v2332 = vmul.f32 %v408, %v2311
        %v2333 = vmul.f32 %v409, %v2311
        %v2334 = vmul.f32 %v410, %v2311
        %v2335 = vmul.f32 %v411, %v2311
        %v2336 = vmul.f32 %v412, %v2311
        %v2337 = vmul.f32 %v413, %v2311
        %v2338 = vmul.f32 %v414, %v2311
        %v2339 = vmul.f32 %v415, %v2311
        %v2340 = vmul.f32 %v416, %v2311
        %v2341 = vmul.f32 %v417, %v2311
        %v2342 = vmul.f32 %v418, %v2311
        %v2343 = vmul.f32 %v419, %v2311
        %v2344 = vmul.f32 %v420, %v2311
        %v2345 = vmul.f32 %v421, %v2311
        %v2346 = vmul.f32 %v422, %v2311
        %v2347 = vmul.f32 %v423, %v2311
        %v2348 = vmul.f32 %v424, %v2311
        %v2349 = vmul.f32 %v425, %v2311
        %v2350 = vmul.f32 %v426, %v2311
        %v2351 = vmul.f32 %v427, %v2311
        %v2352 = vmul.f32 %v428, %v2311
        %v2353 = vmul.f32 %v429, %v2311
        %v2354 = vmul.f32 %v430, %v2311
        %v2355 = vmul.f32 %v431, %v2311
        %v2356 = vmul.f32 %v432, %v2311
        %v2357 = vmul.f32 %v433, %v2311
        %v2358 = vmul.f32 %v434, %v2311
        %v2359 = vmul.f32 %v435, %v2311
        %v2408 = vrot.slane %v2312, 2
        %v2409 = vrot.slane %v2313, 2
        %v2410 = vsel %vm871, %v2408, %v2409
        %v2411 = vrot.slane %v2314, 2
        %v2412 = vsel %vm871, %v2409, %v2411
        %v2413 = vrot.slane %v2315, 2
        %v2414 = vrot.slane %v2316, 2
        %v2415 = vsel %vm871, %v2413, %v2414
        %v2416 = vrot.slane %v2317, 2
        %v2417 = vsel %vm871, %v2414, %v2416
        %v2418 = vrot.slane %v2318, 2
        %v2419 = vrot.slane %v2319, 2
        %v2420 = vsel %vm871, %v2418, %v2419
        %v2421 = vrot.slane %v2320, 2
        %v2422 = vsel %vm871, %v2419, %v2421
        %v2423 = vrot.slane %v2321, 2
        %v2424 = vrot.slane %v2322, 2
        %v2425 = vsel %vm871, %v2423, %v2424
        %v2426 = vrot.slane %v2323, 2
        %v2427 = vsel %vm871, %v2424, %v2426
        %v2428 = vrot.slane %v2324, 2
        %v2429 = vrot.slane %v2325, 2
        %v2430 = vsel %vm871, %v2428, %v2429
        %v2431 = vrot.slane %v2326, 2
        %v2432 = vsel %vm871, %v2429, %v2431
        %v2433 = vrot.slane %v2327, 2
        %v2434 = vrot.slane %v2328, 2
        %v2435 = vsel %vm871, %v2433, %v2434
        %v2436 = vrot.slane %v2329, 2
        %v2437 = vsel %vm871, %v2434, %v2436
        %v2438 = vrot.slane %v2330, 2
        %v2439 = vrot.slane %v2331, 2
        %v2440 = vsel %vm871, %v2438, %v2439
        %v2441 = vrot.slane %v2332, 2
        %v2442 = vsel %vm871, %v2439, %v2441
        %v2443 = vrot.slane %v2333, 2
        %v2444 = vrot.slane %v2334, 2
        %v2445 = vsel %vm871, %v2443, %v2444
        %v2446 = vrot.slane %v2335, 2
        %v2447 = vsel %vm871, %v2444, %v2446
        %v2448 = vrot.slane %v2336, 2
        %v2449 = vrot.slane %v2337, 2
        %v2450 = vsel %vm871, %v2448, %v2449
        %v2451 = vrot.slane %v2338, 2
        %v2452 = vsel %vm871, %v2449, %v2451
        %v2453 = vrot.slane %v2339, 2
        %v2454 = vrot.slane %v2340, 2
        %v2455 = vsel %vm871, %v2453, %v2454
        %v2456 = vrot.slane %v2341, 2
        %v2457 = vsel %vm871, %v2454, %v2456
        %v2458 = vrot.slane %v2342, 2
        %v2459 = vrot.slane %v2343, 2
        %v2460 = vsel %vm871, %v2458, %v2459
        %v2461 = vrot.slane %v2344, 2
        %v2462 = vsel %vm871, %v2459, %v2461
        %v2463 = vrot.slane %v2345, 2
        %v2464 = vrot.slane %v2346, 2
        %v2465 = vsel %vm871, %v2463, %v2464
        %v2466 = vrot.slane %v2347, 2
        %v2467 = vsel %vm871, %v2464, %v2466
        %v2468 = vrot.slane %v2348, 2
        %v2469 = vrot.slane %v2349, 2
        %v2470 = vsel %vm871, %v2468, %v2469
        %v2471 = vrot.slane %v2350, 2
        %v2472 = vsel %vm871, %v2469, %v2471
        %v2473 = vrot.slane %v2351, 2
        %v2474 = vrot.slane %v2352, 2
        %v2475 = vsel %vm871, %v2473, %v2474
        %v2476 = vrot.slane %v2353, 2
        %v2477 = vsel %vm871, %v2474, %v2476
        %v2478 = vrot.slane %v2354, 2
        %v2479 = vrot.slane %v2355, 2
        %v2480 = vsel %vm871, %v2478, %v2479
        %v2481 = vrot.slane %v2356, 2
        %v2482 = vsel %vm871, %v2479, %v2481
        %v2483 = vrot.slane %v2357, 2
        %v2484 = vrot.slane %v2358, 2
        %v2485 = vsel %vm871, %v2483, %v2484
        %v2486 = vrot.slane %v2359, 2
        %v2487 = vsel %vm871, %v2484, %v2486
        %v2520 = vadd.f32 %v2276, %v2410
        %v2521 = vadd.f32 %v2277, %v2412
        %v2522 = vadd.f32 %v2278, %v2415
        %v2523 = vadd.f32 %v2279, %v2417
        %v2524 = vadd.f32 %v2280, %v2420
        %v2525 = vadd.f32 %v2281, %v2422
        %v2526 = vadd.f32 %v2282, %v2425
        %v2527 = vadd.f32 %v2283, %v2427
        %v2528 = vadd.f32 %v2284, %v2430
        %v2529 = vadd.f32 %v2285, %v2432
        %v2530 = vadd.f32 %v2286, %v2435
        %v2531 = vadd.f32 %v2287, %v2437
        %v2532 = vadd.f32 %v2288, %v2440
        %v2533 = vadd.f32 %v2289, %v2442
        %v2534 = vadd.f32 %v2290, %v2445
        %v2535 = vadd.f32 %v2291, %v2447
        %v2536 = vadd.f32 %v2292, %v2450
        %v2537 = vadd.f32 %v2293, %v2452
        %v2538 = vadd.f32 %v2294, %v2455
        %v2539 = vadd.f32 %v2295, %v2457
        %v2540 = vadd.f32 %v2296, %v2460
        %v2541 = vadd.f32 %v2297, %v2462
        %v2542 = vadd.f32 %v2298, %v2465
        %v2543 = vadd.f32 %v2299, %v2467
        %v2544 = vadd.f32 %v2300, %v2470
        %v2545 = vadd.f32 %v2301, %v2472
        %v2546 = vadd.f32 %v2302, %v2475
        %v2547 = vadd.f32 %v2303, %v2477
        %v2548 = vadd.f32 %v2304, %v2480
        %v2549 = vadd.f32 %v2305, %v2482
        %v2550 = vadd.f32 %v2306, %v2485
        %v2551 = vadd.f32 %v2307, %v2487
        %v2552 = vlaneseq
        %v2553 = vshrl.u32 %v2552, 7
        %v2554 = vsub.s32 3, %v2553
        %v2555 = vrot.slane %v452, %v2554
        %v2556 = vmul.f32 %v388, %v2555
        %v2557 = vmul.f32 %v389, %v2555
        %v2558 = vmul.f32 %v390, %v2555
        %v2559 = vmul.f32 %v391, %v2555
        %v2560 = vmul.f32 %v392, %v2555
        %v2561 = vmul.f32 %v393, %v2555
        %v2562 = vmul.f32 %v394, %v2555
        %v2563 = vmul.f32 %v395, %v2555
        %v2564 = vmul.f32 %v396, %v2555
        %v2565 = vmul.f32 %v397, %v2555
        %v2566 = vmul.f32 %v398, %v2555
        %v2567 = vmul.f32 %v399, %v2555
        %v2568 = vmul.f32 %v400, %v2555
        %v2569 = vmul.f32 %v401, %v2555
        %v2570 = vmul.f32 %v402, %v2555
        %v2571 = vmul.f32 %v403, %v2555
        %v2572 = vmul.f32 %v404, %v2555
        %v2573 = vmul.f32 %v405, %v2555
        %v2574 = vmul.f32 %v406, %v2555
        %v2575 = vmul.f32 %v407, %v2555
        %v2576 = vmul.f32 %v408, %v2555
        %v2577 = vmul.f32 %v409, %v2555
        %v2578 = vmul.f32 %v410, %v2555
        %v2579 = vmul.f32 %v411, %v2555
        %v2580 = vmul.f32 %v412, %v2555
        %v2581 = vmul.f32 %v413, %v2555
        %v2582 = vmul.f32 %v414, %v2555
        %v2583 = vmul.f32 %v415, %v2555
        %v2584 = vmul.f32 %v416, %v2555
        %v2585 = vmul.f32 %v417, %v2555
        %v2586 = vmul.f32 %v418, %v2555
        %v2587 = vmul.f32 %v419, %v2555
        %v2588 = vmul.f32 %v420, %v2555
        %v2589 = vmul.f32 %v421, %v2555
        %v2590 = vmul.f32 %v422, %v2555
        %v2591 = vmul.f32 %v423, %v2555
        %v2592 = vmul.f32 %v424, %v2555
        %v2593 = vmul.f32 %v425, %v2555
        %v2594 = vmul.f32 %v426, %v2555
        %v2595 = vmul.f32 %v427, %v2555
        %v2596 = vmul.f32 %v428, %v2555
        %v2597 = vmul.f32 %v429, %v2555
        %v2598 = vmul.f32 %v430, %v2555
        %v2599 = vmul.f32 %v431, %v2555
        %v2600 = vmul.f32 %v432, %v2555
        %v2601 = vmul.f32 %v433, %v2555
        %v2602 = vmul.f32 %v434, %v2555
        %v2603 = vmul.f32 %v435, %v2555
        %v2652 = vrot.slane %v2556, 3
        %v2653 = vrot.slane %v2557, 3
        %v2654 = vsel %vm1116, %v2652, %v2653
        %v2655 = vrot.slane %v2558, 3
        %v2656 = vsel %vm1116, %v2653, %v2655
        %v2657 = vrot.slane %v2559, 3
        %v2658 = vrot.slane %v2560, 3
        %v2659 = vsel %vm1116, %v2657, %v2658
        %v2660 = vrot.slane %v2561, 3
        %v2661 = vsel %vm1116, %v2658, %v2660
        %v2662 = vrot.slane %v2562, 3
        %v2663 = vrot.slane %v2563, 3
        %v2664 = vsel %vm1116, %v2662, %v2663
        %v2665 = vrot.slane %v2564, 3
        %v2666 = vsel %vm1116, %v2663, %v2665
        %v2667 = vrot.slane %v2565, 3
        %v2668 = vrot.slane %v2566, 3
        %v2669 = vsel %vm1116, %v2667, %v2668
        %v2670 = vrot.slane %v2567, 3
        %v2671 = vsel %vm1116, %v2668, %v2670
        %v2672 = vrot.slane %v2568, 3
        %v2673 = vrot.slane %v2569, 3
        %v2674 = vsel %vm1116, %v2672, %v2673
        %v2675 = vrot.slane %v2570, 3
        %v2676 = vsel %vm1116, %v2673, %v2675
        %v2677 = vrot.slane %v2571, 3
        %v2678 = vrot.slane %v2572, 3
        %v2679 = vsel %vm1116, %v2677, %v2678
        %v2680 = vrot.slane %v2573, 3
        %v2681 = vsel %vm1116, %v2678, %v2680
        %v2682 = vrot.slane %v2574, 3
        %v2683 = vrot.slane %v2575, 3
        %v2684 = vsel %vm1116, %v2682, %v2683
        %v2685 = vrot.slane %v2576, 3
        %v2686 = vsel %vm1116, %v2683, %v2685
        %v2687 = vrot.slane %v2577, 3
        %v2688 = vrot.slane %v2578, 3
        %v2689 = vsel %vm1116, %v2687, %v2688
        %v2690 = vrot.slane %v2579, 3
        %v2691 = vsel %vm1116, %v2688, %v2690
        %v2692 = vrot.slane %v2580, 3
        %v2693 = vrot.slane %v2581, 3
        %v2694 = vsel %vm1116, %v2692, %v2693
        %v2695 = vrot.slane %v2582, 3
        %v2696 = vsel %vm1116, %v2693, %v2695
        %v2697 = vrot.slane %v2583, 3
        %v2698 = vrot.slane %v2584, 3
        %v2699 = vsel %vm1116, %v2697, %v2698
        %v2700 = vrot.slane %v2585, 3
        %v2701 = vsel %vm1116, %v2698, %v2700
        %v2702 = vrot.slane %v2586, 3
        %v2703 = vrot.slane %v2587, 3
        %v2704 = vsel %vm1116, %v2702, %v2703
        %v2705 = vrot.slane %v2588, 3
        %v2706 = vsel %vm1116, %v2703, %v2705
        %v2707 = vrot.slane %v2589, 3
        %v2708 = vrot.slane %v2590, 3
        %v2709 = vsel %vm1116, %v2707, %v2708
        %v2710 = vrot.slane %v2591, 3
        %v2711 = vsel %vm1116, %v2708, %v2710
        %v2712 = vrot.slane %v2592, 3
        %v2713 = vrot.slane %v2593, 3
        %v2714 = vsel %vm1116, %v2712, %v2713
        %v2715 = vrot.slane %v2594, 3
        %v2716 = vsel %vm1116, %v2713, %v2715
        %v2717 = vrot.slane %v2595, 3
        %v2718 = vrot.slane %v2596, 3
        %v2719 = vsel %vm1116, %v2717, %v2718
        %v2720 = vrot.slane %v2597, 3
        %v2721 = vsel %vm1116, %v2718, %v2720
        %v2722 = vrot.slane %v2598, 3
        %v2723 = vrot.slane %v2599, 3
        %v2724 = vsel %vm1116, %v2722, %v2723
        %v2725 = vrot.slane %v2600, 3
        %v2726 = vsel %vm1116, %v2723, %v2725
        %v2727 = vrot.slane %v2601, 3
        %v2728 = vrot.slane %v2602, 3
        %v2729 = vsel %vm1116, %v2727, %v2728
        %v2730 = vrot.slane %v2603, 3
        %v2731 = vsel %vm1116, %v2728, %v2730
        %v2764 = vadd.f32 %v2520, %v2654
        %v2765 = vadd.f32 %v2521, %v2656
        %v2766 = vadd.f32 %v2522, %v2659
        %v2767 = vadd.f32 %v2523, %v2661
        %v2768 = vadd.f32 %v2524, %v2664
        %v2769 = vadd.f32 %v2525, %v2666
        %v2770 = vadd.f32 %v2526, %v2669
        %v2771 = vadd.f32 %v2527, %v2671
        %v2772 = vadd.f32 %v2528, %v2674
        %v2773 = vadd.f32 %v2529, %v2676
        %v2774 = vadd.f32 %v2530, %v2679
        %v2775 = vadd.f32 %v2531, %v2681
        %v2776 = vadd.f32 %v2532, %v2684
        %v2777 = vadd.f32 %v2533, %v2686
        %v2778 = vadd.f32 %v2534, %v2689
        %v2779 = vadd.f32 %v2535, %v2691
        %v2780 = vadd.f32 %v2536, %v2694
        %v2781 = vadd.f32 %v2537, %v2696
        %v2782 = vadd.f32 %v2538, %v2699
        %v2783 = vadd.f32 %v2539, %v2701
        %v2784 = vadd.f32 %v2540, %v2704
        %v2785 = vadd.f32 %v2541, %v2706
        %v2786 = vadd.f32 %v2542, %v2709
        %v2787 = vadd.f32 %v2543, %v2711
        %v2788 = vadd.f32 %v2544, %v2714
        %v2789 = vadd.f32 %v2545, %v2716
        %v2790 = vadd.f32 %v2546, %v2719
        %v2791 = vadd.f32 %v2547, %v2721
        %v2792 = vadd.f32 %v2548, %v2724
        %v2793 = vadd.f32 %v2549, %v2726
        %v2794 = vadd.f32 %v2550, %v2729
        %v2795 = vadd.f32 %v2551, %v2731
        %v2796 = vlaneseq
        %v2797 = vshrl.u32 %v2796, 7
        %v2798 = vsub.s32 4, %v2797
        %v2799 = vrot.slane %v452, %v2798
        %v2800 = vmul.f32 %v388, %v2799
        %v2801 = vmul.f32 %v389, %v2799
        %v2802 = vmul.f32 %v390, %v2799
        %v2803 = vmul.f32 %v391, %v2799
        %v2804 = vmul.f32 %v392, %v2799
        %v2805 = vmul.f32 %v393, %v2799
        %v2806 = vmul.f32 %v394, %v2799
        %v2807 = vmul.f32 %v395, %v2799
        %v2808 = vmul.f32 %v396, %v2799
        %v2809 = vmul.f32 %v397, %v2799
        %v2810 = vmul.f32 %v398, %v2799
        %v2811 = vmul.f32 %v399, %v2799
        %v2812 = vmul.f32 %v400, %v2799
        %v2813 = vmul.f32 %v401, %v2799
        %v2814 = vmul.f32 %v402, %v2799
        %v2815 = vmul.f32 %v403, %v2799
        %v2816 = vmul.f32 %v404, %v2799
        %v2817 = vmul.f32 %v405, %v2799
        %v2818 = vmul.f32 %v406, %v2799
        %v2819 = vmul.f32 %v407, %v2799
        %v2820 = vmul.f32 %v408, %v2799
        %v2821 = vmul.f32 %v409, %v2799
        %v2822 = vmul.f32 %v410, %v2799
        %v2823 = vmul.f32 %v411, %v2799
        %v2824 = vmul.f32 %v412, %v2799
        %v2825 = vmul.f32 %v413, %v2799
        %v2826 = vmul.f32 %v414, %v2799
        %v2827 = vmul.f32 %v415, %v2799
        %v2828 = vmul.f32 %v416, %v2799
        %v2829 = vmul.f32 %v417, %v2799
        %v2830 = vmul.f32 %v418, %v2799
        %v2831 = vmul.f32 %v419, %v2799
        %v2832 = vmul.f32 %v420, %v2799
        %v2833 = vmul.f32 %v421, %v2799
        %v2834 = vmul.f32 %v422, %v2799
        %v2835 = vmul.f32 %v423, %v2799
        %v2836 = vmul.f32 %v424, %v2799
        %v2837 = vmul.f32 %v425, %v2799
        %v2838 = vmul.f32 %v426, %v2799
        %v2839 = vmul.f32 %v427, %v2799
        %v2840 = vmul.f32 %v428, %v2799
        %v2841 = vmul.f32 %v429, %v2799
        %v2842 = vmul.f32 %v430, %v2799
        %v2843 = vmul.f32 %v431, %v2799
        %v2844 = vmul.f32 %v432, %v2799
        %v2845 = vmul.f32 %v433, %v2799
        %v2846 = vmul.f32 %v434, %v2799
        %v2847 = vmul.f32 %v435, %v2799
        %v2896 = vrot.slane %v2800, 4
        %v2897 = vrot.slane %v2801, 4
        %v2898 = vsel %vm1361, %v2896, %v2897
        %v2899 = vrot.slane %v2802, 4
        %v2900 = vsel %vm1361, %v2897, %v2899
        %v2901 = vrot.slane %v2803, 4
        %v2902 = vrot.slane %v2804, 4
        %v2903 = vsel %vm1361, %v2901, %v2902
        %v2904 = vrot.slane %v2805, 4
        %v2905 = vsel %vm1361, %v2902, %v2904
        %v2906 = vrot.slane %v2806, 4
        %v2907 = vrot.slane %v2807, 4
        %v2908 = vsel %vm1361, %v2906, %v2907
        %v2909 = vrot.slane %v2808, 4
        %v2910 = vsel %vm1361, %v2907, %v2909
        %v2911 = vrot.slane %v2809, 4
        %v2912 = vrot.slane %v2810, 4
        %v2913 = vsel %vm1361, %v2911, %v2912
        %v2914 = vrot.slane %v2811, 4
        %v2915 = vsel %vm1361, %v2912, %v2914
        %v2916 = vrot.slane %v2812, 4
        %v2917 = vrot.slane %v2813, 4
        %v2918 = vsel %vm1361, %v2916, %v2917
        %v2919 = vrot.slane %v2814, 4
        %v2920 = vsel %vm1361, %v2917, %v2919
        %v2921 = vrot.slane %v2815, 4
        %v2922 = vrot.slane %v2816, 4
        %v2923 = vsel %vm1361, %v2921, %v2922
        %v2924 = vrot.slane %v2817, 4
        %v2925 = vsel %vm1361, %v2922, %v2924
        %v2926 = vrot.slane %v2818, 4
        %v2927 = vrot.slane %v2819, 4
        %v2928 = vsel %vm1361, %v2926, %v2927
        %v2929 = vrot.slane %v2820, 4
        %v2930 = vsel %vm1361, %v2927, %v2929
        %v2931 = vrot.slane %v2821, 4
        %v2932 = vrot.slane %v2822, 4
        %v2933 = vsel %vm1361, %v2931, %v2932
        %v2934 = vrot.slane %v2823, 4
        %v2935 = vsel %vm1361, %v2932, %v2934
        %v2936 = vrot.slane %v2824, 4
        %v2937 = vrot.slane %v2825, 4
        %v2938 = vsel %vm1361, %v2936, %v2937
        %v2939 = vrot.slane %v2826, 4
        %v2940 = vsel %vm1361, %v2937, %v2939
        %v2941 = vrot.slane %v2827, 4
        %v2942 = vrot.slane %v2828, 4
        %v2943 = vsel %vm1361, %v2941, %v2942
        %v2944 = vrot.slane %v2829, 4
        %v2945 = vsel %vm1361, %v2942, %v2944
        %v2946 = vrot.slane %v2830, 4
        %v2947 = vrot.slane %v2831, 4
        %v2948 = vsel %vm1361, %v2946, %v2947
        %v2949 = vrot.slane %v2832, 4
        %v2950 = vsel %vm1361, %v2947, %v2949
        %v2951 = vrot.slane %v2833, 4
        %v2952 = vrot.slane %v2834, 4
        %v2953 = vsel %vm1361, %v2951, %v2952
        %v2954 = vrot.slane %v2835, 4
        %v2955 = vsel %vm1361, %v2952, %v2954
        %v2956 = vrot.slane %v2836, 4
        %v2957 = vrot.slane %v2837, 4
        %v2958 = vsel %vm1361, %v2956, %v2957
        %v2959 = vrot.slane %v2838, 4
        %v2960 = vsel %vm1361, %v2957, %v2959
        %v2961 = vrot.slane %v2839, 4
        %v2962 = vrot.slane %v2840, 4
        %v2963 = vsel %vm1361, %v2961, %v2962
        %v2964 = vrot.slane %v2841, 4
        %v2965 = vsel %vm1361, %v2962, %v2964
        %v2966 = vrot.slane %v2842, 4
        %v2967 = vrot.slane %v2843, 4
        %v2968 = vsel %vm1361, %v2966, %v2967
        %v2969 = vrot.slane %v2844, 4
        %v2970 = vsel %vm1361, %v2967, %v2969
        %v2971 = vrot.slane %v2845, 4
        %v2972 = vrot.slane %v2846, 4
        %v2973 = vsel %vm1361, %v2971, %v2972
        %v2974 = vrot.slane %v2847, 4
        %v2975 = vsel %vm1361, %v2972, %v2974
        %v3008 = vadd.f32 %v2764, %v2898
        %v3009 = vadd.f32 %v2765, %v2900
        %v3010 = vadd.f32 %v2766, %v2903
        %v3011 = vadd.f32 %v2767, %v2905
        %v3012 = vadd.f32 %v2768, %v2908
        %v3013 = vadd.f32 %v2769, %v2910
        %v3014 = vadd.f32 %v2770, %v2913
        %v3015 = vadd.f32 %v2771, %v2915
        %v3016 = vadd.f32 %v2772, %v2918
        %v3017 = vadd.f32 %v2773, %v2920
        %v3018 = vadd.f32 %v2774, %v2923
        %v3019 = vadd.f32 %v2775, %v2925
        %v3020 = vadd.f32 %v2776, %v2928
        %v3021 = vadd.f32 %v2777, %v2930
        %v3022 = vadd.f32 %v2778, %v2933
        %v3023 = vadd.f32 %v2779, %v2935
        %v3024 = vadd.f32 %v2780, %v2938
        %v3025 = vadd.f32 %v2781, %v2940
        %v3026 = vadd.f32 %v2782, %v2943
        %v3027 = vadd.f32 %v2783, %v2945
        %v3028 = vadd.f32 %v2784, %v2948
        %v3029 = vadd.f32 %v2785, %v2950
        %v3030 = vadd.f32 %v2786, %v2953
        %v3031 = vadd.f32 %v2787, %v2955
        %v3032 = vadd.f32 %v2788, %v2958
        %v3033 = vadd.f32 %v2789, %v2960
        %v3034 = vadd.f32 %v2790, %v2963
        %v3035 = vadd.f32 %v2791, %v2965
        %v3036 = vadd.f32 %v2792, %v2968
        %v3037 = vadd.f32 %v2793, %v2970
        %v3038 = vadd.f32 %v2794, %v2973
        %v3039 = vadd.f32 %v2795, %v2975
        %v3040 = vlaneseq
        %v3041 = vshrl.u32 %v3040, 7
        %v3042 = vsub.s32 5, %v3041
        %v3043 = vrot.slane %v452, %v3042
        %v3044 = vmul.f32 %v388, %v3043
        %v3045 = vmul.f32 %v389, %v3043
        %v3046 = vmul.f32 %v390, %v3043
        %v3047 = vmul.f32 %v391, %v3043
        %v3048 = vmul.f32 %v392, %v3043
        %v3049 = vmul.f32 %v393, %v3043
        %v3050 = vmul.f32 %v394, %v3043
        %v3051 = vmul.f32 %v395, %v3043
        %v3052 = vmul.f32 %v396, %v3043
        %v3053 = vmul.f32 %v397, %v3043
        %v3054 = vmul.f32 %v398, %v3043
        %v3055 = vmul.f32 %v399, %v3043
        %v3056 = vmul.f32 %v400, %v3043
        %v3057 = vmul.f32 %v401, %v3043
        %v3058 = vmul.f32 %v402, %v3043
        %v3059 = vmul.f32 %v403, %v3043
        %v3060 = vmul.f32 %v404, %v3043
        %v3061 = vmul.f32 %v405, %v3043
        %v3062 = vmul.f32 %v406, %v3043
        %v3063 = vmul.f32 %v407, %v3043
        %v3064 = vmul.f32 %v408, %v3043
        %v3065 = vmul.f32 %v409, %v3043
        %v3066 = vmul.f32 %v410, %v3043
        %v3067 = vmul.f32 %v411, %v3043
        %v3068 = vmul.f32 %v412, %v3043
        %v3069 = vmul.f32 %v413, %v3043
        %v3070 = vmul.f32 %v414, %v3043
        %v3071 = vmul.f32 %v415, %v3043
        %v3072 = vmul.f32 %v416, %v3043
        %v3073 = vmul.f32 %v417, %v3043
        %v3074 = vmul.f32 %v418, %v3043
        %v3075 = vmul.f32 %v419, %v3043
        %v3076 = vmul.f32 %v420, %v3043
        %v3077 = vmul.f32 %v421, %v3043
        %v3078 = vmul.f32 %v422, %v3043
        %v3079 = vmul.f32 %v423, %v3043
        %v3080 = vmul.f32 %v424, %v3043
        %v3081 = vmul.f32 %v425, %v3043
        %v3082 = vmul.f32 %v426, %v3043
        %v3083 = vmul.f32 %v427, %v3043
        %v3084 = vmul.f32 %v428, %v3043
        %v3085 = vmul.f32 %v429, %v3043
        %v3086 = vmul.f32 %v430, %v3043
        %v3087 = vmul.f32 %v431, %v3043
        %v3088 = vmul.f32 %v432, %v3043
        %v3089 = vmul.f32 %v433, %v3043
        %v3090 = vmul.f32 %v434, %v3043
        %v3091 = vmul.f32 %v435, %v3043
        %v3140 = vrot.slane %v3044, 5
        %v3141 = vrot.slane %v3045, 5
        %v3142 = vsel %vm1606, %v3140, %v3141
        %v3143 = vrot.slane %v3046, 5
        %v3144 = vsel %vm1606, %v3141, %v3143
        %v3145 = vrot.slane %v3047, 5
        %v3146 = vrot.slane %v3048, 5
        %v3147 = vsel %vm1606, %v3145, %v3146
        %v3148 = vrot.slane %v3049, 5
        %v3149 = vsel %vm1606, %v3146, %v3148
        %v3150 = vrot.slane %v3050, 5
        %v3151 = vrot.slane %v3051, 5
        %v3152 = vsel %vm1606, %v3150, %v3151
        %v3153 = vrot.slane %v3052, 5
        %v3154 = vsel %vm1606, %v3151, %v3153
        %v3155 = vrot.slane %v3053, 5
        %v3156 = vrot.slane %v3054, 5
        %v3157 = vsel %vm1606, %v3155, %v3156
        %v3158 = vrot.slane %v3055, 5
        %v3159 = vsel %vm1606, %v3156, %v3158
        %v3160 = vrot.slane %v3056, 5
        %v3161 = vrot.slane %v3057, 5
        %v3162 = vsel %vm1606, %v3160, %v3161
        %v3163 = vrot.slane %v3058, 5
        %v3164 = vsel %vm1606, %v3161, %v3163
        %v3165 = vrot.slane %v3059, 5
        %v3166 = vrot.slane %v3060, 5
        %v3167 = vsel %vm1606, %v3165, %v3166
        %v3168 = vrot.slane %v3061, 5
        %v3169 = vsel %vm1606, %v3166, %v3168
        %v3170 = vrot.slane %v3062, 5
        %v3171 = vrot.slane %v3063, 5
        %v3172 = vsel %vm1606, %v3170, %v3171
        %v3173 = vrot.slane %v3064, 5
        %v3174 = vsel %vm1606, %v3171, %v3173
        %v3175 = vrot.slane %v3065, 5
        %v3176 = vrot.slane %v3066, 5
        %v3177 = vsel %vm1606, %v3175, %v3176
        %v3178 = vrot.slane %v3067, 5
        %v3179 = vsel %vm1606, %v3176, %v3178
        %v3180 = vrot.slane %v3068, 5
        %v3181 = vrot.slane %v3069, 5
        %v3182 = vsel %vm1606, %v3180, %v3181
        %v3183 = vrot.slane %v3070, 5
        %v3184 = vsel %vm1606, %v3181, %v3183
        %v3185 = vrot.slane %v3071, 5
        %v3186 = vrot.slane %v3072, 5
        %v3187 = vsel %vm1606, %v3185, %v3186
        %v3188 = vrot.slane %v3073, 5
        %v3189 = vsel %vm1606, %v3186, %v3188
        %v3190 = vrot.slane %v3074, 5
        %v3191 = vrot.slane %v3075, 5
        %v3192 = vsel %vm1606, %v3190, %v3191
        %v3193 = vrot.slane %v3076, 5
        %v3194 = vsel %vm1606, %v3191, %v3193
        %v3195 = vrot.slane %v3077, 5
        %v3196 = vrot.slane %v3078, 5
        %v3197 = vsel %vm1606, %v3195, %v3196
        %v3198 = vrot.slane %v3079, 5
        %v3199 = vsel %vm1606, %v3196, %v3198
        %v3200 = vrot.slane %v3080, 5
        %v3201 = vrot.slane %v3081, 5
        %v3202 = vsel %vm1606, %v3200, %v3201
        %v3203 = vrot.slane %v3082, 5
        %v3204 = vsel %vm1606, %v3201, %v3203
        %v3205 = vrot.slane %v3083, 5
        %v3206 = vrot.slane %v3084, 5
        %v3207 = vsel %vm1606, %v3205, %v3206
        %v3208 = vrot.slane %v3085, 5
        %v3209 = vsel %vm1606, %v3206, %v3208
        %v3210 = vrot.slane %v3086, 5
        %v3211 = vrot.slane %v3087, 5
        %v3212 = vsel %vm1606, %v3210, %v3211
        %v3213 = vrot.slane %v3088, 5
        %v3214 = vsel %vm1606, %v3211, %v3213
        %v3215 = vrot.slane %v3089, 5
        %v3216 = vrot.slane %v3090, 5
        %v3217 = vsel %vm1606, %v3215, %v3216
        %v3218 = vrot.slane %v3091, 5
        %v3219 = vsel %vm1606, %v3216, %v3218
        %v3252 = vadd.f32 %v3008, %v3142
        %v3253 = vadd.f32 %v3009, %v3144
        %v3254 = vadd.f32 %v3010, %v3147
        %v3255 = vadd.f32 %v3011, %v3149
        %v3256 = vadd.f32 %v3012, %v3152
        %v3257 = vadd.f32 %v3013, %v3154
        %v3258 = vadd.f32 %v3014, %v3157
        %v3259 = vadd.f32 %v3015, %v3159
        %v3260 = vadd.f32 %v3016, %v3162
        %v3261 = vadd.f32 %v3017, %v3164
        %v3262 = vadd.f32 %v3018, %v3167
        %v3263 = vadd.f32 %v3019, %v3169
        %v3264 = vadd.f32 %v3020, %v3172
        %v3265 = vadd.f32 %v3021, %v3174
        %v3266 = vadd.f32 %v3022, %v3177
        %v3267 = vadd.f32 %v3023, %v3179
        %v3268 = vadd.f32 %v3024, %v3182
        %v3269 = vadd.f32 %v3025, %v3184
        %v3270 = vadd.f32 %v3026, %v3187
        %v3271 = vadd.f32 %v3027, %v3189
        %v3272 = vadd.f32 %v3028, %v3192
        %v3273 = vadd.f32 %v3029, %v3194
        %v3274 = vadd.f32 %v3030, %v3197
        %v3275 = vadd.f32 %v3031, %v3199
        %v3276 = vadd.f32 %v3032, %v3202
        %v3277 = vadd.f32 %v3033, %v3204
        %v3278 = vadd.f32 %v3034, %v3207
        %v3279 = vadd.f32 %v3035, %v3209
        %v3280 = vadd.f32 %v3036, %v3212
        %v3281 = vadd.f32 %v3037, %v3214
        %v3282 = vadd.f32 %v3038, %v3217
        %v3283 = vadd.f32 %v3039, %v3219
        %v3284 = vlaneseq
        %v3285 = vshrl.u32 %v3284, 7
        %v3286 = vsub.s32 6, %v3285
        %v3287 = vrot.slane %v452, %v3286
        %v3288 = vmul.f32 %v388, %v3287
        %v3289 = vmul.f32 %v389, %v3287
        %v3290 = vmul.f32 %v390, %v3287
        %v3291 = vmul.f32 %v391, %v3287
        %v3292 = vmul.f32 %v392, %v3287
        %v3293 = vmul.f32 %v393, %v3287
        %v3294 = vmul.f32 %v394, %v3287
        %v3295 = vmul.f32 %v395, %v3287
        %v3296 = vmul.f32 %v396, %v3287
        %v3297 = vmul.f32 %v397, %v3287
        %v3298 = vmul.f32 %v398, %v3287
        %v3299 = vmul.f32 %v399, %v3287
        %v3300 = vmul.f32 %v400, %v3287
        %v3301 = vmul.f32 %v401, %v3287
        %v3302 = vmul.f32 %v402, %v3287
        %v3303 = vmul.f32 %v403, %v3287
        %v3304 = vmul.f32 %v404, %v3287
        %v3305 = vmul.f32 %v405, %v3287
        %v3306 = vmul.f32 %v406, %v3287
        %v3307 = vmul.f32 %v407, %v3287
        %v3308 = vmul.f32 %v408, %v3287
        %v3309 = vmul.f32 %v409, %v3287
        %v3310 = vmul.f32 %v410, %v3287
        %v3311 = vmul.f32 %v411, %v3287
        %v3312 = vmul.f32 %v412, %v3287
        %v3313 = vmul.f32 %v413, %v3287
        %v3314 = vmul.f32 %v414, %v3287
        %v3315 = vmul.f32 %v415, %v3287
        %v3316 = vmul.f32 %v416, %v3287
        %v3317 = vmul.f32 %v417, %v3287
        %v3318 = vmul.f32 %v418, %v3287
        %v3319 = vmul.f32 %v419, %v3287
        %v3320 = vmul.f32 %v420, %v3287
        %v3321 = vmul.f32 %v421, %v3287
        %v3322 = vmul.f32 %v422, %v3287
        %v3323 = vmul.f32 %v423, %v3287
        %v3324 = vmul.f32 %v424, %v3287
        %v3325 = vmul.f32 %v425, %v3287
        %v3326 = vmul.f32 %v426, %v3287
        %v3327 = vmul.f32 %v427, %v3287
        %v3328 = vmul.f32 %v428, %v3287
        %v3329 = vmul.f32 %v429, %v3287
        %v3330 = vmul.f32 %v430, %v3287
        %v3331 = vmul.f32 %v431, %v3287
        %v3332 = vmul.f32 %v432, %v3287
        %v3333 = vmul.f32 %v433, %v3287
        %v3334 = vmul.f32 %v434, %v3287
        %v3335 = vmul.f32 %v435, %v3287
        %v3384 = vrot.slane %v3288, 6
        %v3385 = vrot.slane %v3289, 6
        %v3386 = vsel %vm1851, %v3384, %v3385
        %v3387 = vrot.slane %v3290, 6
        %v3388 = vsel %vm1851, %v3385, %v3387
        %v3389 = vrot.slane %v3291, 6
        %v3390 = vrot.slane %v3292, 6
        %v3391 = vsel %vm1851, %v3389, %v3390
        %v3392 = vrot.slane %v3293, 6
        %v3393 = vsel %vm1851, %v3390, %v3392
        %v3394 = vrot.slane %v3294, 6
        %v3395 = vrot.slane %v3295, 6
        %v3396 = vsel %vm1851, %v3394, %v3395
        %v3397 = vrot.slane %v3296, 6
        %v3398 = vsel %vm1851, %v3395, %v3397
        %v3399 = vrot.slane %v3297, 6
        %v3400 = vrot.slane %v3298, 6
        %v3401 = vsel %vm1851, %v3399, %v3400
        %v3402 = vrot.slane %v3299, 6
        %v3403 = vsel %vm1851, %v3400, %v3402
        %v3404 = vrot.slane %v3300, 6
        %v3405 = vrot.slane %v3301, 6
        %v3406 = vsel %vm1851, %v3404, %v3405
        %v3407 = vrot.slane %v3302, 6
        %v3408 = vsel %vm1851, %v3405, %v3407
        %v3409 = vrot.slane %v3303, 6
        %v3410 = vrot.slane %v3304, 6
        %v3411 = vsel %vm1851, %v3409, %v3410
        %v3412 = vrot.slane %v3305, 6
        %v3413 = vsel %vm1851, %v3410, %v3412
        %v3414 = vrot.slane %v3306, 6
        %v3415 = vrot.slane %v3307, 6
        %v3416 = vsel %vm1851, %v3414, %v3415
        %v3417 = vrot.slane %v3308, 6
        %v3418 = vsel %vm1851, %v3415, %v3417
        %v3419 = vrot.slane %v3309, 6
        %v3420 = vrot.slane %v3310, 6
        %v3421 = vsel %vm1851, %v3419, %v3420
        %v3422 = vrot.slane %v3311, 6
        %v3423 = vsel %vm1851, %v3420, %v3422
        %v3424 = vrot.slane %v3312, 6
        %v3425 = vrot.slane %v3313, 6
        %v3426 = vsel %vm1851, %v3424, %v3425
        %v3427 = vrot.slane %v3314, 6
        %v3428 = vsel %vm1851, %v3425, %v3427
        %v3429 = vrot.slane %v3315, 6
        %v3430 = vrot.slane %v3316, 6
        %v3431 = vsel %vm1851, %v3429, %v3430
        %v3432 = vrot.slane %v3317, 6
        %v3433 = vsel %vm1851, %v3430, %v3432
        %v3434 = vrot.slane %v3318, 6
        %v3435 = vrot.slane %v3319, 6
        %v3436 = vsel %vm1851, %v3434, %v3435
        %v3437 = vrot.slane %v3320, 6
        %v3438 = vsel %vm1851, %v3435, %v3437
        %v3439 = vrot.slane %v3321, 6
        %v3440 = vrot.slane %v3322, 6
        %v3441 = vsel %vm1851, %v3439, %v3440
        %v3442 = vrot.slane %v3323, 6
        %v3443 = vsel %vm1851, %v3440, %v3442
        %v3444 = vrot.slane %v3324, 6
        %v3445 = vrot.slane %v3325, 6
        %v3446 = vsel %vm1851, %v3444, %v3445
        %v3447 = vrot.slane %v3326, 6
        %v3448 = vsel %vm1851, %v3445, %v3447
        %v3449 = vrot.slane %v3327, 6
        %v3450 = vrot.slane %v3328, 6
        %v3451 = vsel %vm1851, %v3449, %v3450
        %v3452 = vrot.slane %v3329, 6
        %v3453 = vsel %vm1851, %v3450, %v3452
        %v3454 = vrot.slane %v3330, 6
        %v3455 = vrot.slane %v3331, 6
        %v3456 = vsel %vm1851, %v3454, %v3455
        %v3457 = vrot.slane %v3332, 6
        %v3458 = vsel %vm1851, %v3455, %v3457
        %v3459 = vrot.slane %v3333, 6
        %v3460 = vrot.slane %v3334, 6
        %v3461 = vsel %vm1851, %v3459, %v3460
        %v3462 = vrot.slane %v3335, 6
        %v3463 = vsel %vm1851, %v3460, %v3462
        %v3496 = vadd.f32 %v3252, %v3386
        %v3497 = vadd.f32 %v3253, %v3388
        %v3498 = vadd.f32 %v3254, %v3391
        %v3499 = vadd.f32 %v3255, %v3393
        %v3500 = vadd.f32 %v3256, %v3396
        %v3501 = vadd.f32 %v3257, %v3398
        %v3502 = vadd.f32 %v3258, %v3401
        %v3503 = vadd.f32 %v3259, %v3403
        %v3504 = vadd.f32 %v3260, %v3406
        %v3505 = vadd.f32 %v3261, %v3408
        %v3506 = vadd.f32 %v3262, %v3411
        %v3507 = vadd.f32 %v3263, %v3413
        %v3508 = vadd.f32 %v3264, %v3416
        %v3509 = vadd.f32 %v3265, %v3418
        %v3510 = vadd.f32 %v3266, %v3421
        %v3511 = vadd.f32 %v3267, %v3423
        %v3512 = vadd.f32 %v3268, %v3426
        %v3513 = vadd.f32 %v3269, %v3428
        %v3514 = vadd.f32 %v3270, %v3431
        %v3515 = vadd.f32 %v3271, %v3433
        %v3516 = vadd.f32 %v3272, %v3436
        %v3517 = vadd.f32 %v3273, %v3438
        %v3518 = vadd.f32 %v3274, %v3441
        %v3519 = vadd.f32 %v3275, %v3443
        %v3520 = vadd.f32 %v3276, %v3446
        %v3521 = vadd.f32 %v3277, %v3448
        %v3522 = vadd.f32 %v3278, %v3451
        %v3523 = vadd.f32 %v3279, %v3453
        %v3524 = vadd.f32 %v3280, %v3456
        %v3525 = vadd.f32 %v3281, %v3458
        %v3526 = vadd.f32 %v3282, %v3461
        %v3527 = vadd.f32 %v3283, %v3463
        %v3528 = vlaneseq
        %v3529 = vshrl.u32 %v3528, 7
        %v3530 = vsub.s32 0, %v3529
        %v3531 = vrot.slane %v453, %v3530
        %v3532 = vmul.f32 %v391, %v3531
        %v3533 = vmul.f32 %v392, %v3531
        %v3534 = vmul.f32 %v394, %v3531
        %v3535 = vmul.f32 %v395, %v3531
        %v3536 = vmul.f32 %v397, %v3531
        %v3537 = vmul.f32 %v398, %v3531
        %v3538 = vmul.f32 %v400, %v3531
        %v3539 = vmul.f32 %v401, %v3531
        %v3540 = vmul.f32 %v403, %v3531
        %v3541 = vmul.f32 %v404, %v3531
        %v3542 = vmul.f32 %v406, %v3531
        %v3543 = vmul.f32 %v407, %v3531
        %v3544 = vmul.f32 %v409, %v3531
        %v3545 = vmul.f32 %v410, %v3531
        %v3546 = vmul.f32 %v412, %v3531
        %v3547 = vmul.f32 %v413, %v3531
        %v3548 = vmul.f32 %v415, %v3531
        %v3549 = vmul.f32 %v416, %v3531
        %v3550 = vmul.f32 %v418, %v3531
        %v3551 = vmul.f32 %v419, %v3531
        %v3552 = vmul.f32 %v421, %v3531
        %v3553 = vmul.f32 %v422, %v3531
        %v3554 = vmul.f32 %v424, %v3531
        %v3555 = vmul.f32 %v425, %v3531
        %v3556 = vmul.f32 %v427, %v3531
        %v3557 = vmul.f32 %v428, %v3531
        %v3558 = vmul.f32 %v430, %v3531
        %v3559 = vmul.f32 %v431, %v3531
        %v3560 = vmul.f32 %v433, %v3531
        %v3561 = vmul.f32 %v434, %v3531
        %v3562 = vmul.f32 %v436, %v3531
        %v3563 = vmul.f32 %v437, %v3531
        %v3564 = vadd.f32 %v3496, %v3532
        %v3565 = vadd.f32 %v3497, %v3533
        %v3566 = vadd.f32 %v3498, %v3534
        %v3567 = vadd.f32 %v3499, %v3535
        %v3568 = vadd.f32 %v3500, %v3536
        %v3569 = vadd.f32 %v3501, %v3537
        %v3570 = vadd.f32 %v3502, %v3538
        %v3571 = vadd.f32 %v3503, %v3539
        %v3572 = vadd.f32 %v3504, %v3540
        %v3573 = vadd.f32 %v3505, %v3541
        %v3574 = vadd.f32 %v3506, %v3542
        %v3575 = vadd.f32 %v3507, %v3543
        %v3576 = vadd.f32 %v3508, %v3544
        %v3577 = vadd.f32 %v3509, %v3545
        %v3578 = vadd.f32 %v3510, %v3546
        %v3579 = vadd.f32 %v3511, %v3547
        %v3580 = vadd.f32 %v3512, %v3548
        %v3581 = vadd.f32 %v3513, %v3549
        %v3582 = vadd.f32 %v3514, %v3550
        %v3583 = vadd.f32 %v3515, %v3551
        %v3584 = vadd.f32 %v3516, %v3552
        %v3585 = vadd.f32 %v3517, %v3553
        %v3586 = vadd.f32 %v3518, %v3554
        %v3587 = vadd.f32 %v3519, %v3555
        %v3588 = vadd.f32 %v3520, %v3556
        %v3589 = vadd.f32 %v3521, %v3557
        %v3590 = vadd.f32 %v3522, %v3558
        %v3591 = vadd.f32 %v3523, %v3559
        %v3592 = vadd.f32 %v3524, %v3560
        %v3593 = vadd.f32 %v3525, %v3561
        %v3594 = vadd.f32 %v3526, %v3562
        %v3595 = vadd.f32 %v3527, %v3563
        %v3596 = vlaneseq
        %v3597 = vshrl.u32 %v3596, 7
        %v3598 = vsub.s32 1, %v3597
        %v3599 = vrot.slane %v453, %v3598
        %v3600 = vmul.f32 %v391, %v3599
        %v3601 = vmul.f32 %v392, %v3599
        %v3602 = vmul.f32 %v393, %v3599
        %v3603 = vmul.f32 %v394, %v3599
        %v3604 = vmul.f32 %v395, %v3599
        %v3605 = vmul.f32 %v396, %v3599
        %v3606 = vmul.f32 %v397, %v3599
        %v3607 = vmul.f32 %v398, %v3599
        %v3608 = vmul.f32 %v399, %v3599
        %v3609 = vmul.f32 %v400, %v3599
        %v3610 = vmul.f32 %v401, %v3599
        %v3611 = vmul.f32 %v402, %v3599
        %v3612 = vmul.f32 %v403, %v3599
        %v3613 = vmul.f32 %v404, %v3599
        %v3614 = vmul.f32 %v405, %v3599
        %v3615 = vmul.f32 %v406, %v3599
        %v3616 = vmul.f32 %v407, %v3599
        %v3617 = vmul.f32 %v408, %v3599
        %v3618 = vmul.f32 %v409, %v3599
        %v3619 = vmul.f32 %v410, %v3599
        %v3620 = vmul.f32 %v411, %v3599
        %v3621 = vmul.f32 %v412, %v3599
        %v3622 = vmul.f32 %v413, %v3599
        %v3623 = vmul.f32 %v414, %v3599
        %v3624 = vmul.f32 %v415, %v3599
        %v3625 = vmul.f32 %v416, %v3599
        %v3626 = vmul.f32 %v417, %v3599
        %v3627 = vmul.f32 %v418, %v3599
        %v3628 = vmul.f32 %v419, %v3599
        %v3629 = vmul.f32 %v420, %v3599
        %v3630 = vmul.f32 %v421, %v3599
        %v3631 = vmul.f32 %v422, %v3599
        %v3632 = vmul.f32 %v423, %v3599
        %v3633 = vmul.f32 %v424, %v3599
        %v3634 = vmul.f32 %v425, %v3599
        %v3635 = vmul.f32 %v426, %v3599
        %v3636 = vmul.f32 %v427, %v3599
        %v3637 = vmul.f32 %v428, %v3599
        %v3638 = vmul.f32 %v429, %v3599
        %v3639 = vmul.f32 %v430, %v3599
        %v3640 = vmul.f32 %v431, %v3599
        %v3641 = vmul.f32 %v432, %v3599
        %v3642 = vmul.f32 %v433, %v3599
        %v3643 = vmul.f32 %v434, %v3599
        %v3644 = vmul.f32 %v435, %v3599
        %v3645 = vmul.f32 %v436, %v3599
        %v3646 = vmul.f32 %v437, %v3599
        %v3647 = vmul.f32 %v438, %v3599
        %v3696 = vrot.slane %v3600, 1
        %v3697 = vrot.slane %v3601, 1
        %v3698 = vsel %vm626, %v3696, %v3697
        %v3699 = vrot.slane %v3602, 1
        %v3700 = vsel %vm626, %v3697, %v3699
        %v3701 = vrot.slane %v3603, 1
        %v3702 = vrot.slane %v3604, 1
        %v3703 = vsel %vm626, %v3701, %v3702
        %v3704 = vrot.slane %v3605, 1
        %v3705 = vsel %vm626, %v3702, %v3704
        %v3706 = vrot.slane %v3606, 1
        %v3707 = vrot.slane %v3607, 1
        %v3708 = vsel %vm626, %v3706, %v3707
        %v3709 = vrot.slane %v3608, 1
        %v3710 = vsel %vm626, %v3707, %v3709
        %v3711 = vrot.slane %v3609, 1
        %v3712 = vrot.slane %v3610, 1
        %v3713 = vsel %vm626, %v3711, %v3712
        %v3714 = vrot.slane %v3611, 1
        %v3715 = vsel %vm626, %v3712, %v3714
        %v3716 = vrot.slane %v3612, 1
        %v3717 = vrot.slane %v3613, 1
        %v3718 = vsel %vm626, %v3716, %v3717
        %v3719 = vrot.slane %v3614, 1
        %v3720 = vsel %vm626, %v3717, %v3719
        %v3721 = vrot.slane %v3615, 1
        %v3722 = vrot.slane %v3616, 1
        %v3723 = vsel %vm626, %v3721, %v3722
        %v3724 = vrot.slane %v3617, 1
        %v3725 = vsel %vm626, %v3722, %v3724
        %v3726 = vrot.slane %v3618, 1
        %v3727 = vrot.slane %v3619, 1
        %v3728 = vsel %vm626, %v3726, %v3727
        %v3729 = vrot.slane %v3620, 1
        %v3730 = vsel %vm626, %v3727, %v3729
        %v3731 = vrot.slane %v3621, 1
        %v3732 = vrot.slane %v3622, 1
        %v3733 = vsel %vm626, %v3731, %v3732
        %v3734 = vrot.slane %v3623, 1
        %v3735 = vsel %vm626, %v3732, %v3734
        %v3736 = vrot.slane %v3624, 1
        %v3737 = vrot.slane %v3625, 1
        %v3738 = vsel %vm626, %v3736, %v3737
        %v3739 = vrot.slane %v3626, 1
        %v3740 = vsel %vm626, %v3737, %v3739
        %v3741 = vrot.slane %v3627, 1
        %v3742 = vrot.slane %v3628, 1
        %v3743 = vsel %vm626, %v3741, %v3742
        %v3744 = vrot.slane %v3629, 1
        %v3745 = vsel %vm626, %v3742, %v3744
        %v3746 = vrot.slane %v3630, 1
        %v3747 = vrot.slane %v3631, 1
        %v3748 = vsel %vm626, %v3746, %v3747
        %v3749 = vrot.slane %v3632, 1
        %v3750 = vsel %vm626, %v3747, %v3749
        %v3751 = vrot.slane %v3633, 1
        %v3752 = vrot.slane %v3634, 1
        %v3753 = vsel %vm626, %v3751, %v3752
        %v3754 = vrot.slane %v3635, 1
        %v3755 = vsel %vm626, %v3752, %v3754
        %v3756 = vrot.slane %v3636, 1
        %v3757 = vrot.slane %v3637, 1
        %v3758 = vsel %vm626, %v3756, %v3757
        %v3759 = vrot.slane %v3638, 1
        %v3760 = vsel %vm626, %v3757, %v3759
        %v3761 = vrot.slane %v3639, 1
        %v3762 = vrot.slane %v3640, 1
        %v3763 = vsel %vm626, %v3761, %v3762
        %v3764 = vrot.slane %v3641, 1
        %v3765 = vsel %vm626, %v3762, %v3764
        %v3766 = vrot.slane %v3642, 1
        %v3767 = vrot.slane %v3643, 1
        %v3768 = vsel %vm626, %v3766, %v3767
        %v3769 = vrot.slane %v3644, 1
        %v3770 = vsel %vm626, %v3767, %v3769
        %v3771 = vrot.slane %v3645, 1
        %v3772 = vrot.slane %v3646, 1
        %v3773 = vsel %vm626, %v3771, %v3772
        %v3774 = vrot.slane %v3647, 1
        %v3775 = vsel %vm626, %v3772, %v3774
        %v3808 = vadd.f32 %v3564, %v3698
        %v3809 = vadd.f32 %v3565, %v3700
        %v3810 = vadd.f32 %v3566, %v3703
        %v3811 = vadd.f32 %v3567, %v3705
        %v3812 = vadd.f32 %v3568, %v3708
        %v3813 = vadd.f32 %v3569, %v3710
        %v3814 = vadd.f32 %v3570, %v3713
        %v3815 = vadd.f32 %v3571, %v3715
        %v3816 = vadd.f32 %v3572, %v3718
        %v3817 = vadd.f32 %v3573, %v3720
        %v3818 = vadd.f32 %v3574, %v3723
        %v3819 = vadd.f32 %v3575, %v3725
        %v3820 = vadd.f32 %v3576, %v3728
        %v3821 = vadd.f32 %v3577, %v3730
        %v3822 = vadd.f32 %v3578, %v3733
        %v3823 = vadd.f32 %v3579, %v3735
        %v3824 = vadd.f32 %v3580, %v3738
        %v3825 = vadd.f32 %v3581, %v3740
        %v3826 = vadd.f32 %v3582, %v3743
        %v3827 = vadd.f32 %v3583, %v3745
        %v3828 = vadd.f32 %v3584, %v3748
        %v3829 = vadd.f32 %v3585, %v3750
        %v3830 = vadd.f32 %v3586, %v3753
        %v3831 = vadd.f32 %v3587, %v3755
        %v3832 = vadd.f32 %v3588, %v3758
        %v3833 = vadd.f32 %v3589, %v3760
        %v3834 = vadd.f32 %v3590, %v3763
        %v3835 = vadd.f32 %v3591, %v3765
        %v3836 = vadd.f32 %v3592, %v3768
        %v3837 = vadd.f32 %v3593, %v3770
        %v3838 = vadd.f32 %v3594, %v3773
        %v3839 = vadd.f32 %v3595, %v3775
        %v3840 = vlaneseq
        %v3841 = vshrl.u32 %v3840, 7
        %v3842 = vsub.s32 2, %v3841
        %v3843 = vrot.slane %v453, %v3842
        %v3844 = vmul.f32 %v391, %v3843
        %v3845 = vmul.f32 %v392, %v3843
        %v3846 = vmul.f32 %v393, %v3843
        %v3847 = vmul.f32 %v394, %v3843
        %v3848 = vmul.f32 %v395, %v3843
        %v3849 = vmul.f32 %v396, %v3843
        %v3850 = vmul.f32 %v397, %v3843
        %v3851 = vmul.f32 %v398, %v3843
        %v3852 = vmul.f32 %v399, %v3843
        %v3853 = vmul.f32 %v400, %v3843
        %v3854 = vmul.f32 %v401, %v3843
        %v3855 = vmul.f32 %v402, %v3843
        %v3856 = vmul.f32 %v403, %v3843
        %v3857 = vmul.f32 %v404, %v3843
        %v3858 = vmul.f32 %v405, %v3843
        %v3859 = vmul.f32 %v406, %v3843
        %v3860 = vmul.f32 %v407, %v3843
        %v3861 = vmul.f32 %v408, %v3843
        %v3862 = vmul.f32 %v409, %v3843
        %v3863 = vmul.f32 %v410, %v3843
        %v3864 = vmul.f32 %v411, %v3843
        %v3865 = vmul.f32 %v412, %v3843
        %v3866 = vmul.f32 %v413, %v3843
        %v3867 = vmul.f32 %v414, %v3843
        %v3868 = vmul.f32 %v415, %v3843
        %v3869 = vmul.f32 %v416, %v3843
        %v3870 = vmul.f32 %v417, %v3843
        %v3871 = vmul.f32 %v418, %v3843
        %v3872 = vmul.f32 %v419, %v3843
        %v3873 = vmul.f32 %v420, %v3843
        %v3874 = vmul.f32 %v421, %v3843
        %v3875 = vmul.f32 %v422, %v3843
        %v3876 = vmul.f32 %v423, %v3843
        %v3877 = vmul.f32 %v424, %v3843
        %v3878 = vmul.f32 %v425, %v3843
        %v3879 = vmul.f32 %v426, %v3843
        %v3880 = vmul.f32 %v427, %v3843
        %v3881 = vmul.f32 %v428, %v3843
        %v3882 = vmul.f32 %v429, %v3843
        %v3883 = vmul.f32 %v430, %v3843
        %v3884 = vmul.f32 %v431, %v3843
        %v3885 = vmul.f32 %v432, %v3843
        %v3886 = vmul.f32 %v433, %v3843
        %v3887 = vmul.f32 %v434, %v3843
        %v3888 = vmul.f32 %v435, %v3843
        %v3889 = vmul.f32 %v436, %v3843
        %v3890 = vmul.f32 %v437, %v3843
        %v3891 = vmul.f32 %v438, %v3843
        %v3940 = vrot.slane %v3844, 2
        %v3941 = vrot.slane %v3845, 2
        %v3942 = vsel %vm871, %v3940, %v3941
        %v3943 = vrot.slane %v3846, 2
        %v3944 = vsel %vm871, %v3941, %v3943
        %v3945 = vrot.slane %v3847, 2
        %v3946 = vrot.slane %v3848, 2
        %v3947 = vsel %vm871, %v3945, %v3946
        %v3948 = vrot.slane %v3849, 2
        %v3949 = vsel %vm871, %v3946, %v3948
        %v3950 = vrot.slane %v3850, 2
        %v3951 = vrot.slane %v3851, 2
        %v3952 = vsel %vm871, %v3950, %v3951
        %v3953 = vrot.slane %v3852, 2
        %v3954 = vsel %vm871, %v3951, %v3953
        %v3955 = vrot.slane %v3853, 2
        %v3956 = vrot.slane %v3854, 2
        %v3957 = vsel %vm871, %v3955, %v3956
        %v3958 = vrot.slane %v3855, 2
        %v3959 = vsel %vm871, %v3956, %v3958
        %v3960 = vrot.slane %v3856, 2
        %v3961 = vrot.slane %v3857, 2
        %v3962 = vsel %vm871, %v3960, %v3961
        %v3963 = vrot.slane %v3858, 2
        %v3964 = vsel %vm871, %v3961, %v3963
        %v3965 = vrot.slane %v3859, 2
        %v3966 = vrot.slane %v3860, 2
        %v3967 = vsel %vm871, %v3965, %v3966
        %v3968 = vrot.slane %v3861, 2
        %v3969 = vsel %vm871, %v3966, %v3968
        %v3970 = vrot.slane %v3862, 2
        %v3971 = vrot.slane %v3863, 2
        %v3972 = vsel %vm871, %v3970, %v3971
        %v3973 = vrot.slane %v3864, 2
        %v3974 = vsel %vm871, %v3971, %v3973
        %v3975 = vrot.slane %v3865, 2
        %v3976 = vrot.slane %v3866, 2
        %v3977 = vsel %vm871, %v3975, %v3976
        %v3978 = vrot.slane %v3867, 2
        %v3979 = vsel %vm871, %v3976, %v3978
        %v3980 = vrot.slane %v3868, 2
        %v3981 = vrot.slane %v3869, 2
        %v3982 = vsel %vm871, %v3980, %v3981
        %v3983 = vrot.slane %v3870, 2
        %v3984 = vsel %vm871, %v3981, %v3983
        %v3985 = vrot.slane %v3871, 2
        %v3986 = vrot.slane %v3872, 2
        %v3987 = vsel %vm871, %v3985, %v3986
        %v3988 = vrot.slane %v3873, 2
        %v3989 = vsel %vm871, %v3986, %v3988
        %v3990 = vrot.slane %v3874, 2
        %v3991 = vrot.slane %v3875, 2
        %v3992 = vsel %vm871, %v3990, %v3991
        %v3993 = vrot.slane %v3876, 2
        %v3994 = vsel %vm871, %v3991, %v3993
        %v3995 = vrot.slane %v3877, 2
        %v3996 = vrot.slane %v3878, 2
        %v3997 = vsel %vm871, %v3995, %v3996
        %v3998 = vrot.slane %v3879, 2
        %v3999 = vsel %vm871, %v3996, %v3998
        %v4000 = vrot.slane %v3880, 2
        %v4001 = vrot.slane %v3881, 2
        %v4002 = vsel %vm871, %v4000, %v4001
        %v4003 = vrot.slane %v3882, 2
        %v4004 = vsel %vm871, %v4001, %v4003
        %v4005 = vrot.slane %v3883, 2
        %v4006 = vrot.slane %v3884, 2
        %v4007 = vsel %vm871, %v4005, %v4006
        %v4008 = vrot.slane %v3885, 2
        %v4009 = vsel %vm871, %v4006, %v4008
        %v4010 = vrot.slane %v3886, 2
        %v4011 = vrot.slane %v3887, 2
        %v4012 = vsel %vm871, %v4010, %v4011
        %v4013 = vrot.slane %v3888, 2
        %v4014 = vsel %vm871, %v4011, %v4013
        %v4015 = vrot.slane %v3889, 2
        %v4016 = vrot.slane %v3890, 2
        %v4017 = vsel %vm871, %v4015, %v4016
        %v4018 = vrot.slane %v3891, 2
        %v4019 = vsel %vm871, %v4016, %v4018
        %v4052 = vadd.f32 %v3808, %v3942
        %v4053 = vadd.f32 %v3809, %v3944
        %v4054 = vadd.f32 %v3810, %v3947
        %v4055 = vadd.f32 %v3811, %v3949
        %v4056 = vadd.f32 %v3812, %v3952
        %v4057 = vadd.f32 %v3813, %v3954
        %v4058 = vadd.f32 %v3814, %v3957
        %v4059 = vadd.f32 %v3815, %v3959
        %v4060 = vadd.f32 %v3816, %v3962
        %v4061 = vadd.f32 %v3817, %v3964
        %v4062 = vadd.f32 %v3818, %v3967
        %v4063 = vadd.f32 %v3819, %v3969
        %v4064 = vadd.f32 %v3820, %v3972
        %v4065 = vadd.f32 %v3821, %v3974
        %v4066 = vadd.f32 %v3822, %v3977
        %v4067 = vadd.f32 %v3823, %v3979
        %v4068 = vadd.f32 %v3824, %v3982
        %v4069 = vadd.f32 %v3825, %v3984
        %v4070 = vadd.f32 %v3826, %v3987
        %v4071 = vadd.f32 %v3827, %v3989
        %v4072 = vadd.f32 %v3828, %v3992
        %v4073 = vadd.f32 %v3829, %v3994
        %v4074 = vadd.f32 %v3830, %v3997
        %v4075 = vadd.f32 %v3831, %v3999
        %v4076 = vadd.f32 %v3832, %v4002
        %v4077 = vadd.f32 %v3833, %v4004
        %v4078 = vadd.f32 %v3834, %v4007
        %v4079 = vadd.f32 %v3835, %v4009
        %v4080 = vadd.f32 %v3836, %v4012
        %v4081 = vadd.f32 %v3837, %v4014
        %v4082 = vadd.f32 %v3838, %v4017
        %v4083 = vadd.f32 %v3839, %v4019
        %v4084 = vlaneseq
        %v4085 = vshrl.u32 %v4084, 7
        %v4086 = vsub.s32 3, %v4085
        %v4087 = vrot.slane %v453, %v4086
        %v4088 = vmul.f32 %v391, %v4087
        %v4089 = vmul.f32 %v392, %v4087
        %v4090 = vmul.f32 %v393, %v4087
        %v4091 = vmul.f32 %v394, %v4087
        %v4092 = vmul.f32 %v395, %v4087
        %v4093 = vmul.f32 %v396, %v4087
        %v4094 = vmul.f32 %v397, %v4087
        %v4095 = vmul.f32 %v398, %v4087
        %v4096 = vmul.f32 %v399, %v4087
        %v4097 = vmul.f32 %v400, %v4087
        %v4098 = vmul.f32 %v401, %v4087
        %v4099 = vmul.f32 %v402, %v4087
        %v4100 = vmul.f32 %v403, %v4087
        %v4101 = vmul.f32 %v404, %v4087
        %v4102 = vmul.f32 %v405, %v4087
        %v4103 = vmul.f32 %v406, %v4087
        %v4104 = vmul.f32 %v407, %v4087
        %v4105 = vmul.f32 %v408, %v4087
        %v4106 = vmul.f32 %v409, %v4087
        %v4107 = vmul.f32 %v410, %v4087
        %v4108 = vmul.f32 %v411, %v4087
        %v4109 = vmul.f32 %v412, %v4087
        %v4110 = vmul.f32 %v413, %v4087
        %v4111 = vmul.f32 %v414, %v4087
        %v4112 = vmul.f32 %v415, %v4087
        %v4113 = vmul.f32 %v416, %v4087
        %v4114 = vmul.f32 %v417, %v4087
        %v4115 = vmul.f32 %v418, %v4087
        %v4116 = vmul.f32 %v419, %v4087
        %v4117 = vmul.f32 %v420, %v4087
        %v4118 = vmul.f32 %v421, %v4087
        %v4119 = vmul.f32 %v422, %v4087
        %v4120 = vmul.f32 %v423, %v4087
        %v4121 = vmul.f32 %v424, %v4087
        %v4122 = vmul.f32 %v425, %v4087
        %v4123 = vmul.f32 %v426, %v4087
        %v4124 = vmul.f32 %v427, %v4087
        %v4125 = vmul.f32 %v428, %v4087
        %v4126 = vmul.f32 %v429, %v4087
        %v4127 = vmul.f32 %v430, %v4087
        %v4128 = vmul.f32 %v431, %v4087
        %v4129 = vmul.f32 %v432, %v4087
        %v4130 = vmul.f32 %v433, %v4087
        %v4131 = vmul.f32 %v434, %v4087
        %v4132 = vmul.f32 %v435, %v4087
        %v4133 = vmul.f32 %v436, %v4087
        %v4134 = vmul.f32 %v437, %v4087
        %v4135 = vmul.f32 %v438, %v4087
        %v4184 = vrot.slane %v4088, 3
        %v4185 = vrot.slane %v4089, 3
        %v4186 = vsel %vm1116, %v4184, %v4185
        %v4187 = vrot.slane %v4090, 3
        %v4188 = vsel %vm1116, %v4185, %v4187
        %v4189 = vrot.slane %v4091, 3
        %v4190 = vrot.slane %v4092, 3
        %v4191 = vsel %vm1116, %v4189, %v4190
        %v4192 = vrot.slane %v4093, 3
        %v4193 = vsel %vm1116, %v4190, %v4192
        %v4194 = vrot.slane %v4094, 3
        %v4195 = vrot.slane %v4095, 3
        %v4196 = vsel %vm1116, %v4194, %v4195
        %v4197 = vrot.slane %v4096, 3
        %v4198 = vsel %vm1116, %v4195, %v4197
        %v4199 = vrot.slane %v4097, 3
        %v4200 = vrot.slane %v4098, 3
        %v4201 = vsel %vm1116, %v4199, %v4200
        %v4202 = vrot.slane %v4099, 3
        %v4203 = vsel %vm1116, %v4200, %v4202
        %v4204 = vrot.slane %v4100, 3
        %v4205 = vrot.slane %v4101, 3
        %v4206 = vsel %vm1116, %v4204, %v4205
        %v4207 = vrot.slane %v4102, 3
        %v4208 = vsel %vm1116, %v4205, %v4207
        %v4209 = vrot.slane %v4103, 3
        %v4210 = vrot.slane %v4104, 3
        %v4211 = vsel %vm1116, %v4209, %v4210
        %v4212 = vrot.slane %v4105, 3
        %v4213 = vsel %vm1116, %v4210, %v4212
        %v4214 = vrot.slane %v4106, 3
        %v4215 = vrot.slane %v4107, 3
        %v4216 = vsel %vm1116, %v4214, %v4215
        %v4217 = vrot.slane %v4108, 3
        %v4218 = vsel %vm1116, %v4215, %v4217
        %v4219 = vrot.slane %v4109, 3
        %v4220 = vrot.slane %v4110, 3
        %v4221 = vsel %vm1116, %v4219, %v4220
        %v4222 = vrot.slane %v4111, 3
        %v4223 = vsel %vm1116, %v4220, %v4222
        %v4224 = vrot.slane %v4112, 3
        %v4225 = vrot.slane %v4113, 3
        %v4226 = vsel %vm1116, %v4224, %v4225
        %v4227 = vrot.slane %v4114, 3
        %v4228 = vsel %vm1116, %v4225, %v4227
        %v4229 = vrot.slane %v4115, 3
        %v4230 = vrot.slane %v4116, 3
        %v4231 = vsel %vm1116, %v4229, %v4230
        %v4232 = vrot.slane %v4117, 3
        %v4233 = vsel %vm1116, %v4230, %v4232
        %v4234 = vrot.slane %v4118, 3
        %v4235 = vrot.slane %v4119, 3
        %v4236 = vsel %vm1116, %v4234, %v4235
        %v4237 = vrot.slane %v4120, 3
        %v4238 = vsel %vm1116, %v4235, %v4237
        %v4239 = vrot.slane %v4121, 3
        %v4240 = vrot.slane %v4122, 3
        %v4241 = vsel %vm1116, %v4239, %v4240
        %v4242 = vrot.slane %v4123, 3
        %v4243 = vsel %vm1116, %v4240, %v4242
        %v4244 = vrot.slane %v4124, 3
        %v4245 = vrot.slane %v4125, 3
        %v4246 = vsel %vm1116, %v4244, %v4245
        %v4247 = vrot.slane %v4126, 3
        %v4248 = vsel %vm1116, %v4245, %v4247
        %v4249 = vrot.slane %v4127, 3
        %v4250 = vrot.slane %v4128, 3
        %v4251 = vsel %vm1116, %v4249, %v4250
        %v4252 = vrot.slane %v4129, 3
        %v4253 = vsel %vm1116, %v4250, %v4252
        %v4254 = vrot.slane %v4130, 3
        %v4255 = vrot.slane %v4131, 3
        %v4256 = vsel %vm1116, %v4254, %v4255
        %v4257 = vrot.slane %v4132, 3
        %v4258 = vsel %vm1116, %v4255, %v4257
        %v4259 = vrot.slane %v4133, 3
        %v4260 = vrot.slane %v4134, 3
        %v4261 = vsel %vm1116, %v4259, %v4260
        %v4262 = vrot.slane %v4135, 3
        %v4263 = vsel %vm1116, %v4260, %v4262
        %v4296 = vadd.f32 %v4052, %v4186
        %v4297 = vadd.f32 %v4053, %v4188
        %v4298 = vadd.f32 %v4054, %v4191
        %v4299 = vadd.f32 %v4055, %v4193
        %v4300 = vadd.f32 %v4056, %v4196
        %v4301 = vadd.f32 %v4057, %v4198
        %v4302 = vadd.f32 %v4058, %v4201
        %v4303 = vadd.f32 %v4059, %v4203
        %v4304 = vadd.f32 %v4060, %v4206
        %v4305 = vadd.f32 %v4061, %v4208
        %v4306 = vadd.f32 %v4062, %v4211
        %v4307 = vadd.f32 %v4063, %v4213
        %v4308 = vadd.f32 %v4064, %v4216
        %v4309 = vadd.f32 %v4065, %v4218
        %v4310 = vadd.f32 %v4066, %v4221
        %v4311 = vadd.f32 %v4067, %v4223
        %v4312 = vadd.f32 %v4068, %v4226
        %v4313 = vadd.f32 %v4069, %v4228
        %v4314 = vadd.f32 %v4070, %v4231
        %v4315 = vadd.f32 %v4071, %v4233
        %v4316 = vadd.f32 %v4072, %v4236
        %v4317 = vadd.f32 %v4073, %v4238
        %v4318 = vadd.f32 %v4074, %v4241
        %v4319 = vadd.f32 %v4075, %v4243
        %v4320 = vadd.f32 %v4076, %v4246
        %v4321 = vadd.f32 %v4077, %v4248
        %v4322 = vadd.f32 %v4078, %v4251
        %v4323 = vadd.f32 %v4079, %v4253
        %v4324 = vadd.f32 %v4080, %v4256
        %v4325 = vadd.f32 %v4081, %v4258
        %v4326 = vadd.f32 %v4082, %v4261
        %v4327 = vadd.f32 %v4083, %v4263
        %v4328 = vlaneseq
        %v4329 = vshrl.u32 %v4328, 7
        %v4330 = vsub.s32 4, %v4329
        %v4331 = vrot.slane %v453, %v4330
        %v4332 = vmul.f32 %v391, %v4331
        %v4333 = vmul.f32 %v392, %v4331
        %v4334 = vmul.f32 %v393, %v4331
        %v4335 = vmul.f32 %v394, %v4331
        %v4336 = vmul.f32 %v395, %v4331
        %v4337 = vmul.f32 %v396, %v4331
        %v4338 = vmul.f32 %v397, %v4331
        %v4339 = vmul.f32 %v398, %v4331
        %v4340 = vmul.f32 %v399, %v4331
        %v4341 = vmul.f32 %v400, %v4331
        %v4342 = vmul.f32 %v401, %v4331
        %v4343 = vmul.f32 %v402, %v4331
        %v4344 = vmul.f32 %v403, %v4331
        %v4345 = vmul.f32 %v404, %v4331
        %v4346 = vmul.f32 %v405, %v4331
        %v4347 = vmul.f32 %v406, %v4331
        %v4348 = vmul.f32 %v407, %v4331
        %v4349 = vmul.f32 %v408, %v4331
        %v4350 = vmul.f32 %v409, %v4331
        %v4351 = vmul.f32 %v410, %v4331
        %v4352 = vmul.f32 %v411, %v4331
        %v4353 = vmul.f32 %v412, %v4331
        %v4354 = vmul.f32 %v413, %v4331
        %v4355 = vmul.f32 %v414, %v4331
        %v4356 = vmul.f32 %v415, %v4331
        %v4357 = vmul.f32 %v416, %v4331
        %v4358 = vmul.f32 %v417, %v4331
        %v4359 = vmul.f32 %v418, %v4331
        %v4360 = vmul.f32 %v419, %v4331
        %v4361 = vmul.f32 %v420, %v4331
        %v4362 = vmul.f32 %v421, %v4331
        %v4363 = vmul.f32 %v422, %v4331
        %v4364 = vmul.f32 %v423, %v4331
        %v4365 = vmul.f32 %v424, %v4331
        %v4366 = vmul.f32 %v425, %v4331
        %v4367 = vmul.f32 %v426, %v4331
        %v4368 = vmul.f32 %v427, %v4331
        %v4369 = vmul.f32 %v428, %v4331
        %v4370 = vmul.f32 %v429, %v4331
        %v4371 = vmul.f32 %v430, %v4331
        %v4372 = vmul.f32 %v431, %v4331
        %v4373 = vmul.f32 %v432, %v4331
        %v4374 = vmul.f32 %v433, %v4331
        %v4375 = vmul.f32 %v434, %v4331
        %v4376 = vmul.f32 %v435, %v4331
        %v4377 = vmul.f32 %v436, %v4331
        %v4378 = vmul.f32 %v437, %v4331
        %v4379 = vmul.f32 %v438, %v4331
        %v4428 = vrot.slane %v4332, 4
        %v4429 = vrot.slane %v4333, 4
        %v4430 = vsel %vm1361, %v4428, %v4429
        %v4431 = vrot.slane %v4334, 4
        %v4432 = vsel %vm1361, %v4429, %v4431
        %v4433 = vrot.slane %v4335, 4
        %v4434 = vrot.slane %v4336, 4
        %v4435 = vsel %vm1361, %v4433, %v4434
        %v4436 = vrot.slane %v4337, 4
        %v4437 = vsel %vm1361, %v4434, %v4436
        %v4438 = vrot.slane %v4338, 4
        %v4439 = vrot.slane %v4339, 4
        %v4440 = vsel %vm1361, %v4438, %v4439
        %v4441 = vrot.slane %v4340, 4
        %v4442 = vsel %vm1361, %v4439, %v4441
        %v4443 = vrot.slane %v4341, 4
        %v4444 = vrot.slane %v4342, 4
        %v4445 = vsel %vm1361, %v4443, %v4444
        %v4446 = vrot.slane %v4343, 4
        %v4447 = vsel %vm1361, %v4444, %v4446
        %v4448 = vrot.slane %v4344, 4
        %v4449 = vrot.slane %v4345, 4
        %v4450 = vsel %vm1361, %v4448, %v4449
        %v4451 = vrot.slane %v4346, 4
        %v4452 = vsel %vm1361, %v4449, %v4451
        %v4453 = vrot.slane %v4347, 4
        %v4454 = vrot.slane %v4348, 4
        %v4455 = vsel %vm1361, %v4453, %v4454
        %v4456 = vrot.slane %v4349, 4
        %v4457 = vsel %vm1361, %v4454, %v4456
        %v4458 = vrot.slane %v4350, 4
        %v4459 = vrot.slane %v4351, 4
        %v4460 = vsel %vm1361, %v4458, %v4459
        %v4461 = vrot.slane %v4352, 4
        %v4462 = vsel %vm1361, %v4459, %v4461
        %v4463 = vrot.slane %v4353, 4
        %v4464 = vrot.slane %v4354, 4
        %v4465 = vsel %vm1361, %v4463, %v4464
        %v4466 = vrot.slane %v4355, 4
        %v4467 = vsel %vm1361, %v4464, %v4466
        %v4468 = vrot.slane %v4356, 4
        %v4469 = vrot.slane %v4357, 4
        %v4470 = vsel %vm1361, %v4468, %v4469
        %v4471 = vrot.slane %v4358, 4
        %v4472 = vsel %vm1361, %v4469, %v4471
        %v4473 = vrot.slane %v4359, 4
        %v4474 = vrot.slane %v4360, 4
        %v4475 = vsel %vm1361, %v4473, %v4474
        %v4476 = vrot.slane %v4361, 4
        %v4477 = vsel %vm1361, %v4474, %v4476
        %v4478 = vrot.slane %v4362, 4
        %v4479 = vrot.slane %v4363, 4
        %v4480 = vsel %vm1361, %v4478, %v4479
        %v4481 = vrot.slane %v4364, 4
        %v4482 = vsel %vm1361, %v4479, %v4481
        %v4483 = vrot.slane %v4365, 4
        %v4484 = vrot.slane %v4366, 4
        %v4485 = vsel %vm1361, %v4483, %v4484
        %v4486 = vrot.slane %v4367, 4
        %v4487 = vsel %vm1361, %v4484, %v4486
        %v4488 = vrot.slane %v4368, 4
        %v4489 = vrot.slane %v4369, 4
        %v4490 = vsel %vm1361, %v4488, %v4489
        %v4491 = vrot.slane %v4370, 4
        %v4492 = vsel %vm1361, %v4489, %v4491
        %v4493 = vrot.slane %v4371, 4
        %v4494 = vrot.slane %v4372, 4
        %v4495 = vsel %vm1361, %v4493, %v4494
        %v4496 = vrot.slane %v4373, 4
        %v4497 = vsel %vm1361, %v4494, %v4496
        %v4498 = vrot.slane %v4374, 4
        %v4499 = vrot.slane %v4375, 4
        %v4500 = vsel %vm1361, %v4498, %v4499
        %v4501 = vrot.slane %v4376, 4
        %v4502 = vsel %vm1361, %v4499, %v4501
        %v4503 = vrot.slane %v4377, 4
        %v4504 = vrot.slane %v4378, 4
        %v4505 = vsel %vm1361, %v4503, %v4504
        %v4506 = vrot.slane %v4379, 4
        %v4507 = vsel %vm1361, %v4504, %v4506
        %v4540 = vadd.f32 %v4296, %v4430
        %v4541 = vadd.f32 %v4297, %v4432
        %v4542 = vadd.f32 %v4298, %v4435
        %v4543 = vadd.f32 %v4299, %v4437
        %v4544 = vadd.f32 %v4300, %v4440
        %v4545 = vadd.f32 %v4301, %v4442
        %v4546 = vadd.f32 %v4302, %v4445
        %v4547 = vadd.f32 %v4303, %v4447
        %v4548 = vadd.f32 %v4304, %v4450
        %v4549 = vadd.f32 %v4305, %v4452
        %v4550 = vadd.f32 %v4306, %v4455
        %v4551 = vadd.f32 %v4307, %v4457
        %v4552 = vadd.f32 %v4308, %v4460
        %v4553 = vadd.f32 %v4309, %v4462
        %v4554 = vadd.f32 %v4310, %v4465
        %v4555 = vadd.f32 %v4311, %v4467
        %v4556 = vadd.f32 %v4312, %v4470
        %v4557 = vadd.f32 %v4313, %v4472
        %v4558 = vadd.f32 %v4314, %v4475
        %v4559 = vadd.f32 %v4315, %v4477
        %v4560 = vadd.f32 %v4316, %v4480
        %v4561 = vadd.f32 %v4317, %v4482
        %v4562 = vadd.f32 %v4318, %v4485
        %v4563 = vadd.f32 %v4319, %v4487
        %v4564 = vadd.f32 %v4320, %v4490
        %v4565 = vadd.f32 %v4321, %v4492
        %v4566 = vadd.f32 %v4322, %v4495
        %v4567 = vadd.f32 %v4323, %v4497
        %v4568 = vadd.f32 %v4324, %v4500
        %v4569 = vadd.f32 %v4325, %v4502
        %v4570 = vadd.f32 %v4326, %v4505
        %v4571 = vadd.f32 %v4327, %v4507
        %v4572 = vlaneseq
        %v4573 = vshrl.u32 %v4572, 7
        %v4574 = vsub.s32 5, %v4573
        %v4575 = vrot.slane %v453, %v4574
        %v4576 = vmul.f32 %v391, %v4575
        %v4577 = vmul.f32 %v392, %v4575
        %v4578 = vmul.f32 %v393, %v4575
        %v4579 = vmul.f32 %v394, %v4575
        %v4580 = vmul.f32 %v395, %v4575
        %v4581 = vmul.f32 %v396, %v4575
        %v4582 = vmul.f32 %v397, %v4575
        %v4583 = vmul.f32 %v398, %v4575
        %v4584 = vmul.f32 %v399, %v4575
        %v4585 = vmul.f32 %v400, %v4575
        %v4586 = vmul.f32 %v401, %v4575
        %v4587 = vmul.f32 %v402, %v4575
        %v4588 = vmul.f32 %v403, %v4575
        %v4589 = vmul.f32 %v404, %v4575
        %v4590 = vmul.f32 %v405, %v4575
        %v4591 = vmul.f32 %v406, %v4575
        %v4592 = vmul.f32 %v407, %v4575
        %v4593 = vmul.f32 %v408, %v4575
        %v4594 = vmul.f32 %v409, %v4575
        %v4595 = vmul.f32 %v410, %v4575
        %v4596 = vmul.f32 %v411, %v4575
        %v4597 = vmul.f32 %v412, %v4575
        %v4598 = vmul.f32 %v413, %v4575
        %v4599 = vmul.f32 %v414, %v4575
        %v4600 = vmul.f32 %v415, %v4575
        %v4601 = vmul.f32 %v416, %v4575
        %v4602 = vmul.f32 %v417, %v4575
        %v4603 = vmul.f32 %v418, %v4575
        %v4604 = vmul.f32 %v419, %v4575
        %v4605 = vmul.f32 %v420, %v4575
        %v4606 = vmul.f32 %v421, %v4575
        %v4607 = vmul.f32 %v422, %v4575
        %v4608 = vmul.f32 %v423, %v4575
        %v4609 = vmul.f32 %v424, %v4575
        %v4610 = vmul.f32 %v425, %v4575
        %v4611 = vmul.f32 %v426, %v4575
        %v4612 = vmul.f32 %v427, %v4575
        %v4613 = vmul.f32 %v428, %v4575
        %v4614 = vmul.f32 %v429, %v4575
        %v4615 = vmul.f32 %v430, %v4575
        %v4616 = vmul.f32 %v431, %v4575
        %v4617 = vmul.f32 %v432, %v4575
        %v4618 = vmul.f32 %v433, %v4575
        %v4619 = vmul.f32 %v434, %v4575
        %v4620 = vmul.f32 %v435, %v4575
        %v4621 = vmul.f32 %v436, %v4575
        %v4622 = vmul.f32 %v437, %v4575
        %v4623 = vmul.f32 %v438, %v4575
        %v4672 = vrot.slane %v4576, 5
        %v4673 = vrot.slane %v4577, 5
        %v4674 = vsel %vm1606, %v4672, %v4673
        %v4675 = vrot.slane %v4578, 5
        %v4676 = vsel %vm1606, %v4673, %v4675
        %v4677 = vrot.slane %v4579, 5
        %v4678 = vrot.slane %v4580, 5
        %v4679 = vsel %vm1606, %v4677, %v4678
        %v4680 = vrot.slane %v4581, 5
        %v4681 = vsel %vm1606, %v4678, %v4680
        %v4682 = vrot.slane %v4582, 5
        %v4683 = vrot.slane %v4583, 5
        %v4684 = vsel %vm1606, %v4682, %v4683
        %v4685 = vrot.slane %v4584, 5
        %v4686 = vsel %vm1606, %v4683, %v4685
        %v4687 = vrot.slane %v4585, 5
        %v4688 = vrot.slane %v4586, 5
        %v4689 = vsel %vm1606, %v4687, %v4688
        %v4690 = vrot.slane %v4587, 5
        %v4691 = vsel %vm1606, %v4688, %v4690
        %v4692 = vrot.slane %v4588, 5
        %v4693 = vrot.slane %v4589, 5
        %v4694 = vsel %vm1606, %v4692, %v4693
        %v4695 = vrot.slane %v4590, 5
        %v4696 = vsel %vm1606, %v4693, %v4695
        %v4697 = vrot.slane %v4591, 5
        %v4698 = vrot.slane %v4592, 5
        %v4699 = vsel %vm1606, %v4697, %v4698
        %v4700 = vrot.slane %v4593, 5
        %v4701 = vsel %vm1606, %v4698, %v4700
        %v4702 = vrot.slane %v4594, 5
        %v4703 = vrot.slane %v4595, 5
        %v4704 = vsel %vm1606, %v4702, %v4703
        %v4705 = vrot.slane %v4596, 5
        %v4706 = vsel %vm1606, %v4703, %v4705
        %v4707 = vrot.slane %v4597, 5
        %v4708 = vrot.slane %v4598, 5
        %v4709 = vsel %vm1606, %v4707, %v4708
        %v4710 = vrot.slane %v4599, 5
        %v4711 = vsel %vm1606, %v4708, %v4710
        %v4712 = vrot.slane %v4600, 5
        %v4713 = vrot.slane %v4601, 5
        %v4714 = vsel %vm1606, %v4712, %v4713
        %v4715 = vrot.slane %v4602, 5
        %v4716 = vsel %vm1606, %v4713, %v4715
        %v4717 = vrot.slane %v4603, 5
        %v4718 = vrot.slane %v4604, 5
        %v4719 = vsel %vm1606, %v4717, %v4718
        %v4720 = vrot.slane %v4605, 5
        %v4721 = vsel %vm1606, %v4718, %v4720
        %v4722 = vrot.slane %v4606, 5
        %v4723 = vrot.slane %v4607, 5
        %v4724 = vsel %vm1606, %v4722, %v4723
        %v4725 = vrot.slane %v4608, 5
        %v4726 = vsel %vm1606, %v4723, %v4725
        %v4727 = vrot.slane %v4609, 5
        %v4728 = vrot.slane %v4610, 5
        %v4729 = vsel %vm1606, %v4727, %v4728
        %v4730 = vrot.slane %v4611, 5
        %v4731 = vsel %vm1606, %v4728, %v4730
        %v4732 = vrot.slane %v4612, 5
        %v4733 = vrot.slane %v4613, 5
        %v4734 = vsel %vm1606, %v4732, %v4733
        %v4735 = vrot.slane %v4614, 5
        %v4736 = vsel %vm1606, %v4733, %v4735
        %v4737 = vrot.slane %v4615, 5
        %v4738 = vrot.slane %v4616, 5
        %v4739 = vsel %vm1606, %v4737, %v4738
        %v4740 = vrot.slane %v4617, 5
        %v4741 = vsel %vm1606, %v4738, %v4740
        %v4742 = vrot.slane %v4618, 5
        %v4743 = vrot.slane %v4619, 5
        %v4744 = vsel %vm1606, %v4742, %v4743
        %v4745 = vrot.slane %v4620, 5
        %v4746 = vsel %vm1606, %v4743, %v4745
        %v4747 = vrot.slane %v4621, 5
        %v4748 = vrot.slane %v4622, 5
        %v4749 = vsel %vm1606, %v4747, %v4748
        %v4750 = vrot.slane %v4623, 5
        %v4751 = vsel %vm1606, %v4748, %v4750
        %v4784 = vadd.f32 %v4540, %v4674
        %v4785 = vadd.f32 %v4541, %v4676
        %v4786 = vadd.f32 %v4542, %v4679
        %v4787 = vadd.f32 %v4543, %v4681
        %v4788 = vadd.f32 %v4544, %v4684
        %v4789 = vadd.f32 %v4545, %v4686
        %v4790 = vadd.f32 %v4546, %v4689
        %v4791 = vadd.f32 %v4547, %v4691
        %v4792 = vadd.f32 %v4548, %v4694
        %v4793 = vadd.f32 %v4549, %v4696
        %v4794 = vadd.f32 %v4550, %v4699
        %v4795 = vadd.f32 %v4551, %v4701
        %v4796 = vadd.f32 %v4552, %v4704
        %v4797 = vadd.f32 %v4553, %v4706
        %v4798 = vadd.f32 %v4554, %v4709
        %v4799 = vadd.f32 %v4555, %v4711
        %v4800 = vadd.f32 %v4556, %v4714
        %v4801 = vadd.f32 %v4557, %v4716
        %v4802 = vadd.f32 %v4558, %v4719
        %v4803 = vadd.f32 %v4559, %v4721
        %v4804 = vadd.f32 %v4560, %v4724
        %v4805 = vadd.f32 %v4561, %v4726
        %v4806 = vadd.f32 %v4562, %v4729
        %v4807 = vadd.f32 %v4563, %v4731
        %v4808 = vadd.f32 %v4564, %v4734
        %v4809 = vadd.f32 %v4565, %v4736
        %v4810 = vadd.f32 %v4566, %v4739
        %v4811 = vadd.f32 %v4567, %v4741
        %v4812 = vadd.f32 %v4568, %v4744
        %v4813 = vadd.f32 %v4569, %v4746
        %v4814 = vadd.f32 %v4570, %v4749
        %v4815 = vadd.f32 %v4571, %v4751
        %v4816 = vlaneseq
        %v4817 = vshrl.u32 %v4816, 7
        %v4818 = vsub.s32 6, %v4817
        %v4819 = vrot.slane %v453, %v4818
        %v4820 = vmul.f32 %v391, %v4819
        %v4821 = vmul.f32 %v392, %v4819
        %v4822 = vmul.f32 %v393, %v4819
        %v4823 = vmul.f32 %v394, %v4819
        %v4824 = vmul.f32 %v395, %v4819
        %v4825 = vmul.f32 %v396, %v4819
        %v4826 = vmul.f32 %v397, %v4819
        %v4827 = vmul.f32 %v398, %v4819
        %v4828 = vmul.f32 %v399, %v4819
        %v4829 = vmul.f32 %v400, %v4819
        %v4830 = vmul.f32 %v401, %v4819
        %v4831 = vmul.f32 %v402, %v4819
        %v4832 = vmul.f32 %v403, %v4819
        %v4833 = vmul.f32 %v404, %v4819
        %v4834 = vmul.f32 %v405, %v4819
        %v4835 = vmul.f32 %v406, %v4819
        %v4836 = vmul.f32 %v407, %v4819
        %v4837 = vmul.f32 %v408, %v4819
        %v4838 = vmul.f32 %v409, %v4819
        %v4839 = vmul.f32 %v410, %v4819
        %v4840 = vmul.f32 %v411, %v4819
        %v4841 = vmul.f32 %v412, %v4819
        %v4842 = vmul.f32 %v413, %v4819
        %v4843 = vmul.f32 %v414, %v4819
        %v4844 = vmul.f32 %v415, %v4819
        %v4845 = vmul.f32 %v416, %v4819
        %v4846 = vmul.f32 %v417, %v4819
        %v4847 = vmul.f32 %v418, %v4819
        %v4848 = vmul.f32 %v419, %v4819
        %v4849 = vmul.f32 %v420, %v4819
        %v4850 = vmul.f32 %v421, %v4819
        %v4851 = vmul.f32 %v422, %v4819
        %v4852 = vmul.f32 %v423, %v4819
        %v4853 = vmul.f32 %v424, %v4819
        %v4854 = vmul.f32 %v425, %v4819
        %v4855 = vmul.f32 %v426, %v4819
        %v4856 = vmul.f32 %v427, %v4819
        %v4857 = vmul.f32 %v428, %v4819
        %v4858 = vmul.f32 %v429, %v4819
        %v4859 = vmul.f32 %v430, %v4819
        %v4860 = vmul.f32 %v431, %v4819
        %v4861 = vmul.f32 %v432, %v4819
        %v4862 = vmul.f32 %v433, %v4819
        %v4863 = vmul.f32 %v434, %v4819
        %v4864 = vmul.f32 %v435, %v4819
        %v4865 = vmul.f32 %v436, %v4819
        %v4866 = vmul.f32 %v437, %v4819
        %v4867 = vmul.f32 %v438, %v4819
        %v4916 = vrot.slane %v4820, 6
        %v4917 = vrot.slane %v4821, 6
        %v4918 = vsel %vm1851, %v4916, %v4917
        %v4919 = vrot.slane %v4822, 6
        %v4920 = vsel %vm1851, %v4917, %v4919
        %v4921 = vrot.slane %v4823, 6
        %v4922 = vrot.slane %v4824, 6
        %v4923 = vsel %vm1851, %v4921, %v4922
        %v4924 = vrot.slane %v4825, 6
        %v4925 = vsel %vm1851, %v4922, %v4924
        %v4926 = vrot.slane %v4826, 6
        %v4927 = vrot.slane %v4827, 6
        %v4928 = vsel %vm1851, %v4926, %v4927
        %v4929 = vrot.slane %v4828, 6
        %v4930 = vsel %vm1851, %v4927, %v4929
        %v4931 = vrot.slane %v4829, 6
        %v4932 = vrot.slane %v4830, 6
        %v4933 = vsel %vm1851, %v4931, %v4932
        %v4934 = vrot.slane %v4831, 6
        %v4935 = vsel %vm1851, %v4932, %v4934
        %v4936 = vrot.slane %v4832, 6
        %v4937 = vrot.slane %v4833, 6
        %v4938 = vsel %vm1851, %v4936, %v4937
        %v4939 = vrot.slane %v4834, 6
        %v4940 = vsel %vm1851, %v4937, %v4939
        %v4941 = vrot.slane %v4835, 6
        %v4942 = vrot.slane %v4836, 6
        %v4943 = vsel %vm1851, %v4941, %v4942
        %v4944 = vrot.slane %v4837, 6
        %v4945 = vsel %vm1851, %v4942, %v4944
        %v4946 = vrot.slane %v4838, 6
        %v4947 = vrot.slane %v4839, 6
        %v4948 = vsel %vm1851, %v4946, %v4947
        %v4949 = vrot.slane %v4840, 6
        %v4950 = vsel %vm1851, %v4947, %v4949
        %v4951 = vrot.slane %v4841, 6
        %v4952 = vrot.slane %v4842, 6
        %v4953 = vsel %vm1851, %v4951, %v4952
        %v4954 = vrot.slane %v4843, 6
        %v4955 = vsel %vm1851, %v4952, %v4954
        %v4956 = vrot.slane %v4844, 6
        %v4957 = vrot.slane %v4845, 6
        %v4958 = vsel %vm1851, %v4956, %v4957
        %v4959 = vrot.slane %v4846, 6
        %v4960 = vsel %vm1851, %v4957, %v4959
        %v4961 = vrot.slane %v4847, 6
        %v4962 = vrot.slane %v4848, 6
        %v4963 = vsel %vm1851, %v4961, %v4962
        %v4964 = vrot.slane %v4849, 6
        %v4965 = vsel %vm1851, %v4962, %v4964
        %v4966 = vrot.slane %v4850, 6
        %v4967 = vrot.slane %v4851, 6
        %v4968 = vsel %vm1851, %v4966, %v4967
        %v4969 = vrot.slane %v4852, 6
        %v4970 = vsel %vm1851, %v4967, %v4969
        %v4971 = vrot.slane %v4853, 6
        %v4972 = vrot.slane %v4854, 6
        %v4973 = vsel %vm1851, %v4971, %v4972
        %v4974 = vrot.slane %v4855, 6
        %v4975 = vsel %vm1851, %v4972, %v4974
        %v4976 = vrot.slane %v4856, 6
        %v4977 = vrot.slane %v4857, 6
        %v4978 = vsel %vm1851, %v4976, %v4977
        %v4979 = vrot.slane %v4858, 6
        %v4980 = vsel %vm1851, %v4977, %v4979
        %v4981 = vrot.slane %v4859, 6
        %v4982 = vrot.slane %v4860, 6
        %v4983 = vsel %vm1851, %v4981, %v4982
        %v4984 = vrot.slane %v4861, 6
        %v4985 = vsel %vm1851, %v4982, %v4984
        %v4986 = vrot.slane %v4862, 6
        %v4987 = vrot.slane %v4863, 6
        %v4988 = vsel %vm1851, %v4986, %v4987
        %v4989 = vrot.slane %v4864, 6
        %v4990 = vsel %vm1851, %v4987, %v4989
        %v4991 = vrot.slane %v4865, 6
        %v4992 = vrot.slane %v4866, 6
        %v4993 = vsel %vm1851, %v4991, %v4992
        %v4994 = vrot.slane %v4867, 6
        %v4995 = vsel %vm1851, %v4992, %v4994
        %v5028 = vadd.f32 %v4784, %v4918
        %v5029 = vadd.f32 %v4785, %v4920
        %v5030 = vadd.f32 %v4786, %v4923
        %v5031 = vadd.f32 %v4787, %v4925
        %v5032 = vadd.f32 %v4788, %v4928
        %v5033 = vadd.f32 %v4789, %v4930
        %v5034 = vadd.f32 %v4790, %v4933
        %v5035 = vadd.f32 %v4791, %v4935
        %v5036 = vadd.f32 %v4792, %v4938
        %v5037 = vadd.f32 %v4793, %v4940
        %v5038 = vadd.f32 %v4794, %v4943
        %v5039 = vadd.f32 %v4795, %v4945
        %v5040 = vadd.f32 %v4796, %v4948
        %v5041 = vadd.f32 %v4797, %v4950
        %v5042 = vadd.f32 %v4798, %v4953
        %v5043 = vadd.f32 %v4799, %v4955
        %v5044 = vadd.f32 %v4800, %v4958
        %v5045 = vadd.f32 %v4801, %v4960
        %v5046 = vadd.f32 %v4802, %v4963
        %v5047 = vadd.f32 %v4803, %v4965
        %v5048 = vadd.f32 %v4804, %v4968
        %v5049 = vadd.f32 %v4805, %v4970
        %v5050 = vadd.f32 %v4806, %v4973
        %v5051 = vadd.f32 %v4807, %v4975
        %v5052 = vadd.f32 %v4808, %v4978
        %v5053 = vadd.f32 %v4809, %v4980
        %v5054 = vadd.f32 %v4810, %v4983
        %v5055 = vadd.f32 %v4811, %v4985
        %v5056 = vadd.f32 %v4812, %v4988
        %v5057 = vadd.f32 %v4813, %v4990
        %v5058 = vadd.f32 %v4814, %v4993
        %v5059 = vadd.f32 %v4815, %v4995
        %v5060 = vlaneseq
        %v5061 = vshrl.u32 %v5060, 7
        %v5062 = vsub.s32 0, %v5061
        %v5063 = vrot.slane %v454, %v5062
        %v5064 = vmul.f32 %v394, %v5063
        %v5065 = vmul.f32 %v395, %v5063
        %v5066 = vmul.f32 %v397, %v5063
        %v5067 = vmul.f32 %v398, %v5063
        %v5068 = vmul.f32 %v400, %v5063
        %v5069 = vmul.f32 %v401, %v5063
        %v5070 = vmul.f32 %v403, %v5063
        %v5071 = vmul.f32 %v404, %v5063
        %v5072 = vmul.f32 %v406, %v5063
        %v5073 = vmul.f32 %v407, %v5063
        %v5074 = vmul.f32 %v409, %v5063
        %v5075 = vmul.f32 %v410, %v5063
        %v5076 = vmul.f32 %v412, %v5063
        %v5077 = vmul.f32 %v413, %v5063
        %v5078 = vmul.f32 %v415, %v5063
        %v5079 = vmul.f32 %v416, %v5063
        %v5080 = vmul.f32 %v418, %v5063
        %v5081 = vmul.f32 %v419, %v5063
        %v5082 = vmul.f32 %v421, %v5063
        %v5083 = vmul.f32 %v422, %v5063
        %v5084 = vmul.f32 %v424, %v5063
        %v5085 = vmul.f32 %v425, %v5063
        %v5086 = vmul.f32 %v427, %v5063
        %v5087 = vmul.f32 %v428, %v5063
        %v5088 = vmul.f32 %v430, %v5063
        %v5089 = vmul.f32 %v431, %v5063
        %v5090 = vmul.f32 %v433, %v5063
        %v5091 = vmul.f32 %v434, %v5063
        %v5092 = vmul.f32 %v436, %v5063
        %v5093 = vmul.f32 %v437, %v5063
        %v5094 = vmul.f32 %v439, %v5063
        %v5095 = vmul.f32 %v440, %v5063
        %v5096 = vadd.f32 %v5028, %v5064
        %v5097 = vadd.f32 %v5029, %v5065
        %v5098 = vadd.f32 %v5030, %v5066
        %v5099 = vadd.f32 %v5031, %v5067
        %v5100 = vadd.f32 %v5032, %v5068
        %v5101 = vadd.f32 %v5033, %v5069
        %v5102 = vadd.f32 %v5034, %v5070
        %v5103 = vadd.f32 %v5035, %v5071
        %v5104 = vadd.f32 %v5036, %v5072
        %v5105 = vadd.f32 %v5037, %v5073
        %v5106 = vadd.f32 %v5038, %v5074
        %v5107 = vadd.f32 %v5039, %v5075
        %v5108 = vadd.f32 %v5040, %v5076
        %v5109 = vadd.f32 %v5041, %v5077
        %v5110 = vadd.f32 %v5042, %v5078
        %v5111 = vadd.f32 %v5043, %v5079
        %v5112 = vadd.f32 %v5044, %v5080
        %v5113 = vadd.f32 %v5045, %v5081
        %v5114 = vadd.f32 %v5046, %v5082
        %v5115 = vadd.f32 %v5047, %v5083
        %v5116 = vadd.f32 %v5048, %v5084
        %v5117 = vadd.f32 %v5049, %v5085
        %v5118 = vadd.f32 %v5050, %v5086
        %v5119 = vadd.f32 %v5051, %v5087
        %v5120 = vadd.f32 %v5052, %v5088
        %v5121 = vadd.f32 %v5053, %v5089
        %v5122 = vadd.f32 %v5054, %v5090
        %v5123 = vadd.f32 %v5055, %v5091
        %v5124 = vadd.f32 %v5056, %v5092
        %v5125 = vadd.f32 %v5057, %v5093
        %v5126 = vadd.f32 %v5058, %v5094
        %v5127 = vadd.f32 %v5059, %v5095
        %v5128 = vlaneseq
        %v5129 = vshrl.u32 %v5128, 7
        %v5130 = vsub.s32 1, %v5129
        %v5131 = vrot.slane %v454, %v5130
        %v5132 = vmul.f32 %v394, %v5131
        %v5133 = vmul.f32 %v395, %v5131
        %v5134 = vmul.f32 %v396, %v5131
        %v5135 = vmul.f32 %v397, %v5131
        %v5136 = vmul.f32 %v398, %v5131
        %v5137 = vmul.f32 %v399, %v5131
        %v5138 = vmul.f32 %v400, %v5131
        %v5139 = vmul.f32 %v401, %v5131
        %v5140 = vmul.f32 %v402, %v5131
        %v5141 = vmul.f32 %v403, %v5131
        %v5142 = vmul.f32 %v404, %v5131
        %v5143 = vmul.f32 %v405, %v5131
        %v5144 = vmul.f32 %v406, %v5131
        %v5145 = vmul.f32 %v407, %v5131
        %v5146 = vmul.f32 %v408, %v5131
        %v5147 = vmul.f32 %v409, %v5131
        %v5148 = vmul.f32 %v410, %v5131
        %v5149 = vmul.f32 %v411, %v5131
        %v5150 = vmul.f32 %v412, %v5131
        %v5151 = vmul.f32 %v413, %v5131
        %v5152 = vmul.f32 %v414, %v5131
        %v5153 = vmul.f32 %v415, %v5131
        %v5154 = vmul.f32 %v416, %v5131
        %v5155 = vmul.f32 %v417, %v5131
        %v5156 = vmul.f32 %v418, %v5131
        %v5157 = vmul.f32 %v419, %v5131
        %v5158 = vmul.f32 %v420, %v5131
        %v5159 = vmul.f32 %v421, %v5131
        %v5160 = vmul.f32 %v422, %v5131
        %v5161 = vmul.f32 %v423, %v5131
        %v5162 = vmul.f32 %v424, %v5131
        %v5163 = vmul.f32 %v425, %v5131
        %v5164 = vmul.f32 %v426, %v5131
        %v5165 = vmul.f32 %v427, %v5131
        %v5166 = vmul.f32 %v428, %v5131
        %v5167 = vmul.f32 %v429, %v5131
        %v5168 = vmul.f32 %v430, %v5131
        %v5169 = vmul.f32 %v431, %v5131
        %v5170 = vmul.f32 %v432, %v5131
        %v5171 = vmul.f32 %v433, %v5131
        %v5172 = vmul.f32 %v434, %v5131
        %v5173 = vmul.f32 %v435, %v5131
        %v5174 = vmul.f32 %v436, %v5131
        %v5175 = vmul.f32 %v437, %v5131
        %v5176 = vmul.f32 %v438, %v5131
        %v5177 = vmul.f32 %v439, %v5131
        %v5178 = vmul.f32 %v440, %v5131
        %v5179 = vmul.f32 %v441, %v5131
        %v5228 = vrot.slane %v5132, 1
        %v5229 = vrot.slane %v5133, 1
        %v5230 = vsel %vm626, %v5228, %v5229
        %v5231 = vrot.slane %v5134, 1
        %v5232 = vsel %vm626, %v5229, %v5231
        %v5233 = vrot.slane %v5135, 1
        %v5234 = vrot.slane %v5136, 1
        %v5235 = vsel %vm626, %v5233, %v5234
        %v5236 = vrot.slane %v5137, 1
        %v5237 = vsel %vm626, %v5234, %v5236
        %v5238 = vrot.slane %v5138, 1
        %v5239 = vrot.slane %v5139, 1
        %v5240 = vsel %vm626, %v5238, %v5239
        %v5241 = vrot.slane %v5140, 1
        %v5242 = vsel %vm626, %v5239, %v5241
        %v5243 = vrot.slane %v5141, 1
        %v5244 = vrot.slane %v5142, 1
        %v5245 = vsel %vm626, %v5243, %v5244
        %v5246 = vrot.slane %v5143, 1
        %v5247 = vsel %vm626, %v5244, %v5246
        %v5248 = vrot.slane %v5144, 1
        %v5249 = vrot.slane %v5145, 1
        %v5250 = vsel %vm626, %v5248, %v5249
        %v5251 = vrot.slane %v5146, 1
        %v5252 = vsel %vm626, %v5249, %v5251
        %v5253 = vrot.slane %v5147, 1
        %v5254 = vrot.slane %v5148, 1
        %v5255 = vsel %vm626, %v5253, %v5254
        %v5256 = vrot.slane %v5149, 1
        %v5257 = vsel %vm626, %v5254, %v5256
        %v5258 = vrot.slane %v5150, 1
        %v5259 = vrot.slane %v5151, 1
        %v5260 = vsel %vm626, %v5258, %v5259
        %v5261 = vrot.slane %v5152, 1
        %v5262 = vsel %vm626, %v5259, %v5261
        %v5263 = vrot.slane %v5153, 1
        %v5264 = vrot.slane %v5154, 1
        %v5265 = vsel %vm626, %v5263, %v5264
        %v5266 = vrot.slane %v5155, 1
        %v5267 = vsel %vm626, %v5264, %v5266
        %v5268 = vrot.slane %v5156, 1
        %v5269 = vrot.slane %v5157, 1
        %v5270 = vsel %vm626, %v5268, %v5269
        %v5271 = vrot.slane %v5158, 1
        %v5272 = vsel %vm626, %v5269, %v5271
        %v5273 = vrot.slane %v5159, 1
        %v5274 = vrot.slane %v5160, 1
        %v5275 = vsel %vm626, %v5273, %v5274
        %v5276 = vrot.slane %v5161, 1
        %v5277 = vsel %vm626, %v5274, %v5276
        %v5278 = vrot.slane %v5162, 1
        %v5279 = vrot.slane %v5163, 1
        %v5280 = vsel %vm626, %v5278, %v5279
        %v5281 = vrot.slane %v5164, 1
        %v5282 = vsel %vm626, %v5279, %v5281
        %v5283 = vrot.slane %v5165, 1
        %v5284 = vrot.slane %v5166, 1
        %v5285 = vsel %vm626, %v5283, %v5284
        %v5286 = vrot.slane %v5167, 1
        %v5287 = vsel %vm626, %v5284, %v5286
        %v5288 = vrot.slane %v5168, 1
        %v5289 = vrot.slane %v5169, 1
        %v5290 = vsel %vm626, %v5288, %v5289
        %v5291 = vrot.slane %v5170, 1
        %v5292 = vsel %vm626, %v5289, %v5291
        %v5293 = vrot.slane %v5171, 1
        %v5294 = vrot.slane %v5172, 1
        %v5295 = vsel %vm626, %v5293, %v5294
        %v5296 = vrot.slane %v5173, 1
        %v5297 = vsel %vm626, %v5294, %v5296
        %v5298 = vrot.slane %v5174, 1
        %v5299 = vrot.slane %v5175, 1
        %v5300 = vsel %vm626, %v5298, %v5299
        %v5301 = vrot.slane %v5176, 1
        %v5302 = vsel %vm626, %v5299, %v5301
        %v5303 = vrot.slane %v5177, 1
        %v5304 = vrot.slane %v5178, 1
        %v5305 = vsel %vm626, %v5303, %v5304
        %v5306 = vrot.slane %v5179, 1
        %v5307 = vsel %vm626, %v5304, %v5306
        %v5340 = vadd.f32 %v5096, %v5230
        %v5341 = vadd.f32 %v5097, %v5232
        %v5342 = vadd.f32 %v5098, %v5235
        %v5343 = vadd.f32 %v5099, %v5237
        %v5344 = vadd.f32 %v5100, %v5240
        %v5345 = vadd.f32 %v5101, %v5242
        %v5346 = vadd.f32 %v5102, %v5245
        %v5347 = vadd.f32 %v5103, %v5247
        %v5348 = vadd.f32 %v5104, %v5250
        %v5349 = vadd.f32 %v5105, %v5252
        %v5350 = vadd.f32 %v5106, %v5255
        %v5351 = vadd.f32 %v5107, %v5257
        %v5352 = vadd.f32 %v5108, %v5260
        %v5353 = vadd.f32 %v5109, %v5262
        %v5354 = vadd.f32 %v5110, %v5265
        %v5355 = vadd.f32 %v5111, %v5267
        %v5356 = vadd.f32 %v5112, %v5270
        %v5357 = vadd.f32 %v5113, %v5272
        %v5358 = vadd.f32 %v5114, %v5275
        %v5359 = vadd.f32 %v5115, %v5277
        %v5360 = vadd.f32 %v5116, %v5280
        %v5361 = vadd.f32 %v5117, %v5282
        %v5362 = vadd.f32 %v5118, %v5285
        %v5363 = vadd.f32 %v5119, %v5287
        %v5364 = vadd.f32 %v5120, %v5290
        %v5365 = vadd.f32 %v5121, %v5292
        %v5366 = vadd.f32 %v5122, %v5295
        %v5367 = vadd.f32 %v5123, %v5297
        %v5368 = vadd.f32 %v5124, %v5300
        %v5369 = vadd.f32 %v5125, %v5302
        %v5370 = vadd.f32 %v5126, %v5305
        %v5371 = vadd.f32 %v5127, %v5307
        %v5372 = vlaneseq
        %v5373 = vshrl.u32 %v5372, 7
        %v5374 = vsub.s32 2, %v5373
        %v5375 = vrot.slane %v454, %v5374
        %v5376 = vmul.f32 %v394, %v5375
        %v5377 = vmul.f32 %v395, %v5375
        %v5378 = vmul.f32 %v396, %v5375
        %v5379 = vmul.f32 %v397, %v5375
        %v5380 = vmul.f32 %v398, %v5375
        %v5381 = vmul.f32 %v399, %v5375
        %v5382 = vmul.f32 %v400, %v5375
        %v5383 = vmul.f32 %v401, %v5375
        %v5384 = vmul.f32 %v402, %v5375
        %v5385 = vmul.f32 %v403, %v5375
        %v5386 = vmul.f32 %v404, %v5375
        %v5387 = vmul.f32 %v405, %v5375
        %v5388 = vmul.f32 %v406, %v5375
        %v5389 = vmul.f32 %v407, %v5375
        %v5390 = vmul.f32 %v408, %v5375
        %v5391 = vmul.f32 %v409, %v5375
        %v5392 = vmul.f32 %v410, %v5375
        %v5393 = vmul.f32 %v411, %v5375
        %v5394 = vmul.f32 %v412, %v5375
        %v5395 = vmul.f32 %v413, %v5375
        %v5396 = vmul.f32 %v414, %v5375
        %v5397 = vmul.f32 %v415, %v5375
        %v5398 = vmul.f32 %v416, %v5375
        %v5399 = vmul.f32 %v417, %v5375
        %v5400 = vmul.f32 %v418, %v5375
        %v5401 = vmul.f32 %v419, %v5375
        %v5402 = vmul.f32 %v420, %v5375
        %v5403 = vmul.f32 %v421, %v5375
        %v5404 = vmul.f32 %v422, %v5375
        %v5405 = vmul.f32 %v423, %v5375
        %v5406 = vmul.f32 %v424, %v5375
        %v5407 = vmul.f32 %v425, %v5375
        %v5408 = vmul.f32 %v426, %v5375
        %v5409 = vmul.f32 %v427, %v5375
        %v5410 = vmul.f32 %v428, %v5375
        %v5411 = vmul.f32 %v429, %v5375
        %v5412 = vmul.f32 %v430, %v5375
        %v5413 = vmul.f32 %v431, %v5375
        %v5414 = vmul.f32 %v432, %v5375
        %v5415 = vmul.f32 %v433, %v5375
        %v5416 = vmul.f32 %v434, %v5375
        %v5417 = vmul.f32 %v435, %v5375
        %v5418 = vmul.f32 %v436, %v5375
        %v5419 = vmul.f32 %v437, %v5375
        %v5420 = vmul.f32 %v438, %v5375
        %v5421 = vmul.f32 %v439, %v5375
        %v5422 = vmul.f32 %v440, %v5375
        %v5423 = vmul.f32 %v441, %v5375
        %v5472 = vrot.slane %v5376, 2
        %v5473 = vrot.slane %v5377, 2
        %v5474 = vsel %vm871, %v5472, %v5473
        %v5475 = vrot.slane %v5378, 2
        %v5476 = vsel %vm871, %v5473, %v5475
        %v5477 = vrot.slane %v5379, 2
        %v5478 = vrot.slane %v5380, 2
        %v5479 = vsel %vm871, %v5477, %v5478
        %v5480 = vrot.slane %v5381, 2
        %v5481 = vsel %vm871, %v5478, %v5480
        %v5482 = vrot.slane %v5382, 2
        %v5483 = vrot.slane %v5383, 2
        %v5484 = vsel %vm871, %v5482, %v5483
        %v5485 = vrot.slane %v5384, 2
        %v5486 = vsel %vm871, %v5483, %v5485
        %v5487 = vrot.slane %v5385, 2
        %v5488 = vrot.slane %v5386, 2
        %v5489 = vsel %vm871, %v5487, %v5488
        %v5490 = vrot.slane %v5387, 2
        %v5491 = vsel %vm871, %v5488, %v5490
        %v5492 = vrot.slane %v5388, 2
        %v5493 = vrot.slane %v5389, 2
        %v5494 = vsel %vm871, %v5492, %v5493
        %v5495 = vrot.slane %v5390, 2
        %v5496 = vsel %vm871, %v5493, %v5495
        %v5497 = vrot.slane %v5391, 2
        %v5498 = vrot.slane %v5392, 2
        %v5499 = vsel %vm871, %v5497, %v5498
        %v5500 = vrot.slane %v5393, 2
        %v5501 = vsel %vm871, %v5498, %v5500
        %v5502 = vrot.slane %v5394, 2
        %v5503 = vrot.slane %v5395, 2
        %v5504 = vsel %vm871, %v5502, %v5503
        %v5505 = vrot.slane %v5396, 2
        %v5506 = vsel %vm871, %v5503, %v5505
        %v5507 = vrot.slane %v5397, 2
        %v5508 = vrot.slane %v5398, 2
        %v5509 = vsel %vm871, %v5507, %v5508
        %v5510 = vrot.slane %v5399, 2
        %v5511 = vsel %vm871, %v5508, %v5510
        %v5512 = vrot.slane %v5400, 2
        %v5513 = vrot.slane %v5401, 2
        %v5514 = vsel %vm871, %v5512, %v5513
        %v5515 = vrot.slane %v5402, 2
        %v5516 = vsel %vm871, %v5513, %v5515
        %v5517 = vrot.slane %v5403, 2
        %v5518 = vrot.slane %v5404, 2
        %v5519 = vsel %vm871, %v5517, %v5518
        %v5520 = vrot.slane %v5405, 2
        %v5521 = vsel %vm871, %v5518, %v5520
        %v5522 = vrot.slane %v5406, 2
        %v5523 = vrot.slane %v5407, 2
        %v5524 = vsel %vm871, %v5522, %v5523
        %v5525 = vrot.slane %v5408, 2
        %v5526 = vsel %vm871, %v5523, %v5525
        %v5527 = vrot.slane %v5409, 2
        %v5528 = vrot.slane %v5410, 2
        %v5529 = vsel %vm871, %v5527, %v5528
        %v5530 = vrot.slane %v5411, 2
        %v5531 = vsel %vm871, %v5528, %v5530
        %v5532 = vrot.slane %v5412, 2
        %v5533 = vrot.slane %v5413, 2
        %v5534 = vsel %vm871, %v5532, %v5533
        %v5535 = vrot.slane %v5414, 2
        %v5536 = vsel %vm871, %v5533, %v5535
        %v5537 = vrot.slane %v5415, 2
        %v5538 = vrot.slane %v5416, 2
        %v5539 = vsel %vm871, %v5537, %v5538
        %v5540 = vrot.slane %v5417, 2
        %v5541 = vsel %vm871, %v5538, %v5540
        %v5542 = vrot.slane %v5418, 2
        %v5543 = vrot.slane %v5419, 2
        %v5544 = vsel %vm871, %v5542, %v5543
        %v5545 = vrot.slane %v5420, 2
        %v5546 = vsel %vm871, %v5543, %v5545
        %v5547 = vrot.slane %v5421, 2
        %v5548 = vrot.slane %v5422, 2
        %v5549 = vsel %vm871, %v5547, %v5548
        %v5550 = vrot.slane %v5423, 2
        %v5551 = vsel %vm871, %v5548, %v5550
        %v5584 = vadd.f32 %v5340, %v5474
        %v5585 = vadd.f32 %v5341, %v5476
        %v5586 = vadd.f32 %v5342, %v5479
        %v5587 = vadd.f32 %v5343, %v5481
        %v5588 = vadd.f32 %v5344, %v5484
        %v5589 = vadd.f32 %v5345, %v5486
        %v5590 = vadd.f32 %v5346, %v5489
        %v5591 = vadd.f32 %v5347, %v5491
        %v5592 = vadd.f32 %v5348, %v5494
        %v5593 = vadd.f32 %v5349, %v5496
        %v5594 = vadd.f32 %v5350, %v5499
        %v5595 = vadd.f32 %v5351, %v5501
        %v5596 = vadd.f32 %v5352, %v5504
        %v5597 = vadd.f32 %v5353, %v5506
        %v5598 = vadd.f32 %v5354, %v5509
        %v5599 = vadd.f32 %v5355, %v5511
        %v5600 = vadd.f32 %v5356, %v5514
        %v5601 = vadd.f32 %v5357, %v5516
        %v5602 = vadd.f32 %v5358, %v5519
        %v5603 = vadd.f32 %v5359, %v5521
        %v5604 = vadd.f32 %v5360, %v5524
        %v5605 = vadd.f32 %v5361, %v5526
        %v5606 = vadd.f32 %v5362, %v5529
        %v5607 = vadd.f32 %v5363, %v5531
        %v5608 = vadd.f32 %v5364, %v5534
        %v5609 = vadd.f32 %v5365, %v5536
        %v5610 = vadd.f32 %v5366, %v5539
        %v5611 = vadd.f32 %v5367, %v5541
        %v5612 = vadd.f32 %v5368, %v5544
        %v5613 = vadd.f32 %v5369, %v5546
        %v5614 = vadd.f32 %v5370, %v5549
        %v5615 = vadd.f32 %v5371, %v5551
        %v5616 = vlaneseq
        %v5617 = vshrl.u32 %v5616, 7
        %v5618 = vsub.s32 3, %v5617
        %v5619 = vrot.slane %v454, %v5618
        %v5620 = vmul.f32 %v394, %v5619
        %v5621 = vmul.f32 %v395, %v5619
        %v5622 = vmul.f32 %v396, %v5619
        %v5623 = vmul.f32 %v397, %v5619
        %v5624 = vmul.f32 %v398, %v5619
        %v5625 = vmul.f32 %v399, %v5619
        %v5626 = vmul.f32 %v400, %v5619
        %v5627 = vmul.f32 %v401, %v5619
        %v5628 = vmul.f32 %v402, %v5619
        %v5629 = vmul.f32 %v403, %v5619
        %v5630 = vmul.f32 %v404, %v5619
        %v5631 = vmul.f32 %v405, %v5619
        %v5632 = vmul.f32 %v406, %v5619
        %v5633 = vmul.f32 %v407, %v5619
        %v5634 = vmul.f32 %v408, %v5619
        %v5635 = vmul.f32 %v409, %v5619
        %v5636 = vmul.f32 %v410, %v5619
        %v5637 = vmul.f32 %v411, %v5619
        %v5638 = vmul.f32 %v412, %v5619
        %v5639 = vmul.f32 %v413, %v5619
        %v5640 = vmul.f32 %v414, %v5619
        %v5641 = vmul.f32 %v415, %v5619
        %v5642 = vmul.f32 %v416, %v5619
        %v5643 = vmul.f32 %v417, %v5619
        %v5644 = vmul.f32 %v418, %v5619
        %v5645 = vmul.f32 %v419, %v5619
        %v5646 = vmul.f32 %v420, %v5619
        %v5647 = vmul.f32 %v421, %v5619
        %v5648 = vmul.f32 %v422, %v5619
        %v5649 = vmul.f32 %v423, %v5619
        %v5650 = vmul.f32 %v424, %v5619
        %v5651 = vmul.f32 %v425, %v5619
        %v5652 = vmul.f32 %v426, %v5619
        %v5653 = vmul.f32 %v427, %v5619
        %v5654 = vmul.f32 %v428, %v5619
        %v5655 = vmul.f32 %v429, %v5619
        %v5656 = vmul.f32 %v430, %v5619
        %v5657 = vmul.f32 %v431, %v5619
        %v5658 = vmul.f32 %v432, %v5619
        %v5659 = vmul.f32 %v433, %v5619
        %v5660 = vmul.f32 %v434, %v5619
        %v5661 = vmul.f32 %v435, %v5619
        %v5662 = vmul.f32 %v436, %v5619
        %v5663 = vmul.f32 %v437, %v5619
        %v5664 = vmul.f32 %v438, %v5619
        %v5665 = vmul.f32 %v439, %v5619
        %v5666 = vmul.f32 %v440, %v5619
        %v5667 = vmul.f32 %v441, %v5619
        %v5716 = vrot.slane %v5620, 3
        %v5717 = vrot.slane %v5621, 3
        %v5718 = vsel %vm1116, %v5716, %v5717
        %v5719 = vrot.slane %v5622, 3
        %v5720 = vsel %vm1116, %v5717, %v5719
        %v5721 = vrot.slane %v5623, 3
        %v5722 = vrot.slane %v5624, 3
        %v5723 = vsel %vm1116, %v5721, %v5722
        %v5724 = vrot.slane %v5625, 3
        %v5725 = vsel %vm1116, %v5722, %v5724
        %v5726 = vrot.slane %v5626, 3
        %v5727 = vrot.slane %v5627, 3
        %v5728 = vsel %vm1116, %v5726, %v5727
        %v5729 = vrot.slane %v5628, 3
        %v5730 = vsel %vm1116, %v5727, %v5729
        %v5731 = vrot.slane %v5629, 3
        %v5732 = vrot.slane %v5630, 3
        %v5733 = vsel %vm1116, %v5731, %v5732
        %v5734 = vrot.slane %v5631, 3
        %v5735 = vsel %vm1116, %v5732, %v5734
        %v5736 = vrot.slane %v5632, 3
        %v5737 = vrot.slane %v5633, 3
        %v5738 = vsel %vm1116, %v5736, %v5737
        %v5739 = vrot.slane %v5634, 3
        %v5740 = vsel %vm1116, %v5737, %v5739
        %v5741 = vrot.slane %v5635, 3
        %v5742 = vrot.slane %v5636, 3
        %v5743 = vsel %vm1116, %v5741, %v5742
        %v5744 = vrot.slane %v5637, 3
        %v5745 = vsel %vm1116, %v5742, %v5744
        %v5746 = vrot.slane %v5638, 3
        %v5747 = vrot.slane %v5639, 3
        %v5748 = vsel %vm1116, %v5746, %v5747
        %v5749 = vrot.slane %v5640, 3
        %v5750 = vsel %vm1116, %v5747, %v5749
        %v5751 = vrot.slane %v5641, 3
        %v5752 = vrot.slane %v5642, 3
        %v5753 = vsel %vm1116, %v5751, %v5752
        %v5754 = vrot.slane %v5643, 3
        %v5755 = vsel %vm1116, %v5752, %v5754
        %v5756 = vrot.slane %v5644, 3
        %v5757 = vrot.slane %v5645, 3
        %v5758 = vsel %vm1116, %v5756, %v5757
        %v5759 = vrot.slane %v5646, 3
        %v5760 = vsel %vm1116, %v5757, %v5759
        %v5761 = vrot.slane %v5647, 3
        %v5762 = vrot.slane %v5648, 3
        %v5763 = vsel %vm1116, %v5761, %v5762
        %v5764 = vrot.slane %v5649, 3
        %v5765 = vsel %vm1116, %v5762, %v5764
        %v5766 = vrot.slane %v5650, 3
        %v5767 = vrot.slane %v5651, 3
        %v5768 = vsel %vm1116, %v5766, %v5767
        %v5769 = vrot.slane %v5652, 3
        %v5770 = vsel %vm1116, %v5767, %v5769
        %v5771 = vrot.slane %v5653, 3
        %v5772 = vrot.slane %v5654, 3
        %v5773 = vsel %vm1116, %v5771, %v5772
        %v5774 = vrot.slane %v5655, 3
        %v5775 = vsel %vm1116, %v5772, %v5774
        %v5776 = vrot.slane %v5656, 3
        %v5777 = vrot.slane %v5657, 3
        %v5778 = vsel %vm1116, %v5776, %v5777
        %v5779 = vrot.slane %v5658, 3
        %v5780 = vsel %vm1116, %v5777, %v5779
        %v5781 = vrot.slane %v5659, 3
        %v5782 = vrot.slane %v5660, 3
        %v5783 = vsel %vm1116, %v5781, %v5782
        %v5784 = vrot.slane %v5661, 3
        %v5785 = vsel %vm1116, %v5782, %v5784
        %v5786 = vrot.slane %v5662, 3
        %v5787 = vrot.slane %v5663, 3
        %v5788 = vsel %vm1116, %v5786, %v5787
        %v5789 = vrot.slane %v5664, 3
        %v5790 = vsel %vm1116, %v5787, %v5789
        %v5791 = vrot.slane %v5665, 3
        %v5792 = vrot.slane %v5666, 3
        %v5793 = vsel %vm1116, %v5791, %v5792
        %v5794 = vrot.slane %v5667, 3
        %v5795 = vsel %vm1116, %v5792, %v5794
        %v5828 = vadd.f32 %v5584, %v5718
        %v5829 = vadd.f32 %v5585, %v5720
        %v5830 = vadd.f32 %v5586, %v5723
        %v5831 = vadd.f32 %v5587, %v5725
        %v5832 = vadd.f32 %v5588, %v5728
        %v5833 = vadd.f32 %v5589, %v5730
        %v5834 = vadd.f32 %v5590, %v5733
        %v5835 = vadd.f32 %v5591, %v5735
        %v5836 = vadd.f32 %v5592, %v5738
        %v5837 = vadd.f32 %v5593, %v5740
        %v5838 = vadd.f32 %v5594, %v5743
        %v5839 = vadd.f32 %v5595, %v5745
        %v5840 = vadd.f32 %v5596, %v5748
        %v5841 = vadd.f32 %v5597, %v5750
        %v5842 = vadd.f32 %v5598, %v5753
        %v5843 = vadd.f32 %v5599, %v5755
        %v5844 = vadd.f32 %v5600, %v5758
        %v5845 = vadd.f32 %v5601, %v5760
        %v5846 = vadd.f32 %v5602, %v5763
        %v5847 = vadd.f32 %v5603, %v5765
        %v5848 = vadd.f32 %v5604, %v5768
        %v5849 = vadd.f32 %v5605, %v5770
        %v5850 = vadd.f32 %v5606, %v5773
        %v5851 = vadd.f32 %v5607, %v5775
        %v5852 = vadd.f32 %v5608, %v5778
        %v5853 = vadd.f32 %v5609, %v5780
        %v5854 = vadd.f32 %v5610, %v5783
        %v5855 = vadd.f32 %v5611, %v5785
        %v5856 = vadd.f32 %v5612, %v5788
        %v5857 = vadd.f32 %v5613, %v5790
        %v5858 = vadd.f32 %v5614, %v5793
        %v5859 = vadd.f32 %v5615, %v5795
        %v5860 = vlaneseq
        %v5861 = vshrl.u32 %v5860, 7
        %v5862 = vsub.s32 4, %v5861
        %v5863 = vrot.slane %v454, %v5862
        %v5864 = vmul.f32 %v394, %v5863
        %v5865 = vmul.f32 %v395, %v5863
        %v5866 = vmul.f32 %v396, %v5863
        %v5867 = vmul.f32 %v397, %v5863
        %v5868 = vmul.f32 %v398, %v5863
        %v5869 = vmul.f32 %v399, %v5863
        %v5870 = vmul.f32 %v400, %v5863
        %v5871 = vmul.f32 %v401, %v5863
        %v5872 = vmul.f32 %v402, %v5863
        %v5873 = vmul.f32 %v403, %v5863
        %v5874 = vmul.f32 %v404, %v5863
        %v5875 = vmul.f32 %v405, %v5863
        %v5876 = vmul.f32 %v406, %v5863
        %v5877 = vmul.f32 %v407, %v5863
        %v5878 = vmul.f32 %v408, %v5863
        %v5879 = vmul.f32 %v409, %v5863
        %v5880 = vmul.f32 %v410, %v5863
        %v5881 = vmul.f32 %v411, %v5863
        %v5882 = vmul.f32 %v412, %v5863
        %v5883 = vmul.f32 %v413, %v5863
        %v5884 = vmul.f32 %v414, %v5863
        %v5885 = vmul.f32 %v415, %v5863
        %v5886 = vmul.f32 %v416, %v5863
        %v5887 = vmul.f32 %v417, %v5863
        %v5888 = vmul.f32 %v418, %v5863
        %v5889 = vmul.f32 %v419, %v5863
        %v5890 = vmul.f32 %v420, %v5863
        %v5891 = vmul.f32 %v421, %v5863
        %v5892 = vmul.f32 %v422, %v5863
        %v5893 = vmul.f32 %v423, %v5863
        %v5894 = vmul.f32 %v424, %v5863
        %v5895 = vmul.f32 %v425, %v5863
        %v5896 = vmul.f32 %v426, %v5863
        %v5897 = vmul.f32 %v427, %v5863
        %v5898 = vmul.f32 %v428, %v5863
        %v5899 = vmul.f32 %v429, %v5863
        %v5900 = vmul.f32 %v430, %v5863
        %v5901 = vmul.f32 %v431, %v5863
        %v5902 = vmul.f32 %v432, %v5863
        %v5903 = vmul.f32 %v433, %v5863
        %v5904 = vmul.f32 %v434, %v5863
        %v5905 = vmul.f32 %v435, %v5863
        %v5906 = vmul.f32 %v436, %v5863
        %v5907 = vmul.f32 %v437, %v5863
        %v5908 = vmul.f32 %v438, %v5863
        %v5909 = vmul.f32 %v439, %v5863
        %v5910 = vmul.f32 %v440, %v5863
        %v5911 = vmul.f32 %v441, %v5863
        %v5960 = vrot.slane %v5864, 4
        %v5961 = vrot.slane %v5865, 4
        %v5962 = vsel %vm1361, %v5960, %v5961
        %v5963 = vrot.slane %v5866, 4
        %v5964 = vsel %vm1361, %v5961, %v5963
        %v5965 = vrot.slane %v5867, 4
        %v5966 = vrot.slane %v5868, 4
        %v5967 = vsel %vm1361, %v5965, %v5966
        %v5968 = vrot.slane %v5869, 4
        %v5969 = vsel %vm1361, %v5966, %v5968
        %v5970 = vrot.slane %v5870, 4
        %v5971 = vrot.slane %v5871, 4
        %v5972 = vsel %vm1361, %v5970, %v5971
        %v5973 = vrot.slane %v5872, 4
        %v5974 = vsel %vm1361, %v5971, %v5973
        %v5975 = vrot.slane %v5873, 4
        %v5976 = vrot.slane %v5874, 4
        %v5977 = vsel %vm1361, %v5975, %v5976
        %v5978 = vrot.slane %v5875, 4
        %v5979 = vsel %vm1361, %v5976, %v5978
        %v5980 = vrot.slane %v5876, 4
        %v5981 = vrot.slane %v5877, 4
        %v5982 = vsel %vm1361, %v5980, %v5981
        %v5983 = vrot.slane %v5878, 4
        %v5984 = vsel %vm1361, %v5981, %v5983
        %v5985 = vrot.slane %v5879, 4
        %v5986 = vrot.slane %v5880, 4
        %v5987 = vsel %vm1361, %v5985, %v5986
        %v5988 = vrot.slane %v5881, 4
        %v5989 = vsel %vm1361, %v5986, %v5988
        %v5990 = vrot.slane %v5882, 4
        %v5991 = vrot.slane %v5883, 4
        %v5992 = vsel %vm1361, %v5990, %v5991
        %v5993 = vrot.slane %v5884, 4
        %v5994 = vsel %vm1361, %v5991, %v5993
        %v5995 = vrot.slane %v5885, 4
        %v5996 = vrot.slane %v5886, 4
        %v5997 = vsel %vm1361, %v5995, %v5996
        %v5998 = vrot.slane %v5887, 4
        %v5999 = vsel %vm1361, %v5996, %v5998
        %v6000 = vrot.slane %v5888, 4
        %v6001 = vrot.slane %v5889, 4
        %v6002 = vsel %vm1361, %v6000, %v6001
        %v6003 = vrot.slane %v5890, 4
        %v6004 = vsel %vm1361, %v6001, %v6003
        %v6005 = vrot.slane %v5891, 4
        %v6006 = vrot.slane %v5892, 4
        %v6007 = vsel %vm1361, %v6005, %v6006
        %v6008 = vrot.slane %v5893, 4
        %v6009 = vsel %vm1361, %v6006, %v6008
        %v6010 = vrot.slane %v5894, 4
        %v6011 = vrot.slane %v5895, 4
        %v6012 = vsel %vm1361, %v6010, %v6011
        %v6013 = vrot.slane %v5896, 4
        %v6014 = vsel %vm1361, %v6011, %v6013
        %v6015 = vrot.slane %v5897, 4
        %v6016 = vrot.slane %v5898, 4
        %v6017 = vsel %vm1361, %v6015, %v6016
        %v6018 = vrot.slane %v5899, 4
        %v6019 = vsel %vm1361, %v6016, %v6018
        %v6020 = vrot.slane %v5900, 4
        %v6021 = vrot.slane %v5901, 4
        %v6022 = vsel %vm1361, %v6020, %v6021
        %v6023 = vrot.slane %v5902, 4
        %v6024 = vsel %vm1361, %v6021, %v6023
        %v6025 = vrot.slane %v5903, 4
        %v6026 = vrot.slane %v5904, 4
        %v6027 = vsel %vm1361, %v6025, %v6026
        %v6028 = vrot.slane %v5905, 4
        %v6029 = vsel %vm1361, %v6026, %v6028
        %v6030 = vrot.slane %v5906, 4
        %v6031 = vrot.slane %v5907, 4
        %v6032 = vsel %vm1361, %v6030, %v6031
        %v6033 = vrot.slane %v5908, 4
        %v6034 = vsel %vm1361, %v6031, %v6033
        %v6035 = vrot.slane %v5909, 4
        %v6036 = vrot.slane %v5910, 4
        %v6037 = vsel %vm1361, %v6035, %v6036
        %v6038 = vrot.slane %v5911, 4
        %v6039 = vsel %vm1361, %v6036, %v6038
        %v6072 = vadd.f32 %v5828, %v5962
        %v6073 = vadd.f32 %v5829, %v5964
        %v6074 = vadd.f32 %v5830, %v5967
        %v6075 = vadd.f32 %v5831, %v5969
        %v6076 = vadd.f32 %v5832, %v5972
        %v6077 = vadd.f32 %v5833, %v5974
        %v6078 = vadd.f32 %v5834, %v5977
        %v6079 = vadd.f32 %v5835, %v5979
        %v6080 = vadd.f32 %v5836, %v5982
        %v6081 = vadd.f32 %v5837, %v5984
        %v6082 = vadd.f32 %v5838, %v5987
        %v6083 = vadd.f32 %v5839, %v5989
        %v6084 = vadd.f32 %v5840, %v5992
        %v6085 = vadd.f32 %v5841, %v5994
        %v6086 = vadd.f32 %v5842, %v5997
        %v6087 = vadd.f32 %v5843, %v5999
        %v6088 = vadd.f32 %v5844, %v6002
        %v6089 = vadd.f32 %v5845, %v6004
        %v6090 = vadd.f32 %v5846, %v6007
        %v6091 = vadd.f32 %v5847, %v6009
        %v6092 = vadd.f32 %v5848, %v6012
        %v6093 = vadd.f32 %v5849, %v6014
        %v6094 = vadd.f32 %v5850, %v6017
        %v6095 = vadd.f32 %v5851, %v6019
        %v6096 = vadd.f32 %v5852, %v6022
        %v6097 = vadd.f32 %v5853, %v6024
        %v6098 = vadd.f32 %v5854, %v6027
        %v6099 = vadd.f32 %v5855, %v6029
        %v6100 = vadd.f32 %v5856, %v6032
        %v6101 = vadd.f32 %v5857, %v6034
        %v6102 = vadd.f32 %v5858, %v6037
        %v6103 = vadd.f32 %v5859, %v6039
        %v6104 = vlaneseq
        %v6105 = vshrl.u32 %v6104, 7
        %v6106 = vsub.s32 5, %v6105
        %v6107 = vrot.slane %v454, %v6106
        %v6108 = vmul.f32 %v394, %v6107
        %v6109 = vmul.f32 %v395, %v6107
        %v6110 = vmul.f32 %v396, %v6107
        %v6111 = vmul.f32 %v397, %v6107
        %v6112 = vmul.f32 %v398, %v6107
        %v6113 = vmul.f32 %v399, %v6107
        %v6114 = vmul.f32 %v400, %v6107
        %v6115 = vmul.f32 %v401, %v6107
        %v6116 = vmul.f32 %v402, %v6107
        %v6117 = vmul.f32 %v403, %v6107
        %v6118 = vmul.f32 %v404, %v6107
        %v6119 = vmul.f32 %v405, %v6107
        %v6120 = vmul.f32 %v406, %v6107
        %v6121 = vmul.f32 %v407, %v6107
        %v6122 = vmul.f32 %v408, %v6107
        %v6123 = vmul.f32 %v409, %v6107
        %v6124 = vmul.f32 %v410, %v6107
        %v6125 = vmul.f32 %v411, %v6107
        %v6126 = vmul.f32 %v412, %v6107
        %v6127 = vmul.f32 %v413, %v6107
        %v6128 = vmul.f32 %v414, %v6107
        %v6129 = vmul.f32 %v415, %v6107
        %v6130 = vmul.f32 %v416, %v6107
        %v6131 = vmul.f32 %v417, %v6107
        %v6132 = vmul.f32 %v418, %v6107
        %v6133 = vmul.f32 %v419, %v6107
        %v6134 = vmul.f32 %v420, %v6107
        %v6135 = vmul.f32 %v421, %v6107
        %v6136 = vmul.f32 %v422, %v6107
        %v6137 = vmul.f32 %v423, %v6107
        %v6138 = vmul.f32 %v424, %v6107
        %v6139 = vmul.f32 %v425, %v6107
        %v6140 = vmul.f32 %v426, %v6107
        %v6141 = vmul.f32 %v427, %v6107
        %v6142 = vmul.f32 %v428, %v6107
        %v6143 = vmul.f32 %v429, %v6107
        %v6144 = vmul.f32 %v430, %v6107
        %v6145 = vmul.f32 %v431, %v6107
        %v6146 = vmul.f32 %v432, %v6107
        %v6147 = vmul.f32 %v433, %v6107
        %v6148 = vmul.f32 %v434, %v6107
        %v6149 = vmul.f32 %v435, %v6107
        %v6150 = vmul.f32 %v436, %v6107
        %v6151 = vmul.f32 %v437, %v6107
        %v6152 = vmul.f32 %v438, %v6107
        %v6153 = vmul.f32 %v439, %v6107
        %v6154 = vmul.f32 %v440, %v6107
        %v6155 = vmul.f32 %v441, %v6107
        %v6204 = vrot.slane %v6108, 5
        %v6205 = vrot.slane %v6109, 5
        %v6206 = vsel %vm1606, %v6204, %v6205
        %v6207 = vrot.slane %v6110, 5
        %v6208 = vsel %vm1606, %v6205, %v6207
        %v6209 = vrot.slane %v6111, 5
        %v6210 = vrot.slane %v6112, 5
        %v6211 = vsel %vm1606, %v6209, %v6210
        %v6212 = vrot.slane %v6113, 5
        %v6213 = vsel %vm1606, %v6210, %v6212
        %v6214 = vrot.slane %v6114, 5
        %v6215 = vrot.slane %v6115, 5
        %v6216 = vsel %vm1606, %v6214, %v6215
        %v6217 = vrot.slane %v6116, 5
        %v6218 = vsel %vm1606, %v6215, %v6217
        %v6219 = vrot.slane %v6117, 5
        %v6220 = vrot.slane %v6118, 5
        %v6221 = vsel %vm1606, %v6219, %v6220
        %v6222 = vrot.slane %v6119, 5
        %v6223 = vsel %vm1606, %v6220, %v6222
        %v6224 = vrot.slane %v6120, 5
        %v6225 = vrot.slane %v6121, 5
        %v6226 = vsel %vm1606, %v6224, %v6225
        %v6227 = vrot.slane %v6122, 5
        %v6228 = vsel %vm1606, %v6225, %v6227
        %v6229 = vrot.slane %v6123, 5
        %v6230 = vrot.slane %v6124, 5
        %v6231 = vsel %vm1606, %v6229, %v6230
        %v6232 = vrot.slane %v6125, 5
        %v6233 = vsel %vm1606, %v6230, %v6232
        %v6234 = vrot.slane %v6126, 5
        %v6235 = vrot.slane %v6127, 5
        %v6236 = vsel %vm1606, %v6234, %v6235
        %v6237 = vrot.slane %v6128, 5
        %v6238 = vsel %vm1606, %v6235, %v6237
        %v6239 = vrot.slane %v6129, 5
        %v6240 = vrot.slane %v6130, 5
        %v6241 = vsel %vm1606, %v6239, %v6240
        %v6242 = vrot.slane %v6131, 5
        %v6243 = vsel %vm1606, %v6240, %v6242
        %v6244 = vrot.slane %v6132, 5
        %v6245 = vrot.slane %v6133, 5
        %v6246 = vsel %vm1606, %v6244, %v6245
        %v6247 = vrot.slane %v6134, 5
        %v6248 = vsel %vm1606, %v6245, %v6247
        %v6249 = vrot.slane %v6135, 5
        %v6250 = vrot.slane %v6136, 5
        %v6251 = vsel %vm1606, %v6249, %v6250
        %v6252 = vrot.slane %v6137, 5
        %v6253 = vsel %vm1606, %v6250, %v6252
        %v6254 = vrot.slane %v6138, 5
        %v6255 = vrot.slane %v6139, 5
        %v6256 = vsel %vm1606, %v6254, %v6255
        %v6257 = vrot.slane %v6140, 5
        %v6258 = vsel %vm1606, %v6255, %v6257
        %v6259 = vrot.slane %v6141, 5
        %v6260 = vrot.slane %v6142, 5
        %v6261 = vsel %vm1606, %v6259, %v6260
        %v6262 = vrot.slane %v6143, 5
        %v6263 = vsel %vm1606, %v6260, %v6262
        %v6264 = vrot.slane %v6144, 5
        %v6265 = vrot.slane %v6145, 5
        %v6266 = vsel %vm1606, %v6264, %v6265
        %v6267 = vrot.slane %v6146, 5
        %v6268 = vsel %vm1606, %v6265, %v6267
        %v6269 = vrot.slane %v6147, 5
        %v6270 = vrot.slane %v6148, 5
        %v6271 = vsel %vm1606, %v6269, %v6270
        %v6272 = vrot.slane %v6149, 5
        %v6273 = vsel %vm1606, %v6270, %v6272
        %v6274 = vrot.slane %v6150, 5
        %v6275 = vrot.slane %v6151, 5
        %v6276 = vsel %vm1606, %v6274, %v6275
        %v6277 = vrot.slane %v6152, 5
        %v6278 = vsel %vm1606, %v6275, %v6277
        %v6279 = vrot.slane %v6153, 5
        %v6280 = vrot.slane %v6154, 5
        %v6281 = vsel %vm1606, %v6279, %v6280
        %v6282 = vrot.slane %v6155, 5
        %v6283 = vsel %vm1606, %v6280, %v6282
        %v6316 = vadd.f32 %v6072, %v6206
        %v6317 = vadd.f32 %v6073, %v6208
        %v6318 = vadd.f32 %v6074, %v6211
        %v6319 = vadd.f32 %v6075, %v6213
        %v6320 = vadd.f32 %v6076, %v6216
        %v6321 = vadd.f32 %v6077, %v6218
        %v6322 = vadd.f32 %v6078, %v6221
        %v6323 = vadd.f32 %v6079, %v6223
        %v6324 = vadd.f32 %v6080, %v6226
        %v6325 = vadd.f32 %v6081, %v6228
        %v6326 = vadd.f32 %v6082, %v6231
        %v6327 = vadd.f32 %v6083, %v6233
        %v6328 = vadd.f32 %v6084, %v6236
        %v6329 = vadd.f32 %v6085, %v6238
        %v6330 = vadd.f32 %v6086, %v6241
        %v6331 = vadd.f32 %v6087, %v6243
        %v6332 = vadd.f32 %v6088, %v6246
        %v6333 = vadd.f32 %v6089, %v6248
        %v6334 = vadd.f32 %v6090, %v6251
        %v6335 = vadd.f32 %v6091, %v6253
        %v6336 = vadd.f32 %v6092, %v6256
        %v6337 = vadd.f32 %v6093, %v6258
        %v6338 = vadd.f32 %v6094, %v6261
        %v6339 = vadd.f32 %v6095, %v6263
        %v6340 = vadd.f32 %v6096, %v6266
        %v6341 = vadd.f32 %v6097, %v6268
        %v6342 = vadd.f32 %v6098, %v6271
        %v6343 = vadd.f32 %v6099, %v6273
        %v6344 = vadd.f32 %v6100, %v6276
        %v6345 = vadd.f32 %v6101, %v6278
        %v6346 = vadd.f32 %v6102, %v6281
        %v6347 = vadd.f32 %v6103, %v6283
        %v6348 = vlaneseq
        %v6349 = vshrl.u32 %v6348, 7
        %v6350 = vsub.s32 6, %v6349
        %v6351 = vrot.slane %v454, %v6350
        %v6352 = vmul.f32 %v394, %v6351
        %v6353 = vmul.f32 %v395, %v6351
        %v6354 = vmul.f32 %v396, %v6351
        %v6355 = vmul.f32 %v397, %v6351
        %v6356 = vmul.f32 %v398, %v6351
        %v6357 = vmul.f32 %v399, %v6351
        %v6358 = vmul.f32 %v400, %v6351
        %v6359 = vmul.f32 %v401, %v6351
        %v6360 = vmul.f32 %v402, %v6351
        %v6361 = vmul.f32 %v403, %v6351
        %v6362 = vmul.f32 %v404, %v6351
        %v6363 = vmul.f32 %v405, %v6351
        %v6364 = vmul.f32 %v406, %v6351
        %v6365 = vmul.f32 %v407, %v6351
        %v6366 = vmul.f32 %v408, %v6351
        %v6367 = vmul.f32 %v409, %v6351
        %v6368 = vmul.f32 %v410, %v6351
        %v6369 = vmul.f32 %v411, %v6351
        %v6370 = vmul.f32 %v412, %v6351
        %v6371 = vmul.f32 %v413, %v6351
        %v6372 = vmul.f32 %v414, %v6351
        %v6373 = vmul.f32 %v415, %v6351
        %v6374 = vmul.f32 %v416, %v6351
        %v6375 = vmul.f32 %v417, %v6351
        %v6376 = vmul.f32 %v418, %v6351
        %v6377 = vmul.f32 %v419, %v6351
        %v6378 = vmul.f32 %v420, %v6351
        %v6379 = vmul.f32 %v421, %v6351
        %v6380 = vmul.f32 %v422, %v6351
        %v6381 = vmul.f32 %v423, %v6351
        %v6382 = vmul.f32 %v424, %v6351
        %v6383 = vmul.f32 %v425, %v6351
        %v6384 = vmul.f32 %v426, %v6351
        %v6385 = vmul.f32 %v427, %v6351
        %v6386 = vmul.f32 %v428, %v6351
        %v6387 = vmul.f32 %v429, %v6351
        %v6388 = vmul.f32 %v430, %v6351
        %v6389 = vmul.f32 %v431, %v6351
        %v6390 = vmul.f32 %v432, %v6351
        %v6391 = vmul.f32 %v433, %v6351
        %v6392 = vmul.f32 %v434, %v6351
        %v6393 = vmul.f32 %v435, %v6351
        %v6394 = vmul.f32 %v436, %v6351
        %v6395 = vmul.f32 %v437, %v6351
        %v6396 = vmul.f32 %v438, %v6351
        %v6397 = vmul.f32 %v439, %v6351
        %v6398 = vmul.f32 %v440, %v6351
        %v6399 = vmul.f32 %v441, %v6351
        %v6448 = vrot.slane %v6352, 6
        %v6449 = vrot.slane %v6353, 6
        %v6450 = vsel %vm1851, %v6448, %v6449
        %v6451 = vrot.slane %v6354, 6
        %v6452 = vsel %vm1851, %v6449, %v6451
        %v6453 = vrot.slane %v6355, 6
        %v6454 = vrot.slane %v6356, 6
        %v6455 = vsel %vm1851, %v6453, %v6454
        %v6456 = vrot.slane %v6357, 6
        %v6457 = vsel %vm1851, %v6454, %v6456
        %v6458 = vrot.slane %v6358, 6
        %v6459 = vrot.slane %v6359, 6
        %v6460 = vsel %vm1851, %v6458, %v6459
        %v6461 = vrot.slane %v6360, 6
        %v6462 = vsel %vm1851, %v6459, %v6461
        %v6463 = vrot.slane %v6361, 6
        %v6464 = vrot.slane %v6362, 6
        %v6465 = vsel %vm1851, %v6463, %v6464
        %v6466 = vrot.slane %v6363, 6
        %v6467 = vsel %vm1851, %v6464, %v6466
        %v6468 = vrot.slane %v6364, 6
        %v6469 = vrot.slane %v6365, 6
        %v6470 = vsel %vm1851, %v6468, %v6469
        %v6471 = vrot.slane %v6366, 6
        %v6472 = vsel %vm1851, %v6469, %v6471
        %v6473 = vrot.slane %v6367, 6
        %v6474 = vrot.slane %v6368, 6
        %v6475 = vsel %vm1851, %v6473, %v6474
        %v6476 = vrot.slane %v6369, 6
        %v6477 = vsel %vm1851, %v6474, %v6476
        %v6478 = vrot.slane %v6370, 6
        %v6479 = vrot.slane %v6371, 6
        %v6480 = vsel %vm1851, %v6478, %v6479
        %v6481 = vrot.slane %v6372, 6
        %v6482 = vsel %vm1851, %v6479, %v6481
        %v6483 = vrot.slane %v6373, 6
        %v6484 = vrot.slane %v6374, 6
        %v6485 = vsel %vm1851, %v6483, %v6484
        %v6486 = vrot.slane %v6375, 6
        %v6487 = vsel %vm1851, %v6484, %v6486
        %v6488 = vrot.slane %v6376, 6
        %v6489 = vrot.slane %v6377, 6
        %v6490 = vsel %vm1851, %v6488, %v6489
        %v6491 = vrot.slane %v6378, 6
        %v6492 = vsel %vm1851, %v6489, %v6491
        %v6493 = vrot.slane %v6379, 6
        %v6494 = vrot.slane %v6380, 6
        %v6495 = vsel %vm1851, %v6493, %v6494
        %v6496 = vrot.slane %v6381, 6
        %v6497 = vsel %vm1851, %v6494, %v6496
        %v6498 = vrot.slane %v6382, 6
        %v6499 = vrot.slane %v6383, 6
        %v6500 = vsel %vm1851, %v6498, %v6499
        %v6501 = vrot.slane %v6384, 6
        %v6502 = vsel %vm1851, %v6499, %v6501
        %v6503 = vrot.slane %v6385, 6
        %v6504 = vrot.slane %v6386, 6
        %v6505 = vsel %vm1851, %v6503, %v6504
        %v6506 = vrot.slane %v6387, 6
        %v6507 = vsel %vm1851, %v6504, %v6506
        %v6508 = vrot.slane %v6388, 6
        %v6509 = vrot.slane %v6389, 6
        %v6510 = vsel %vm1851, %v6508, %v6509
        %v6511 = vrot.slane %v6390, 6
        %v6512 = vsel %vm1851, %v6509, %v6511
        %v6513 = vrot.slane %v6391, 6
        %v6514 = vrot.slane %v6392, 6
        %v6515 = vsel %vm1851, %v6513, %v6514
        %v6516 = vrot.slane %v6393, 6
        %v6517 = vsel %vm1851, %v6514, %v6516
        %v6518 = vrot.slane %v6394, 6
        %v6519 = vrot.slane %v6395, 6
        %v6520 = vsel %vm1851, %v6518, %v6519
        %v6521 = vrot.slane %v6396, 6
        %v6522 = vsel %vm1851, %v6519, %v6521
        %v6523 = vrot.slane %v6397, 6
        %v6524 = vrot.slane %v6398, 6
        %v6525 = vsel %vm1851, %v6523, %v6524
        %v6526 = vrot.slane %v6399, 6
        %v6527 = vsel %vm1851, %v6524, %v6526
        %v6560 = vadd.f32 %v6316, %v6450
        %v6561 = vadd.f32 %v6317, %v6452
        %v6562 = vadd.f32 %v6318, %v6455
        %v6563 = vadd.f32 %v6319, %v6457
        %v6564 = vadd.f32 %v6320, %v6460
        %v6565 = vadd.f32 %v6321, %v6462
        %v6566 = vadd.f32 %v6322, %v6465
        %v6567 = vadd.f32 %v6323, %v6467
        %v6568 = vadd.f32 %v6324, %v6470
        %v6569 = vadd.f32 %v6325, %v6472
        %v6570 = vadd.f32 %v6326, %v6475
        %v6571 = vadd.f32 %v6327, %v6477
        %v6572 = vadd.f32 %v6328, %v6480
        %v6573 = vadd.f32 %v6329, %v6482
        %v6574 = vadd.f32 %v6330, %v6485
        %v6575 = vadd.f32 %v6331, %v6487
        %v6576 = vadd.f32 %v6332, %v6490
        %v6577 = vadd.f32 %v6333, %v6492
        %v6578 = vadd.f32 %v6334, %v6495
        %v6579 = vadd.f32 %v6335, %v6497
        %v6580 = vadd.f32 %v6336, %v6500
        %v6581 = vadd.f32 %v6337, %v6502
        %v6582 = vadd.f32 %v6338, %v6505
        %v6583 = vadd.f32 %v6339, %v6507
        %v6584 = vadd.f32 %v6340, %v6510
        %v6585 = vadd.f32 %v6341, %v6512
        %v6586 = vadd.f32 %v6342, %v6515
        %v6587 = vadd.f32 %v6343, %v6517
        %v6588 = vadd.f32 %v6344, %v6520
        %v6589 = vadd.f32 %v6345, %v6522
        %v6590 = vadd.f32 %v6346, %v6525
        %v6591 = vadd.f32 %v6347, %v6527
        %v6592 = vlaneseq
        %v6593 = vshrl.u32 %v6592, 7
        %v6594 = vsub.s32 0, %v6593
        %v6595 = vrot.slane %v455, %v6594
        %v6596 = vmul.f32 %v397, %v6595
        %v6597 = vmul.f32 %v398, %v6595
        %v6598 = vmul.f32 %v400, %v6595
        %v6599 = vmul.f32 %v401, %v6595
        %v6600 = vmul.f32 %v403, %v6595
        %v6601 = vmul.f32 %v404, %v6595
        %v6602 = vmul.f32 %v406, %v6595
        %v6603 = vmul.f32 %v407, %v6595
        %v6604 = vmul.f32 %v409, %v6595
        %v6605 = vmul.f32 %v410, %v6595
        %v6606 = vmul.f32 %v412, %v6595
        %v6607 = vmul.f32 %v413, %v6595
        %v6608 = vmul.f32 %v415, %v6595
        %v6609 = vmul.f32 %v416, %v6595
        %v6610 = vmul.f32 %v418, %v6595
        %v6611 = vmul.f32 %v419, %v6595
        %v6612 = vmul.f32 %v421, %v6595
        %v6613 = vmul.f32 %v422, %v6595
        %v6614 = vmul.f32 %v424, %v6595
        %v6615 = vmul.f32 %v425, %v6595
        %v6616 = vmul.f32 %v427, %v6595
        %v6617 = vmul.f32 %v428, %v6595
        %v6618 = vmul.f32 %v430, %v6595
        %v6619 = vmul.f32 %v431, %v6595
        %v6620 = vmul.f32 %v433, %v6595
        %v6621 = vmul.f32 %v434, %v6595
        %v6622 = vmul.f32 %v436, %v6595
        %v6623 = vmul.f32 %v437, %v6595
        %v6624 = vmul.f32 %v439, %v6595
        %v6625 = vmul.f32 %v440, %v6595
        %v6626 = vmul.f32 %v442, %v6595
        %v6627 = vmul.f32 %v443, %v6595
        %v6628 = vadd.f32 %v6560, %v6596
        %v6629 = vadd.f32 %v6561, %v6597
        %v6630 = vadd.f32 %v6562, %v6598
        %v6631 = vadd.f32 %v6563, %v6599
        %v6632 = vadd.f32 %v6564, %v6600
        %v6633 = vadd.f32 %v6565, %v6601
        %v6634 = vadd.f32 %v6566, %v6602
        %v6635 = vadd.f32 %v6567, %v6603
        %v6636 = vadd.f32 %v6568, %v6604
        %v6637 = vadd.f32 %v6569, %v6605
        %v6638 = vadd.f32 %v6570, %v6606
        %v6639 = vadd.f32 %v6571, %v6607
        %v6640 = vadd.f32 %v6572, %v6608
        %v6641 = vadd.f32 %v6573, %v6609
        %v6642 = vadd.f32 %v6574, %v6610
        %v6643 = vadd.f32 %v6575, %v6611
        %v6644 = vadd.f32 %v6576, %v6612
        %v6645 = vadd.f32 %v6577, %v6613
        %v6646 = vadd.f32 %v6578, %v6614
        %v6647 = vadd.f32 %v6579, %v6615
        %v6648 = vadd.f32 %v6580, %v6616
        %v6649 = vadd.f32 %v6581, %v6617
        %v6650 = vadd.f32 %v6582, %v6618
        %v6651 = vadd.f32 %v6583, %v6619
        %v6652 = vadd.f32 %v6584, %v6620
        %v6653 = vadd.f32 %v6585, %v6621
        %v6654 = vadd.f32 %v6586, %v6622
        %v6655 = vadd.f32 %v6587, %v6623
        %v6656 = vadd.f32 %v6588, %v6624
        %v6657 = vadd.f32 %v6589, %v6625
        %v6658 = vadd.f32 %v6590, %v6626
        %v6659 = vadd.f32 %v6591, %v6627
        %v6660 = vlaneseq
        %v6661 = vshrl.u32 %v6660, 7
        %v6662 = vsub.s32 1, %v6661
        %v6663 = vrot.slane %v455, %v6662
        %v6664 = vmul.f32 %v397, %v6663
        %v6665 = vmul.f32 %v398, %v6663
        %v6666 = vmul.f32 %v399, %v6663
        %v6667 = vmul.f32 %v400, %v6663
        %v6668 = vmul.f32 %v401, %v6663
        %v6669 = vmul.f32 %v402, %v6663
        %v6670 = vmul.f32 %v403, %v6663
        %v6671 = vmul.f32 %v404, %v6663
        %v6672 = vmul.f32 %v405, %v6663
        %v6673 = vmul.f32 %v406, %v6663
        %v6674 = vmul.f32 %v407, %v6663
        %v6675 = vmul.f32 %v408, %v6663
        %v6676 = vmul.f32 %v409, %v6663
        %v6677 = vmul.f32 %v410, %v6663
        %v6678 = vmul.f32 %v411, %v6663
        %v6679 = vmul.f32 %v412, %v6663
        %v6680 = vmul.f32 %v413, %v6663
        %v6681 = vmul.f32 %v414, %v6663
        %v6682 = vmul.f32 %v415, %v6663
        %v6683 = vmul.f32 %v416, %v6663
        %v6684 = vmul.f32 %v417, %v6663
        %v6685 = vmul.f32 %v418, %v6663
        %v6686 = vmul.f32 %v419, %v6663
        %v6687 = vmul.f32 %v420, %v6663
        %v6688 = vmul.f32 %v421, %v6663
        %v6689 = vmul.f32 %v422, %v6663
        %v6690 = vmul.f32 %v423, %v6663
        %v6691 = vmul.f32 %v424, %v6663
        %v6692 = vmul.f32 %v425, %v6663
        %v6693 = vmul.f32 %v426, %v6663
        %v6694 = vmul.f32 %v427, %v6663
        %v6695 = vmul.f32 %v428, %v6663
        %v6696 = vmul.f32 %v429, %v6663
        %v6697 = vmul.f32 %v430, %v6663
        %v6698 = vmul.f32 %v431, %v6663
        %v6699 = vmul.f32 %v432, %v6663
        %v6700 = vmul.f32 %v433, %v6663
        %v6701 = vmul.f32 %v434, %v6663
        %v6702 = vmul.f32 %v435, %v6663
        %v6703 = vmul.f32 %v436, %v6663
        %v6704 = vmul.f32 %v437, %v6663
        %v6705 = vmul.f32 %v438, %v6663
        %v6706 = vmul.f32 %v439, %v6663
        %v6707 = vmul.f32 %v440, %v6663
        %v6708 = vmul.f32 %v441, %v6663
        %v6709 = vmul.f32 %v442, %v6663
        %v6710 = vmul.f32 %v443, %v6663
        %v6711 = vmul.f32 %v444, %v6663
        %v6760 = vrot.slane %v6664, 1
        %v6761 = vrot.slane %v6665, 1
        %v6762 = vsel %vm626, %v6760, %v6761
        %v6763 = vrot.slane %v6666, 1
        %v6764 = vsel %vm626, %v6761, %v6763
        %v6765 = vrot.slane %v6667, 1
        %v6766 = vrot.slane %v6668, 1
        %v6767 = vsel %vm626, %v6765, %v6766
        %v6768 = vrot.slane %v6669, 1
        %v6769 = vsel %vm626, %v6766, %v6768
        %v6770 = vrot.slane %v6670, 1
        %v6771 = vrot.slane %v6671, 1
        %v6772 = vsel %vm626, %v6770, %v6771
        %v6773 = vrot.slane %v6672, 1
        %v6774 = vsel %vm626, %v6771, %v6773
        %v6775 = vrot.slane %v6673, 1
        %v6776 = vrot.slane %v6674, 1
        %v6777 = vsel %vm626, %v6775, %v6776
        %v6778 = vrot.slane %v6675, 1
        %v6779 = vsel %vm626, %v6776, %v6778
        %v6780 = vrot.slane %v6676, 1
        %v6781 = vrot.slane %v6677, 1
        %v6782 = vsel %vm626, %v6780, %v6781
        %v6783 = vrot.slane %v6678, 1
        %v6784 = vsel %vm626, %v6781, %v6783
        %v6785 = vrot.slane %v6679, 1
        %v6786 = vrot.slane %v6680, 1
        %v6787 = vsel %vm626, %v6785, %v6786
        %v6788 = vrot.slane %v6681, 1
        %v6789 = vsel %vm626, %v6786, %v6788
        %v6790 = vrot.slane %v6682, 1
        %v6791 = vrot.slane %v6683, 1
        %v6792 = vsel %vm626, %v6790, %v6791
        %v6793 = vrot.slane %v6684, 1
        %v6794 = vsel %vm626, %v6791, %v6793
        %v6795 = vrot.slane %v6685, 1
        %v6796 = vrot.slane %v6686, 1
        %v6797 = vsel %vm626, %v6795, %v6796
        %v6798 = vrot.slane %v6687, 1
        %v6799 = vsel %vm626, %v6796, %v6798
        %v6800 = vrot.slane %v6688, 1
        %v6801 = vrot.slane %v6689, 1
        %v6802 = vsel %vm626, %v6800, %v6801
        %v6803 = vrot.slane %v6690, 1
        %v6804 = vsel %vm626, %v6801, %v6803
        %v6805 = vrot.slane %v6691, 1
        %v6806 = vrot.slane %v6692, 1
        %v6807 = vsel %vm626, %v6805, %v6806
        %v6808 = vrot.slane %v6693, 1
        %v6809 = vsel %vm626, %v6806, %v6808
        %v6810 = vrot.slane %v6694, 1
        %v6811 = vrot.slane %v6695, 1
        %v6812 = vsel %vm626, %v6810, %v6811
        %v6813 = vrot.slane %v6696, 1
        %v6814 = vsel %vm626, %v6811, %v6813
        %v6815 = vrot.slane %v6697, 1
        %v6816 = vrot.slane %v6698, 1
        %v6817 = vsel %vm626, %v6815, %v6816
        %v6818 = vrot.slane %v6699, 1
        %v6819 = vsel %vm626, %v6816, %v6818
        %v6820 = vrot.slane %v6700, 1
        %v6821 = vrot.slane %v6701, 1
        %v6822 = vsel %vm626, %v6820, %v6821
        %v6823 = vrot.slane %v6702, 1
        %v6824 = vsel %vm626, %v6821, %v6823
        %v6825 = vrot.slane %v6703, 1
        %v6826 = vrot.slane %v6704, 1
        %v6827 = vsel %vm626, %v6825, %v6826
        %v6828 = vrot.slane %v6705, 1
        %v6829 = vsel %vm626, %v6826, %v6828
        %v6830 = vrot.slane %v6706, 1
        %v6831 = vrot.slane %v6707, 1
        %v6832 = vsel %vm626, %v6830, %v6831
        %v6833 = vrot.slane %v6708, 1
        %v6834 = vsel %vm626, %v6831, %v6833
        %v6835 = vrot.slane %v6709, 1
        %v6836 = vrot.slane %v6710, 1
        %v6837 = vsel %vm626, %v6835, %v6836
        %v6838 = vrot.slane %v6711, 1
        %v6839 = vsel %vm626, %v6836, %v6838
        %v6872 = vadd.f32 %v6628, %v6762
        %v6873 = vadd.f32 %v6629, %v6764
        %v6874 = vadd.f32 %v6630, %v6767
        %v6875 = vadd.f32 %v6631, %v6769
        %v6876 = vadd.f32 %v6632, %v6772
        %v6877 = vadd.f32 %v6633, %v6774
        %v6878 = vadd.f32 %v6634, %v6777
        %v6879 = vadd.f32 %v6635, %v6779
        %v6880 = vadd.f32 %v6636, %v6782
        %v6881 = vadd.f32 %v6637, %v6784
        %v6882 = vadd.f32 %v6638, %v6787
        %v6883 = vadd.f32 %v6639, %v6789
        %v6884 = vadd.f32 %v6640, %v6792
        %v6885 = vadd.f32 %v6641, %v6794
        %v6886 = vadd.f32 %v6642, %v6797
        %v6887 = vadd.f32 %v6643, %v6799
        %v6888 = vadd.f32 %v6644, %v6802
        %v6889 = vadd.f32 %v6645, %v6804
        %v6890 = vadd.f32 %v6646, %v6807
        %v6891 = vadd.f32 %v6647, %v6809
        %v6892 = vadd.f32 %v6648, %v6812
        %v6893 = vadd.f32 %v6649, %v6814
        %v6894 = vadd.f32 %v6650, %v6817
        %v6895 = vadd.f32 %v6651, %v6819
        %v6896 = vadd.f32 %v6652, %v6822
        %v6897 = vadd.f32 %v6653, %v6824
        %v6898 = vadd.f32 %v6654, %v6827
        %v6899 = vadd.f32 %v6655, %v6829
        %v6900 = vadd.f32 %v6656, %v6832
        %v6901 = vadd.f32 %v6657, %v6834
        %v6902 = vadd.f32 %v6658, %v6837
        %v6903 = vadd.f32 %v6659, %v6839
        %v6904 = vlaneseq
        %v6905 = vshrl.u32 %v6904, 7
        %v6906 = vsub.s32 2, %v6905
        %v6907 = vrot.slane %v455, %v6906
        %v6908 = vmul.f32 %v397, %v6907
        %v6909 = vmul.f32 %v398, %v6907
        %v6910 = vmul.f32 %v399, %v6907
        %v6911 = vmul.f32 %v400, %v6907
        %v6912 = vmul.f32 %v401, %v6907
        %v6913 = vmul.f32 %v402, %v6907
        %v6914 = vmul.f32 %v403, %v6907
        %v6915 = vmul.f32 %v404, %v6907
        %v6916 = vmul.f32 %v405, %v6907
        %v6917 = vmul.f32 %v406, %v6907
        %v6918 = vmul.f32 %v407, %v6907
        %v6919 = vmul.f32 %v408, %v6907
        %v6920 = vmul.f32 %v409, %v6907
        %v6921 = vmul.f32 %v410, %v6907
        %v6922 = vmul.f32 %v411, %v6907
        %v6923 = vmul.f32 %v412, %v6907
        %v6924 = vmul.f32 %v413, %v6907
        %v6925 = vmul.f32 %v414, %v6907
        %v6926 = vmul.f32 %v415, %v6907
        %v6927 = vmul.f32 %v416, %v6907
        %v6928 = vmul.f32 %v417, %v6907
        %v6929 = vmul.f32 %v418, %v6907
        %v6930 = vmul.f32 %v419, %v6907
        %v6931 = vmul.f32 %v420, %v6907
        %v6932 = vmul.f32 %v421, %v6907
        %v6933 = vmul.f32 %v422, %v6907
        %v6934 = vmul.f32 %v423, %v6907
        %v6935 = vmul.f32 %v424, %v6907
        %v6936 = vmul.f32 %v425, %v6907
        %v6937 = vmul.f32 %v426, %v6907
        %v6938 = vmul.f32 %v427, %v6907
        %v6939 = vmul.f32 %v428, %v6907
        %v6940 = vmul.f32 %v429, %v6907
        %v6941 = vmul.f32 %v430, %v6907
        %v6942 = vmul.f32 %v431, %v6907
        %v6943 = vmul.f32 %v432, %v6907
        %v6944 = vmul.f32 %v433, %v6907
        %v6945 = vmul.f32 %v434, %v6907
        %v6946 = vmul.f32 %v435, %v6907
        %v6947 = vmul.f32 %v436, %v6907
        %v6948 = vmul.f32 %v437, %v6907
        %v6949 = vmul.f32 %v438, %v6907
        %v6950 = vmul.f32 %v439, %v6907
        %v6951 = vmul.f32 %v440, %v6907
        %v6952 = vmul.f32 %v441, %v6907
        %v6953 = vmul.f32 %v442, %v6907
        %v6954 = vmul.f32 %v443, %v6907
        %v6955 = vmul.f32 %v444, %v6907
        %v7004 = vrot.slane %v6908, 2
        %v7005 = vrot.slane %v6909, 2
        %v7006 = vsel %vm871, %v7004, %v7005
        %v7007 = vrot.slane %v6910, 2
        %v7008 = vsel %vm871, %v7005, %v7007
        %v7009 = vrot.slane %v6911, 2
        %v7010 = vrot.slane %v6912, 2
        %v7011 = vsel %vm871, %v7009, %v7010
        %v7012 = vrot.slane %v6913, 2
        %v7013 = vsel %vm871, %v7010, %v7012
        %v7014 = vrot.slane %v6914, 2
        %v7015 = vrot.slane %v6915, 2
        %v7016 = vsel %vm871, %v7014, %v7015
        %v7017 = vrot.slane %v6916, 2
        %v7018 = vsel %vm871, %v7015, %v7017
        %v7019 = vrot.slane %v6917, 2
        %v7020 = vrot.slane %v6918, 2
        %v7021 = vsel %vm871, %v7019, %v7020
        %v7022 = vrot.slane %v6919, 2
        %v7023 = vsel %vm871, %v7020, %v7022
        %v7024 = vrot.slane %v6920, 2
        %v7025 = vrot.slane %v6921, 2
        %v7026 = vsel %vm871, %v7024, %v7025
        %v7027 = vrot.slane %v6922, 2
        %v7028 = vsel %vm871, %v7025, %v7027
        %v7029 = vrot.slane %v6923, 2
        %v7030 = vrot.slane %v6924, 2
        %v7031 = vsel %vm871, %v7029, %v7030
        %v7032 = vrot.slane %v6925, 2
        %v7033 = vsel %vm871, %v7030, %v7032
        %v7034 = vrot.slane %v6926, 2
        %v7035 = vrot.slane %v6927, 2
        %v7036 = vsel %vm871, %v7034, %v7035
        %v7037 = vrot.slane %v6928, 2
        %v7038 = vsel %vm871, %v7035, %v7037
        %v7039 = vrot.slane %v6929, 2
        %v7040 = vrot.slane %v6930, 2
        %v7041 = vsel %vm871, %v7039, %v7040
        %v7042 = vrot.slane %v6931, 2
        %v7043 = vsel %vm871, %v7040, %v7042
        %v7044 = vrot.slane %v6932, 2
        %v7045 = vrot.slane %v6933, 2
        %v7046 = vsel %vm871, %v7044, %v7045
        %v7047 = vrot.slane %v6934, 2
        %v7048 = vsel %vm871, %v7045, %v7047
        %v7049 = vrot.slane %v6935, 2
        %v7050 = vrot.slane %v6936, 2
        %v7051 = vsel %vm871, %v7049, %v7050
        %v7052 = vrot.slane %v6937, 2
        %v7053 = vsel %vm871, %v7050, %v7052
        %v7054 = vrot.slane %v6938, 2
        %v7055 = vrot.slane %v6939, 2
        %v7056 = vsel %vm871, %v7054, %v7055
        %v7057 = vrot.slane %v6940, 2
        %v7058 = vsel %vm871, %v7055, %v7057
        %v7059 = vrot.slane %v6941, 2
        %v7060 = vrot.slane %v6942, 2
        %v7061 = vsel %vm871, %v7059, %v7060
        %v7062 = vrot.slane %v6943, 2
        %v7063 = vsel %vm871, %v7060, %v7062
        %v7064 = vrot.slane %v6944, 2
        %v7065 = vrot.slane %v6945, 2
        %v7066 = vsel %vm871, %v7064, %v7065
        %v7067 = vrot.slane %v6946, 2
        %v7068 = vsel %vm871, %v7065, %v7067
        %v7069 = vrot.slane %v6947, 2
        %v7070 = vrot.slane %v6948, 2
        %v7071 = vsel %vm871, %v7069, %v7070
        %v7072 = vrot.slane %v6949, 2
        %v7073 = vsel %vm871, %v7070, %v7072
        %v7074 = vrot.slane %v6950, 2
        %v7075 = vrot.slane %v6951, 2
        %v7076 = vsel %vm871, %v7074, %v7075
        %v7077 = vrot.slane %v6952, 2
        %v7078 = vsel %vm871, %v7075, %v7077
        %v7079 = vrot.slane %v6953, 2
        %v7080 = vrot.slane %v6954, 2
        %v7081 = vsel %vm871, %v7079, %v7080
        %v7082 = vrot.slane %v6955, 2
        %v7083 = vsel %vm871, %v7080, %v7082
        %v7116 = vadd.f32 %v6872, %v7006
        %v7117 = vadd.f32 %v6873, %v7008
        %v7118 = vadd.f32 %v6874, %v7011
        %v7119 = vadd.f32 %v6875, %v7013
        %v7120 = vadd.f32 %v6876, %v7016
        %v7121 = vadd.f32 %v6877, %v7018
        %v7122 = vadd.f32 %v6878, %v7021
        %v7123 = vadd.f32 %v6879, %v7023
        %v7124 = vadd.f32 %v6880, %v7026
        %v7125 = vadd.f32 %v6881, %v7028
        %v7126 = vadd.f32 %v6882, %v7031
        %v7127 = vadd.f32 %v6883, %v7033
        %v7128 = vadd.f32 %v6884, %v7036
        %v7129 = vadd.f32 %v6885, %v7038
        %v7130 = vadd.f32 %v6886, %v7041
        %v7131 = vadd.f32 %v6887, %v7043
        %v7132 = vadd.f32 %v6888, %v7046
        %v7133 = vadd.f32 %v6889, %v7048
        %v7134 = vadd.f32 %v6890, %v7051
        %v7135 = vadd.f32 %v6891, %v7053
        %v7136 = vadd.f32 %v6892, %v7056
        %v7137 = vadd.f32 %v6893, %v7058
        %v7138 = vadd.f32 %v6894, %v7061
        %v7139 = vadd.f32 %v6895, %v7063
        %v7140 = vadd.f32 %v6896, %v7066
        %v7141 = vadd.f32 %v6897, %v7068
        %v7142 = vadd.f32 %v6898, %v7071
        %v7143 = vadd.f32 %v6899, %v7073
        %v7144 = vadd.f32 %v6900, %v7076
        %v7145 = vadd.f32 %v6901, %v7078
        %v7146 = vadd.f32 %v6902, %v7081
        %v7147 = vadd.f32 %v6903, %v7083
        %v7148 = vlaneseq
        %v7149 = vshrl.u32 %v7148, 7
        %v7150 = vsub.s32 3, %v7149
        %v7151 = vrot.slane %v455, %v7150
        %v7152 = vmul.f32 %v397, %v7151
        %v7153 = vmul.f32 %v398, %v7151
        %v7154 = vmul.f32 %v399, %v7151
        %v7155 = vmul.f32 %v400, %v7151
        %v7156 = vmul.f32 %v401, %v7151
        %v7157 = vmul.f32 %v402, %v7151
        %v7158 = vmul.f32 %v403, %v7151
        %v7159 = vmul.f32 %v404, %v7151
        %v7160 = vmul.f32 %v405, %v7151
        %v7161 = vmul.f32 %v406, %v7151
        %v7162 = vmul.f32 %v407, %v7151
        %v7163 = vmul.f32 %v408, %v7151
        %v7164 = vmul.f32 %v409, %v7151
        %v7165 = vmul.f32 %v410, %v7151
        %v7166 = vmul.f32 %v411, %v7151
        %v7167 = vmul.f32 %v412, %v7151
        %v7168 = vmul.f32 %v413, %v7151
        %v7169 = vmul.f32 %v414, %v7151
        %v7170 = vmul.f32 %v415, %v7151
        %v7171 = vmul.f32 %v416, %v7151
        %v7172 = vmul.f32 %v417, %v7151
        %v7173 = vmul.f32 %v418, %v7151
        %v7174 = vmul.f32 %v419, %v7151
        %v7175 = vmul.f32 %v420, %v7151
        %v7176 = vmul.f32 %v421, %v7151
        %v7177 = vmul.f32 %v422, %v7151
        %v7178 = vmul.f32 %v423, %v7151
        %v7179 = vmul.f32 %v424, %v7151
        %v7180 = vmul.f32 %v425, %v7151
        %v7181 = vmul.f32 %v426, %v7151
        %v7182 = vmul.f32 %v427, %v7151
        %v7183 = vmul.f32 %v428, %v7151
        %v7184 = vmul.f32 %v429, %v7151
        %v7185 = vmul.f32 %v430, %v7151
        %v7186 = vmul.f32 %v431, %v7151
        %v7187 = vmul.f32 %v432, %v7151
        %v7188 = vmul.f32 %v433, %v7151
        %v7189 = vmul.f32 %v434, %v7151
        %v7190 = vmul.f32 %v435, %v7151
        %v7191 = vmul.f32 %v436, %v7151
        %v7192 = vmul.f32 %v437, %v7151
        %v7193 = vmul.f32 %v438, %v7151
        %v7194 = vmul.f32 %v439, %v7151
        %v7195 = vmul.f32 %v440, %v7151
        %v7196 = vmul.f32 %v441, %v7151
        %v7197 = vmul.f32 %v442, %v7151
        %v7198 = vmul.f32 %v443, %v7151
        %v7199 = vmul.f32 %v444, %v7151
        %v7248 = vrot.slane %v7152, 3
        %v7249 = vrot.slane %v7153, 3
        %v7250 = vsel %vm1116, %v7248, %v7249
        %v7251 = vrot.slane %v7154, 3
        %v7252 = vsel %vm1116, %v7249, %v7251
        %v7253 = vrot.slane %v7155, 3
        %v7254 = vrot.slane %v7156, 3
        %v7255 = vsel %vm1116, %v7253, %v7254
        %v7256 = vrot.slane %v7157, 3
        %v7257 = vsel %vm1116, %v7254, %v7256
        %v7258 = vrot.slane %v7158, 3
        %v7259 = vrot.slane %v7159, 3
        %v7260 = vsel %vm1116, %v7258, %v7259
        %v7261 = vrot.slane %v7160, 3
        %v7262 = vsel %vm1116, %v7259, %v7261
        %v7263 = vrot.slane %v7161, 3
        %v7264 = vrot.slane %v7162, 3
        %v7265 = vsel %vm1116, %v7263, %v7264
        %v7266 = vrot.slane %v7163, 3
        %v7267 = vsel %vm1116, %v7264, %v7266
        %v7268 = vrot.slane %v7164, 3
        %v7269 = vrot.slane %v7165, 3
        %v7270 = vsel %vm1116, %v7268, %v7269
        %v7271 = vrot.slane %v7166, 3
        %v7272 = vsel %vm1116, %v7269, %v7271
        %v7273 = vrot.slane %v7167, 3
        %v7274 = vrot.slane %v7168, 3
        %v7275 = vsel %vm1116, %v7273, %v7274
        %v7276 = vrot.slane %v7169, 3
        %v7277 = vsel %vm1116, %v7274, %v7276
        %v7278 = vrot.slane %v7170, 3
        %v7279 = vrot.slane %v7171, 3
        %v7280 = vsel %vm1116, %v7278, %v7279
        %v7281 = vrot.slane %v7172, 3
        %v7282 = vsel %vm1116, %v7279, %v7281
        %v7283 = vrot.slane %v7173, 3
        %v7284 = vrot.slane %v7174, 3
        %v7285 = vsel %vm1116, %v7283, %v7284
        %v7286 = vrot.slane %v7175, 3
        %v7287 = vsel %vm1116, %v7284, %v7286
        %v7288 = vrot.slane %v7176, 3
        %v7289 = vrot.slane %v7177, 3
        %v7290 = vsel %vm1116, %v7288, %v7289
        %v7291 = vrot.slane %v7178, 3
        %v7292 = vsel %vm1116, %v7289, %v7291
        %v7293 = vrot.slane %v7179, 3
        %v7294 = vrot.slane %v7180, 3
        %v7295 = vsel %vm1116, %v7293, %v7294
        %v7296 = vrot.slane %v7181, 3
        %v7297 = vsel %vm1116, %v7294, %v7296
        %v7298 = vrot.slane %v7182, 3
        %v7299 = vrot.slane %v7183, 3
        %v7300 = vsel %vm1116, %v7298, %v7299
        %v7301 = vrot.slane %v7184, 3
        %v7302 = vsel %vm1116, %v7299, %v7301
        %v7303 = vrot.slane %v7185, 3
        %v7304 = vrot.slane %v7186, 3
        %v7305 = vsel %vm1116, %v7303, %v7304
        %v7306 = vrot.slane %v7187, 3
        %v7307 = vsel %vm1116, %v7304, %v7306
        %v7308 = vrot.slane %v7188, 3
        %v7309 = vrot.slane %v7189, 3
        %v7310 = vsel %vm1116, %v7308, %v7309
        %v7311 = vrot.slane %v7190, 3
        %v7312 = vsel %vm1116, %v7309, %v7311
        %v7313 = vrot.slane %v7191, 3
        %v7314 = vrot.slane %v7192, 3
        %v7315 = vsel %vm1116, %v7313, %v7314
        %v7316 = vrot.slane %v7193, 3
        %v7317 = vsel %vm1116, %v7314, %v7316
        %v7318 = vrot.slane %v7194, 3
        %v7319 = vrot.slane %v7195, 3
        %v7320 = vsel %vm1116, %v7318, %v7319
        %v7321 = vrot.slane %v7196, 3
        %v7322 = vsel %vm1116, %v7319, %v7321
        %v7323 = vrot.slane %v7197, 3
        %v7324 = vrot.slane %v7198, 3
        %v7325 = vsel %vm1116, %v7323, %v7324
        %v7326 = vrot.slane %v7199, 3
        %v7327 = vsel %vm1116, %v7324, %v7326
        %v7360 = vadd.f32 %v7116, %v7250
        %v7361 = vadd.f32 %v7117, %v7252
        %v7362 = vadd.f32 %v7118, %v7255
        %v7363 = vadd.f32 %v7119, %v7257
        %v7364 = vadd.f32 %v7120, %v7260
        %v7365 = vadd.f32 %v7121, %v7262
        %v7366 = vadd.f32 %v7122, %v7265
        %v7367 = vadd.f32 %v7123, %v7267
        %v7368 = vadd.f32 %v7124, %v7270
        %v7369 = vadd.f32 %v7125, %v7272
        %v7370 = vadd.f32 %v7126, %v7275
        %v7371 = vadd.f32 %v7127, %v7277
        %v7372 = vadd.f32 %v7128, %v7280
        %v7373 = vadd.f32 %v7129, %v7282
        %v7374 = vadd.f32 %v7130, %v7285
        %v7375 = vadd.f32 %v7131, %v7287
        %v7376 = vadd.f32 %v7132, %v7290
        %v7377 = vadd.f32 %v7133, %v7292
        %v7378 = vadd.f32 %v7134, %v7295
        %v7379 = vadd.f32 %v7135, %v7297
        %v7380 = vadd.f32 %v7136, %v7300
        %v7381 = vadd.f32 %v7137, %v7302
        %v7382 = vadd.f32 %v7138, %v7305
        %v7383 = vadd.f32 %v7139, %v7307
        %v7384 = vadd.f32 %v7140, %v7310
        %v7385 = vadd.f32 %v7141, %v7312
        %v7386 = vadd.f32 %v7142, %v7315
        %v7387 = vadd.f32 %v7143, %v7317
        %v7388 = vadd.f32 %v7144, %v7320
        %v7389 = vadd.f32 %v7145, %v7322
        %v7390 = vadd.f32 %v7146, %v7325
        %v7391 = vadd.f32 %v7147, %v7327
        %v7392 = vlaneseq
        %v7393 = vshrl.u32 %v7392, 7
        %v7394 = vsub.s32 4, %v7393
        %v7395 = vrot.slane %v455, %v7394
        %v7396 = vmul.f32 %v397, %v7395
        %v7397 = vmul.f32 %v398, %v7395
        %v7398 = vmul.f32 %v399, %v7395
        %v7399 = vmul.f32 %v400, %v7395
        %v7400 = vmul.f32 %v401, %v7395
        %v7401 = vmul.f32 %v402, %v7395
        %v7402 = vmul.f32 %v403, %v7395
        %v7403 = vmul.f32 %v404, %v7395
        %v7404 = vmul.f32 %v405, %v7395
        %v7405 = vmul.f32 %v406, %v7395
        %v7406 = vmul.f32 %v407, %v7395
        %v7407 = vmul.f32 %v408, %v7395
        %v7408 = vmul.f32 %v409, %v7395
        %v7409 = vmul.f32 %v410, %v7395
        %v7410 = vmul.f32 %v411, %v7395
        %v7411 = vmul.f32 %v412, %v7395
        %v7412 = vmul.f32 %v413, %v7395
        %v7413 = vmul.f32 %v414, %v7395
        %v7414 = vmul.f32 %v415, %v7395
        %v7415 = vmul.f32 %v416, %v7395
        %v7416 = vmul.f32 %v417, %v7395
        %v7417 = vmul.f32 %v418, %v7395
        %v7418 = vmul.f32 %v419, %v7395
        %v7419 = vmul.f32 %v420, %v7395
        %v7420 = vmul.f32 %v421, %v7395
        %v7421 = vmul.f32 %v422, %v7395
        %v7422 = vmul.f32 %v423, %v7395
        %v7423 = vmul.f32 %v424, %v7395
        %v7424 = vmul.f32 %v425, %v7395
        %v7425 = vmul.f32 %v426, %v7395
        %v7426 = vmul.f32 %v427, %v7395
        %v7427 = vmul.f32 %v428, %v7395
        %v7428 = vmul.f32 %v429, %v7395
        %v7429 = vmul.f32 %v430, %v7395
        %v7430 = vmul.f32 %v431, %v7395
        %v7431 = vmul.f32 %v432, %v7395
        %v7432 = vmul.f32 %v433, %v7395
        %v7433 = vmul.f32 %v434, %v7395
        %v7434 = vmul.f32 %v435, %v7395
        %v7435 = vmul.f32 %v436, %v7395
        %v7436 = vmul.f32 %v437, %v7395
        %v7437 = vmul.f32 %v438, %v7395
        %v7438 = vmul.f32 %v439, %v7395
        %v7439 = vmul.f32 %v440, %v7395
        %v7440 = vmul.f32 %v441, %v7395
        %v7441 = vmul.f32 %v442, %v7395
        %v7442 = vmul.f32 %v443, %v7395
        %v7443 = vmul.f32 %v444, %v7395
        %v7492 = vrot.slane %v7396, 4
        %v7493 = vrot.slane %v7397, 4
        %v7494 = vsel %vm1361, %v7492, %v7493
        %v7495 = vrot.slane %v7398, 4
        %v7496 = vsel %vm1361, %v7493, %v7495
        %v7497 = vrot.slane %v7399, 4
        %v7498 = vrot.slane %v7400, 4
        %v7499 = vsel %vm1361, %v7497, %v7498
        %v7500 = vrot.slane %v7401, 4
        %v7501 = vsel %vm1361, %v7498, %v7500
        %v7502 = vrot.slane %v7402, 4
        %v7503 = vrot.slane %v7403, 4
        %v7504 = vsel %vm1361, %v7502, %v7503
        %v7505 = vrot.slane %v7404, 4
        %v7506 = vsel %vm1361, %v7503, %v7505
        %v7507 = vrot.slane %v7405, 4
        %v7508 = vrot.slane %v7406, 4
        %v7509 = vsel %vm1361, %v7507, %v7508
        %v7510 = vrot.slane %v7407, 4
        %v7511 = vsel %vm1361, %v7508, %v7510
        %v7512 = vrot.slane %v7408, 4
        %v7513 = vrot.slane %v7409, 4
        %v7514 = vsel %vm1361, %v7512, %v7513
        %v7515 = vrot.slane %v7410, 4
        %v7516 = vsel %vm1361, %v7513, %v7515
        %v7517 = vrot.slane %v7411, 4
        %v7518 = vrot.slane %v7412, 4
        %v7519 = vsel %vm1361, %v7517, %v7518
        %v7520 = vrot.slane %v7413, 4
        %v7521 = vsel %vm1361, %v7518, %v7520
        %v7522 = vrot.slane %v7414, 4
        %v7523 = vrot.slane %v7415, 4
        %v7524 = vsel %vm1361, %v7522, %v7523
        %v7525 = vrot.slane %v7416, 4
        %v7526 = vsel %vm1361, %v7523, %v7525
        %v7527 = vrot.slane %v7417, 4
        %v7528 = vrot.slane %v7418, 4
        %v7529 = vsel %vm1361, %v7527, %v7528
        %v7530 = vrot.slane %v7419, 4
        %v7531 = vsel %vm1361, %v7528, %v7530
        %v7532 = vrot.slane %v7420, 4
        %v7533 = vrot.slane %v7421, 4
        %v7534 = vsel %vm1361, %v7532, %v7533
        %v7535 = vrot.slane %v7422, 4
        %v7536 = vsel %vm1361, %v7533, %v7535
        %v7537 = vrot.slane %v7423, 4
        %v7538 = vrot.slane %v7424, 4
        %v7539 = vsel %vm1361, %v7537, %v7538
        %v7540 = vrot.slane %v7425, 4
        %v7541 = vsel %vm1361, %v7538, %v7540
        %v7542 = vrot.slane %v7426, 4
        %v7543 = vrot.slane %v7427, 4
        %v7544 = vsel %vm1361, %v7542, %v7543
        %v7545 = vrot.slane %v7428, 4
        %v7546 = vsel %vm1361, %v7543, %v7545
        %v7547 = vrot.slane %v7429, 4
        %v7548 = vrot.slane %v7430, 4
        %v7549 = vsel %vm1361, %v7547, %v7548
        %v7550 = vrot.slane %v7431, 4
        %v7551 = vsel %vm1361, %v7548, %v7550
        %v7552 = vrot.slane %v7432, 4
        %v7553 = vrot.slane %v7433, 4
        %v7554 = vsel %vm1361, %v7552, %v7553
        %v7555 = vrot.slane %v7434, 4
        %v7556 = vsel %vm1361, %v7553, %v7555
        %v7557 = vrot.slane %v7435, 4
        %v7558 = vrot.slane %v7436, 4
        %v7559 = vsel %vm1361, %v7557, %v7558
        %v7560 = vrot.slane %v7437, 4
        %v7561 = vsel %vm1361, %v7558, %v7560
        %v7562 = vrot.slane %v7438, 4
        %v7563 = vrot.slane %v7439, 4
        %v7564 = vsel %vm1361, %v7562, %v7563
        %v7565 = vrot.slane %v7440, 4
        %v7566 = vsel %vm1361, %v7563, %v7565
        %v7567 = vrot.slane %v7441, 4
        %v7568 = vrot.slane %v7442, 4
        %v7569 = vsel %vm1361, %v7567, %v7568
        %v7570 = vrot.slane %v7443, 4
        %v7571 = vsel %vm1361, %v7568, %v7570
        %v7604 = vadd.f32 %v7360, %v7494
        %v7605 = vadd.f32 %v7361, %v7496
        %v7606 = vadd.f32 %v7362, %v7499
        %v7607 = vadd.f32 %v7363, %v7501
        %v7608 = vadd.f32 %v7364, %v7504
        %v7609 = vadd.f32 %v7365, %v7506
        %v7610 = vadd.f32 %v7366, %v7509
        %v7611 = vadd.f32 %v7367, %v7511
        %v7612 = vadd.f32 %v7368, %v7514
        %v7613 = vadd.f32 %v7369, %v7516
        %v7614 = vadd.f32 %v7370, %v7519
        %v7615 = vadd.f32 %v7371, %v7521
        %v7616 = vadd.f32 %v7372, %v7524
        %v7617 = vadd.f32 %v7373, %v7526
        %v7618 = vadd.f32 %v7374, %v7529
        %v7619 = vadd.f32 %v7375, %v7531
        %v7620 = vadd.f32 %v7376, %v7534
        %v7621 = vadd.f32 %v7377, %v7536
        %v7622 = vadd.f32 %v7378, %v7539
        %v7623 = vadd.f32 %v7379, %v7541
        %v7624 = vadd.f32 %v7380, %v7544
        %v7625 = vadd.f32 %v7381, %v7546
        %v7626 = vadd.f32 %v7382, %v7549
        %v7627 = vadd.f32 %v7383, %v7551
        %v7628 = vadd.f32 %v7384, %v7554
        %v7629 = vadd.f32 %v7385, %v7556
        %v7630 = vadd.f32 %v7386, %v7559
        %v7631 = vadd.f32 %v7387, %v7561
        %v7632 = vadd.f32 %v7388, %v7564
        %v7633 = vadd.f32 %v7389, %v7566
        %v7634 = vadd.f32 %v7390, %v7569
        %v7635 = vadd.f32 %v7391, %v7571
        %v7636 = vlaneseq
        %v7637 = vshrl.u32 %v7636, 7
        %v7638 = vsub.s32 5, %v7637
        %v7639 = vrot.slane %v455, %v7638
        %v7640 = vmul.f32 %v397, %v7639
        %v7641 = vmul.f32 %v398, %v7639
        %v7642 = vmul.f32 %v399, %v7639
        %v7643 = vmul.f32 %v400, %v7639
        %v7644 = vmul.f32 %v401, %v7639
        %v7645 = vmul.f32 %v402, %v7639
        %v7646 = vmul.f32 %v403, %v7639
        %v7647 = vmul.f32 %v404, %v7639
        %v7648 = vmul.f32 %v405, %v7639
        %v7649 = vmul.f32 %v406, %v7639
        %v7650 = vmul.f32 %v407, %v7639
        %v7651 = vmul.f32 %v408, %v7639
        %v7652 = vmul.f32 %v409, %v7639
        %v7653 = vmul.f32 %v410, %v7639
        %v7654 = vmul.f32 %v411, %v7639
        %v7655 = vmul.f32 %v412, %v7639
        %v7656 = vmul.f32 %v413, %v7639
        %v7657 = vmul.f32 %v414, %v7639
        %v7658 = vmul.f32 %v415, %v7639
        %v7659 = vmul.f32 %v416, %v7639
        %v7660 = vmul.f32 %v417, %v7639
        %v7661 = vmul.f32 %v418, %v7639
        %v7662 = vmul.f32 %v419, %v7639
        %v7663 = vmul.f32 %v420, %v7639
        %v7664 = vmul.f32 %v421, %v7639
        %v7665 = vmul.f32 %v422, %v7639
        %v7666 = vmul.f32 %v423, %v7639
        %v7667 = vmul.f32 %v424, %v7639
        %v7668 = vmul.f32 %v425, %v7639
        %v7669 = vmul.f32 %v426, %v7639
        %v7670 = vmul.f32 %v427, %v7639
        %v7671 = vmul.f32 %v428, %v7639
        %v7672 = vmul.f32 %v429, %v7639
        %v7673 = vmul.f32 %v430, %v7639
        %v7674 = vmul.f32 %v431, %v7639
        %v7675 = vmul.f32 %v432, %v7639
        %v7676 = vmul.f32 %v433, %v7639
        %v7677 = vmul.f32 %v434, %v7639
        %v7678 = vmul.f32 %v435, %v7639
        %v7679 = vmul.f32 %v436, %v7639
        %v7680 = vmul.f32 %v437, %v7639
        %v7681 = vmul.f32 %v438, %v7639
        %v7682 = vmul.f32 %v439, %v7639
        %v7683 = vmul.f32 %v440, %v7639
        %v7684 = vmul.f32 %v441, %v7639
        %v7685 = vmul.f32 %v442, %v7639
        %v7686 = vmul.f32 %v443, %v7639
        %v7687 = vmul.f32 %v444, %v7639
        %v7736 = vrot.slane %v7640, 5
        %v7737 = vrot.slane %v7641, 5
        %v7738 = vsel %vm1606, %v7736, %v7737
        %v7739 = vrot.slane %v7642, 5
        %v7740 = vsel %vm1606, %v7737, %v7739
        %v7741 = vrot.slane %v7643, 5
        %v7742 = vrot.slane %v7644, 5
        %v7743 = vsel %vm1606, %v7741, %v7742
        %v7744 = vrot.slane %v7645, 5
        %v7745 = vsel %vm1606, %v7742, %v7744
        %v7746 = vrot.slane %v7646, 5
        %v7747 = vrot.slane %v7647, 5
        %v7748 = vsel %vm1606, %v7746, %v7747
        %v7749 = vrot.slane %v7648, 5
        %v7750 = vsel %vm1606, %v7747, %v7749
        %v7751 = vrot.slane %v7649, 5
        %v7752 = vrot.slane %v7650, 5
        %v7753 = vsel %vm1606, %v7751, %v7752
        %v7754 = vrot.slane %v7651, 5
        %v7755 = vsel %vm1606, %v7752, %v7754
        %v7756 = vrot.slane %v7652, 5
        %v7757 = vrot.slane %v7653, 5
        %v7758 = vsel %vm1606, %v7756, %v7757
        %v7759 = vrot.slane %v7654, 5
        %v7760 = vsel %vm1606, %v7757, %v7759
        %v7761 = vrot.slane %v7655, 5
        %v7762 = vrot.slane %v7656, 5
        %v7763 = vsel %vm1606, %v7761, %v7762
        %v7764 = vrot.slane %v7657, 5
        %v7765 = vsel %vm1606, %v7762, %v7764
        %v7766 = vrot.slane %v7658, 5
        %v7767 = vrot.slane %v7659, 5
        %v7768 = vsel %vm1606, %v7766, %v7767
        %v7769 = vrot.slane %v7660, 5
        %v7770 = vsel %vm1606, %v7767, %v7769
        %v7771 = vrot.slane %v7661, 5
        %v7772 = vrot.slane %v7662, 5
        %v7773 = vsel %vm1606, %v7771, %v7772
        %v7774 = vrot.slane %v7663, 5
        %v7775 = vsel %vm1606, %v7772, %v7774
        %v7776 = vrot.slane %v7664, 5
        %v7777 = vrot.slane %v7665, 5
        %v7778 = vsel %vm1606, %v7776, %v7777
        %v7779 = vrot.slane %v7666, 5
        %v7780 = vsel %vm1606, %v7777, %v7779
        %v7781 = vrot.slane %v7667, 5
        %v7782 = vrot.slane %v7668, 5
        %v7783 = vsel %vm1606, %v7781, %v7782
        %v7784 = vrot.slane %v7669, 5
        %v7785 = vsel %vm1606, %v7782, %v7784
        %v7786 = vrot.slane %v7670, 5
        %v7787 = vrot.slane %v7671, 5
        %v7788 = vsel %vm1606, %v7786, %v7787
        %v7789 = vrot.slane %v7672, 5
        %v7790 = vsel %vm1606, %v7787, %v7789
        %v7791 = vrot.slane %v7673, 5
        %v7792 = vrot.slane %v7674, 5
        %v7793 = vsel %vm1606, %v7791, %v7792
        %v7794 = vrot.slane %v7675, 5
        %v7795 = vsel %vm1606, %v7792, %v7794
        %v7796 = vrot.slane %v7676, 5
        %v7797 = vrot.slane %v7677, 5
        %v7798 = vsel %vm1606, %v7796, %v7797
        %v7799 = vrot.slane %v7678, 5
        %v7800 = vsel %vm1606, %v7797, %v7799
        %v7801 = vrot.slane %v7679, 5
        %v7802 = vrot.slane %v7680, 5
        %v7803 = vsel %vm1606, %v7801, %v7802
        %v7804 = vrot.slane %v7681, 5
        %v7805 = vsel %vm1606, %v7802, %v7804
        %v7806 = vrot.slane %v7682, 5
        %v7807 = vrot.slane %v7683, 5
        %v7808 = vsel %vm1606, %v7806, %v7807
        %v7809 = vrot.slane %v7684, 5
        %v7810 = vsel %vm1606, %v7807, %v7809
        %v7811 = vrot.slane %v7685, 5
        %v7812 = vrot.slane %v7686, 5
        %v7813 = vsel %vm1606, %v7811, %v7812
        %v7814 = vrot.slane %v7687, 5
        %v7815 = vsel %vm1606, %v7812, %v7814
        %v7848 = vadd.f32 %v7604, %v7738
        %v7849 = vadd.f32 %v7605, %v7740
        %v7850 = vadd.f32 %v7606, %v7743
        %v7851 = vadd.f32 %v7607, %v7745
        %v7852 = vadd.f32 %v7608, %v7748
        %v7853 = vadd.f32 %v7609, %v7750
        %v7854 = vadd.f32 %v7610, %v7753
        %v7855 = vadd.f32 %v7611, %v7755
        %v7856 = vadd.f32 %v7612, %v7758
        %v7857 = vadd.f32 %v7613, %v7760
        %v7858 = vadd.f32 %v7614, %v7763
        %v7859 = vadd.f32 %v7615, %v7765
        %v7860 = vadd.f32 %v7616, %v7768
        %v7861 = vadd.f32 %v7617, %v7770
        %v7862 = vadd.f32 %v7618, %v7773
        %v7863 = vadd.f32 %v7619, %v7775
        %v7864 = vadd.f32 %v7620, %v7778
        %v7865 = vadd.f32 %v7621, %v7780
        %v7866 = vadd.f32 %v7622, %v7783
        %v7867 = vadd.f32 %v7623, %v7785
        %v7868 = vadd.f32 %v7624, %v7788
        %v7869 = vadd.f32 %v7625, %v7790
        %v7870 = vadd.f32 %v7626, %v7793
        %v7871 = vadd.f32 %v7627, %v7795
        %v7872 = vadd.f32 %v7628, %v7798
        %v7873 = vadd.f32 %v7629, %v7800
        %v7874 = vadd.f32 %v7630, %v7803
        %v7875 = vadd.f32 %v7631, %v7805
        %v7876 = vadd.f32 %v7632, %v7808
        %v7877 = vadd.f32 %v7633, %v7810
        %v7878 = vadd.f32 %v7634, %v7813
        %v7879 = vadd.f32 %v7635, %v7815
        %v7880 = vlaneseq
        %v7881 = vshrl.u32 %v7880, 7
        %v7882 = vsub.s32 6, %v7881
        %v7883 = vrot.slane %v455, %v7882
        %v7884 = vmul.f32 %v397, %v7883
        %v7885 = vmul.f32 %v398, %v7883
        %v7886 = vmul.f32 %v399, %v7883
        %v7887 = vmul.f32 %v400, %v7883
        %v7888 = vmul.f32 %v401, %v7883
        %v7889 = vmul.f32 %v402, %v7883
        %v7890 = vmul.f32 %v403, %v7883
        %v7891 = vmul.f32 %v404, %v7883
        %v7892 = vmul.f32 %v405, %v7883
        %v7893 = vmul.f32 %v406, %v7883
        %v7894 = vmul.f32 %v407, %v7883
        %v7895 = vmul.f32 %v408, %v7883
        %v7896 = vmul.f32 %v409, %v7883
        %v7897 = vmul.f32 %v410, %v7883
        %v7898 = vmul.f32 %v411, %v7883
        %v7899 = vmul.f32 %v412, %v7883
        %v7900 = vmul.f32 %v413, %v7883
        %v7901 = vmul.f32 %v414, %v7883
        %v7902 = vmul.f32 %v415, %v7883
        %v7903 = vmul.f32 %v416, %v7883
        %v7904 = vmul.f32 %v417, %v7883
        %v7905 = vmul.f32 %v418, %v7883
        %v7906 = vmul.f32 %v419, %v7883
        %v7907 = vmul.f32 %v420, %v7883
        %v7908 = vmul.f32 %v421, %v7883
        %v7909 = vmul.f32 %v422, %v7883
        %v7910 = vmul.f32 %v423, %v7883
        %v7911 = vmul.f32 %v424, %v7883
        %v7912 = vmul.f32 %v425, %v7883
        %v7913 = vmul.f32 %v426, %v7883
        %v7914 = vmul.f32 %v427, %v7883
        %v7915 = vmul.f32 %v428, %v7883
        %v7916 = vmul.f32 %v429, %v7883
        %v7917 = vmul.f32 %v430, %v7883
        %v7918 = vmul.f32 %v431, %v7883
        %v7919 = vmul.f32 %v432, %v7883
        %v7920 = vmul.f32 %v433, %v7883
        %v7921 = vmul.f32 %v434, %v7883
        %v7922 = vmul.f32 %v435, %v7883
        %v7923 = vmul.f32 %v436, %v7883
        %v7924 = vmul.f32 %v437, %v7883
        %v7925 = vmul.f32 %v438, %v7883
        %v7926 = vmul.f32 %v439, %v7883
        %v7927 = vmul.f32 %v440, %v7883
        %v7928 = vmul.f32 %v441, %v7883
        %v7929 = vmul.f32 %v442, %v7883
        %v7930 = vmul.f32 %v443, %v7883
        %v7931 = vmul.f32 %v444, %v7883
        %v7980 = vrot.slane %v7884, 6
        %v7981 = vrot.slane %v7885, 6
        %v7982 = vsel %vm1851, %v7980, %v7981
        %v7983 = vrot.slane %v7886, 6
        %v7984 = vsel %vm1851, %v7981, %v7983
        %v7985 = vrot.slane %v7887, 6
        %v7986 = vrot.slane %v7888, 6
        %v7987 = vsel %vm1851, %v7985, %v7986
        %v7988 = vrot.slane %v7889, 6
        %v7989 = vsel %vm1851, %v7986, %v7988
        %v7990 = vrot.slane %v7890, 6
        %v7991 = vrot.slane %v7891, 6
        %v7992 = vsel %vm1851, %v7990, %v7991
        %v7993 = vrot.slane %v7892, 6
        %v7994 = vsel %vm1851, %v7991, %v7993
        %v7995 = vrot.slane %v7893, 6
        %v7996 = vrot.slane %v7894, 6
        %v7997 = vsel %vm1851, %v7995, %v7996
        %v7998 = vrot.slane %v7895, 6
        %v7999 = vsel %vm1851, %v7996, %v7998
        %v8000 = vrot.slane %v7896, 6
        %v8001 = vrot.slane %v7897, 6
        %v8002 = vsel %vm1851, %v8000, %v8001
        %v8003 = vrot.slane %v7898, 6
        %v8004 = vsel %vm1851, %v8001, %v8003
        %v8005 = vrot.slane %v7899, 6
        %v8006 = vrot.slane %v7900, 6
        %v8007 = vsel %vm1851, %v8005, %v8006
        %v8008 = vrot.slane %v7901, 6
        %v8009 = vsel %vm1851, %v8006, %v8008
        %v8010 = vrot.slane %v7902, 6
        %v8011 = vrot.slane %v7903, 6
        %v8012 = vsel %vm1851, %v8010, %v8011
        %v8013 = vrot.slane %v7904, 6
        %v8014 = vsel %vm1851, %v8011, %v8013
        %v8015 = vrot.slane %v7905, 6
        %v8016 = vrot.slane %v7906, 6
        %v8017 = vsel %vm1851, %v8015, %v8016
        %v8018 = vrot.slane %v7907, 6
        %v8019 = vsel %vm1851, %v8016, %v8018
        %v8020 = vrot.slane %v7908, 6
        %v8021 = vrot.slane %v7909, 6
        %v8022 = vsel %vm1851, %v8020, %v8021
        %v8023 = vrot.slane %v7910, 6
        %v8024 = vsel %vm1851, %v8021, %v8023
        %v8025 = vrot.slane %v7911, 6
        %v8026 = vrot.slane %v7912, 6
        %v8027 = vsel %vm1851, %v8025, %v8026
        %v8028 = vrot.slane %v7913, 6
        %v8029 = vsel %vm1851, %v8026, %v8028
        %v8030 = vrot.slane %v7914, 6
        %v8031 = vrot.slane %v7915, 6
        %v8032 = vsel %vm1851, %v8030, %v8031
        %v8033 = vrot.slane %v7916, 6
        %v8034 = vsel %vm1851, %v8031, %v8033
        %v8035 = vrot.slane %v7917, 6
        %v8036 = vrot.slane %v7918, 6
        %v8037 = vsel %vm1851, %v8035, %v8036
        %v8038 = vrot.slane %v7919, 6
        %v8039 = vsel %vm1851, %v8036, %v8038
        %v8040 = vrot.slane %v7920, 6
        %v8041 = vrot.slane %v7921, 6
        %v8042 = vsel %vm1851, %v8040, %v8041
        %v8043 = vrot.slane %v7922, 6
        %v8044 = vsel %vm1851, %v8041, %v8043
        %v8045 = vrot.slane %v7923, 6
        %v8046 = vrot.slane %v7924, 6
        %v8047 = vsel %vm1851, %v8045, %v8046
        %v8048 = vrot.slane %v7925, 6
        %v8049 = vsel %vm1851, %v8046, %v8048
        %v8050 = vrot.slane %v7926, 6
        %v8051 = vrot.slane %v7927, 6
        %v8052 = vsel %vm1851, %v8050, %v8051
        %v8053 = vrot.slane %v7928, 6
        %v8054 = vsel %vm1851, %v8051, %v8053
        %v8055 = vrot.slane %v7929, 6
        %v8056 = vrot.slane %v7930, 6
        %v8057 = vsel %vm1851, %v8055, %v8056
        %v8058 = vrot.slane %v7931, 6
        %v8059 = vsel %vm1851, %v8056, %v8058
        %v8092 = vadd.f32 %v7848, %v7982
        %v8093 = vadd.f32 %v7849, %v7984
        %v8094 = vadd.f32 %v7850, %v7987
        %v8095 = vadd.f32 %v7851, %v7989
        %v8096 = vadd.f32 %v7852, %v7992
        %v8097 = vadd.f32 %v7853, %v7994
        %v8098 = vadd.f32 %v7854, %v7997
        %v8099 = vadd.f32 %v7855, %v7999
        %v8100 = vadd.f32 %v7856, %v8002
        %v8101 = vadd.f32 %v7857, %v8004
        %v8102 = vadd.f32 %v7858, %v8007
        %v8103 = vadd.f32 %v7859, %v8009
        %v8104 = vadd.f32 %v7860, %v8012
        %v8105 = vadd.f32 %v7861, %v8014
        %v8106 = vadd.f32 %v7862, %v8017
        %v8107 = vadd.f32 %v7863, %v8019
        %v8108 = vadd.f32 %v7864, %v8022
        %v8109 = vadd.f32 %v7865, %v8024
        %v8110 = vadd.f32 %v7866, %v8027
        %v8111 = vadd.f32 %v7867, %v8029
        %v8112 = vadd.f32 %v7868, %v8032
        %v8113 = vadd.f32 %v7869, %v8034
        %v8114 = vadd.f32 %v7870, %v8037
        %v8115 = vadd.f32 %v7871, %v8039
        %v8116 = vadd.f32 %v7872, %v8042
        %v8117 = vadd.f32 %v7873, %v8044
        %v8118 = vadd.f32 %v7874, %v8047
        %v8119 = vadd.f32 %v7875, %v8049
        %v8120 = vadd.f32 %v7876, %v8052
        %v8121 = vadd.f32 %v7877, %v8054
        %v8122 = vadd.f32 %v7878, %v8057
        %v8123 = vadd.f32 %v7879, %v8059
        %v8124 = vlaneseq
        %v8125 = vshrl.u32 %v8124, 7
        %v8126 = vsub.s32 0, %v8125
        %v8127 = vrot.slane %v456, %v8126
        %v8128 = vmul.f32 %v400, %v8127
        %v8129 = vmul.f32 %v401, %v8127
        %v8130 = vmul.f32 %v403, %v8127
        %v8131 = vmul.f32 %v404, %v8127
        %v8132 = vmul.f32 %v406, %v8127
        %v8133 = vmul.f32 %v407, %v8127
        %v8134 = vmul.f32 %v409, %v8127
        %v8135 = vmul.f32 %v410, %v8127
        %v8136 = vmul.f32 %v412, %v8127
        %v8137 = vmul.f32 %v413, %v8127
        %v8138 = vmul.f32 %v415, %v8127
        %v8139 = vmul.f32 %v416, %v8127
        %v8140 = vmul.f32 %v418, %v8127
        %v8141 = vmul.f32 %v419, %v8127
        %v8142 = vmul.f32 %v421, %v8127
        %v8143 = vmul.f32 %v422, %v8127
        %v8144 = vmul.f32 %v424, %v8127
        %v8145 = vmul.f32 %v425, %v8127
        %v8146 = vmul.f32 %v427, %v8127
        %v8147 = vmul.f32 %v428, %v8127
        %v8148 = vmul.f32 %v430, %v8127
        %v8149 = vmul.f32 %v431, %v8127
        %v8150 = vmul.f32 %v433, %v8127
        %v8151 = vmul.f32 %v434, %v8127
        %v8152 = vmul.f32 %v436, %v8127
        %v8153 = vmul.f32 %v437, %v8127
        %v8154 = vmul.f32 %v439, %v8127
        %v8155 = vmul.f32 %v440, %v8127
        %v8156 = vmul.f32 %v442, %v8127
        %v8157 = vmul.f32 %v443, %v8127
        %v8158 = vmul.f32 %v445, %v8127
        %v8159 = vmul.f32 %v446, %v8127
        %v8160 = vadd.f32 %v8092, %v8128
        %v8161 = vadd.f32 %v8093, %v8129
        %v8162 = vadd.f32 %v8094, %v8130
        %v8163 = vadd.f32 %v8095, %v8131
        %v8164 = vadd.f32 %v8096, %v8132
        %v8165 = vadd.f32 %v8097, %v8133
        %v8166 = vadd.f32 %v8098, %v8134
        %v8167 = vadd.f32 %v8099, %v8135
        %v8168 = vadd.f32 %v8100, %v8136
        %v8169 = vadd.f32 %v8101, %v8137
        %v8170 = vadd.f32 %v8102, %v8138
        %v8171 = vadd.f32 %v8103, %v8139
        %v8172 = vadd.f32 %v8104, %v8140
        %v8173 = vadd.f32 %v8105, %v8141
        %v8174 = vadd.f32 %v8106, %v8142
        %v8175 = vadd.f32 %v8107, %v8143
        %v8176 = vadd.f32 %v8108, %v8144
        %v8177 = vadd.f32 %v8109, %v8145
        %v8178 = vadd.f32 %v8110, %v8146
        %v8179 = vadd.f32 %v8111, %v8147
        %v8180 = vadd.f32 %v8112, %v8148
        %v8181 = vadd.f32 %v8113, %v8149
        %v8182 = vadd.f32 %v8114, %v8150
        %v8183 = vadd.f32 %v8115, %v8151
        %v8184 = vadd.f32 %v8116, %v8152
        %v8185 = vadd.f32 %v8117, %v8153
        %v8186 = vadd.f32 %v8118, %v8154
        %v8187 = vadd.f32 %v8119, %v8155
        %v8188 = vadd.f32 %v8120, %v8156
        %v8189 = vadd.f32 %v8121, %v8157
        %v8190 = vadd.f32 %v8122, %v8158
        %v8191 = vadd.f32 %v8123, %v8159
        %v8192 = vlaneseq
        %v8193 = vshrl.u32 %v8192, 7
        %v8194 = vsub.s32 1, %v8193
        %v8195 = vrot.slane %v456, %v8194
        %v8196 = vmul.f32 %v400, %v8195
        %v8197 = vmul.f32 %v401, %v8195
        %v8198 = vmul.f32 %v402, %v8195
        %v8199 = vmul.f32 %v403, %v8195
        %v8200 = vmul.f32 %v404, %v8195
        %v8201 = vmul.f32 %v405, %v8195
        %v8202 = vmul.f32 %v406, %v8195
        %v8203 = vmul.f32 %v407, %v8195
        %v8204 = vmul.f32 %v408, %v8195
        %v8205 = vmul.f32 %v409, %v8195
        %v8206 = vmul.f32 %v410, %v8195
        %v8207 = vmul.f32 %v411, %v8195
        %v8208 = vmul.f32 %v412, %v8195
        %v8209 = vmul.f32 %v413, %v8195
        %v8210 = vmul.f32 %v414, %v8195
        %v8211 = vmul.f32 %v415, %v8195
        %v8212 = vmul.f32 %v416, %v8195
        %v8213 = vmul.f32 %v417, %v8195
        %v8214 = vmul.f32 %v418, %v8195
        %v8215 = vmul.f32 %v419, %v8195
        %v8216 = vmul.f32 %v420, %v8195
        %v8217 = vmul.f32 %v421, %v8195
        %v8218 = vmul.f32 %v422, %v8195
        %v8219 = vmul.f32 %v423, %v8195
        %v8220 = vmul.f32 %v424, %v8195
        %v8221 = vmul.f32 %v425, %v8195
        %v8222 = vmul.f32 %v426, %v8195
        %v8223 = vmul.f32 %v427, %v8195
        %v8224 = vmul.f32 %v428, %v8195
        %v8225 = vmul.f32 %v429, %v8195
        %v8226 = vmul.f32 %v430, %v8195
        %v8227 = vmul.f32 %v431, %v8195
        %v8228 = vmul.f32 %v432, %v8195
        %v8229 = vmul.f32 %v433, %v8195
        %v8230 = vmul.f32 %v434, %v8195
        %v8231 = vmul.f32 %v435, %v8195
        %v8232 = vmul.f32 %v436, %v8195
        %v8233 = vmul.f32 %v437, %v8195
        %v8234 = vmul.f32 %v438, %v8195
        %v8235 = vmul.f32 %v439, %v8195
        %v8236 = vmul.f32 %v440, %v8195
        %v8237 = vmul.f32 %v441, %v8195
        %v8238 = vmul.f32 %v442, %v8195
        %v8239 = vmul.f32 %v443, %v8195
        %v8240 = vmul.f32 %v444, %v8195
        %v8241 = vmul.f32 %v445, %v8195
        %v8242 = vmul.f32 %v446, %v8195
        %v8243 = vmul.f32 %v447, %v8195
        %v8292 = vrot.slane %v8196, 1
        %v8293 = vrot.slane %v8197, 1
        %v8294 = vsel %vm626, %v8292, %v8293
        %v8295 = vrot.slane %v8198, 1
        %v8296 = vsel %vm626, %v8293, %v8295
        %v8297 = vrot.slane %v8199, 1
        %v8298 = vrot.slane %v8200, 1
        %v8299 = vsel %vm626, %v8297, %v8298
        %v8300 = vrot.slane %v8201, 1
        %v8301 = vsel %vm626, %v8298, %v8300
        %v8302 = vrot.slane %v8202, 1
        %v8303 = vrot.slane %v8203, 1
        %v8304 = vsel %vm626, %v8302, %v8303
        %v8305 = vrot.slane %v8204, 1
        %v8306 = vsel %vm626, %v8303, %v8305
        %v8307 = vrot.slane %v8205, 1
        %v8308 = vrot.slane %v8206, 1
        %v8309 = vsel %vm626, %v8307, %v8308
        %v8310 = vrot.slane %v8207, 1
        %v8311 = vsel %vm626, %v8308, %v8310
        %v8312 = vrot.slane %v8208, 1
        %v8313 = vrot.slane %v8209, 1
        %v8314 = vsel %vm626, %v8312, %v8313
        %v8315 = vrot.slane %v8210, 1
        %v8316 = vsel %vm626, %v8313, %v8315
        %v8317 = vrot.slane %v8211, 1
        %v8318 = vrot.slane %v8212, 1
        %v8319 = vsel %vm626, %v8317, %v8318
        %v8320 = vrot.slane %v8213, 1
        %v8321 = vsel %vm626, %v8318, %v8320
        %v8322 = vrot.slane %v8214, 1
        %v8323 = vrot.slane %v8215, 1
        %v8324 = vsel %vm626, %v8322, %v8323
        %v8325 = vrot.slane %v8216, 1
        %v8326 = vsel %vm626, %v8323, %v8325
        %v8327 = vrot.slane %v8217, 1
        %v8328 = vrot.slane %v8218, 1
        %v8329 = vsel %vm626, %v8327, %v8328
        %v8330 = vrot.slane %v8219, 1
        %v8331 = vsel %vm626, %v8328, %v8330
        %v8332 = vrot.slane %v8220, 1
        %v8333 = vrot.slane %v8221, 1
        %v8334 = vsel %vm626, %v8332, %v8333
        %v8335 = vrot.slane %v8222, 1
        %v8336 = vsel %vm626, %v8333, %v8335
        %v8337 = vrot.slane %v8223, 1
        %v8338 = vrot.slane %v8224, 1
        %v8339 = vsel %vm626, %v8337, %v8338
        %v8340 = vrot.slane %v8225, 1
        %v8341 = vsel %vm626, %v8338, %v8340
        %v8342 = vrot.slane %v8226, 1
        %v8343 = vrot.slane %v8227, 1
        %v8344 = vsel %vm626, %v8342, %v8343
        %v8345 = vrot.slane %v8228, 1
        %v8346 = vsel %vm626, %v8343, %v8345
        %v8347 = vrot.slane %v8229, 1
        %v8348 = vrot.slane %v8230, 1
        %v8349 = vsel %vm626, %v8347, %v8348
        %v8350 = vrot.slane %v8231, 1
        %v8351 = vsel %vm626, %v8348, %v8350
        %v8352 = vrot.slane %v8232, 1
        %v8353 = vrot.slane %v8233, 1
        %v8354 = vsel %vm626, %v8352, %v8353
        %v8355 = vrot.slane %v8234, 1
        %v8356 = vsel %vm626, %v8353, %v8355
        %v8357 = vrot.slane %v8235, 1
        %v8358 = vrot.slane %v8236, 1
        %v8359 = vsel %vm626, %v8357, %v8358
        %v8360 = vrot.slane %v8237, 1
        %v8361 = vsel %vm626, %v8358, %v8360
        %v8362 = vrot.slane %v8238, 1
        %v8363 = vrot.slane %v8239, 1
        %v8364 = vsel %vm626, %v8362, %v8363
        %v8365 = vrot.slane %v8240, 1
        %v8366 = vsel %vm626, %v8363, %v8365
        %v8367 = vrot.slane %v8241, 1
        %v8368 = vrot.slane %v8242, 1
        %v8369 = vsel %vm626, %v8367, %v8368
        %v8370 = vrot.slane %v8243, 1
        %v8371 = vsel %vm626, %v8368, %v8370
        %v8404 = vadd.f32 %v8160, %v8294
        %v8405 = vadd.f32 %v8161, %v8296
        %v8406 = vadd.f32 %v8162, %v8299
        %v8407 = vadd.f32 %v8163, %v8301
        %v8408 = vadd.f32 %v8164, %v8304
        %v8409 = vadd.f32 %v8165, %v8306
        %v8410 = vadd.f32 %v8166, %v8309
        %v8411 = vadd.f32 %v8167, %v8311
        %v8412 = vadd.f32 %v8168, %v8314
        %v8413 = vadd.f32 %v8169, %v8316
        %v8414 = vadd.f32 %v8170, %v8319
        %v8415 = vadd.f32 %v8171, %v8321
        %v8416 = vadd.f32 %v8172, %v8324
        %v8417 = vadd.f32 %v8173, %v8326
        %v8418 = vadd.f32 %v8174, %v8329
        %v8419 = vadd.f32 %v8175, %v8331
        %v8420 = vadd.f32 %v8176, %v8334
        %v8421 = vadd.f32 %v8177, %v8336
        %v8422 = vadd.f32 %v8178, %v8339
        %v8423 = vadd.f32 %v8179, %v8341
        %v8424 = vadd.f32 %v8180, %v8344
        %v8425 = vadd.f32 %v8181, %v8346
        %v8426 = vadd.f32 %v8182, %v8349
        %v8427 = vadd.f32 %v8183, %v8351
        %v8428 = vadd.f32 %v8184, %v8354
        %v8429 = vadd.f32 %v8185, %v8356
        %v8430 = vadd.f32 %v8186, %v8359
        %v8431 = vadd.f32 %v8187, %v8361
        %v8432 = vadd.f32 %v8188, %v8364
        %v8433 = vadd.f32 %v8189, %v8366
        %v8434 = vadd.f32 %v8190, %v8369
        %v8435 = vadd.f32 %v8191, %v8371
        %v8436 = vlaneseq
        %v8437 = vshrl.u32 %v8436, 7
        %v8438 = vsub.s32 2, %v8437
        %v8439 = vrot.slane %v456, %v8438
        %v8440 = vmul.f32 %v400, %v8439
        %v8441 = vmul.f32 %v401, %v8439
        %v8442 = vmul.f32 %v402, %v8439
        %v8443 = vmul.f32 %v403, %v8439
        %v8444 = vmul.f32 %v404, %v8439
        %v8445 = vmul.f32 %v405, %v8439
        %v8446 = vmul.f32 %v406, %v8439
        %v8447 = vmul.f32 %v407, %v8439
        %v8448 = vmul.f32 %v408, %v8439
        %v8449 = vmul.f32 %v409, %v8439
        %v8450 = vmul.f32 %v410, %v8439
        %v8451 = vmul.f32 %v411, %v8439
        %v8452 = vmul.f32 %v412, %v8439
        %v8453 = vmul.f32 %v413, %v8439
        %v8454 = vmul.f32 %v414, %v8439
        %v8455 = vmul.f32 %v415, %v8439
        %v8456 = vmul.f32 %v416, %v8439
        %v8457 = vmul.f32 %v417, %v8439
        %v8458 = vmul.f32 %v418, %v8439
        %v8459 = vmul.f32 %v419, %v8439
        %v8460 = vmul.f32 %v420, %v8439
        %v8461 = vmul.f32 %v421, %v8439
        %v8462 = vmul.f32 %v422, %v8439
        %v8463 = vmul.f32 %v423, %v8439
        %v8464 = vmul.f32 %v424, %v8439
        %v8465 = vmul.f32 %v425, %v8439
        %v8466 = vmul.f32 %v426, %v8439
        %v8467 = vmul.f32 %v427, %v8439
        %v8468 = vmul.f32 %v428, %v8439
        %v8469 = vmul.f32 %v429, %v8439
        %v8470 = vmul.f32 %v430, %v8439
        %v8471 = vmul.f32 %v431, %v8439
        %v8472 = vmul.f32 %v432, %v8439
        %v8473 = vmul.f32 %v433, %v8439
        %v8474 = vmul.f32 %v434, %v8439
        %v8475 = vmul.f32 %v435, %v8439
        %v8476 = vmul.f32 %v436, %v8439
        %v8477 = vmul.f32 %v437, %v8439
        %v8478 = vmul.f32 %v438, %v8439
        %v8479 = vmul.f32 %v439, %v8439
        %v8480 = vmul.f32 %v440, %v8439
        %v8481 = vmul.f32 %v441, %v8439
        %v8482 = vmul.f32 %v442, %v8439
        %v8483 = vmul.f32 %v443, %v8439
        %v8484 = vmul.f32 %v444, %v8439
        %v8485 = vmul.f32 %v445, %v8439
        %v8486 = vmul.f32 %v446, %v8439
        %v8487 = vmul.f32 %v447, %v8439
        %v8536 = vrot.slane %v8440, 2
        %v8537 = vrot.slane %v8441, 2
        %v8538 = vsel %vm871, %v8536, %v8537
        %v8539 = vrot.slane %v8442, 2
        %v8540 = vsel %vm871, %v8537, %v8539
        %v8541 = vrot.slane %v8443, 2
        %v8542 = vrot.slane %v8444, 2
        %v8543 = vsel %vm871, %v8541, %v8542
        %v8544 = vrot.slane %v8445, 2
        %v8545 = vsel %vm871, %v8542, %v8544
        %v8546 = vrot.slane %v8446, 2
        %v8547 = vrot.slane %v8447, 2
        %v8548 = vsel %vm871, %v8546, %v8547
        %v8549 = vrot.slane %v8448, 2
        %v8550 = vsel %vm871, %v8547, %v8549
        %v8551 = vrot.slane %v8449, 2
        %v8552 = vrot.slane %v8450, 2
        %v8553 = vsel %vm871, %v8551, %v8552
        %v8554 = vrot.slane %v8451, 2
        %v8555 = vsel %vm871, %v8552, %v8554
        %v8556 = vrot.slane %v8452, 2
        %v8557 = vrot.slane %v8453, 2
        %v8558 = vsel %vm871, %v8556, %v8557
        %v8559 = vrot.slane %v8454, 2
        %v8560 = vsel %vm871, %v8557, %v8559
        %v8561 = vrot.slane %v8455, 2
        %v8562 = vrot.slane %v8456, 2
        %v8563 = vsel %vm871, %v8561, %v8562
        %v8564 = vrot.slane %v8457, 2
        %v8565 = vsel %vm871, %v8562, %v8564
        %v8566 = vrot.slane %v8458, 2
        %v8567 = vrot.slane %v8459, 2
        %v8568 = vsel %vm871, %v8566, %v8567
        %v8569 = vrot.slane %v8460, 2
        %v8570 = vsel %vm871, %v8567, %v8569
        %v8571 = vrot.slane %v8461, 2
        %v8572 = vrot.slane %v8462, 2
        %v8573 = vsel %vm871, %v8571, %v8572
        %v8574 = vrot.slane %v8463, 2
        %v8575 = vsel %vm871, %v8572, %v8574
        %v8576 = vrot.slane %v8464, 2
        %v8577 = vrot.slane %v8465, 2
        %v8578 = vsel %vm871, %v8576, %v8577
        %v8579 = vrot.slane %v8466, 2
        %v8580 = vsel %vm871, %v8577, %v8579
        %v8581 = vrot.slane %v8467, 2
        %v8582 = vrot.slane %v8468, 2
        %v8583 = vsel %vm871, %v8581, %v8582
        %v8584 = vrot.slane %v8469, 2
        %v8585 = vsel %vm871, %v8582, %v8584
        %v8586 = vrot.slane %v8470, 2
        %v8587 = vrot.slane %v8471, 2
        %v8588 = vsel %vm871, %v8586, %v8587
        %v8589 = vrot.slane %v8472, 2
        %v8590 = vsel %vm871, %v8587, %v8589
        %v8591 = vrot.slane %v8473, 2
        %v8592 = vrot.slane %v8474, 2
        %v8593 = vsel %vm871, %v8591, %v8592
        %v8594 = vrot.slane %v8475, 2
        %v8595 = vsel %vm871, %v8592, %v8594
        %v8596 = vrot.slane %v8476, 2
        %v8597 = vrot.slane %v8477, 2
        %v8598 = vsel %vm871, %v8596, %v8597
        %v8599 = vrot.slane %v8478, 2
        %v8600 = vsel %vm871, %v8597, %v8599
        %v8601 = vrot.slane %v8479, 2
        %v8602 = vrot.slane %v8480, 2
        %v8603 = vsel %vm871, %v8601, %v8602
        %v8604 = vrot.slane %v8481, 2
        %v8605 = vsel %vm871, %v8602, %v8604
        %v8606 = vrot.slane %v8482, 2
        %v8607 = vrot.slane %v8483, 2
        %v8608 = vsel %vm871, %v8606, %v8607
        %v8609 = vrot.slane %v8484, 2
        %v8610 = vsel %vm871, %v8607, %v8609
        %v8611 = vrot.slane %v8485, 2
        %v8612 = vrot.slane %v8486, 2
        %v8613 = vsel %vm871, %v8611, %v8612
        %v8614 = vrot.slane %v8487, 2
        %v8615 = vsel %vm871, %v8612, %v8614
        %v8648 = vadd.f32 %v8404, %v8538
        %v8649 = vadd.f32 %v8405, %v8540
        %v8650 = vadd.f32 %v8406, %v8543
        %v8651 = vadd.f32 %v8407, %v8545
        %v8652 = vadd.f32 %v8408, %v8548
        %v8653 = vadd.f32 %v8409, %v8550
        %v8654 = vadd.f32 %v8410, %v8553
        %v8655 = vadd.f32 %v8411, %v8555
        %v8656 = vadd.f32 %v8412, %v8558
        %v8657 = vadd.f32 %v8413, %v8560
        %v8658 = vadd.f32 %v8414, %v8563
        %v8659 = vadd.f32 %v8415, %v8565
        %v8660 = vadd.f32 %v8416, %v8568
        %v8661 = vadd.f32 %v8417, %v8570
        %v8662 = vadd.f32 %v8418, %v8573
        %v8663 = vadd.f32 %v8419, %v8575
        %v8664 = vadd.f32 %v8420, %v8578
        %v8665 = vadd.f32 %v8421, %v8580
        %v8666 = vadd.f32 %v8422, %v8583
        %v8667 = vadd.f32 %v8423, %v8585
        %v8668 = vadd.f32 %v8424, %v8588
        %v8669 = vadd.f32 %v8425, %v8590
        %v8670 = vadd.f32 %v8426, %v8593
        %v8671 = vadd.f32 %v8427, %v8595
        %v8672 = vadd.f32 %v8428, %v8598
        %v8673 = vadd.f32 %v8429, %v8600
        %v8674 = vadd.f32 %v8430, %v8603
        %v8675 = vadd.f32 %v8431, %v8605
        %v8676 = vadd.f32 %v8432, %v8608
        %v8677 = vadd.f32 %v8433, %v8610
        %v8678 = vadd.f32 %v8434, %v8613
        %v8679 = vadd.f32 %v8435, %v8615
        %v8680 = vlaneseq
        %v8681 = vshrl.u32 %v8680, 7
        %v8682 = vsub.s32 3, %v8681
        %v8683 = vrot.slane %v456, %v8682
        %v8684 = vmul.f32 %v400, %v8683
        %v8685 = vmul.f32 %v401, %v8683
        %v8686 = vmul.f32 %v402, %v8683
        %v8687 = vmul.f32 %v403, %v8683
        %v8688 = vmul.f32 %v404, %v8683
        %v8689 = vmul.f32 %v405, %v8683
        %v8690 = vmul.f32 %v406, %v8683
        %v8691 = vmul.f32 %v407, %v8683
        %v8692 = vmul.f32 %v408, %v8683
        %v8693 = vmul.f32 %v409, %v8683
        %v8694 = vmul.f32 %v410, %v8683
        %v8695 = vmul.f32 %v411, %v8683
        %v8696 = vmul.f32 %v412, %v8683
        %v8697 = vmul.f32 %v413, %v8683
        %v8698 = vmul.f32 %v414, %v8683
        %v8699 = vmul.f32 %v415, %v8683
        %v8700 = vmul.f32 %v416, %v8683
        %v8701 = vmul.f32 %v417, %v8683
        %v8702 = vmul.f32 %v418, %v8683
        %v8703 = vmul.f32 %v419, %v8683
        %v8704 = vmul.f32 %v420, %v8683
        %v8705 = vmul.f32 %v421, %v8683
        %v8706 = vmul.f32 %v422, %v8683
        %v8707 = vmul.f32 %v423, %v8683
        %v8708 = vmul.f32 %v424, %v8683
        %v8709 = vmul.f32 %v425, %v8683
        %v8710 = vmul.f32 %v426, %v8683
        %v8711 = vmul.f32 %v427, %v8683
        %v8712 = vmul.f32 %v428, %v8683
        %v8713 = vmul.f32 %v429, %v8683
        %v8714 = vmul.f32 %v430, %v8683
        %v8715 = vmul.f32 %v431, %v8683
        %v8716 = vmul.f32 %v432, %v8683
        %v8717 = vmul.f32 %v433, %v8683
        %v8718 = vmul.f32 %v434, %v8683
        %v8719 = vmul.f32 %v435, %v8683
        %v8720 = vmul.f32 %v436, %v8683
        %v8721 = vmul.f32 %v437, %v8683
        %v8722 = vmul.f32 %v438, %v8683
        %v8723 = vmul.f32 %v439, %v8683
        %v8724 = vmul.f32 %v440, %v8683
        %v8725 = vmul.f32 %v441, %v8683
        %v8726 = vmul.f32 %v442, %v8683
        %v8727 = vmul.f32 %v443, %v8683
        %v8728 = vmul.f32 %v444, %v8683
        %v8729 = vmul.f32 %v445, %v8683
        %v8730 = vmul.f32 %v446, %v8683
        %v8731 = vmul.f32 %v447, %v8683
        %v8780 = vrot.slane %v8684, 3
        %v8781 = vrot.slane %v8685, 3
        %v8782 = vsel %vm1116, %v8780, %v8781
        %v8783 = vrot.slane %v8686, 3
        %v8784 = vsel %vm1116, %v8781, %v8783
        %v8785 = vrot.slane %v8687, 3
        %v8786 = vrot.slane %v8688, 3
        %v8787 = vsel %vm1116, %v8785, %v8786
        %v8788 = vrot.slane %v8689, 3
        %v8789 = vsel %vm1116, %v8786, %v8788
        %v8790 = vrot.slane %v8690, 3
        %v8791 = vrot.slane %v8691, 3
        %v8792 = vsel %vm1116, %v8790, %v8791
        %v8793 = vrot.slane %v8692, 3
        %v8794 = vsel %vm1116, %v8791, %v8793
        %v8795 = vrot.slane %v8693, 3
        %v8796 = vrot.slane %v8694, 3
        %v8797 = vsel %vm1116, %v8795, %v8796
        %v8798 = vrot.slane %v8695, 3
        %v8799 = vsel %vm1116, %v8796, %v8798
        %v8800 = vrot.slane %v8696, 3
        %v8801 = vrot.slane %v8697, 3
        %v8802 = vsel %vm1116, %v8800, %v8801
        %v8803 = vrot.slane %v8698, 3
        %v8804 = vsel %vm1116, %v8801, %v8803
        %v8805 = vrot.slane %v8699, 3
        %v8806 = vrot.slane %v8700, 3
        %v8807 = vsel %vm1116, %v8805, %v8806
        %v8808 = vrot.slane %v8701, 3
        %v8809 = vsel %vm1116, %v8806, %v8808
        %v8810 = vrot.slane %v8702, 3
        %v8811 = vrot.slane %v8703, 3
        %v8812 = vsel %vm1116, %v8810, %v8811
        %v8813 = vrot.slane %v8704, 3
        %v8814 = vsel %vm1116, %v8811, %v8813
        %v8815 = vrot.slane %v8705, 3
        %v8816 = vrot.slane %v8706, 3
        %v8817 = vsel %vm1116, %v8815, %v8816
        %v8818 = vrot.slane %v8707, 3
        %v8819 = vsel %vm1116, %v8816, %v8818
        %v8820 = vrot.slane %v8708, 3
        %v8821 = vrot.slane %v8709, 3
        %v8822 = vsel %vm1116, %v8820, %v8821
        %v8823 = vrot.slane %v8710, 3
        %v8824 = vsel %vm1116, %v8821, %v8823
        %v8825 = vrot.slane %v8711, 3
        %v8826 = vrot.slane %v8712, 3
        %v8827 = vsel %vm1116, %v8825, %v8826
        %v8828 = vrot.slane %v8713, 3
        %v8829 = vsel %vm1116, %v8826, %v8828
        %v8830 = vrot.slane %v8714, 3
        %v8831 = vrot.slane %v8715, 3
        %v8832 = vsel %vm1116, %v8830, %v8831
        %v8833 = vrot.slane %v8716, 3
        %v8834 = vsel %vm1116, %v8831, %v8833
        %v8835 = vrot.slane %v8717, 3
        %v8836 = vrot.slane %v8718, 3
        %v8837 = vsel %vm1116, %v8835, %v8836
        %v8838 = vrot.slane %v8719, 3
        %v8839 = vsel %vm1116, %v8836, %v8838
        %v8840 = vrot.slane %v8720, 3
        %v8841 = vrot.slane %v8721, 3
        %v8842 = vsel %vm1116, %v8840, %v8841
        %v8843 = vrot.slane %v8722, 3
        %v8844 = vsel %vm1116, %v8841, %v8843
        %v8845 = vrot.slane %v8723, 3
        %v8846 = vrot.slane %v8724, 3
        %v8847 = vsel %vm1116, %v8845, %v8846
        %v8848 = vrot.slane %v8725, 3
        %v8849 = vsel %vm1116, %v8846, %v8848
        %v8850 = vrot.slane %v8726, 3
        %v8851 = vrot.slane %v8727, 3
        %v8852 = vsel %vm1116, %v8850, %v8851
        %v8853 = vrot.slane %v8728, 3
        %v8854 = vsel %vm1116, %v8851, %v8853
        %v8855 = vrot.slane %v8729, 3
        %v8856 = vrot.slane %v8730, 3
        %v8857 = vsel %vm1116, %v8855, %v8856
        %v8858 = vrot.slane %v8731, 3
        %v8859 = vsel %vm1116, %v8856, %v8858
        %v8892 = vadd.f32 %v8648, %v8782
        %v8893 = vadd.f32 %v8649, %v8784
        %v8894 = vadd.f32 %v8650, %v8787
        %v8895 = vadd.f32 %v8651, %v8789
        %v8896 = vadd.f32 %v8652, %v8792
        %v8897 = vadd.f32 %v8653, %v8794
        %v8898 = vadd.f32 %v8654, %v8797
        %v8899 = vadd.f32 %v8655, %v8799
        %v8900 = vadd.f32 %v8656, %v8802
        %v8901 = vadd.f32 %v8657, %v8804
        %v8902 = vadd.f32 %v8658, %v8807
        %v8903 = vadd.f32 %v8659, %v8809
        %v8904 = vadd.f32 %v8660, %v8812
        %v8905 = vadd.f32 %v8661, %v8814
        %v8906 = vadd.f32 %v8662, %v8817
        %v8907 = vadd.f32 %v8663, %v8819
        %v8908 = vadd.f32 %v8664, %v8822
        %v8909 = vadd.f32 %v8665, %v8824
        %v8910 = vadd.f32 %v8666, %v8827
        %v8911 = vadd.f32 %v8667, %v8829
        %v8912 = vadd.f32 %v8668, %v8832
        %v8913 = vadd.f32 %v8669, %v8834
        %v8914 = vadd.f32 %v8670, %v8837
        %v8915 = vadd.f32 %v8671, %v8839
        %v8916 = vadd.f32 %v8672, %v8842
        %v8917 = vadd.f32 %v8673, %v8844
        %v8918 = vadd.f32 %v8674, %v8847
        %v8919 = vadd.f32 %v8675, %v8849
        %v8920 = vadd.f32 %v8676, %v8852
        %v8921 = vadd.f32 %v8677, %v8854
        %v8922 = vadd.f32 %v8678, %v8857
        %v8923 = vadd.f32 %v8679, %v8859
        %v8924 = vlaneseq
        %v8925 = vshrl.u32 %v8924, 7
        %v8926 = vsub.s32 4, %v8925
        %v8927 = vrot.slane %v456, %v8926
        %v8928 = vmul.f32 %v400, %v8927
        %v8929 = vmul.f32 %v401, %v8927
        %v8930 = vmul.f32 %v402, %v8927
        %v8931 = vmul.f32 %v403, %v8927
        %v8932 = vmul.f32 %v404, %v8927
        %v8933 = vmul.f32 %v405, %v8927
        %v8934 = vmul.f32 %v406, %v8927
        %v8935 = vmul.f32 %v407, %v8927
        %v8936 = vmul.f32 %v408, %v8927
        %v8937 = vmul.f32 %v409, %v8927
        %v8938 = vmul.f32 %v410, %v8927
        %v8939 = vmul.f32 %v411, %v8927
        %v8940 = vmul.f32 %v412, %v8927
        %v8941 = vmul.f32 %v413, %v8927
        %v8942 = vmul.f32 %v414, %v8927
        %v8943 = vmul.f32 %v415, %v8927
        %v8944 = vmul.f32 %v416, %v8927
        %v8945 = vmul.f32 %v417, %v8927
        %v8946 = vmul.f32 %v418, %v8927
        %v8947 = vmul.f32 %v419, %v8927
        %v8948 = vmul.f32 %v420, %v8927
        %v8949 = vmul.f32 %v421, %v8927
        %v8950 = vmul.f32 %v422, %v8927
        %v8951 = vmul.f32 %v423, %v8927
        %v8952 = vmul.f32 %v424, %v8927
        %v8953 = vmul.f32 %v425, %v8927
        %v8954 = vmul.f32 %v426, %v8927
        %v8955 = vmul.f32 %v427, %v8927
        %v8956 = vmul.f32 %v428, %v8927
        %v8957 = vmul.f32 %v429, %v8927
        %v8958 = vmul.f32 %v430, %v8927
        %v8959 = vmul.f32 %v431, %v8927
        %v8960 = vmul.f32 %v432, %v8927
        %v8961 = vmul.f32 %v433, %v8927
        %v8962 = vmul.f32 %v434, %v8927
        %v8963 = vmul.f32 %v435, %v8927
        %v8964 = vmul.f32 %v436, %v8927
        %v8965 = vmul.f32 %v437, %v8927
        %v8966 = vmul.f32 %v438, %v8927
        %v8967 = vmul.f32 %v439, %v8927
        %v8968 = vmul.f32 %v440, %v8927
        %v8969 = vmul.f32 %v441, %v8927
        %v8970 = vmul.f32 %v442, %v8927
        %v8971 = vmul.f32 %v443, %v8927
        %v8972 = vmul.f32 %v444, %v8927
        %v8973 = vmul.f32 %v445, %v8927
        %v8974 = vmul.f32 %v446, %v8927
        %v8975 = vmul.f32 %v447, %v8927
        %v9024 = vrot.slane %v8928, 4
        %v9025 = vrot.slane %v8929, 4
        %v9026 = vsel %vm1361, %v9024, %v9025
        %v9027 = vrot.slane %v8930, 4
        %v9028 = vsel %vm1361, %v9025, %v9027
        %v9029 = vrot.slane %v8931, 4
        %v9030 = vrot.slane %v8932, 4
        %v9031 = vsel %vm1361, %v9029, %v9030
        %v9032 = vrot.slane %v8933, 4
        %v9033 = vsel %vm1361, %v9030, %v9032
        %v9034 = vrot.slane %v8934, 4
        %v9035 = vrot.slane %v8935, 4
        %v9036 = vsel %vm1361, %v9034, %v9035
        %v9037 = vrot.slane %v8936, 4
        %v9038 = vsel %vm1361, %v9035, %v9037
        %v9039 = vrot.slane %v8937, 4
        %v9040 = vrot.slane %v8938, 4
        %v9041 = vsel %vm1361, %v9039, %v9040
        %v9042 = vrot.slane %v8939, 4
        %v9043 = vsel %vm1361, %v9040, %v9042
        %v9044 = vrot.slane %v8940, 4
        %v9045 = vrot.slane %v8941, 4
        %v9046 = vsel %vm1361, %v9044, %v9045
        %v9047 = vrot.slane %v8942, 4
        %v9048 = vsel %vm1361, %v9045, %v9047
        %v9049 = vrot.slane %v8943, 4
        %v9050 = vrot.slane %v8944, 4
        %v9051 = vsel %vm1361, %v9049, %v9050
        %v9052 = vrot.slane %v8945, 4
        %v9053 = vsel %vm1361, %v9050, %v9052
        %v9054 = vrot.slane %v8946, 4
        %v9055 = vrot.slane %v8947, 4
        %v9056 = vsel %vm1361, %v9054, %v9055
        %v9057 = vrot.slane %v8948, 4
        %v9058 = vsel %vm1361, %v9055, %v9057
        %v9059 = vrot.slane %v8949, 4
        %v9060 = vrot.slane %v8950, 4
        %v9061 = vsel %vm1361, %v9059, %v9060
        %v9062 = vrot.slane %v8951, 4
        %v9063 = vsel %vm1361, %v9060, %v9062
        %v9064 = vrot.slane %v8952, 4
        %v9065 = vrot.slane %v8953, 4
        %v9066 = vsel %vm1361, %v9064, %v9065
        %v9067 = vrot.slane %v8954, 4
        %v9068 = vsel %vm1361, %v9065, %v9067
        %v9069 = vrot.slane %v8955, 4
        %v9070 = vrot.slane %v8956, 4
        %v9071 = vsel %vm1361, %v9069, %v9070
        %v9072 = vrot.slane %v8957, 4
        %v9073 = vsel %vm1361, %v9070, %v9072
        %v9074 = vrot.slane %v8958, 4
        %v9075 = vrot.slane %v8959, 4
        %v9076 = vsel %vm1361, %v9074, %v9075
        %v9077 = vrot.slane %v8960, 4
        %v9078 = vsel %vm1361, %v9075, %v9077
        %v9079 = vrot.slane %v8961, 4
        %v9080 = vrot.slane %v8962, 4
        %v9081 = vsel %vm1361, %v9079, %v9080
        %v9082 = vrot.slane %v8963, 4
        %v9083 = vsel %vm1361, %v9080, %v9082
        %v9084 = vrot.slane %v8964, 4
        %v9085 = vrot.slane %v8965, 4
        %v9086 = vsel %vm1361, %v9084, %v9085
        %v9087 = vrot.slane %v8966, 4
        %v9088 = vsel %vm1361, %v9085, %v9087
        %v9089 = vrot.slane %v8967, 4
        %v9090 = vrot.slane %v8968, 4
        %v9091 = vsel %vm1361, %v9089, %v9090
        %v9092 = vrot.slane %v8969, 4
        %v9093 = vsel %vm1361, %v9090, %v9092
        %v9094 = vrot.slane %v8970, 4
        %v9095 = vrot.slane %v8971, 4
        %v9096 = vsel %vm1361, %v9094, %v9095
        %v9097 = vrot.slane %v8972, 4
        %v9098 = vsel %vm1361, %v9095, %v9097
        %v9099 = vrot.slane %v8973, 4
        %v9100 = vrot.slane %v8974, 4
        %v9101 = vsel %vm1361, %v9099, %v9100
        %v9102 = vrot.slane %v8975, 4
        %v9103 = vsel %vm1361, %v9100, %v9102
        %v9136 = vadd.f32 %v8892, %v9026
        %v9137 = vadd.f32 %v8893, %v9028
        %v9138 = vadd.f32 %v8894, %v9031
        %v9139 = vadd.f32 %v8895, %v9033
        %v9140 = vadd.f32 %v8896, %v9036
        %v9141 = vadd.f32 %v8897, %v9038
        %v9142 = vadd.f32 %v8898, %v9041
        %v9143 = vadd.f32 %v8899, %v9043
        %v9144 = vadd.f32 %v8900, %v9046
        %v9145 = vadd.f32 %v8901, %v9048
        %v9146 = vadd.f32 %v8902, %v9051
        %v9147 = vadd.f32 %v8903, %v9053
        %v9148 = vadd.f32 %v8904, %v9056
        %v9149 = vadd.f32 %v8905, %v9058
        %v9150 = vadd.f32 %v8906, %v9061
        %v9151 = vadd.f32 %v8907, %v9063
        %v9152 = vadd.f32 %v8908, %v9066
        %v9153 = vadd.f32 %v8909, %v9068
        %v9154 = vadd.f32 %v8910, %v9071
        %v9155 = vadd.f32 %v8911, %v9073
        %v9156 = vadd.f32 %v8912, %v9076
        %v9157 = vadd.f32 %v8913, %v9078
        %v9158 = vadd.f32 %v8914, %v9081
        %v9159 = vadd.f32 %v8915, %v9083
        %v9160 = vadd.f32 %v8916, %v9086
        %v9161 = vadd.f32 %v8917, %v9088
        %v9162 = vadd.f32 %v8918, %v9091
        %v9163 = vadd.f32 %v8919, %v9093
        %v9164 = vadd.f32 %v8920, %v9096
        %v9165 = vadd.f32 %v8921, %v9098
        %v9166 = vadd.f32 %v8922, %v9101
        %v9167 = vadd.f32 %v8923, %v9103
        %v9168 = vlaneseq
        %v9169 = vshrl.u32 %v9168, 7
        %v9170 = vsub.s32 5, %v9169
        %v9171 = vrot.slane %v456, %v9170
        %v9172 = vmul.f32 %v400, %v9171
        %v9173 = vmul.f32 %v401, %v9171
        %v9174 = vmul.f32 %v402, %v9171
        %v9175 = vmul.f32 %v403, %v9171
        %v9176 = vmul.f32 %v404, %v9171
        %v9177 = vmul.f32 %v405, %v9171
        %v9178 = vmul.f32 %v406, %v9171
        %v9179 = vmul.f32 %v407, %v9171
        %v9180 = vmul.f32 %v408, %v9171
        %v9181 = vmul.f32 %v409, %v9171
        %v9182 = vmul.f32 %v410, %v9171
        %v9183 = vmul.f32 %v411, %v9171
        %v9184 = vmul.f32 %v412, %v9171
        %v9185 = vmul.f32 %v413, %v9171
        %v9186 = vmul.f32 %v414, %v9171
        %v9187 = vmul.f32 %v415, %v9171
        %v9188 = vmul.f32 %v416, %v9171
        %v9189 = vmul.f32 %v417, %v9171
        %v9190 = vmul.f32 %v418, %v9171
        %v9191 = vmul.f32 %v419, %v9171
        %v9192 = vmul.f32 %v420, %v9171
        %v9193 = vmul.f32 %v421, %v9171
        %v9194 = vmul.f32 %v422, %v9171
        %v9195 = vmul.f32 %v423, %v9171
        %v9196 = vmul.f32 %v424, %v9171
        %v9197 = vmul.f32 %v425, %v9171
        %v9198 = vmul.f32 %v426, %v9171
        %v9199 = vmul.f32 %v427, %v9171
        %v9200 = vmul.f32 %v428, %v9171
        %v9201 = vmul.f32 %v429, %v9171
        %v9202 = vmul.f32 %v430, %v9171
        %v9203 = vmul.f32 %v431, %v9171
        %v9204 = vmul.f32 %v432, %v9171
        %v9205 = vmul.f32 %v433, %v9171
        %v9206 = vmul.f32 %v434, %v9171
        %v9207 = vmul.f32 %v435, %v9171
        %v9208 = vmul.f32 %v436, %v9171
        %v9209 = vmul.f32 %v437, %v9171
        %v9210 = vmul.f32 %v438, %v9171
        %v9211 = vmul.f32 %v439, %v9171
        %v9212 = vmul.f32 %v440, %v9171
        %v9213 = vmul.f32 %v441, %v9171
        %v9214 = vmul.f32 %v442, %v9171
        %v9215 = vmul.f32 %v443, %v9171
        %v9216 = vmul.f32 %v444, %v9171
        %v9217 = vmul.f32 %v445, %v9171
        %v9218 = vmul.f32 %v446, %v9171
        %v9219 = vmul.f32 %v447, %v9171
        %v9268 = vrot.slane %v9172, 5
        %v9269 = vrot.slane %v9173, 5
        %v9270 = vsel %vm1606, %v9268, %v9269
        %v9271 = vrot.slane %v9174, 5
        %v9272 = vsel %vm1606, %v9269, %v9271
        %v9273 = vrot.slane %v9175, 5
        %v9274 = vrot.slane %v9176, 5
        %v9275 = vsel %vm1606, %v9273, %v9274
        %v9276 = vrot.slane %v9177, 5
        %v9277 = vsel %vm1606, %v9274, %v9276
        %v9278 = vrot.slane %v9178, 5
        %v9279 = vrot.slane %v9179, 5
        %v9280 = vsel %vm1606, %v9278, %v9279
        %v9281 = vrot.slane %v9180, 5
        %v9282 = vsel %vm1606, %v9279, %v9281
        %v9283 = vrot.slane %v9181, 5
        %v9284 = vrot.slane %v9182, 5
        %v9285 = vsel %vm1606, %v9283, %v9284
        %v9286 = vrot.slane %v9183, 5
        %v9287 = vsel %vm1606, %v9284, %v9286
        %v9288 = vrot.slane %v9184, 5
        %v9289 = vrot.slane %v9185, 5
        %v9290 = vsel %vm1606, %v9288, %v9289
        %v9291 = vrot.slane %v9186, 5
        %v9292 = vsel %vm1606, %v9289, %v9291
        %v9293 = vrot.slane %v9187, 5
        %v9294 = vrot.slane %v9188, 5
        %v9295 = vsel %vm1606, %v9293, %v9294
        %v9296 = vrot.slane %v9189, 5
        %v9297 = vsel %vm1606, %v9294, %v9296
        %v9298 = vrot.slane %v9190, 5
        %v9299 = vrot.slane %v9191, 5
        %v9300 = vsel %vm1606, %v9298, %v9299
        %v9301 = vrot.slane %v9192, 5
        %v9302 = vsel %vm1606, %v9299, %v9301
        %v9303 = vrot.slane %v9193, 5
        %v9304 = vrot.slane %v9194, 5
        %v9305 = vsel %vm1606, %v9303, %v9304
        %v9306 = vrot.slane %v9195, 5
        %v9307 = vsel %vm1606, %v9304, %v9306
        %v9308 = vrot.slane %v9196, 5
        %v9309 = vrot.slane %v9197, 5
        %v9310 = vsel %vm1606, %v9308, %v9309
        %v9311 = vrot.slane %v9198, 5
        %v9312 = vsel %vm1606, %v9309, %v9311
        %v9313 = vrot.slane %v9199, 5
        %v9314 = vrot.slane %v9200, 5
        %v9315 = vsel %vm1606, %v9313, %v9314
        %v9316 = vrot.slane %v9201, 5
        %v9317 = vsel %vm1606, %v9314, %v9316
        %v9318 = vrot.slane %v9202, 5
        %v9319 = vrot.slane %v9203, 5
        %v9320 = vsel %vm1606, %v9318, %v9319
        %v9321 = vrot.slane %v9204, 5
        %v9322 = vsel %vm1606, %v9319, %v9321
        %v9323 = vrot.slane %v9205, 5
        %v9324 = vrot.slane %v9206, 5
        %v9325 = vsel %vm1606, %v9323, %v9324
        %v9326 = vrot.slane %v9207, 5
        %v9327 = vsel %vm1606, %v9324, %v9326
        %v9328 = vrot.slane %v9208, 5
        %v9329 = vrot.slane %v9209, 5
        %v9330 = vsel %vm1606, %v9328, %v9329
        %v9331 = vrot.slane %v9210, 5
        %v9332 = vsel %vm1606, %v9329, %v9331
        %v9333 = vrot.slane %v9211, 5
        %v9334 = vrot.slane %v9212, 5
        %v9335 = vsel %vm1606, %v9333, %v9334
        %v9336 = vrot.slane %v9213, 5
        %v9337 = vsel %vm1606, %v9334, %v9336
        %v9338 = vrot.slane %v9214, 5
        %v9339 = vrot.slane %v9215, 5
        %v9340 = vsel %vm1606, %v9338, %v9339
        %v9341 = vrot.slane %v9216, 5
        %v9342 = vsel %vm1606, %v9339, %v9341
        %v9343 = vrot.slane %v9217, 5
        %v9344 = vrot.slane %v9218, 5
        %v9345 = vsel %vm1606, %v9343, %v9344
        %v9346 = vrot.slane %v9219, 5
        %v9347 = vsel %vm1606, %v9344, %v9346
        %v9380 = vadd.f32 %v9136, %v9270
        %v9381 = vadd.f32 %v9137, %v9272
        %v9382 = vadd.f32 %v9138, %v9275
        %v9383 = vadd.f32 %v9139, %v9277
        %v9384 = vadd.f32 %v9140, %v9280
        %v9385 = vadd.f32 %v9141, %v9282
        %v9386 = vadd.f32 %v9142, %v9285
        %v9387 = vadd.f32 %v9143, %v9287
        %v9388 = vadd.f32 %v9144, %v9290
        %v9389 = vadd.f32 %v9145, %v9292
        %v9390 = vadd.f32 %v9146, %v9295
        %v9391 = vadd.f32 %v9147, %v9297
        %v9392 = vadd.f32 %v9148, %v9300
        %v9393 = vadd.f32 %v9149, %v9302
        %v9394 = vadd.f32 %v9150, %v9305
        %v9395 = vadd.f32 %v9151, %v9307
        %v9396 = vadd.f32 %v9152, %v9310
        %v9397 = vadd.f32 %v9153, %v9312
        %v9398 = vadd.f32 %v9154, %v9315
        %v9399 = vadd.f32 %v9155, %v9317
        %v9400 = vadd.f32 %v9156, %v9320
        %v9401 = vadd.f32 %v9157, %v9322
        %v9402 = vadd.f32 %v9158, %v9325
        %v9403 = vadd.f32 %v9159, %v9327
        %v9404 = vadd.f32 %v9160, %v9330
        %v9405 = vadd.f32 %v9161, %v9332
        %v9406 = vadd.f32 %v9162, %v9335
        %v9407 = vadd.f32 %v9163, %v9337
        %v9408 = vadd.f32 %v9164, %v9340
        %v9409 = vadd.f32 %v9165, %v9342
        %v9410 = vadd.f32 %v9166, %v9345
        %v9411 = vadd.f32 %v9167, %v9347
        %v9412 = vlaneseq
        %v9413 = vshrl.u32 %v9412, 7
        %v9414 = vsub.s32 6, %v9413
        %v9415 = vrot.slane %v456, %v9414
        %v9416 = vmul.f32 %v400, %v9415
        %v9417 = vmul.f32 %v401, %v9415
        %v9418 = vmul.f32 %v402, %v9415
        %v9419 = vmul.f32 %v403, %v9415
        %v9420 = vmul.f32 %v404, %v9415
        %v9421 = vmul.f32 %v405, %v9415
        %v9422 = vmul.f32 %v406, %v9415
        %v9423 = vmul.f32 %v407, %v9415
        %v9424 = vmul.f32 %v408, %v9415
        %v9425 = vmul.f32 %v409, %v9415
        %v9426 = vmul.f32 %v410, %v9415
        %v9427 = vmul.f32 %v411, %v9415
        %v9428 = vmul.f32 %v412, %v9415
        %v9429 = vmul.f32 %v413, %v9415
        %v9430 = vmul.f32 %v414, %v9415
        %v9431 = vmul.f32 %v415, %v9415
        %v9432 = vmul.f32 %v416, %v9415
        %v9433 = vmul.f32 %v417, %v9415
        %v9434 = vmul.f32 %v418, %v9415
        %v9435 = vmul.f32 %v419, %v9415
        %v9436 = vmul.f32 %v420, %v9415
        %v9437 = vmul.f32 %v421, %v9415
        %v9438 = vmul.f32 %v422, %v9415
        %v9439 = vmul.f32 %v423, %v9415
        %v9440 = vmul.f32 %v424, %v9415
        %v9441 = vmul.f32 %v425, %v9415
        %v9442 = vmul.f32 %v426, %v9415
        %v9443 = vmul.f32 %v427, %v9415
        %v9444 = vmul.f32 %v428, %v9415
        %v9445 = vmul.f32 %v429, %v9415
        %v9446 = vmul.f32 %v430, %v9415
        %v9447 = vmul.f32 %v431, %v9415
        %v9448 = vmul.f32 %v432, %v9415
        %v9449 = vmul.f32 %v433, %v9415
        %v9450 = vmul.f32 %v434, %v9415
        %v9451 = vmul.f32 %v435, %v9415
        %v9452 = vmul.f32 %v436, %v9415
        %v9453 = vmul.f32 %v437, %v9415
        %v9454 = vmul.f32 %v438, %v9415
        %v9455 = vmul.f32 %v439, %v9415
        %v9456 = vmul.f32 %v440, %v9415
        %v9457 = vmul.f32 %v441, %v9415
        %v9458 = vmul.f32 %v442, %v9415
        %v9459 = vmul.f32 %v443, %v9415
        %v9460 = vmul.f32 %v444, %v9415
        %v9461 = vmul.f32 %v445, %v9415
        %v9462 = vmul.f32 %v446, %v9415
        %v9463 = vmul.f32 %v447, %v9415
        %v9512 = vrot.slane %v9416, 6
        %v9513 = vrot.slane %v9417, 6
        %v9514 = vsel %vm1851, %v9512, %v9513
        %v9515 = vrot.slane %v9418, 6
        %v9516 = vsel %vm1851, %v9513, %v9515
        %v9517 = vrot.slane %v9419, 6
        %v9518 = vrot.slane %v9420, 6
        %v9519 = vsel %vm1851, %v9517, %v9518
        %v9520 = vrot.slane %v9421, 6
        %v9521 = vsel %vm1851, %v9518, %v9520
        %v9522 = vrot.slane %v9422, 6
        %v9523 = vrot.slane %v9423, 6
        %v9524 = vsel %vm1851, %v9522, %v9523
        %v9525 = vrot.slane %v9424, 6
        %v9526 = vsel %vm1851, %v9523, %v9525
        %v9527 = vrot.slane %v9425, 6
        %v9528 = vrot.slane %v9426, 6
        %v9529 = vsel %vm1851, %v9527, %v9528
        %v9530 = vrot.slane %v9427, 6
        %v9531 = vsel %vm1851, %v9528, %v9530
        %v9532 = vrot.slane %v9428, 6
        %v9533 = vrot.slane %v9429, 6
        %v9534 = vsel %vm1851, %v9532, %v9533
        %v9535 = vrot.slane %v9430, 6
        %v9536 = vsel %vm1851, %v9533, %v9535
        %v9537 = vrot.slane %v9431, 6
        %v9538 = vrot.slane %v9432, 6
        %v9539 = vsel %vm1851, %v9537, %v9538
        %v9540 = vrot.slane %v9433, 6
        %v9541 = vsel %vm1851, %v9538, %v9540
        %v9542 = vrot.slane %v9434, 6
        %v9543 = vrot.slane %v9435, 6
        %v9544 = vsel %vm1851, %v9542, %v9543
        %v9545 = vrot.slane %v9436, 6
        %v9546 = vsel %vm1851, %v9543, %v9545
        %v9547 = vrot.slane %v9437, 6
        %v9548 = vrot.slane %v9438, 6
        %v9549 = vsel %vm1851, %v9547, %v9548
        %v9550 = vrot.slane %v9439, 6
        %v9551 = vsel %vm1851, %v9548, %v9550
        %v9552 = vrot.slane %v9440, 6
        %v9553 = vrot.slane %v9441, 6
        %v9554 = vsel %vm1851, %v9552, %v9553
        %v9555 = vrot.slane %v9442, 6
        %v9556 = vsel %vm1851, %v9553, %v9555
        %v9557 = vrot.slane %v9443, 6
        %v9558 = vrot.slane %v9444, 6
        %v9559 = vsel %vm1851, %v9557, %v9558
        %v9560 = vrot.slane %v9445, 6
        %v9561 = vsel %vm1851, %v9558, %v9560
        %v9562 = vrot.slane %v9446, 6
        %v9563 = vrot.slane %v9447, 6
        %v9564 = vsel %vm1851, %v9562, %v9563
        %v9565 = vrot.slane %v9448, 6
        %v9566 = vsel %vm1851, %v9563, %v9565
        %v9567 = vrot.slane %v9449, 6
        %v9568 = vrot.slane %v9450, 6
        %v9569 = vsel %vm1851, %v9567, %v9568
        %v9570 = vrot.slane %v9451, 6
        %v9571 = vsel %vm1851, %v9568, %v9570
        %v9572 = vrot.slane %v9452, 6
        %v9573 = vrot.slane %v9453, 6
        %v9574 = vsel %vm1851, %v9572, %v9573
        %v9575 = vrot.slane %v9454, 6
        %v9576 = vsel %vm1851, %v9573, %v9575
        %v9577 = vrot.slane %v9455, 6
        %v9578 = vrot.slane %v9456, 6
        %v9579 = vsel %vm1851, %v9577, %v9578
        %v9580 = vrot.slane %v9457, 6
        %v9581 = vsel %vm1851, %v9578, %v9580
        %v9582 = vrot.slane %v9458, 6
        %v9583 = vrot.slane %v9459, 6
        %v9584 = vsel %vm1851, %v9582, %v9583
        %v9585 = vrot.slane %v9460, 6
        %v9586 = vsel %vm1851, %v9583, %v9585
        %v9587 = vrot.slane %v9461, 6
        %v9588 = vrot.slane %v9462, 6
        %v9589 = vsel %vm1851, %v9587, %v9588
        %v9590 = vrot.slane %v9463, 6
        %v9591 = vsel %vm1851, %v9588, %v9590
        %v9624 = vadd.f32 %v9380, %v9514
        %v9625 = vadd.f32 %v9381, %v9516
        %v9626 = vadd.f32 %v9382, %v9519
        %v9627 = vadd.f32 %v9383, %v9521
        %v9628 = vadd.f32 %v9384, %v9524
        %v9629 = vadd.f32 %v9385, %v9526
        %v9630 = vadd.f32 %v9386, %v9529
        %v9631 = vadd.f32 %v9387, %v9531
        %v9632 = vadd.f32 %v9388, %v9534
        %v9633 = vadd.f32 %v9389, %v9536
        %v9634 = vadd.f32 %v9390, %v9539
        %v9635 = vadd.f32 %v9391, %v9541
        %v9636 = vadd.f32 %v9392, %v9544
        %v9637 = vadd.f32 %v9393, %v9546
        %v9638 = vadd.f32 %v9394, %v9549
        %v9639 = vadd.f32 %v9395, %v9551
        %v9640 = vadd.f32 %v9396, %v9554
        %v9641 = vadd.f32 %v9397, %v9556
        %v9642 = vadd.f32 %v9398, %v9559
        %v9643 = vadd.f32 %v9399, %v9561
        %v9644 = vadd.f32 %v9400, %v9564
        %v9645 = vadd.f32 %v9401, %v9566
        %v9646 = vadd.f32 %v9402, %v9569
        %v9647 = vadd.f32 %v9403, %v9571
        %v9648 = vadd.f32 %v9404, %v9574
        %v9649 = vadd.f32 %v9405, %v9576
        %v9650 = vadd.f32 %v9406, %v9579
        %v9651 = vadd.f32 %v9407, %v9581
        %v9652 = vadd.f32 %v9408, %v9584
        %v9653 = vadd.f32 %v9409, %v9586
        %v9654 = vadd.f32 %v9410, %v9589
        %v9655 = vadd.f32 %v9411, %v9591
        %v9656 = vlaneseq
        %v9657 = vshrl.u32 %v9656, 7
        %v9658 = vsub.s32 0, %v9657
        %v9659 = vrot.slane %v457, %v9658
        %v9660 = vmul.f32 %v403, %v9659
        %v9661 = vmul.f32 %v404, %v9659
        %v9662 = vmul.f32 %v406, %v9659
        %v9663 = vmul.f32 %v407, %v9659
        %v9664 = vmul.f32 %v409, %v9659
        %v9665 = vmul.f32 %v410, %v9659
        %v9666 = vmul.f32 %v412, %v9659
        %v9667 = vmul.f32 %v413, %v9659
        %v9668 = vmul.f32 %v415, %v9659
        %v9669 = vmul.f32 %v416, %v9659
        %v9670 = vmul.f32 %v418, %v9659
        %v9671 = vmul.f32 %v419, %v9659
        %v9672 = vmul.f32 %v421, %v9659
        %v9673 = vmul.f32 %v422, %v9659
        %v9674 = vmul.f32 %v424, %v9659
        %v9675 = vmul.f32 %v425, %v9659
        %v9676 = vmul.f32 %v427, %v9659
        %v9677 = vmul.f32 %v428, %v9659
        %v9678 = vmul.f32 %v430, %v9659
        %v9679 = vmul.f32 %v431, %v9659
        %v9680 = vmul.f32 %v433, %v9659
        %v9681 = vmul.f32 %v434, %v9659
        %v9682 = vmul.f32 %v436, %v9659
        %v9683 = vmul.f32 %v437, %v9659
        %v9684 = vmul.f32 %v439, %v9659
        %v9685 = vmul.f32 %v440, %v9659
        %v9686 = vmul.f32 %v442, %v9659
        %v9687 = vmul.f32 %v443, %v9659
        %v9688 = vmul.f32 %v445, %v9659
        %v9689 = vmul.f32 %v446, %v9659
        %v9690 = vmul.f32 %v448, %v9659
        %v9691 = vmul.f32 %v449, %v9659
        %v9692 = vadd.f32 %v9624, %v9660
        %v9693 = vadd.f32 %v9625, %v9661
        %v9694 = vadd.f32 %v9626, %v9662
        %v9695 = vadd.f32 %v9627, %v9663
        %v9696 = vadd.f32 %v9628, %v9664
        %v9697 = vadd.f32 %v9629, %v9665
        %v9698 = vadd.f32 %v9630, %v9666
        %v9699 = vadd.f32 %v9631, %v9667
        %v9700 = vadd.f32 %v9632, %v9668
        %v9701 = vadd.f32 %v9633, %v9669
        %v9702 = vadd.f32 %v9634, %v9670
        %v9703 = vadd.f32 %v9635, %v9671
        %v9704 = vadd.f32 %v9636, %v9672
        %v9705 = vadd.f32 %v9637, %v9673
        %v9706 = vadd.f32 %v9638, %v9674
        %v9707 = vadd.f32 %v9639, %v9675
        %v9708 = vadd.f32 %v9640, %v9676
        %v9709 = vadd.f32 %v9641, %v9677
        %v9710 = vadd.f32 %v9642, %v9678
        %v9711 = vadd.f32 %v9643, %v9679
        %v9712 = vadd.f32 %v9644, %v9680
        %v9713 = vadd.f32 %v9645, %v9681
        %v9714 = vadd.f32 %v9646, %v9682
        %v9715 = vadd.f32 %v9647, %v9683
        %v9716 = vadd.f32 %v9648, %v9684
        %v9717 = vadd.f32 %v9649, %v9685
        %v9718 = vadd.f32 %v9650, %v9686
        %v9719 = vadd.f32 %v9651, %v9687
        %v9720 = vadd.f32 %v9652, %v9688
        %v9721 = vadd.f32 %v9653, %v9689
        %v9722 = vadd.f32 %v9654, %v9690
        %v9723 = vadd.f32 %v9655, %v9691
        %v9724 = vlaneseq
        %v9725 = vshrl.u32 %v9724, 7
        %v9726 = vsub.s32 1, %v9725
        %v9727 = vrot.slane %v457, %v9726
        %v9728 = vmul.f32 %v403, %v9727
        %v9729 = vmul.f32 %v404, %v9727
        %v9730 = vmul.f32 %v405, %v9727
        %v9731 = vmul.f32 %v406, %v9727
        %v9732 = vmul.f32 %v407, %v9727
        %v9733 = vmul.f32 %v408, %v9727
        %v9734 = vmul.f32 %v409, %v9727
        %v9735 = vmul.f32 %v410, %v9727
        %v9736 = vmul.f32 %v411, %v9727
        %v9737 = vmul.f32 %v412, %v9727
        %v9738 = vmul.f32 %v413, %v9727
        %v9739 = vmul.f32 %v414, %v9727
        %v9740 = vmul.f32 %v415, %v9727
        %v9741 = vmul.f32 %v416, %v9727
        %v9742 = vmul.f32 %v417, %v9727
        %v9743 = vmul.f32 %v418, %v9727
        %v9744 = vmul.f32 %v419, %v9727
        %v9745 = vmul.f32 %v420, %v9727
        %v9746 = vmul.f32 %v421, %v9727
        %v9747 = vmul.f32 %v422, %v9727
        %v9748 = vmul.f32 %v423, %v9727
        %v9749 = vmul.f32 %v424, %v9727
        %v9750 = vmul.f32 %v425, %v9727
        %v9751 = vmul.f32 %v426, %v9727
        %v9752 = vmul.f32 %v427, %v9727
        %v9753 = vmul.f32 %v428, %v9727
        %v9754 = vmul.f32 %v429, %v9727
        %v9755 = vmul.f32 %v430, %v9727
        %v9756 = vmul.f32 %v431, %v9727
        %v9757 = vmul.f32 %v432, %v9727
        %v9758 = vmul.f32 %v433, %v9727
        %v9759 = vmul.f32 %v434, %v9727
        %v9760 = vmul.f32 %v435, %v9727
        %v9761 = vmul.f32 %v436, %v9727
        %v9762 = vmul.f32 %v437, %v9727
        %v9763 = vmul.f32 %v438, %v9727
        %v9764 = vmul.f32 %v439, %v9727
        %v9765 = vmul.f32 %v440, %v9727
        %v9766 = vmul.f32 %v441, %v9727
        %v9767 = vmul.f32 %v442, %v9727
        %v9768 = vmul.f32 %v443, %v9727
        %v9769 = vmul.f32 %v444, %v9727
        %v9770 = vmul.f32 %v445, %v9727
        %v9771 = vmul.f32 %v446, %v9727
        %v9772 = vmul.f32 %v447, %v9727
        %v9773 = vmul.f32 %v448, %v9727
        %v9774 = vmul.f32 %v449, %v9727
        %v9775 = vmul.f32 %v450, %v9727
        %v9824 = vrot.slane %v9728, 1
        %v9825 = vrot.slane %v9729, 1
        %v9826 = vsel %vm626, %v9824, %v9825
        %v9827 = vrot.slane %v9730, 1
        %v9828 = vsel %vm626, %v9825, %v9827
        %v9829 = vrot.slane %v9731, 1
        %v9830 = vrot.slane %v9732, 1
        %v9831 = vsel %vm626, %v9829, %v9830
        %v9832 = vrot.slane %v9733, 1
        %v9833 = vsel %vm626, %v9830, %v9832
        %v9834 = vrot.slane %v9734, 1
        %v9835 = vrot.slane %v9735, 1
        %v9836 = vsel %vm626, %v9834, %v9835
        %v9837 = vrot.slane %v9736, 1
        %v9838 = vsel %vm626, %v9835, %v9837
        %v9839 = vrot.slane %v9737, 1
        %v9840 = vrot.slane %v9738, 1
        %v9841 = vsel %vm626, %v9839, %v9840
        %v9842 = vrot.slane %v9739, 1
        %v9843 = vsel %vm626, %v9840, %v9842
        %v9844 = vrot.slane %v9740, 1
        %v9845 = vrot.slane %v9741, 1
        %v9846 = vsel %vm626, %v9844, %v9845
        %v9847 = vrot.slane %v9742, 1
        %v9848 = vsel %vm626, %v9845, %v9847
        %v9849 = vrot.slane %v9743, 1
        %v9850 = vrot.slane %v9744, 1
        %v9851 = vsel %vm626, %v9849, %v9850
        %v9852 = vrot.slane %v9745, 1
        %v9853 = vsel %vm626, %v9850, %v9852
        %v9854 = vrot.slane %v9746, 1
        %v9855 = vrot.slane %v9747, 1
        %v9856 = vsel %vm626, %v9854, %v9855
        %v9857 = vrot.slane %v9748, 1
        %v9858 = vsel %vm626, %v9855, %v9857
        %v9859 = vrot.slane %v9749, 1
        %v9860 = vrot.slane %v9750, 1
        %v9861 = vsel %vm626, %v9859, %v9860
        %v9862 = vrot.slane %v9751, 1
        %v9863 = vsel %vm626, %v9860, %v9862
        %v9864 = vrot.slane %v9752, 1
        %v9865 = vrot.slane %v9753, 1
        %v9866 = vsel %vm626, %v9864, %v9865
        %v9867 = vrot.slane %v9754, 1
        %v9868 = vsel %vm626, %v9865, %v9867
        %v9869 = vrot.slane %v9755, 1
        %v9870 = vrot.slane %v9756, 1
        %v9871 = vsel %vm626, %v9869, %v9870
        %v9872 = vrot.slane %v9757, 1
        %v9873 = vsel %vm626, %v9870, %v9872
        %v9874 = vrot.slane %v9758, 1
        %v9875 = vrot.slane %v9759, 1
        %v9876 = vsel %vm626, %v9874, %v9875
        %v9877 = vrot.slane %v9760, 1
        %v9878 = vsel %vm626, %v9875, %v9877
        %v9879 = vrot.slane %v9761, 1
        %v9880 = vrot.slane %v9762, 1
        %v9881 = vsel %vm626, %v9879, %v9880
        %v9882 = vrot.slane %v9763, 1
        %v9883 = vsel %vm626, %v9880, %v9882
        %v9884 = vrot.slane %v9764, 1
        %v9885 = vrot.slane %v9765, 1
        %v9886 = vsel %vm626, %v9884, %v9885
        %v9887 = vrot.slane %v9766, 1
        %v9888 = vsel %vm626, %v9885, %v9887
        %v9889 = vrot.slane %v9767, 1
        %v9890 = vrot.slane %v9768, 1
        %v9891 = vsel %vm626, %v9889, %v9890
        %v9892 = vrot.slane %v9769, 1
        %v9893 = vsel %vm626, %v9890, %v9892
        %v9894 = vrot.slane %v9770, 1
        %v9895 = vrot.slane %v9771, 1
        %v9896 = vsel %vm626, %v9894, %v9895
        %v9897 = vrot.slane %v9772, 1
        %v9898 = vsel %vm626, %v9895, %v9897
        %v9899 = vrot.slane %v9773, 1
        %v9900 = vrot.slane %v9774, 1
        %v9901 = vsel %vm626, %v9899, %v9900
        %v9902 = vrot.slane %v9775, 1
        %v9903 = vsel %vm626, %v9900, %v9902
        %v9936 = vadd.f32 %v9692, %v9826
        %v9937 = vadd.f32 %v9693, %v9828
        %v9938 = vadd.f32 %v9694, %v9831
        %v9939 = vadd.f32 %v9695, %v9833
        %v9940 = vadd.f32 %v9696, %v9836
        %v9941 = vadd.f32 %v9697, %v9838
        %v9942 = vadd.f32 %v9698, %v9841
        %v9943 = vadd.f32 %v9699, %v9843
        %v9944 = vadd.f32 %v9700, %v9846
        %v9945 = vadd.f32 %v9701, %v9848
        %v9946 = vadd.f32 %v9702, %v9851
        %v9947 = vadd.f32 %v9703, %v9853
        %v9948 = vadd.f32 %v9704, %v9856
        %v9949 = vadd.f32 %v9705, %v9858
        %v9950 = vadd.f32 %v9706, %v9861
        %v9951 = vadd.f32 %v9707, %v9863
        %v9952 = vadd.f32 %v9708, %v9866
        %v9953 = vadd.f32 %v9709, %v9868
        %v9954 = vadd.f32 %v9710, %v9871
        %v9955 = vadd.f32 %v9711, %v9873
        %v9956 = vadd.f32 %v9712, %v9876
        %v9957 = vadd.f32 %v9713, %v9878
        %v9958 = vadd.f32 %v9714, %v9881
        %v9959 = vadd.f32 %v9715, %v9883
        %v9960 = vadd.f32 %v9716, %v9886
        %v9961 = vadd.f32 %v9717, %v9888
        %v9962 = vadd.f32 %v9718, %v9891
        %v9963 = vadd.f32 %v9719, %v9893
        %v9964 = vadd.f32 %v9720, %v9896
        %v9965 = vadd.f32 %v9721, %v9898
        %v9966 = vadd.f32 %v9722, %v9901
        %v9967 = vadd.f32 %v9723, %v9903
        %v9968 = vlaneseq
        %v9969 = vshrl.u32 %v9968, 7
        %v9970 = vsub.s32 2, %v9969
        %v9971 = vrot.slane %v457, %v9970
        %v9972 = vmul.f32 %v403, %v9971
        %v9973 = vmul.f32 %v404, %v9971
        %v9974 = vmul.f32 %v405, %v9971
        %v9975 = vmul.f32 %v406, %v9971
        %v9976 = vmul.f32 %v407, %v9971
        %v9977 = vmul.f32 %v408, %v9971
        %v9978 = vmul.f32 %v409, %v9971
        %v9979 = vmul.f32 %v410, %v9971
        %v9980 = vmul.f32 %v411, %v9971
        %v9981 = vmul.f32 %v412, %v9971
        %v9982 = vmul.f32 %v413, %v9971
        %v9983 = vmul.f32 %v414, %v9971
        %v9984 = vmul.f32 %v415, %v9971
        %v9985 = vmul.f32 %v416, %v9971
        %v9986 = vmul.f32 %v417, %v9971
        %v9987 = vmul.f32 %v418, %v9971
        %v9988 = vmul.f32 %v419, %v9971
        %v9989 = vmul.f32 %v420, %v9971
        %v9990 = vmul.f32 %v421, %v9971
        %v9991 = vmul.f32 %v422, %v9971
        %v9992 = vmul.f32 %v423, %v9971
        %v9993 = vmul.f32 %v424, %v9971
        %v9994 = vmul.f32 %v425, %v9971
        %v9995 = vmul.f32 %v426, %v9971
        %v9996 = vmul.f32 %v427, %v9971
        %v9997 = vmul.f32 %v428, %v9971
        %v9998 = vmul.f32 %v429, %v9971
        %v9999 = vmul.f32 %v430, %v9971
        %v10000 = vmul.f32 %v431, %v9971
        %v10001 = vmul.f32 %v432, %v9971
        %v10002 = vmul.f32 %v433, %v9971
        %v10003 = vmul.f32 %v434, %v9971
        %v10004 = vmul.f32 %v435, %v9971
        %v10005 = vmul.f32 %v436, %v9971
        %v10006 = vmul.f32 %v437, %v9971
        %v10007 = vmul.f32 %v438, %v9971
        %v10008 = vmul.f32 %v439, %v9971
        %v10009 = vmul.f32 %v440, %v9971
        %v10010 = vmul.f32 %v441, %v9971
        %v10011 = vmul.f32 %v442, %v9971
        %v10012 = vmul.f32 %v443, %v9971
        %v10013 = vmul.f32 %v444, %v9971
        %v10014 = vmul.f32 %v445, %v9971
        %v10015 = vmul.f32 %v446, %v9971
        %v10016 = vmul.f32 %v447, %v9971
        %v10017 = vmul.f32 %v448, %v9971
        %v10018 = vmul.f32 %v449, %v9971
        %v10019 = vmul.f32 %v450, %v9971
        %v10068 = vrot.slane %v9972, 2
        %v10069 = vrot.slane %v9973, 2
        %v10070 = vsel %vm871, %v10068, %v10069
        %v10071 = vrot.slane %v9974, 2
        %v10072 = vsel %vm871, %v10069, %v10071
        %v10073 = vrot.slane %v9975, 2
        %v10074 = vrot.slane %v9976, 2
        %v10075 = vsel %vm871, %v10073, %v10074
        %v10076 = vrot.slane %v9977, 2
        %v10077 = vsel %vm871, %v10074, %v10076
        %v10078 = vrot.slane %v9978, 2
        %v10079 = vrot.slane %v9979, 2
        %v10080 = vsel %vm871, %v10078, %v10079
        %v10081 = vrot.slane %v9980, 2
        %v10082 = vsel %vm871, %v10079, %v10081
        %v10083 = vrot.slane %v9981, 2
        %v10084 = vrot.slane %v9982, 2
        %v10085 = vsel %vm871, %v10083, %v10084
        %v10086 = vrot.slane %v9983, 2
        %v10087 = vsel %vm871, %v10084, %v10086
        %v10088 = vrot.slane %v9984, 2
        %v10089 = vrot.slane %v9985, 2
        %v10090 = vsel %vm871, %v10088, %v10089
        %v10091 = vrot.slane %v9986, 2
        %v10092 = vsel %vm871, %v10089, %v10091
        %v10093 = vrot.slane %v9987, 2
        %v10094 = vrot.slane %v9988, 2
        %v10095 = vsel %vm871, %v10093, %v10094
        %v10096 = vrot.slane %v9989, 2
        %v10097 = vsel %vm871, %v10094, %v10096
        %v10098 = vrot.slane %v9990, 2
        %v10099 = vrot.slane %v9991, 2
        %v10100 = vsel %vm871, %v10098, %v10099
        %v10101 = vrot.slane %v9992, 2
        %v10102 = vsel %vm871, %v10099, %v10101
        %v10103 = vrot.slane %v9993, 2
        %v10104 = vrot.slane %v9994, 2
        %v10105 = vsel %vm871, %v10103, %v10104
        %v10106 = vrot.slane %v9995, 2
        %v10107 = vsel %vm871, %v10104, %v10106
        %v10108 = vrot.slane %v9996, 2
        %v10109 = vrot.slane %v9997, 2
        %v10110 = vsel %vm871, %v10108, %v10109
        %v10111 = vrot.slane %v9998, 2
        %v10112 = vsel %vm871, %v10109, %v10111
        %v10113 = vrot.slane %v9999, 2
        %v10114 = vrot.slane %v10000, 2
        %v10115 = vsel %vm871, %v10113, %v10114
        %v10116 = vrot.slane %v10001, 2
        %v10117 = vsel %vm871, %v10114, %v10116
        %v10118 = vrot.slane %v10002, 2
        %v10119 = vrot.slane %v10003, 2
        %v10120 = vsel %vm871, %v10118, %v10119
        %v10121 = vrot.slane %v10004, 2
        %v10122 = vsel %vm871, %v10119, %v10121
        %v10123 = vrot.slane %v10005, 2
        %v10124 = vrot.slane %v10006, 2
        %v10125 = vsel %vm871, %v10123, %v10124
        %v10126 = vrot.slane %v10007, 2
        %v10127 = vsel %vm871, %v10124, %v10126
        %v10128 = vrot.slane %v10008, 2
        %v10129 = vrot.slane %v10009, 2
        %v10130 = vsel %vm871, %v10128, %v10129
        %v10131 = vrot.slane %v10010, 2
        %v10132 = vsel %vm871, %v10129, %v10131
        %v10133 = vrot.slane %v10011, 2
        %v10134 = vrot.slane %v10012, 2
        %v10135 = vsel %vm871, %v10133, %v10134
        %v10136 = vrot.slane %v10013, 2
        %v10137 = vsel %vm871, %v10134, %v10136
        %v10138 = vrot.slane %v10014, 2
        %v10139 = vrot.slane %v10015, 2
        %v10140 = vsel %vm871, %v10138, %v10139
        %v10141 = vrot.slane %v10016, 2
        %v10142 = vsel %vm871, %v10139, %v10141
        %v10143 = vrot.slane %v10017, 2
        %v10144 = vrot.slane %v10018, 2
        %v10145 = vsel %vm871, %v10143, %v10144
        %v10146 = vrot.slane %v10019, 2
        %v10147 = vsel %vm871, %v10144, %v10146
        %v10180 = vadd.f32 %v9936, %v10070
        %v10181 = vadd.f32 %v9937, %v10072
        %v10182 = vadd.f32 %v9938, %v10075
        %v10183 = vadd.f32 %v9939, %v10077
        %v10184 = vadd.f32 %v9940, %v10080
        %v10185 = vadd.f32 %v9941, %v10082
        %v10186 = vadd.f32 %v9942, %v10085
        %v10187 = vadd.f32 %v9943, %v10087
        %v10188 = vadd.f32 %v9944, %v10090
        %v10189 = vadd.f32 %v9945, %v10092
        %v10190 = vadd.f32 %v9946, %v10095
        %v10191 = vadd.f32 %v9947, %v10097
        %v10192 = vadd.f32 %v9948, %v10100
        %v10193 = vadd.f32 %v9949, %v10102
        %v10194 = vadd.f32 %v9950, %v10105
        %v10195 = vadd.f32 %v9951, %v10107
        %v10196 = vadd.f32 %v9952, %v10110
        %v10197 = vadd.f32 %v9953, %v10112
        %v10198 = vadd.f32 %v9954, %v10115
        %v10199 = vadd.f32 %v9955, %v10117
        %v10200 = vadd.f32 %v9956, %v10120
        %v10201 = vadd.f32 %v9957, %v10122
        %v10202 = vadd.f32 %v9958, %v10125
        %v10203 = vadd.f32 %v9959, %v10127
        %v10204 = vadd.f32 %v9960, %v10130
        %v10205 = vadd.f32 %v9961, %v10132
        %v10206 = vadd.f32 %v9962, %v10135
        %v10207 = vadd.f32 %v9963, %v10137
        %v10208 = vadd.f32 %v9964, %v10140
        %v10209 = vadd.f32 %v9965, %v10142
        %v10210 = vadd.f32 %v9966, %v10145
        %v10211 = vadd.f32 %v9967, %v10147
        %v10212 = vlaneseq
        %v10213 = vshrl.u32 %v10212, 7
        %v10214 = vsub.s32 3, %v10213
        %v10215 = vrot.slane %v457, %v10214
        %v10216 = vmul.f32 %v403, %v10215
        %v10217 = vmul.f32 %v404, %v10215
        %v10218 = vmul.f32 %v405, %v10215
        %v10219 = vmul.f32 %v406, %v10215
        %v10220 = vmul.f32 %v407, %v10215
        %v10221 = vmul.f32 %v408, %v10215
        %v10222 = vmul.f32 %v409, %v10215
        %v10223 = vmul.f32 %v410, %v10215
        %v10224 = vmul.f32 %v411, %v10215
        %v10225 = vmul.f32 %v412, %v10215
        %v10226 = vmul.f32 %v413, %v10215
        %v10227 = vmul.f32 %v414, %v10215
        %v10228 = vmul.f32 %v415, %v10215
        %v10229 = vmul.f32 %v416, %v10215
        %v10230 = vmul.f32 %v417, %v10215
        %v10231 = vmul.f32 %v418, %v10215
        %v10232 = vmul.f32 %v419, %v10215
        %v10233 = vmul.f32 %v420, %v10215
        %v10234 = vmul.f32 %v421, %v10215
        %v10235 = vmul.f32 %v422, %v10215
        %v10236 = vmul.f32 %v423, %v10215
        %v10237 = vmul.f32 %v424, %v10215
        %v10238 = vmul.f32 %v425, %v10215
        %v10239 = vmul.f32 %v426, %v10215
        %v10240 = vmul.f32 %v427, %v10215
        %v10241 = vmul.f32 %v428, %v10215
        %v10242 = vmul.f32 %v429, %v10215
        %v10243 = vmul.f32 %v430, %v10215
        %v10244 = vmul.f32 %v431, %v10215
        %v10245 = vmul.f32 %v432, %v10215
        %v10246 = vmul.f32 %v433, %v10215
        %v10247 = vmul.f32 %v434, %v10215
        %v10248 = vmul.f32 %v435, %v10215
        %v10249 = vmul.f32 %v436, %v10215
        %v10250 = vmul.f32 %v437, %v10215
        %v10251 = vmul.f32 %v438, %v10215
        %v10252 = vmul.f32 %v439, %v10215
        %v10253 = vmul.f32 %v440, %v10215
        %v10254 = vmul.f32 %v441, %v10215
        %v10255 = vmul.f32 %v442, %v10215
        %v10256 = vmul.f32 %v443, %v10215
        %v10257 = vmul.f32 %v444, %v10215
        %v10258 = vmul.f32 %v445, %v10215
        %v10259 = vmul.f32 %v446, %v10215
        %v10260 = vmul.f32 %v447, %v10215
        %v10261 = vmul.f32 %v448, %v10215
        %v10262 = vmul.f32 %v449, %v10215
        %v10263 = vmul.f32 %v450, %v10215
        %v10312 = vrot.slane %v10216, 3
        %v10313 = vrot.slane %v10217, 3
        %v10314 = vsel %vm1116, %v10312, %v10313
        %v10315 = vrot.slane %v10218, 3
        %v10316 = vsel %vm1116, %v10313, %v10315
        %v10317 = vrot.slane %v10219, 3
        %v10318 = vrot.slane %v10220, 3
        %v10319 = vsel %vm1116, %v10317, %v10318
        %v10320 = vrot.slane %v10221, 3
        %v10321 = vsel %vm1116, %v10318, %v10320
        %v10322 = vrot.slane %v10222, 3
        %v10323 = vrot.slane %v10223, 3
        %v10324 = vsel %vm1116, %v10322, %v10323
        %v10325 = vrot.slane %v10224, 3
        %v10326 = vsel %vm1116, %v10323, %v10325
        %v10327 = vrot.slane %v10225, 3
        %v10328 = vrot.slane %v10226, 3
        %v10329 = vsel %vm1116, %v10327, %v10328
        %v10330 = vrot.slane %v10227, 3
        %v10331 = vsel %vm1116, %v10328, %v10330
        %v10332 = vrot.slane %v10228, 3
        %v10333 = vrot.slane %v10229, 3
        %v10334 = vsel %vm1116, %v10332, %v10333
        %v10335 = vrot.slane %v10230, 3
        %v10336 = vsel %vm1116, %v10333, %v10335
        %v10337 = vrot.slane %v10231, 3
        %v10338 = vrot.slane %v10232, 3
        %v10339 = vsel %vm1116, %v10337, %v10338
        %v10340 = vrot.slane %v10233, 3
        %v10341 = vsel %vm1116, %v10338, %v10340
        %v10342 = vrot.slane %v10234, 3
        %v10343 = vrot.slane %v10235, 3
        %v10344 = vsel %vm1116, %v10342, %v10343
        %v10345 = vrot.slane %v10236, 3
        %v10346 = vsel %vm1116, %v10343, %v10345
        %v10347 = vrot.slane %v10237, 3
        %v10348 = vrot.slane %v10238, 3
        %v10349 = vsel %vm1116, %v10347, %v10348
        %v10350 = vrot.slane %v10239, 3
        %v10351 = vsel %vm1116, %v10348, %v10350
        %v10352 = vrot.slane %v10240, 3
        %v10353 = vrot.slane %v10241, 3
        %v10354 = vsel %vm1116, %v10352, %v10353
        %v10355 = vrot.slane %v10242, 3
        %v10356 = vsel %vm1116, %v10353, %v10355
        %v10357 = vrot.slane %v10243, 3
        %v10358 = vrot.slane %v10244, 3
        %v10359 = vsel %vm1116, %v10357, %v10358
        %v10360 = vrot.slane %v10245, 3
        %v10361 = vsel %vm1116, %v10358, %v10360
        %v10362 = vrot.slane %v10246, 3
        %v10363 = vrot.slane %v10247, 3
        %v10364 = vsel %vm1116, %v10362, %v10363
        %v10365 = vrot.slane %v10248, 3
        %v10366 = vsel %vm1116, %v10363, %v10365
        %v10367 = vrot.slane %v10249, 3
        %v10368 = vrot.slane %v10250, 3
        %v10369 = vsel %vm1116, %v10367, %v10368
        %v10370 = vrot.slane %v10251, 3
        %v10371 = vsel %vm1116, %v10368, %v10370
        %v10372 = vrot.slane %v10252, 3
        %v10373 = vrot.slane %v10253, 3
        %v10374 = vsel %vm1116, %v10372, %v10373
        %v10375 = vrot.slane %v10254, 3
        %v10376 = vsel %vm1116, %v10373, %v10375
        %v10377 = vrot.slane %v10255, 3
        %v10378 = vrot.slane %v10256, 3
        %v10379 = vsel %vm1116, %v10377, %v10378
        %v10380 = vrot.slane %v10257, 3
        %v10381 = vsel %vm1116, %v10378, %v10380
        %v10382 = vrot.slane %v10258, 3
        %v10383 = vrot.slane %v10259, 3
        %v10384 = vsel %vm1116, %v10382, %v10383
        %v10385 = vrot.slane %v10260, 3
        %v10386 = vsel %vm1116, %v10383, %v10385
        %v10387 = vrot.slane %v10261, 3
        %v10388 = vrot.slane %v10262, 3
        %v10389 = vsel %vm1116, %v10387, %v10388
        %v10390 = vrot.slane %v10263, 3
        %v10391 = vsel %vm1116, %v10388, %v10390
        %v10424 = vadd.f32 %v10180, %v10314
        %v10425 = vadd.f32 %v10181, %v10316
        %v10426 = vadd.f32 %v10182, %v10319
        %v10427 = vadd.f32 %v10183, %v10321
        %v10428 = vadd.f32 %v10184, %v10324
        %v10429 = vadd.f32 %v10185, %v10326
        %v10430 = vadd.f32 %v10186, %v10329
        %v10431 = vadd.f32 %v10187, %v10331
        %v10432 = vadd.f32 %v10188, %v10334
        %v10433 = vadd.f32 %v10189, %v10336
        %v10434 = vadd.f32 %v10190, %v10339
        %v10435 = vadd.f32 %v10191, %v10341
        %v10436 = vadd.f32 %v10192, %v10344
        %v10437 = vadd.f32 %v10193, %v10346
        %v10438 = vadd.f32 %v10194, %v10349
        %v10439 = vadd.f32 %v10195, %v10351
        %v10440 = vadd.f32 %v10196, %v10354
        %v10441 = vadd.f32 %v10197, %v10356
        %v10442 = vadd.f32 %v10198, %v10359
        %v10443 = vadd.f32 %v10199, %v10361
        %v10444 = vadd.f32 %v10200, %v10364
        %v10445 = vadd.f32 %v10201, %v10366
        %v10446 = vadd.f32 %v10202, %v10369
        %v10447 = vadd.f32 %v10203, %v10371
        %v10448 = vadd.f32 %v10204, %v10374
        %v10449 = vadd.f32 %v10205, %v10376
        %v10450 = vadd.f32 %v10206, %v10379
        %v10451 = vadd.f32 %v10207, %v10381
        %v10452 = vadd.f32 %v10208, %v10384
        %v10453 = vadd.f32 %v10209, %v10386
        %v10454 = vadd.f32 %v10210, %v10389
        %v10455 = vadd.f32 %v10211, %v10391
        %v10456 = vlaneseq
        %v10457 = vshrl.u32 %v10456, 7
        %v10458 = vsub.s32 4, %v10457
        %v10459 = vrot.slane %v457, %v10458
        %v10460 = vmul.f32 %v403, %v10459
        %v10461 = vmul.f32 %v404, %v10459
        %v10462 = vmul.f32 %v405, %v10459
        %v10463 = vmul.f32 %v406, %v10459
        %v10464 = vmul.f32 %v407, %v10459
        %v10465 = vmul.f32 %v408, %v10459
        %v10466 = vmul.f32 %v409, %v10459
        %v10467 = vmul.f32 %v410, %v10459
        %v10468 = vmul.f32 %v411, %v10459
        %v10469 = vmul.f32 %v412, %v10459
        %v10470 = vmul.f32 %v413, %v10459
        %v10471 = vmul.f32 %v414, %v10459
        %v10472 = vmul.f32 %v415, %v10459
        %v10473 = vmul.f32 %v416, %v10459
        %v10474 = vmul.f32 %v417, %v10459
        %v10475 = vmul.f32 %v418, %v10459
        %v10476 = vmul.f32 %v419, %v10459
        %v10477 = vmul.f32 %v420, %v10459
        %v10478 = vmul.f32 %v421, %v10459
        %v10479 = vmul.f32 %v422, %v10459
        %v10480 = vmul.f32 %v423, %v10459
        %v10481 = vmul.f32 %v424, %v10459
        %v10482 = vmul.f32 %v425, %v10459
        %v10483 = vmul.f32 %v426, %v10459
        %v10484 = vmul.f32 %v427, %v10459
        %v10485 = vmul.f32 %v428, %v10459
        %v10486 = vmul.f32 %v429, %v10459
        %v10487 = vmul.f32 %v430, %v10459
        %v10488 = vmul.f32 %v431, %v10459
        %v10489 = vmul.f32 %v432, %v10459
        %v10490 = vmul.f32 %v433, %v10459
        %v10491 = vmul.f32 %v434, %v10459
        %v10492 = vmul.f32 %v435, %v10459
        %v10493 = vmul.f32 %v436, %v10459
        %v10494 = vmul.f32 %v437, %v10459
        %v10495 = vmul.f32 %v438, %v10459
        %v10496 = vmul.f32 %v439, %v10459
        %v10497 = vmul.f32 %v440, %v10459
        %v10498 = vmul.f32 %v441, %v10459
        %v10499 = vmul.f32 %v442, %v10459
        %v10500 = vmul.f32 %v443, %v10459
        %v10501 = vmul.f32 %v444, %v10459
        %v10502 = vmul.f32 %v445, %v10459
        %v10503 = vmul.f32 %v446, %v10459
        %v10504 = vmul.f32 %v447, %v10459
        %v10505 = vmul.f32 %v448, %v10459
        %v10506 = vmul.f32 %v449, %v10459
        %v10507 = vmul.f32 %v450, %v10459
        %v10556 = vrot.slane %v10460, 4
        %v10557 = vrot.slane %v10461, 4
        %v10558 = vsel %vm1361, %v10556, %v10557
        %v10559 = vrot.slane %v10462, 4
        %v10560 = vsel %vm1361, %v10557, %v10559
        %v10561 = vrot.slane %v10463, 4
        %v10562 = vrot.slane %v10464, 4
        %v10563 = vsel %vm1361, %v10561, %v10562
        %v10564 = vrot.slane %v10465, 4
        %v10565 = vsel %vm1361, %v10562, %v10564
        %v10566 = vrot.slane %v10466, 4
        %v10567 = vrot.slane %v10467, 4
        %v10568 = vsel %vm1361, %v10566, %v10567
        %v10569 = vrot.slane %v10468, 4
        %v10570 = vsel %vm1361, %v10567, %v10569
        %v10571 = vrot.slane %v10469, 4
        %v10572 = vrot.slane %v10470, 4
        %v10573 = vsel %vm1361, %v10571, %v10572
        %v10574 = vrot.slane %v10471, 4
        %v10575 = vsel %vm1361, %v10572, %v10574
        %v10576 = vrot.slane %v10472, 4
        %v10577 = vrot.slane %v10473, 4
        %v10578 = vsel %vm1361, %v10576, %v10577
        %v10579 = vrot.slane %v10474, 4
        %v10580 = vsel %vm1361, %v10577, %v10579
        %v10581 = vrot.slane %v10475, 4
        %v10582 = vrot.slane %v10476, 4
        %v10583 = vsel %vm1361, %v10581, %v10582
        %v10584 = vrot.slane %v10477, 4
        %v10585 = vsel %vm1361, %v10582, %v10584
        %v10586 = vrot.slane %v10478, 4
        %v10587 = vrot.slane %v10479, 4
        %v10588 = vsel %vm1361, %v10586, %v10587
        %v10589 = vrot.slane %v10480, 4
        %v10590 = vsel %vm1361, %v10587, %v10589
        %v10591 = vrot.slane %v10481, 4
        %v10592 = vrot.slane %v10482, 4
        %v10593 = vsel %vm1361, %v10591, %v10592
        %v10594 = vrot.slane %v10483, 4
        %v10595 = vsel %vm1361, %v10592, %v10594
        %v10596 = vrot.slane %v10484, 4
        %v10597 = vrot.slane %v10485, 4
        %v10598 = vsel %vm1361, %v10596, %v10597
        %v10599 = vrot.slane %v10486, 4
        %v10600 = vsel %vm1361, %v10597, %v10599
        %v10601 = vrot.slane %v10487, 4
        %v10602 = vrot.slane %v10488, 4
        %v10603 = vsel %vm1361, %v10601, %v10602
        %v10604 = vrot.slane %v10489, 4
        %v10605 = vsel %vm1361, %v10602, %v10604
        %v10606 = vrot.slane %v10490, 4
        %v10607 = vrot.slane %v10491, 4
        %v10608 = vsel %vm1361, %v10606, %v10607
        %v10609 = vrot.slane %v10492, 4
        %v10610 = vsel %vm1361, %v10607, %v10609
        %v10611 = vrot.slane %v10493, 4
        %v10612 = vrot.slane %v10494, 4
        %v10613 = vsel %vm1361, %v10611, %v10612
        %v10614 = vrot.slane %v10495, 4
        %v10615 = vsel %vm1361, %v10612, %v10614
        %v10616 = vrot.slane %v10496, 4
        %v10617 = vrot.slane %v10497, 4
        %v10618 = vsel %vm1361, %v10616, %v10617
        %v10619 = vrot.slane %v10498, 4
        %v10620 = vsel %vm1361, %v10617, %v10619
        %v10621 = vrot.slane %v10499, 4
        %v10622 = vrot.slane %v10500, 4
        %v10623 = vsel %vm1361, %v10621, %v10622
        %v10624 = vrot.slane %v10501, 4
        %v10625 = vsel %vm1361, %v10622, %v10624
        %v10626 = vrot.slane %v10502, 4
        %v10627 = vrot.slane %v10503, 4
        %v10628 = vsel %vm1361, %v10626, %v10627
        %v10629 = vrot.slane %v10504, 4
        %v10630 = vsel %vm1361, %v10627, %v10629
        %v10631 = vrot.slane %v10505, 4
        %v10632 = vrot.slane %v10506, 4
        %v10633 = vsel %vm1361, %v10631, %v10632
        %v10634 = vrot.slane %v10507, 4
        %v10635 = vsel %vm1361, %v10632, %v10634
        %v10668 = vadd.f32 %v10424, %v10558
        %v10669 = vadd.f32 %v10425, %v10560
        %v10670 = vadd.f32 %v10426, %v10563
        %v10671 = vadd.f32 %v10427, %v10565
        %v10672 = vadd.f32 %v10428, %v10568
        %v10673 = vadd.f32 %v10429, %v10570
        %v10674 = vadd.f32 %v10430, %v10573
        %v10675 = vadd.f32 %v10431, %v10575
        %v10676 = vadd.f32 %v10432, %v10578
        %v10677 = vadd.f32 %v10433, %v10580
        %v10678 = vadd.f32 %v10434, %v10583
        %v10679 = vadd.f32 %v10435, %v10585
        %v10680 = vadd.f32 %v10436, %v10588
        %v10681 = vadd.f32 %v10437, %v10590
        %v10682 = vadd.f32 %v10438, %v10593
        %v10683 = vadd.f32 %v10439, %v10595
        %v10684 = vadd.f32 %v10440, %v10598
        %v10685 = vadd.f32 %v10441, %v10600
        %v10686 = vadd.f32 %v10442, %v10603
        %v10687 = vadd.f32 %v10443, %v10605
        %v10688 = vadd.f32 %v10444, %v10608
        %v10689 = vadd.f32 %v10445, %v10610
        %v10690 = vadd.f32 %v10446, %v10613
        %v10691 = vadd.f32 %v10447, %v10615
        %v10692 = vadd.f32 %v10448, %v10618
        %v10693 = vadd.f32 %v10449, %v10620
        %v10694 = vadd.f32 %v10450, %v10623
        %v10695 = vadd.f32 %v10451, %v10625
        %v10696 = vadd.f32 %v10452, %v10628
        %v10697 = vadd.f32 %v10453, %v10630
        %v10698 = vadd.f32 %v10454, %v10633
        %v10699 = vadd.f32 %v10455, %v10635
        %v10700 = vlaneseq
        %v10701 = vshrl.u32 %v10700, 7
        %v10702 = vsub.s32 5, %v10701
        %v10703 = vrot.slane %v457, %v10702
        %v10704 = vmul.f32 %v403, %v10703
        %v10705 = vmul.f32 %v404, %v10703
        %v10706 = vmul.f32 %v405, %v10703
        %v10707 = vmul.f32 %v406, %v10703
        %v10708 = vmul.f32 %v407, %v10703
        %v10709 = vmul.f32 %v408, %v10703
        %v10710 = vmul.f32 %v409, %v10703
        %v10711 = vmul.f32 %v410, %v10703
        %v10712 = vmul.f32 %v411, %v10703
        %v10713 = vmul.f32 %v412, %v10703
        %v10714 = vmul.f32 %v413, %v10703
        %v10715 = vmul.f32 %v414, %v10703
        %v10716 = vmul.f32 %v415, %v10703
        %v10717 = vmul.f32 %v416, %v10703
        %v10718 = vmul.f32 %v417, %v10703
        %v10719 = vmul.f32 %v418, %v10703
        %v10720 = vmul.f32 %v419, %v10703
        %v10721 = vmul.f32 %v420, %v10703
        %v10722 = vmul.f32 %v421, %v10703
        %v10723 = vmul.f32 %v422, %v10703
        %v10724 = vmul.f32 %v423, %v10703
        %v10725 = vmul.f32 %v424, %v10703
        %v10726 = vmul.f32 %v425, %v10703
        %v10727 = vmul.f32 %v426, %v10703
        %v10728 = vmul.f32 %v427, %v10703
        %v10729 = vmul.f32 %v428, %v10703
        %v10730 = vmul.f32 %v429, %v10703
        %v10731 = vmul.f32 %v430, %v10703
        %v10732 = vmul.f32 %v431, %v10703
        %v10733 = vmul.f32 %v432, %v10703
        %v10734 = vmul.f32 %v433, %v10703
        %v10735 = vmul.f32 %v434, %v10703
        %v10736 = vmul.f32 %v435, %v10703
        %v10737 = vmul.f32 %v436, %v10703
        %v10738 = vmul.f32 %v437, %v10703
        %v10739 = vmul.f32 %v438, %v10703
        %v10740 = vmul.f32 %v439, %v10703
        %v10741 = vmul.f32 %v440, %v10703
        %v10742 = vmul.f32 %v441, %v10703
        %v10743 = vmul.f32 %v442, %v10703
        %v10744 = vmul.f32 %v443, %v10703
        %v10745 = vmul.f32 %v444, %v10703
        %v10746 = vmul.f32 %v445, %v10703
        %v10747 = vmul.f32 %v446, %v10703
        %v10748 = vmul.f32 %v447, %v10703
        %v10749 = vmul.f32 %v448, %v10703
        %v10750 = vmul.f32 %v449, %v10703
        %v10751 = vmul.f32 %v450, %v10703
        %v10800 = vrot.slane %v10704, 5
        %v10801 = vrot.slane %v10705, 5
        %v10802 = vsel %vm1606, %v10800, %v10801
        %v10803 = vrot.slane %v10706, 5
        %v10804 = vsel %vm1606, %v10801, %v10803
        %v10805 = vrot.slane %v10707, 5
        %v10806 = vrot.slane %v10708, 5
        %v10807 = vsel %vm1606, %v10805, %v10806
        %v10808 = vrot.slane %v10709, 5
        %v10809 = vsel %vm1606, %v10806, %v10808
        %v10810 = vrot.slane %v10710, 5
        %v10811 = vrot.slane %v10711, 5
        %v10812 = vsel %vm1606, %v10810, %v10811
        %v10813 = vrot.slane %v10712, 5
        %v10814 = vsel %vm1606, %v10811, %v10813
        %v10815 = vrot.slane %v10713, 5
        %v10816 = vrot.slane %v10714, 5
        %v10817 = vsel %vm1606, %v10815, %v10816
        %v10818 = vrot.slane %v10715, 5
        %v10819 = vsel %vm1606, %v10816, %v10818
        %v10820 = vrot.slane %v10716, 5
        %v10821 = vrot.slane %v10717, 5
        %v10822 = vsel %vm1606, %v10820, %v10821
        %v10823 = vrot.slane %v10718, 5
        %v10824 = vsel %vm1606, %v10821, %v10823
        %v10825 = vrot.slane %v10719, 5
        %v10826 = vrot.slane %v10720, 5
        %v10827 = vsel %vm1606, %v10825, %v10826
        %v10828 = vrot.slane %v10721, 5
        %v10829 = vsel %vm1606, %v10826, %v10828
        %v10830 = vrot.slane %v10722, 5
        %v10831 = vrot.slane %v10723, 5
        %v10832 = vsel %vm1606, %v10830, %v10831
        %v10833 = vrot.slane %v10724, 5
        %v10834 = vsel %vm1606, %v10831, %v10833
        %v10835 = vrot.slane %v10725, 5
        %v10836 = vrot.slane %v10726, 5
        %v10837 = vsel %vm1606, %v10835, %v10836
        %v10838 = vrot.slane %v10727, 5
        %v10839 = vsel %vm1606, %v10836, %v10838
        %v10840 = vrot.slane %v10728, 5
        %v10841 = vrot.slane %v10729, 5
        %v10842 = vsel %vm1606, %v10840, %v10841
        %v10843 = vrot.slane %v10730, 5
        %v10844 = vsel %vm1606, %v10841, %v10843
        %v10845 = vrot.slane %v10731, 5
        %v10846 = vrot.slane %v10732, 5
        %v10847 = vsel %vm1606, %v10845, %v10846
        %v10848 = vrot.slane %v10733, 5
        %v10849 = vsel %vm1606, %v10846, %v10848
        %v10850 = vrot.slane %v10734, 5
        %v10851 = vrot.slane %v10735, 5
        %v10852 = vsel %vm1606, %v10850, %v10851
        %v10853 = vrot.slane %v10736, 5
        %v10854 = vsel %vm1606, %v10851, %v10853
        %v10855 = vrot.slane %v10737, 5
        %v10856 = vrot.slane %v10738, 5
        %v10857 = vsel %vm1606, %v10855, %v10856
        %v10858 = vrot.slane %v10739, 5
        %v10859 = vsel %vm1606, %v10856, %v10858
        %v10860 = vrot.slane %v10740, 5
        %v10861 = vrot.slane %v10741, 5
        %v10862 = vsel %vm1606, %v10860, %v10861
        %v10863 = vrot.slane %v10742, 5
        %v10864 = vsel %vm1606, %v10861, %v10863
        %v10865 = vrot.slane %v10743, 5
        %v10866 = vrot.slane %v10744, 5
        %v10867 = vsel %vm1606, %v10865, %v10866
        %v10868 = vrot.slane %v10745, 5
        %v10869 = vsel %vm1606, %v10866, %v10868
        %v10870 = vrot.slane %v10746, 5
        %v10871 = vrot.slane %v10747, 5
        %v10872 = vsel %vm1606, %v10870, %v10871
        %v10873 = vrot.slane %v10748, 5
        %v10874 = vsel %vm1606, %v10871, %v10873
        %v10875 = vrot.slane %v10749, 5
        %v10876 = vrot.slane %v10750, 5
        %v10877 = vsel %vm1606, %v10875, %v10876
        %v10878 = vrot.slane %v10751, 5
        %v10879 = vsel %vm1606, %v10876, %v10878
        %v10912 = vadd.f32 %v10668, %v10802
        %v10913 = vadd.f32 %v10669, %v10804
        %v10914 = vadd.f32 %v10670, %v10807
        %v10915 = vadd.f32 %v10671, %v10809
        %v10916 = vadd.f32 %v10672, %v10812
        %v10917 = vadd.f32 %v10673, %v10814
        %v10918 = vadd.f32 %v10674, %v10817
        %v10919 = vadd.f32 %v10675, %v10819
        %v10920 = vadd.f32 %v10676, %v10822
        %v10921 = vadd.f32 %v10677, %v10824
        %v10922 = vadd.f32 %v10678, %v10827
        %v10923 = vadd.f32 %v10679, %v10829
        %v10924 = vadd.f32 %v10680, %v10832
        %v10925 = vadd.f32 %v10681, %v10834
        %v10926 = vadd.f32 %v10682, %v10837
        %v10927 = vadd.f32 %v10683, %v10839
        %v10928 = vadd.f32 %v10684, %v10842
        %v10929 = vadd.f32 %v10685, %v10844
        %v10930 = vadd.f32 %v10686, %v10847
        %v10931 = vadd.f32 %v10687, %v10849
        %v10932 = vadd.f32 %v10688, %v10852
        %v10933 = vadd.f32 %v10689, %v10854
        %v10934 = vadd.f32 %v10690, %v10857
        %v10935 = vadd.f32 %v10691, %v10859
        %v10936 = vadd.f32 %v10692, %v10862
        %v10937 = vadd.f32 %v10693, %v10864
        %v10938 = vadd.f32 %v10694, %v10867
        %v10939 = vadd.f32 %v10695, %v10869
        %v10940 = vadd.f32 %v10696, %v10872
        %v10941 = vadd.f32 %v10697, %v10874
        %v10942 = vadd.f32 %v10698, %v10877
        %v10943 = vadd.f32 %v10699, %v10879
        %v10944 = vlaneseq
        %v10945 = vshrl.u32 %v10944, 7
        %v10946 = vsub.s32 6, %v10945
        %v10947 = vrot.slane %v457, %v10946
        %v10948 = vmul.f32 %v403, %v10947
        %v10949 = vmul.f32 %v404, %v10947
        %v10950 = vmul.f32 %v405, %v10947
        %v10951 = vmul.f32 %v406, %v10947
        %v10952 = vmul.f32 %v407, %v10947
        %v10953 = vmul.f32 %v408, %v10947
        %v10954 = vmul.f32 %v409, %v10947
        %v10955 = vmul.f32 %v410, %v10947
        %v10956 = vmul.f32 %v411, %v10947
        %v10957 = vmul.f32 %v412, %v10947
        %v10958 = vmul.f32 %v413, %v10947
        %v10959 = vmul.f32 %v414, %v10947
        %v10960 = vmul.f32 %v415, %v10947
        %v10961 = vmul.f32 %v416, %v10947
        %v10962 = vmul.f32 %v417, %v10947
        %v10963 = vmul.f32 %v418, %v10947
        %v10964 = vmul.f32 %v419, %v10947
        %v10965 = vmul.f32 %v420, %v10947
        %v10966 = vmul.f32 %v421, %v10947
        %v10967 = vmul.f32 %v422, %v10947
        %v10968 = vmul.f32 %v423, %v10947
        %v10969 = vmul.f32 %v424, %v10947
        %v10970 = vmul.f32 %v425, %v10947
        %v10971 = vmul.f32 %v426, %v10947
        %v10972 = vmul.f32 %v427, %v10947
        %v10973 = vmul.f32 %v428, %v10947
        %v10974 = vmul.f32 %v429, %v10947
        %v10975 = vmul.f32 %v430, %v10947
        %v10976 = vmul.f32 %v431, %v10947
        %v10977 = vmul.f32 %v432, %v10947
        %v10978 = vmul.f32 %v433, %v10947
        %v10979 = vmul.f32 %v434, %v10947
        %v10980 = vmul.f32 %v435, %v10947
        %v10981 = vmul.f32 %v436, %v10947
        %v10982 = vmul.f32 %v437, %v10947
        %v10983 = vmul.f32 %v438, %v10947
        %v10984 = vmul.f32 %v439, %v10947
        %v10985 = vmul.f32 %v440, %v10947
        %v10986 = vmul.f32 %v441, %v10947
        %v10987 = vmul.f32 %v442, %v10947
        %v10988 = vmul.f32 %v443, %v10947
        %v10989 = vmul.f32 %v444, %v10947
        %v10990 = vmul.f32 %v445, %v10947
        %v10991 = vmul.f32 %v446, %v10947
        %v10992 = vmul.f32 %v447, %v10947
        %v10993 = vmul.f32 %v448, %v10947
        %v10994 = vmul.f32 %v449, %v10947
        %v10995 = vmul.f32 %v450, %v10947
        %v11044 = vrot.slane %v10948, 6
        %v11045 = vrot.slane %v10949, 6
        %v11046 = vsel %vm1851, %v11044, %v11045
        %v11047 = vrot.slane %v10950, 6
        %v11048 = vsel %vm1851, %v11045, %v11047
        %v11049 = vrot.slane %v10951, 6
        %v11050 = vrot.slane %v10952, 6
        %v11051 = vsel %vm1851, %v11049, %v11050
        %v11052 = vrot.slane %v10953, 6
        %v11053 = vsel %vm1851, %v11050, %v11052
        %v11054 = vrot.slane %v10954, 6
        %v11055 = vrot.slane %v10955, 6
        %v11056 = vsel %vm1851, %v11054, %v11055
        %v11057 = vrot.slane %v10956, 6
        %v11058 = vsel %vm1851, %v11055, %v11057
        %v11059 = vrot.slane %v10957, 6
        %v11060 = vrot.slane %v10958, 6
        %v11061 = vsel %vm1851, %v11059, %v11060
        %v11062 = vrot.slane %v10959, 6
        %v11063 = vsel %vm1851, %v11060, %v11062
        %v11064 = vrot.slane %v10960, 6
        %v11065 = vrot.slane %v10961, 6
        %v11066 = vsel %vm1851, %v11064, %v11065
        %v11067 = vrot.slane %v10962, 6
        %v11068 = vsel %vm1851, %v11065, %v11067
        %v11069 = vrot.slane %v10963, 6
        %v11070 = vrot.slane %v10964, 6
        %v11071 = vsel %vm1851, %v11069, %v11070
        %v11072 = vrot.slane %v10965, 6
        %v11073 = vsel %vm1851, %v11070, %v11072
        %v11074 = vrot.slane %v10966, 6
        %v11075 = vrot.slane %v10967, 6
        %v11076 = vsel %vm1851, %v11074, %v11075
        %v11077 = vrot.slane %v10968, 6
        %v11078 = vsel %vm1851, %v11075, %v11077
        %v11079 = vrot.slane %v10969, 6
        %v11080 = vrot.slane %v10970, 6
        %v11081 = vsel %vm1851, %v11079, %v11080
        %v11082 = vrot.slane %v10971, 6
        %v11083 = vsel %vm1851, %v11080, %v11082
        %v11084 = vrot.slane %v10972, 6
        %v11085 = vrot.slane %v10973, 6
        %v11086 = vsel %vm1851, %v11084, %v11085
        %v11087 = vrot.slane %v10974, 6
        %v11088 = vsel %vm1851, %v11085, %v11087
        %v11089 = vrot.slane %v10975, 6
        %v11090 = vrot.slane %v10976, 6
        %v11091 = vsel %vm1851, %v11089, %v11090
        %v11092 = vrot.slane %v10977, 6
        %v11093 = vsel %vm1851, %v11090, %v11092
        %v11094 = vrot.slane %v10978, 6
        %v11095 = vrot.slane %v10979, 6
        %v11096 = vsel %vm1851, %v11094, %v11095
        %v11097 = vrot.slane %v10980, 6
        %v11098 = vsel %vm1851, %v11095, %v11097
        %v11099 = vrot.slane %v10981, 6
        %v11100 = vrot.slane %v10982, 6
        %v11101 = vsel %vm1851, %v11099, %v11100
        %v11102 = vrot.slane %v10983, 6
        %v11103 = vsel %vm1851, %v11100, %v11102
        %v11104 = vrot.slane %v10984, 6
        %v11105 = vrot.slane %v10985, 6
        %v11106 = vsel %vm1851, %v11104, %v11105
        %v11107 = vrot.slane %v10986, 6
        %v11108 = vsel %vm1851, %v11105, %v11107
        %v11109 = vrot.slane %v10987, 6
        %v11110 = vrot.slane %v10988, 6
        %v11111 = vsel %vm1851, %v11109, %v11110
        %v11112 = vrot.slane %v10989, 6
        %v11113 = vsel %vm1851, %v11110, %v11112
        %v11114 = vrot.slane %v10990, 6
        %v11115 = vrot.slane %v10991, 6
        %v11116 = vsel %vm1851, %v11114, %v11115
        %v11117 = vrot.slane %v10992, 6
        %v11118 = vsel %vm1851, %v11115, %v11117
        %v11119 = vrot.slane %v10993, 6
        %v11120 = vrot.slane %v10994, 6
        %v11121 = vsel %vm1851, %v11119, %v11120
        %v11122 = vrot.slane %v10995, 6
        %v11123 = vsel %vm1851, %v11120, %v11122
        %v11156 = vadd.f32 %v10912, %v11046
        %v11157 = vadd.f32 %v10913, %v11048
        %v11158 = vadd.f32 %v10914, %v11051
        %v11159 = vadd.f32 %v10915, %v11053
        %v11160 = vadd.f32 %v10916, %v11056
        %v11161 = vadd.f32 %v10917, %v11058
        %v11162 = vadd.f32 %v10918, %v11061
        %v11163 = vadd.f32 %v10919, %v11063
        %v11164 = vadd.f32 %v10920, %v11066
        %v11165 = vadd.f32 %v10921, %v11068
        %v11166 = vadd.f32 %v10922, %v11071
        %v11167 = vadd.f32 %v10923, %v11073
        %v11168 = vadd.f32 %v10924, %v11076
        %v11169 = vadd.f32 %v10925, %v11078
        %v11170 = vadd.f32 %v10926, %v11081
        %v11171 = vadd.f32 %v10927, %v11083
        %v11172 = vadd.f32 %v10928, %v11086
        %v11173 = vadd.f32 %v10929, %v11088
        %v11174 = vadd.f32 %v10930, %v11091
        %v11175 = vadd.f32 %v10931, %v11093
        %v11176 = vadd.f32 %v10932, %v11096
        %v11177 = vadd.f32 %v10933, %v11098
        %v11178 = vadd.f32 %v10934, %v11101
        %v11179 = vadd.f32 %v10935, %v11103
        %v11180 = vadd.f32 %v10936, %v11106
        %v11181 = vadd.f32 %v10937, %v11108
        %v11182 = vadd.f32 %v10938, %v11111
        %v11183 = vadd.f32 %v10939, %v11113
        %v11184 = vadd.f32 %v10940, %v11116
        %v11185 = vadd.f32 %v10941, %v11118
        %v11186 = vadd.f32 %v10942, %v11121
        %v11187 = vadd.f32 %v10943, %v11123
        %v11188 = vld [vmem:[%s2] sm:$0x1]
        %v11190 = vlaneseq
        %v11191 = vshrl.u32 %v11190, 7
        %v11192 = vsub.s32 0, %v11191
        %v11193 = vrot.slane %v11188, %v11192
        %v11195 = vadd.f32 %v11156, %v11193
        %v11196 = vadd.f32 %v11157, %v11193
        %v11197 = vadd.f32 %v11158, %v11193
        %v11198 = vadd.f32 %v11159, %v11193
        %v11199 = vadd.f32 %v11160, %v11193
        %v11200 = vadd.f32 %v11161, %v11193
        %v11201 = vadd.f32 %v11162, %v11193
        %v11202 = vadd.f32 %v11163, %v11193
        %v11203 = vadd.f32 %v11164, %v11193
        %v11204 = vadd.f32 %v11165, %v11193
        %v11205 = vadd.f32 %v11166, %v11193
        %v11206 = vadd.f32 %v11167, %v11193
        %v11207 = vadd.f32 %v11168, %v11193
        %v11208 = vadd.f32 %v11169, %v11193
        %v11209 = vadd.f32 %v11170, %v11193
        %v11210 = vadd.f32 %v11171, %v11193
        %v11211 = vadd.f32 %v11172, %v11193
        %v11212 = vadd.f32 %v11173, %v11193
        %v11213 = vadd.f32 %v11174, %v11193
        %v11214 = vadd.f32 %v11175, %v11193
        %v11215 = vadd.f32 %v11176, %v11193
        %v11216 = vadd.f32 %v11177, %v11193
        %v11217 = vadd.f32 %v11178, %v11193
        %v11218 = vadd.f32 %v11179, %v11193
        %v11219 = vadd.f32 %v11180, %v11193
        %v11220 = vadd.f32 %v11181, %v11193
        %v11221 = vadd.f32 %v11182, %v11193
        %v11222 = vadd.f32 %v11183, %v11193
        %v11223 = vadd.f32 %v11184, %v11193
        %v11224 = vadd.f32 %v11185, %v11193
        %v11225 = vadd.f32 %v11186, %v11193
        %v11226 = vadd.f32 %v11187, %v11193
        %vm11227 = vcmask 261120
        %v11228 = vsel %vm11227, %v11195, 0.0
        %11229 = vadd.xlane.f32.xlu0 %v11228
        %v11230 = vpop.xlane.xlu0 %11229
        %v11231 = vsel %vm11227, %v11196, 0.0
        %11232 = vadd.xlane.f32.xlu0 %v11231
        %v11233 = vpop.xlane.xlu0 %11232
        %v11234 = vsel %vm11227, %v11197, 0.0
        %11235 = vadd.xlane.f32.xlu0 %v11234
        %v11236 = vpop.xlane.xlu0 %11235
        %v11237 = vsel %vm11227, %v11198, 0.0
        %11238 = vadd.xlane.f32.xlu0 %v11237
        %v11239 = vpop.xlane.xlu0 %11238
        %v11240 = vsel %vm11227, %v11199, 0.0
        %11241 = vadd.xlane.f32.xlu0 %v11240
        %v11242 = vpop.xlane.xlu0 %11241
        %v11243 = vsel %vm11227, %v11200, 0.0
        %11244 = vadd.xlane.f32.xlu0 %v11243
        %v11245 = vpop.xlane.xlu0 %11244
        %v11246 = vsel %vm11227, %v11201, 0.0
        %11247 = vadd.xlane.f32.xlu0 %v11246
        %v11248 = vpop.xlane.xlu0 %11247
        %v11249 = vsel %vm11227, %v11202, 0.0
        %11250 = vadd.xlane.f32.xlu0 %v11249
        %v11251 = vpop.xlane.xlu0 %11250
        %v11252 = vsel %vm11227, %v11203, 0.0
        %11253 = vadd.xlane.f32.xlu0 %v11252
        %v11254 = vpop.xlane.xlu0 %11253
        %v11255 = vsel %vm11227, %v11204, 0.0
        %11256 = vadd.xlane.f32.xlu0 %v11255
        %v11257 = vpop.xlane.xlu0 %11256
        %v11258 = vsel %vm11227, %v11205, 0.0
        %11259 = vadd.xlane.f32.xlu0 %v11258
        %v11260 = vpop.xlane.xlu0 %11259
        %v11261 = vsel %vm11227, %v11206, 0.0
        %11262 = vadd.xlane.f32.xlu0 %v11261
        %v11263 = vpop.xlane.xlu0 %11262
        %v11264 = vsel %vm11227, %v11207, 0.0
        %11265 = vadd.xlane.f32.xlu0 %v11264
        %v11266 = vpop.xlane.xlu0 %11265
        %v11267 = vsel %vm11227, %v11208, 0.0
        %11268 = vadd.xlane.f32.xlu0 %v11267
        %v11269 = vpop.xlane.xlu0 %11268
        %v11270 = vsel %vm11227, %v11209, 0.0
        %11271 = vadd.xlane.f32.xlu0 %v11270
        %v11272 = vpop.xlane.xlu0 %11271
        %v11273 = vsel %vm11227, %v11210, 0.0
        %11274 = vadd.xlane.f32.xlu0 %v11273
        %v11275 = vpop.xlane.xlu0 %11274
        %v11276 = vsel %vm11227, %v11211, 0.0
        %11277 = vadd.xlane.f32.xlu0 %v11276
        %v11278 = vpop.xlane.xlu0 %11277
        %v11279 = vsel %vm11227, %v11212, 0.0
        %11280 = vadd.xlane.f32.xlu0 %v11279
        %v11281 = vpop.xlane.xlu0 %11280
        %v11282 = vsel %vm11227, %v11213, 0.0
        %11283 = vadd.xlane.f32.xlu0 %v11282
        %v11284 = vpop.xlane.xlu0 %11283
        %v11285 = vsel %vm11227, %v11214, 0.0
        %11286 = vadd.xlane.f32.xlu0 %v11285
        %v11287 = vpop.xlane.xlu0 %11286
        %v11288 = vsel %vm11227, %v11215, 0.0
        %11289 = vadd.xlane.f32.xlu0 %v11288
        %v11290 = vpop.xlane.xlu0 %11289
        %v11291 = vsel %vm11227, %v11216, 0.0
        %11292 = vadd.xlane.f32.xlu0 %v11291
        %v11293 = vpop.xlane.xlu0 %11292
        %v11294 = vsel %vm11227, %v11217, 0.0
        %11295 = vadd.xlane.f32.xlu0 %v11294
        %v11296 = vpop.xlane.xlu0 %11295
        %v11297 = vsel %vm11227, %v11218, 0.0
        %11298 = vadd.xlane.f32.xlu0 %v11297
        %v11299 = vpop.xlane.xlu0 %11298
        %v11300 = vsel %vm11227, %v11219, 0.0
        %11301 = vadd.xlane.f32.xlu0 %v11300
        %v11302 = vpop.xlane.xlu0 %11301
        %v11303 = vsel %vm11227, %v11220, 0.0
        %11304 = vadd.xlane.f32.xlu0 %v11303
        %v11305 = vpop.xlane.xlu0 %11304
        %v11306 = vsel %vm11227, %v11221, 0.0
        %11307 = vadd.xlane.f32.xlu0 %v11306
        %v11308 = vpop.xlane.xlu0 %11307
        %v11309 = vsel %vm11227, %v11222, 0.0
        %11310 = vadd.xlane.f32.xlu0 %v11309
        %v11311 = vpop.xlane.xlu0 %11310
        %v11312 = vsel %vm11227, %v11223, 0.0
        %11313 = vadd.xlane.f32.xlu0 %v11312
        %v11314 = vpop.xlane.xlu0 %11313
        %v11315 = vsel %vm11227, %v11224, 0.0
        %11316 = vadd.xlane.f32.xlu0 %v11315
        %v11317 = vpop.xlane.xlu0 %11316
        %v11318 = vsel %vm11227, %v11225, 0.0
        %11319 = vadd.xlane.f32.xlu0 %v11318
        %v11320 = vpop.xlane.xlu0 %11319
        %v11321 = vsel %vm11227, %v11226, 0.0
        %11322 = vadd.xlane.f32.xlu0 %v11321
        %v11323 = vpop.xlane.xlu0 %11322
        %v11324 = vrcp.pop 32.0
        %v11325 = vmul.f32 %v11230, %v11324
        %v11326 = vmul.f32 %v11233, %v11324
        %v11327 = vmul.f32 %v11236, %v11324
        %v11328 = vmul.f32 %v11239, %v11324
        %v11329 = vmul.f32 %v11242, %v11324
        %v11330 = vmul.f32 %v11245, %v11324
        %v11331 = vmul.f32 %v11248, %v11324
        %v11332 = vmul.f32 %v11251, %v11324
        %v11333 = vmul.f32 %v11254, %v11324
        %v11334 = vmul.f32 %v11257, %v11324
        %v11335 = vmul.f32 %v11260, %v11324
        %v11336 = vmul.f32 %v11263, %v11324
        %v11337 = vmul.f32 %v11266, %v11324
        %v11338 = vmul.f32 %v11269, %v11324
        %v11339 = vmul.f32 %v11272, %v11324
        %v11340 = vmul.f32 %v11275, %v11324
        %v11341 = vmul.f32 %v11278, %v11324
        %v11342 = vmul.f32 %v11281, %v11324
        %v11343 = vmul.f32 %v11284, %v11324
        %v11344 = vmul.f32 %v11287, %v11324
        %v11345 = vmul.f32 %v11290, %v11324
        %v11346 = vmul.f32 %v11293, %v11324
        %v11347 = vmul.f32 %v11296, %v11324
        %v11348 = vmul.f32 %v11299, %v11324
        %v11349 = vmul.f32 %v11302, %v11324
        %v11350 = vmul.f32 %v11305, %v11324
        %v11351 = vmul.f32 %v11308, %v11324
        %v11352 = vmul.f32 %v11311, %v11324
        %v11353 = vmul.f32 %v11314, %v11324
        %v11354 = vmul.f32 %v11317, %v11324
        %v11355 = vmul.f32 %v11320, %v11324
        %v11356 = vmul.f32 %v11323, %v11324
        %v11357 = vsub.f32 %v11195, %v11325
        %v11358 = vsub.f32 %v11196, %v11326
        %v11359 = vsub.f32 %v11197, %v11327
        %v11360 = vsub.f32 %v11198, %v11328
        %v11361 = vsub.f32 %v11199, %v11329
        %v11362 = vsub.f32 %v11200, %v11330
        %v11363 = vsub.f32 %v11201, %v11331
        %v11364 = vsub.f32 %v11202, %v11332
        %v11365 = vsub.f32 %v11203, %v11333
        %v11366 = vsub.f32 %v11204, %v11334
        %v11367 = vsub.f32 %v11205, %v11335
        %v11368 = vsub.f32 %v11206, %v11336
        %v11369 = vsub.f32 %v11207, %v11337
        %v11370 = vsub.f32 %v11208, %v11338
        %v11371 = vsub.f32 %v11209, %v11339
        %v11372 = vsub.f32 %v11210, %v11340
        %v11373 = vsub.f32 %v11211, %v11341
        %v11374 = vsub.f32 %v11212, %v11342
        %v11375 = vsub.f32 %v11213, %v11343
        %v11376 = vsub.f32 %v11214, %v11344
        %v11377 = vsub.f32 %v11215, %v11345
        %v11378 = vsub.f32 %v11216, %v11346
        %v11379 = vsub.f32 %v11217, %v11347
        %v11380 = vsub.f32 %v11218, %v11348
        %v11381 = vsub.f32 %v11219, %v11349
        %v11382 = vsub.f32 %v11220, %v11350
        %v11383 = vsub.f32 %v11221, %v11351
        %v11384 = vsub.f32 %v11222, %v11352
        %v11385 = vsub.f32 %v11223, %v11353
        %v11386 = vsub.f32 %v11224, %v11354
        %v11387 = vsub.f32 %v11225, %v11355
        %v11388 = vsub.f32 %v11226, %v11356
        %v11389 = vmul.f32 %v11357, %v11357
        %v11390 = vmul.f32 %v11358, %v11358
        %v11391 = vmul.f32 %v11359, %v11359
        %v11392 = vmul.f32 %v11360, %v11360
        %v11393 = vmul.f32 %v11361, %v11361
        %v11394 = vmul.f32 %v11362, %v11362
        %v11395 = vmul.f32 %v11363, %v11363
        %v11396 = vmul.f32 %v11364, %v11364
        %v11397 = vmul.f32 %v11365, %v11365
        %v11398 = vmul.f32 %v11366, %v11366
        %v11399 = vmul.f32 %v11367, %v11367
        %v11400 = vmul.f32 %v11368, %v11368
        %v11401 = vmul.f32 %v11369, %v11369
        %v11402 = vmul.f32 %v11370, %v11370
        %v11403 = vmul.f32 %v11371, %v11371
        %v11404 = vmul.f32 %v11372, %v11372
        %v11405 = vmul.f32 %v11373, %v11373
        %v11406 = vmul.f32 %v11374, %v11374
        %v11407 = vmul.f32 %v11375, %v11375
        %v11408 = vmul.f32 %v11376, %v11376
        %v11409 = vmul.f32 %v11377, %v11377
        %v11410 = vmul.f32 %v11378, %v11378
        %v11411 = vmul.f32 %v11379, %v11379
        %v11412 = vmul.f32 %v11380, %v11380
        %v11413 = vmul.f32 %v11381, %v11381
        %v11414 = vmul.f32 %v11382, %v11382
        %v11415 = vmul.f32 %v11383, %v11383
        %v11416 = vmul.f32 %v11384, %v11384
        %v11417 = vmul.f32 %v11385, %v11385
        %v11418 = vmul.f32 %v11386, %v11386
        %v11419 = vmul.f32 %v11387, %v11387
        %v11420 = vmul.f32 %v11388, %v11388
        %v11421 = vsel %vm11227, %v11389, 0.0
        %11422 = vadd.xlane.f32.xlu0 %v11421
        %v11423 = vpop.xlane.xlu0 %11422
        %v11424 = vsel %vm11227, %v11390, 0.0
        %11425 = vadd.xlane.f32.xlu0 %v11424
        %v11426 = vpop.xlane.xlu0 %11425
        %v11427 = vsel %vm11227, %v11391, 0.0
        %11428 = vadd.xlane.f32.xlu0 %v11427
        %v11429 = vpop.xlane.xlu0 %11428
        %v11430 = vsel %vm11227, %v11392, 0.0
        %11431 = vadd.xlane.f32.xlu0 %v11430
        %v11432 = vpop.xlane.xlu0 %11431
        %v11433 = vsel %vm11227, %v11393, 0.0
        %11434 = vadd.xlane.f32.xlu0 %v11433
        %v11435 = vpop.xlane.xlu0 %11434
        %v11436 = vsel %vm11227, %v11394, 0.0
        %11437 = vadd.xlane.f32.xlu0 %v11436
        %v11438 = vpop.xlane.xlu0 %11437
        %v11439 = vsel %vm11227, %v11395, 0.0
        %11440 = vadd.xlane.f32.xlu0 %v11439
        %v11441 = vpop.xlane.xlu0 %11440
        %v11442 = vsel %vm11227, %v11396, 0.0
        %11443 = vadd.xlane.f32.xlu0 %v11442
        %v11444 = vpop.xlane.xlu0 %11443
        %v11445 = vsel %vm11227, %v11397, 0.0
        %11446 = vadd.xlane.f32.xlu0 %v11445
        %v11447 = vpop.xlane.xlu0 %11446
        %v11448 = vsel %vm11227, %v11398, 0.0
        %11449 = vadd.xlane.f32.xlu0 %v11448
        %v11450 = vpop.xlane.xlu0 %11449
        %v11451 = vsel %vm11227, %v11399, 0.0
        %11452 = vadd.xlane.f32.xlu0 %v11451
        %v11453 = vpop.xlane.xlu0 %11452
        %v11454 = vsel %vm11227, %v11400, 0.0
        %11455 = vadd.xlane.f32.xlu0 %v11454
        %v11456 = vpop.xlane.xlu0 %11455
        %v11457 = vsel %vm11227, %v11401, 0.0
        %11458 = vadd.xlane.f32.xlu0 %v11457
        %v11459 = vpop.xlane.xlu0 %11458
        %v11460 = vsel %vm11227, %v11402, 0.0
        %11461 = vadd.xlane.f32.xlu0 %v11460
        %v11462 = vpop.xlane.xlu0 %11461
        %v11463 = vsel %vm11227, %v11403, 0.0
        %11464 = vadd.xlane.f32.xlu0 %v11463
        %v11465 = vpop.xlane.xlu0 %11464
        %v11466 = vsel %vm11227, %v11404, 0.0
        %11467 = vadd.xlane.f32.xlu0 %v11466
        %v11468 = vpop.xlane.xlu0 %11467
        %v11469 = vsel %vm11227, %v11405, 0.0
        %11470 = vadd.xlane.f32.xlu0 %v11469
        %v11471 = vpop.xlane.xlu0 %11470
        %v11472 = vsel %vm11227, %v11406, 0.0
        %11473 = vadd.xlane.f32.xlu0 %v11472
        %v11474 = vpop.xlane.xlu0 %11473
        %v11475 = vsel %vm11227, %v11407, 0.0
        %11476 = vadd.xlane.f32.xlu0 %v11475
        %v11477 = vpop.xlane.xlu0 %11476
        %v11478 = vsel %vm11227, %v11408, 0.0
        %11479 = vadd.xlane.f32.xlu0 %v11478
        %v11480 = vpop.xlane.xlu0 %11479
        %v11481 = vsel %vm11227, %v11409, 0.0
        %11482 = vadd.xlane.f32.xlu0 %v11481
        %v11483 = vpop.xlane.xlu0 %11482
        %v11484 = vsel %vm11227, %v11410, 0.0
        %11485 = vadd.xlane.f32.xlu0 %v11484
        %v11486 = vpop.xlane.xlu0 %11485
        %v11487 = vsel %vm11227, %v11411, 0.0
        %11488 = vadd.xlane.f32.xlu0 %v11487
        %v11489 = vpop.xlane.xlu0 %11488
        %v11490 = vsel %vm11227, %v11412, 0.0
        %11491 = vadd.xlane.f32.xlu0 %v11490
        %v11492 = vpop.xlane.xlu0 %11491
        %v11493 = vsel %vm11227, %v11413, 0.0
        %11494 = vadd.xlane.f32.xlu0 %v11493
        %v11495 = vpop.xlane.xlu0 %11494
        %v11496 = vsel %vm11227, %v11414, 0.0
        %11497 = vadd.xlane.f32.xlu0 %v11496
        %v11498 = vpop.xlane.xlu0 %11497
        %v11499 = vsel %vm11227, %v11415, 0.0
        %11500 = vadd.xlane.f32.xlu0 %v11499
        %v11501 = vpop.xlane.xlu0 %11500
        %v11502 = vsel %vm11227, %v11416, 0.0
        %11503 = vadd.xlane.f32.xlu0 %v11502
        %v11504 = vpop.xlane.xlu0 %11503
        %v11505 = vsel %vm11227, %v11417, 0.0
        %11506 = vadd.xlane.f32.xlu0 %v11505
        %v11507 = vpop.xlane.xlu0 %11506
        %v11508 = vsel %vm11227, %v11418, 0.0
        %11509 = vadd.xlane.f32.xlu0 %v11508
        %v11510 = vpop.xlane.xlu0 %11509
        %v11511 = vsel %vm11227, %v11419, 0.0
        %11512 = vadd.xlane.f32.xlu0 %v11511
        %v11513 = vpop.xlane.xlu0 %11512
        %v11514 = vsel %vm11227, %v11420, 0.0
        %11515 = vadd.xlane.f32.xlu0 %v11514
        %v11516 = vpop.xlane.xlu0 %11515
        %v11517 = vmul.f32 %v11423, %v11324
        %v11518 = vmul.f32 %v11426, %v11324
        %v11519 = vmul.f32 %v11429, %v11324
        %v11520 = vmul.f32 %v11432, %v11324
        %v11521 = vmul.f32 %v11435, %v11324
        %v11522 = vmul.f32 %v11438, %v11324
        %v11523 = vmul.f32 %v11441, %v11324
        %v11524 = vmul.f32 %v11444, %v11324
        %v11525 = vmul.f32 %v11447, %v11324
        %v11526 = vmul.f32 %v11450, %v11324
        %v11527 = vmul.f32 %v11453, %v11324
        %v11528 = vmul.f32 %v11456, %v11324
        %v11529 = vmul.f32 %v11459, %v11324
        %v11530 = vmul.f32 %v11462, %v11324
        %v11531 = vmul.f32 %v11465, %v11324
        %v11532 = vmul.f32 %v11468, %v11324
        %v11533 = vmul.f32 %v11471, %v11324
        %v11534 = vmul.f32 %v11474, %v11324
        %v11535 = vmul.f32 %v11477, %v11324
        %v11536 = vmul.f32 %v11480, %v11324
        %v11537 = vmul.f32 %v11483, %v11324
        %v11538 = vmul.f32 %v11486, %v11324
        %v11539 = vmul.f32 %v11489, %v11324
        %v11540 = vmul.f32 %v11492, %v11324
        %v11541 = vmul.f32 %v11495, %v11324
        %v11542 = vmul.f32 %v11498, %v11324
        %v11543 = vmul.f32 %v11501, %v11324
        %v11544 = vmul.f32 %v11504, %v11324
        %v11545 = vmul.f32 %v11507, %v11324
        %v11546 = vmul.f32 %v11510, %v11324
        %v11547 = vmul.f32 %v11513, %v11324
        %v11548 = vmul.f32 %v11516, %v11324
        %v11549 = vadd.f32 %v11517, 1e-06
        %v11550 = vadd.f32 %v11518, 1e-06
        %v11551 = vadd.f32 %v11519, 1e-06
        %v11552 = vadd.f32 %v11520, 1e-06
        %v11553 = vadd.f32 %v11521, 1e-06
        %v11554 = vadd.f32 %v11522, 1e-06
        %v11555 = vadd.f32 %v11523, 1e-06
        %v11556 = vadd.f32 %v11524, 1e-06
        %v11557 = vadd.f32 %v11525, 1e-06
        %v11558 = vadd.f32 %v11526, 1e-06
        %v11559 = vadd.f32 %v11527, 1e-06
        %v11560 = vadd.f32 %v11528, 1e-06
        %v11561 = vadd.f32 %v11529, 1e-06
        %v11562 = vadd.f32 %v11530, 1e-06
        %v11563 = vadd.f32 %v11531, 1e-06
        %v11564 = vadd.f32 %v11532, 1e-06
        %v11565 = vadd.f32 %v11533, 1e-06
        %v11566 = vadd.f32 %v11534, 1e-06
        %v11567 = vadd.f32 %v11535, 1e-06
        %v11568 = vadd.f32 %v11536, 1e-06
        %v11569 = vadd.f32 %v11537, 1e-06
        %v11570 = vadd.f32 %v11538, 1e-06
        %v11571 = vadd.f32 %v11539, 1e-06
        %v11572 = vadd.f32 %v11540, 1e-06
        %v11573 = vadd.f32 %v11541, 1e-06
        %v11574 = vadd.f32 %v11542, 1e-06
        %v11575 = vadd.f32 %v11543, 1e-06
        %v11576 = vadd.f32 %v11544, 1e-06
        %v11577 = vadd.f32 %v11545, 1e-06
        %v11578 = vadd.f32 %v11546, 1e-06
        %v11579 = vadd.f32 %v11547, 1e-06
        %v11580 = vadd.f32 %v11548, 1e-06
        %v11581 = vrsqrt.pop %v11549
        %v11582 = vrsqrt.pop %v11550
        %v11583 = vrsqrt.pop %v11551
        %v11584 = vrsqrt.pop %v11552
        %v11585 = vrsqrt.pop %v11553
        %v11586 = vrsqrt.pop %v11554
        %v11587 = vrsqrt.pop %v11555
        %v11588 = vrsqrt.pop %v11556
        %v11589 = vrsqrt.pop %v11557
        %v11590 = vrsqrt.pop %v11558
        %v11591 = vrsqrt.pop %v11559
        %v11592 = vrsqrt.pop %v11560
        %v11593 = vrsqrt.pop %v11561
        %v11594 = vrsqrt.pop %v11562
        %v11595 = vrsqrt.pop %v11563
        %v11596 = vrsqrt.pop %v11564
        %v11597 = vrsqrt.pop %v11565
        %v11598 = vrsqrt.pop %v11566
        %v11599 = vrsqrt.pop %v11567
        %v11600 = vrsqrt.pop %v11568
        %v11601 = vrsqrt.pop %v11569
        %v11602 = vrsqrt.pop %v11570
        %v11603 = vrsqrt.pop %v11571
        %v11604 = vrsqrt.pop %v11572
        %v11605 = vrsqrt.pop %v11573
        %v11606 = vrsqrt.pop %v11574
        %v11607 = vrsqrt.pop %v11575
        %v11608 = vrsqrt.pop %v11576
        %v11609 = vrsqrt.pop %v11577
        %v11610 = vrsqrt.pop %v11578
        %v11611 = vrsqrt.pop %v11579
        %v11612 = vrsqrt.pop %v11580
        %v11613 = vmul.f32 %v11357, %v11581
        %v11614 = vmul.f32 %v11358, %v11582
        %v11615 = vmul.f32 %v11359, %v11583
        %v11616 = vmul.f32 %v11360, %v11584
        %v11617 = vmul.f32 %v11361, %v11585
        %v11618 = vmul.f32 %v11362, %v11586
        %v11619 = vmul.f32 %v11363, %v11587
        %v11620 = vmul.f32 %v11364, %v11588
        %v11621 = vmul.f32 %v11365, %v11589
        %v11622 = vmul.f32 %v11366, %v11590
        %v11623 = vmul.f32 %v11367, %v11591
        %v11624 = vmul.f32 %v11368, %v11592
        %v11625 = vmul.f32 %v11369, %v11593
        %v11626 = vmul.f32 %v11370, %v11594
        %v11627 = vmul.f32 %v11371, %v11595
        %v11628 = vmul.f32 %v11372, %v11596
        %v11629 = vmul.f32 %v11373, %v11597
        %v11630 = vmul.f32 %v11374, %v11598
        %v11631 = vmul.f32 %v11375, %v11599
        %v11632 = vmul.f32 %v11376, %v11600
        %v11633 = vmul.f32 %v11377, %v11601
        %v11634 = vmul.f32 %v11378, %v11602
        %v11635 = vmul.f32 %v11379, %v11603
        %v11636 = vmul.f32 %v11380, %v11604
        %v11637 = vmul.f32 %v11381, %v11605
        %v11638 = vmul.f32 %v11382, %v11606
        %v11639 = vmul.f32 %v11383, %v11607
        %v11640 = vmul.f32 %v11384, %v11608
        %v11641 = vmul.f32 %v11385, %v11609
        %v11642 = vmul.f32 %v11386, %v11610
        %v11643 = vmul.f32 %v11387, %v11611
        %v11644 = vmul.f32 %v11388, %v11612
        %v11645 = vld [vmem:[%s3] sm:$0x1]
        %v11647 = vlaneseq
        %v11648 = vshrl.u32 %v11647, 7
        %v11649 = vsub.s32 0, %v11648
        %v11650 = vrot.slane %v11645, %v11649
        %v11652 = vmul.f32 %v11613, %v11650
        %v11653 = vmul.f32 %v11614, %v11650
        %v11654 = vmul.f32 %v11615, %v11650
        %v11655 = vmul.f32 %v11616, %v11650
        %v11656 = vmul.f32 %v11617, %v11650
        %v11657 = vmul.f32 %v11618, %v11650
        %v11658 = vmul.f32 %v11619, %v11650
        %v11659 = vmul.f32 %v11620, %v11650
        %v11660 = vmul.f32 %v11621, %v11650
        %v11661 = vmul.f32 %v11622, %v11650
        %v11662 = vmul.f32 %v11623, %v11650
        %v11663 = vmul.f32 %v11624, %v11650
        %v11664 = vmul.f32 %v11625, %v11650
        %v11665 = vmul.f32 %v11626, %v11650
        %v11666 = vmul.f32 %v11627, %v11650
        %v11667 = vmul.f32 %v11628, %v11650
        %v11668 = vmul.f32 %v11629, %v11650
        %v11669 = vmul.f32 %v11630, %v11650
        %v11670 = vmul.f32 %v11631, %v11650
        %v11671 = vmul.f32 %v11632, %v11650
        %v11672 = vmul.f32 %v11633, %v11650
        %v11673 = vmul.f32 %v11634, %v11650
        %v11674 = vmul.f32 %v11635, %v11650
        %v11675 = vmul.f32 %v11636, %v11650
        %v11676 = vmul.f32 %v11637, %v11650
        %v11677 = vmul.f32 %v11638, %v11650
        %v11678 = vmul.f32 %v11639, %v11650
        %v11679 = vmul.f32 %v11640, %v11650
        %v11680 = vmul.f32 %v11641, %v11650
        %v11681 = vmul.f32 %v11642, %v11650
        %v11682 = vmul.f32 %v11643, %v11650
        %v11683 = vmul.f32 %v11644, %v11650
        %v11684 = vld [vmem:[%s4] sm:$0x1]
        %v11686 = vlaneseq
        %v11687 = vshrl.u32 %v11686, 7
        %v11688 = vsub.s32 0, %v11687
        %v11689 = vrot.slane %v11684, %v11688
        %v11691 = vadd.f32 %v11652, %v11689
        %v11692 = vadd.f32 %v11653, %v11689
        %v11693 = vadd.f32 %v11654, %v11689
        %v11694 = vadd.f32 %v11655, %v11689
        %v11695 = vadd.f32 %v11656, %v11689
        %v11696 = vadd.f32 %v11657, %v11689
        %v11697 = vadd.f32 %v11658, %v11689
        %v11698 = vadd.f32 %v11659, %v11689
        %v11699 = vadd.f32 %v11660, %v11689
        %v11700 = vadd.f32 %v11661, %v11689
        %v11701 = vadd.f32 %v11662, %v11689
        %v11702 = vadd.f32 %v11663, %v11689
        %v11703 = vadd.f32 %v11664, %v11689
        %v11704 = vadd.f32 %v11665, %v11689
        %v11705 = vadd.f32 %v11666, %v11689
        %v11706 = vadd.f32 %v11667, %v11689
        %v11707 = vadd.f32 %v11668, %v11689
        %v11708 = vadd.f32 %v11669, %v11689
        %v11709 = vadd.f32 %v11670, %v11689
        %v11710 = vadd.f32 %v11671, %v11689
        %v11711 = vadd.f32 %v11672, %v11689
        %v11712 = vadd.f32 %v11673, %v11689
        %v11713 = vadd.f32 %v11674, %v11689
        %v11714 = vadd.f32 %v11675, %v11689
        %v11715 = vadd.f32 %v11676, %v11689
        %v11716 = vadd.f32 %v11677, %v11689
        %v11717 = vadd.f32 %v11678, %v11689
        %v11718 = vadd.f32 %v11679, %v11689
        %v11719 = vadd.f32 %v11680, %v11689
        %v11720 = vadd.f32 %v11681, %v11689
        %v11721 = vadd.f32 %v11682, %v11689
        %v11722 = vadd.f32 %v11683, %v11689
        %v11723 = vld [vmem:[%s5] sm:$0xff]
        %v11724 = vld [vmem:[%s5 + $0x8] sm:$0xff]
        %v11725 = vld [vmem:[%s5 + $0x10] sm:$0xff]
        %v11726 = vld [vmem:[%s5 + $0x18] sm:$0xff]
        %v11727 = vld [vmem:[%s6] sm:$0x1]
        %v11729 = vlaneseq
        %v11730 = vshrl.u32 %v11729, 7
        %v11731 = vsub.s32 0, %v11730
        %v11732 = vrot.slane %v11727, %v11731
        %v11735 = vsel %vm11227, %v11691, 0
        %v11738 = vsel %vm11227, %v11692, 0
        %v11741 = vsel %vm11227, %v11693, 0
        %v11744 = vsel %vm11227, %v11694, 0
        %v11747 = vsel %vm11227, %v11695, 0
        %v11750 = vsel %vm11227, %v11696, 0
        %v11753 = vsel %vm11227, %v11697, 0
        %v11756 = vsel %vm11227, %v11698, 0
        %v11759 = vsel %vm11227, %v11699, 0
        %v11762 = vsel %vm11227, %v11700, 0
        %v11765 = vsel %vm11227, %v11701, 0
        %v11768 = vsel %vm11227, %v11702, 0
        %v11771 = vsel %vm11227, %v11703, 0
        %v11774 = vsel %vm11227, %v11704, 0
        %v11777 = vsel %vm11227, %v11705, 0
        %v11780 = vsel %vm11227, %v11706, 0
        %v11783 = vsel %vm11227, %v11707, 0
        %v11786 = vsel %vm11227, %v11708, 0
        %v11789 = vsel %vm11227, %v11709, 0
        %v11792 = vsel %vm11227, %v11710, 0
        %v11795 = vsel %vm11227, %v11711, 0
        %v11798 = vsel %vm11227, %v11712, 0
        %v11801 = vsel %vm11227, %v11713, 0
        %v11804 = vsel %vm11227, %v11714, 0
        %v11807 = vsel %vm11227, %v11715, 0
        %v11810 = vsel %vm11227, %v11716, 0
        %v11813 = vsel %vm11227, %v11717, 0
        %v11816 = vsel %vm11227, %v11718, 0
        %v11819 = vsel %vm11227, %v11719, 0
        %v11822 = vsel %vm11227, %v11720, 0
        %v11825 = vsel %vm11227, %v11721, 0
        %v11828 = vsel %vm11227, %v11722, 0
        %11830 = vmatprep.subr.mxu0 0.0
        %11831 = vmatpush1.msra.mxu0 %v11723
        %11832 = vmatprep.subr.mxu0 0.0
        %11833 = vmatpush1.msra.mxu0 %v11724
        %11834 = vmatprep.subr.mxu0 0.0
        %11835 = vmatpush1.msra.mxu0 %v11725
        %11836 = vmatprep.subr.mxu0 0.0
        %11837 = vmatpush1.msra.mxu0 %v11726
        %11838 = vmatprep.subr.mxu0 0.0
        %11839 = vmatpush1.msra.mxu0 0.0
        %11840 = vmatprep.subr.mxu0 0.0
        %11841 = vmatpush1.msra.mxu0 0.0
        %11842 = vmatprep.subr.mxu0 0.0
        %11843 = vmatpush1.msra.mxu0 0.0
        %11844 = vmatprep.subr.mxu0 0.0
        %11845 = vmatpush1.msra.mxu0 0.0
        %11846 = vmatprep.subr.mxu0 0.0
        %11847 = vmatpush1.msra.mxu0 0.0
        %11848 = vmatprep.subr.mxu0 0.0
        %11849 = vmatpush1.msra.mxu0 0.0
        %11850 = vmatprep.subr.mxu0 0.0
        %11851 = vmatpush1.msra.mxu0 0.0
        %11852 = vmatprep.subr.mxu0 0.0
        %11853 = vmatpush1.msra.mxu0 0.0
        %11854 = vmatprep.subr.mxu0 0.0
        %11855 = vmatpush1.msra.mxu0 0.0
        %11856 = vmatprep.subr.mxu0 0.0
        %11857 = vmatpush1.msra.mxu0 0.0
        %11858 = vmatprep.subr.mxu0 0.0
        %11859 = vmatpush1.msra.mxu0 0.0
        %11860 = vmatprep.subr.mxu0 0.0
        %11861 = vmatpush1.msra.mxu0 0.0
        %11862 = vmatprep.subr.mxu0 0.0
        %11863 = vmatpush1.msra.mxu0 0.0
        %11864 = vmatprep.subr.mxu0 0.0
        %11865 = vmatpush1.msra.mxu0 0.0
        %11866 = vmatprep.subr.mxu0 0.0
        %11867 = vmatpush1.msra.mxu0 0.0
        %11868 = vmatprep.subr.mxu0 0.0
        %11869 = vmatpush1.msra.mxu0 0.0
        %11870 = vmatprep.subr.mxu0 0.0
        %11871 = vmatpush1.msra.mxu0 0.0
        %11872 = vmatprep.subr.mxu0 0.0
        %11873 = vmatpush1.msra.mxu0 0.0
        %11874 = vmatprep.subr.mxu0 0.0
        %11875 = vmatpush1.msra.mxu0 0.0
        %11876 = vmatprep.subr.mxu0 0.0
        %11877 = vmatpush1.msra.mxu0 0.0
        %11878 = vmatprep.subr.mxu0 0.0
        %11879 = vmatpush1.msra.mxu0 0.0
        %11880 = vmatprep.subr.mxu0 0.0
        %11881 = vmatpush1.msra.mxu0 0.0
        %11882 = vmatprep.subr.mxu0 0.0
        %11883 = vmatpush1.msra.mxu0 0.0
        %11884 = vmatprep.subr.mxu0 0.0
        %11885 = vmatpush1.msra.mxu0 0.0
        %11886 = vmatprep.subr.mxu0 0.0
        %11887 = vmatpush1.msra.mxu0 0.0
        %11888 = vmatprep.subr.mxu0 0.0
        %11889 = vmatpush1.msra.mxu0 0.0
        %11890 = vmatprep.subr.mxu0 0.0
        %11891 = vmatpush1.msra.mxu0 0.0
        %11892 = vmatprep.subr.mxu0 0.0
        %11893 = vmatpush1.msra.mxu0 0.0
        %11894 = vmatprep.mubr.f32.mxu0 0.0
        %11895 = vmatmul.mubr.f32.gmra.mrb[0].mxu0 %v11735
        %v11896 = vpop.f32.mrb[0].mxu0
        %v11897 = vadd.f32 %v11732, %v11896
        %v11898 = vpop.f32.mrb[0].mxu0
        %11899 = vmatprep.mubr.f32.mxu0 0.0
        %11900 = vmatmul.mubr.f32.gmra.mrb[0].mxu0 %v11738
        %v11901 = vpop.f32.mrb[0].mxu0
        %v11902 = vadd.f32 %v11732, %v11901
        %v11903 = vpop.f32.mrb[0].mxu0
        %11904 = vmatprep.mubr.f32.mxu0 0.0
        %11905 = vmatmul.mubr.f32.gmra.mrb[0].mxu0 %v11741
        %v11906 = vpop.f32.mrb[0].mxu0
        %v11907 = vadd.f32 %v11732, %v11906
        %v11908 = vpop.f32.mrb[0].mxu0
        %11909 = vmatprep.mubr.f32.mxu0 0.0
        %11910 = vmatmul.mubr.f32.gmra.mrb[0].mxu0 %v11744
        %v11911 = vpop.f32.mrb[0].mxu0
        %v11912 = vadd.f32 %v11732, %v11911
        %v11913 = vpop.f32.mrb[0].mxu0
        %11914 = vmatprep.mubr.f32.mxu0 0.0
        %11915 = vmatmul.mubr.f32.gmra.mrb[0].mxu0 %v11747
        %v11916 = vpop.f32.mrb[0].mxu0
        %v11917 = vadd.f32 %v11732, %v11916
        %v11918 = vpop.f32.mrb[0].mxu0
        %11919 = vmatprep.mubr.f32.mxu0 0.0
        %11920 = vmatmul.mubr.f32.gmra.mrb[0].mxu0 %v11750
        %v11921 = vpop.f32.mrb[0].mxu0
        %v11922 = vadd.f32 %v11732, %v11921
        %v11923 = vpop.f32.mrb[0].mxu0
        %11924 = vmatprep.mubr.f32.mxu0 0.0
        %11925 = vmatmul.mubr.f32.gmra.mrb[0].mxu0 %v11753
        %v11926 = vpop.f32.mrb[0].mxu0
        %v11927 = vadd.f32 %v11732, %v11926
        %v11928 = vpop.f32.mrb[0].mxu0
        %11929 = vmatprep.mubr.f32.mxu0 0.0
        %11930 = vmatmul.mubr.f32.gmra.mrb[0].mxu0 %v11756
        %v11931 = vpop.f32.mrb[0].mxu0
        %v11932 = vadd.f32 %v11732, %v11931
        %v11933 = vpop.f32.mrb[0].mxu0
        %11934 = vmatprep.mubr.f32.mxu0 0.0
        %11935 = vmatmul.mubr.f32.gmra.mrb[0].mxu0 %v11759
        %v11936 = vpop.f32.mrb[0].mxu0
        %v11937 = vadd.f32 %v11732, %v11936
        %v11938 = vpop.f32.mrb[0].mxu0
        %11939 = vmatprep.mubr.f32.mxu0 0.0
        %11940 = vmatmul.mubr.f32.gmra.mrb[0].mxu0 %v11762
        %v11941 = vpop.f32.mrb[0].mxu0
        %v11942 = vadd.f32 %v11732, %v11941
        %v11943 = vpop.f32.mrb[0].mxu0
        %11944 = vmatprep.mubr.f32.mxu0 0.0
        %11945 = vmatmul.mubr.f32.gmra.mrb[0].mxu0 %v11765
        %v11946 = vpop.f32.mrb[0].mxu0
        %v11947 = vadd.f32 %v11732, %v11946
        %v11948 = vpop.f32.mrb[0].mxu0
        %11949 = vmatprep.mubr.f32.mxu0 0.0
        %11950 = vmatmul.mubr.f32.gmra.mrb[0].mxu0 %v11768
        %v11951 = vpop.f32.mrb[0].mxu0
        %v11952 = vadd.f32 %v11732, %v11951
        %v11953 = vpop.f32.mrb[0].mxu0
        %11954 = vmatprep.mubr.f32.mxu0 0.0
        %11955 = vmatmul.mubr.f32.gmra.mrb[0].mxu0 %v11771
        %v11956 = vpop.f32.mrb[0].mxu0
        %v11957 = vadd.f32 %v11732, %v11956
        %v11958 = vpop.f32.mrb[0].mxu0
        %11959 = vmatprep.mubr.f32.mxu0 0.0
        %11960 = vmatmul.mubr.f32.gmra.mrb[0].mxu0 %v11774
        %v11961 = vpop.f32.mrb[0].mxu0
        %v11962 = vadd.f32 %v11732, %v11961
        %v11963 = vpop.f32.mrb[0].mxu0
        %11964 = vmatprep.mubr.f32.mxu0 0.0
        %11965 = vmatmul.mubr.f32.gmra.mrb[0].mxu0 %v11777
        %v11966 = vpop.f32.mrb[0].mxu0
        %v11967 = vadd.f32 %v11732, %v11966
        %v11968 = vpop.f32.mrb[0].mxu0
        %11969 = vmatprep.mubr.f32.mxu0 0.0
        %11970 = vmatmul.mubr.f32.gmra.mrb[0].mxu0 %v11780
        %v11971 = vpop.f32.mrb[0].mxu0
        %v11972 = vadd.f32 %v11732, %v11971
        %v11973 = vpop.f32.mrb[0].mxu0
        %11974 = vmatprep.mubr.f32.mxu0 0.0
        %11975 = vmatmul.mubr.f32.gmra.mrb[0].mxu0 %v11783
        %v11976 = vpop.f32.mrb[0].mxu0
        %v11977 = vadd.f32 %v11732, %v11976
        %v11978 = vpop.f32.mrb[0].mxu0
        %11979 = vmatprep.mubr.f32.mxu0 0.0
        %11980 = vmatmul.mubr.f32.gmra.mrb[0].mxu0 %v11786
        %v11981 = vpop.f32.mrb[0].mxu0
        %v11982 = vadd.f32 %v11732, %v11981
        %v11983 = vpop.f32.mrb[0].mxu0
        %11984 = vmatprep.mubr.f32.mxu0 0.0
        %11985 = vmatmul.mubr.f32.gmra.mrb[0].mxu0 %v11789
        %v11986 = vpop.f32.mrb[0].mxu0
        %v11987 = vadd.f32 %v11732, %v11986
        %v11988 = vpop.f32.mrb[0].mxu0
        %11989 = vmatprep.mubr.f32.mxu0 0.0
        %11990 = vmatmul.mubr.f32.gmra.mrb[0].mxu0 %v11792
        %v11991 = vpop.f32.mrb[0].mxu0
        %v11992 = vadd.f32 %v11732, %v11991
        %v11993 = vpop.f32.mrb[0].mxu0
        %11994 = vmatprep.mubr.f32.mxu0 0.0
        %11995 = vmatmul.mubr.f32.gmra.mrb[0].mxu0 %v11795
        %v11996 = vpop.f32.mrb[0].mxu0
        %v11997 = vadd.f32 %v11732, %v11996
        %v11998 = vpop.f32.mrb[0].mxu0
        %11999 = vmatprep.mubr.f32.mxu0 0.0
        %12000 = vmatmul.mubr.f32.gmra.mrb[0].mxu0 %v11798
        %v12001 = vpop.f32.mrb[0].mxu0
        %v12002 = vadd.f32 %v11732, %v12001
        %v12003 = vpop.f32.mrb[0].mxu0
        %12004 = vmatprep.mubr.f32.mxu0 0.0
        %12005 = vmatmul.mubr.f32.gmra.mrb[0].mxu0 %v11801
        %v12006 = vpop.f32.mrb[0].mxu0
        %v12007 = vadd.f32 %v11732, %v12006
        %v12008 = vpop.f32.mrb[0].mxu0
        %12009 = vmatprep.mubr.f32.mxu0 0.0
        %12010 = vmatmul.mubr.f32.gmra.mrb[0].mxu0 %v11804
        %v12011 = vpop.f32.mrb[0].mxu0
        %v12012 = vadd.f32 %v11732, %v12011
        %v12013 = vpop.f32.mrb[0].mxu0
        %12014 = vmatprep.mubr.f32.mxu0 0.0
        %12015 = vmatmul.mubr.f32.gmra.mrb[0].mxu0 %v11807
        %v12016 = vpop.f32.mrb[0].mxu0
        %v12017 = vadd.f32 %v11732, %v12016
        %v12018 = vpop.f32.mrb[0].mxu0
        %12019 = vmatprep.mubr.f32.mxu0 0.0
        %12020 = vmatmul.mubr.f32.gmra.mrb[0].mxu0 %v11810
        %v12021 = vpop.f32.mrb[0].mxu0
        %v12022 = vadd.f32 %v11732, %v12021
        %v12023 = vpop.f32.mrb[0].mxu0
        %12024 = vmatprep.mubr.f32.mxu0 0.0
        %12025 = vmatmul.mubr.f32.gmra.mrb[0].mxu0 %v11813
        %v12026 = vpop.f32.mrb[0].mxu0
        %v12027 = vadd.f32 %v11732, %v12026
        %v12028 = vpop.f32.mrb[0].mxu0
        %12029 = vmatprep.mubr.f32.mxu0 0.0
        %12030 = vmatmul.mubr.f32.gmra.mrb[0].mxu0 %v11816
        %v12031 = vpop.f32.mrb[0].mxu0
        %v12032 = vadd.f32 %v11732, %v12031
        %v12033 = vpop.f32.mrb[0].mxu0
        %12034 = vmatprep.mubr.f32.mxu0 0.0
        %12035 = vmatmul.mubr.f32.gmra.mrb[0].mxu0 %v11819
        %v12036 = vpop.f32.mrb[0].mxu0
        %v12037 = vadd.f32 %v11732, %v12036
        %v12038 = vpop.f32.mrb[0].mxu0
        %12039 = vmatprep.mubr.f32.mxu0 0.0
        %12040 = vmatmul.mubr.f32.gmra.mrb[0].mxu0 %v11822
        %v12041 = vpop.f32.mrb[0].mxu0
        %v12042 = vadd.f32 %v11732, %v12041
        %v12043 = vpop.f32.mrb[0].mxu0
        %12044 = vmatprep.mubr.f32.mxu0 0.0
        %12045 = vmatmul.mubr.f32.gmra.mrb[0].mxu0 %v11825
        %v12046 = vpop.f32.mrb[0].mxu0
        %v12047 = vadd.f32 %v11732, %v12046
        %v12048 = vpop.f32.mrb[0].mxu0
        %12049 = vmatprep.mubr.f32.mxu0 0.0
        %12050 = vmatmul.mubr.f32.gmra.mrb[0].mxu0 %v11828
        %v12051 = vpop.f32.mrb[0].mxu0
        %v12052 = vadd.f32 %v11732, %v12051
        %v12053 = vpop.f32.mrb[0].mxu0
        %12054 = vdwg.mxu0
        %v12055 = vmul.f32 %v11897, %v11897
        %v12056 = vmul.f32 %v11902, %v11902
        %v12057 = vmul.f32 %v11907, %v11907
        %v12058 = vmul.f32 %v11912, %v11912
        %v12059 = vmul.f32 %v11917, %v11917
        %v12060 = vmul.f32 %v11922, %v11922
        %v12061 = vmul.f32 %v11927, %v11927
        %v12062 = vmul.f32 %v11932, %v11932
        %v12063 = vmul.f32 %v11937, %v11937
        %v12064 = vmul.f32 %v11942, %v11942
        %v12065 = vmul.f32 %v11947, %v11947
        %v12066 = vmul.f32 %v11952, %v11952
        %v12067 = vmul.f32 %v11957, %v11957
        %v12068 = vmul.f32 %v11962, %v11962
        %v12069 = vmul.f32 %v11967, %v11967
        %v12070 = vmul.f32 %v11972, %v11972
        %v12071 = vmul.f32 %v11977, %v11977
        %v12072 = vmul.f32 %v11982, %v11982
        %v12073 = vmul.f32 %v11987, %v11987
        %v12074 = vmul.f32 %v11992, %v11992
        %v12075 = vmul.f32 %v11997, %v11997
        %v12076 = vmul.f32 %v12002, %v12002
        %v12077 = vmul.f32 %v12007, %v12007
        %v12078 = vmul.f32 %v12012, %v12012
        %v12079 = vmul.f32 %v12017, %v12017
        %v12080 = vmul.f32 %v12022, %v12022
        %v12081 = vmul.f32 %v12027, %v12027
        %v12082 = vmul.f32 %v12032, %v12032
        %v12083 = vmul.f32 %v12037, %v12037
        %v12084 = vmul.f32 %v12042, %v12042
        %v12085 = vmul.f32 %v12047, %v12047
        %v12086 = vmul.f32 %v12052, %v12052
        %v12087 = vmul.f32 %v11897, %v12055
        %v12088 = vmul.f32 %v11902, %v12056
        %v12089 = vmul.f32 %v11907, %v12057
        %v12090 = vmul.f32 %v11912, %v12058
        %v12091 = vmul.f32 %v11917, %v12059
        %v12092 = vmul.f32 %v11922, %v12060
        %v12093 = vmul.f32 %v11927, %v12061
        %v12094 = vmul.f32 %v11932, %v12062
        %v12095 = vmul.f32 %v11937, %v12063
        %v12096 = vmul.f32 %v11942, %v12064
        %v12097 = vmul.f32 %v11947, %v12065
        %v12098 = vmul.f32 %v11952, %v12066
        %v12099 = vmul.f32 %v11957, %v12067
        %v12100 = vmul.f32 %v11962, %v12068
        %v12101 = vmul.f32 %v11967, %v12069
        %v12102 = vmul.f32 %v11972, %v12070
        %v12103 = vmul.f32 %v11977, %v12071
        %v12104 = vmul.f32 %v11982, %v12072
        %v12105 = vmul.f32 %v11987, %v12073
        %v12106 = vmul.f32 %v11992, %v12074
        %v12107 = vmul.f32 %v11997, %v12075
        %v12108 = vmul.f32 %v12002, %v12076
        %v12109 = vmul.f32 %v12007, %v12077
        %v12110 = vmul.f32 %v12012, %v12078
        %v12111 = vmul.f32 %v12017, %v12079
        %v12112 = vmul.f32 %v12022, %v12080
        %v12113 = vmul.f32 %v12027, %v12081
        %v12114 = vmul.f32 %v12032, %v12082
        %v12115 = vmul.f32 %v12037, %v12083
        %v12116 = vmul.f32 %v12042, %v12084
        %v12117 = vmul.f32 %v12047, %v12085
        %v12118 = vmul.f32 %v12052, %v12086
        %v12119 = vmul.f32 %v12087, 0.044715
        %v12120 = vmul.f32 %v12088, 0.044715
        %v12121 = vmul.f32 %v12089, 0.044715
        %v12122 = vmul.f32 %v12090, 0.044715
        %v12123 = vmul.f32 %v12091, 0.044715
        %v12124 = vmul.f32 %v12092, 0.044715
        %v12125 = vmul.f32 %v12093, 0.044715
        %v12126 = vmul.f32 %v12094, 0.044715
        %v12127 = vmul.f32 %v12095, 0.044715
        %v12128 = vmul.f32 %v12096, 0.044715
        %v12129 = vmul.f32 %v12097, 0.044715
        %v12130 = vmul.f32 %v12098, 0.044715
        %v12131 = vmul.f32 %v12099, 0.044715
        %v12132 = vmul.f32 %v12100, 0.044715
        %v12133 = vmul.f32 %v12101, 0.044715
        %v12134 = vmul.f32 %v12102, 0.044715
        %v12135 = vmul.f32 %v12103, 0.044715
        %v12136 = vmul.f32 %v12104, 0.044715
        %v12137 = vmul.f32 %v12105, 0.044715
        %v12138 = vmul.f32 %v12106, 0.044715
        %v12139 = vmul.f32 %v12107, 0.044715
        %v12140 = vmul.f32 %v12108, 0.044715
        %v12141 = vmul.f32 %v12109, 0.044715
        %v12142 = vmul.f32 %v12110, 0.044715
        %v12143 = vmul.f32 %v12111, 0.044715
        %v12144 = vmul.f32 %v12112, 0.044715
        %v12145 = vmul.f32 %v12113, 0.044715
        %v12146 = vmul.f32 %v12114, 0.044715
        %v12147 = vmul.f32 %v12115, 0.044715
        %v12148 = vmul.f32 %v12116, 0.044715
        %v12149 = vmul.f32 %v12117, 0.044715
        %v12150 = vmul.f32 %v12118, 0.044715
        %v12151 = vadd.f32 %v11897, %v12119
        %v12152 = vadd.f32 %v11902, %v12120
        %v12153 = vadd.f32 %v11907, %v12121
        %v12154 = vadd.f32 %v11912, %v12122
        %v12155 = vadd.f32 %v11917, %v12123
        %v12156 = vadd.f32 %v11922, %v12124
        %v12157 = vadd.f32 %v11927, %v12125
        %v12158 = vadd.f32 %v11932, %v12126
        %v12159 = vadd.f32 %v11937, %v12127
        %v12160 = vadd.f32 %v11942, %v12128
        %v12161 = vadd.f32 %v11947, %v12129
        %v12162 = vadd.f32 %v11952, %v12130
        %v12163 = vadd.f32 %v11957, %v12131
        %v12164 = vadd.f32 %v11962, %v12132
        %v12165 = vadd.f32 %v11967, %v12133
        %v12166 = vadd.f32 %v11972, %v12134
        %v12167 = vadd.f32 %v11977, %v12135
        %v12168 = vadd.f32 %v11982, %v12136
        %v12169 = vadd.f32 %v11987, %v12137
        %v12170 = vadd.f32 %v11992, %v12138
        %v12171 = vadd.f32 %v11997, %v12139
        %v12172 = vadd.f32 %v12002, %v12140
        %v12173 = vadd.f32 %v12007, %v12141
        %v12174 = vadd.f32 %v12012, %v12142
        %v12175 = vadd.f32 %v12017, %v12143
        %v12176 = vadd.f32 %v12022, %v12144
        %v12177 = vadd.f32 %v12027, %v12145
        %v12178 = vadd.f32 %v12032, %v12146
        %v12179 = vadd.f32 %v12037, %v12147
        %v12180 = vadd.f32 %v12042, %v12148
        %v12181 = vadd.f32 %v12047, %v12149
        %v12182 = vadd.f32 %v12052, %v12150
        %v12183 = vmul.f32 %v12151, 0.7978846
        %v12184 = vmul.f32 %v12152, 0.7978846
        %v12185 = vmul.f32 %v12153, 0.7978846
        %v12186 = vmul.f32 %v12154, 0.7978846
        %v12187 = vmul.f32 %v12155, 0.7978846
        %v12188 = vmul.f32 %v12156, 0.7978846
        %v12189 = vmul.f32 %v12157, 0.7978846
        %v12190 = vmul.f32 %v12158, 0.7978846
        %v12191 = vmul.f32 %v12159, 0.7978846
        %v12192 = vmul.f32 %v12160, 0.7978846
        %v12193 = vmul.f32 %v12161, 0.7978846
        %v12194 = vmul.f32 %v12162, 0.7978846
        %v12195 = vmul.f32 %v12163, 0.7978846
        %v12196 = vmul.f32 %v12164, 0.7978846
        %v12197 = vmul.f32 %v12165, 0.7978846
        %v12198 = vmul.f32 %v12166, 0.7978846
        %v12199 = vmul.f32 %v12167, 0.7978846
        %v12200 = vmul.f32 %v12168, 0.7978846
        %v12201 = vmul.f32 %v12169, 0.7978846
        %v12202 = vmul.f32 %v12170, 0.7978846
        %v12203 = vmul.f32 %v12171, 0.7978846
        %v12204 = vmul.f32 %v12172, 0.7978846
        %v12205 = vmul.f32 %v12173, 0.7978846
        %v12206 = vmul.f32 %v12174, 0.7978846
        %v12207 = vmul.f32 %v12175, 0.7978846
        %v12208 = vmul.f32 %v12176, 0.7978846
        %v12209 = vmul.f32 %v12177, 0.7978846
        %v12210 = vmul.f32 %v12178, 0.7978846
        %v12211 = vmul.f32 %v12179, 0.7978846
        %v12212 = vmul.f32 %v12180, 0.7978846
        %v12213 = vmul.f32 %v12181, 0.7978846
        %v12214 = vmul.f32 %v12182, 0.7978846
        %v12215 = vtanh.pop %v12183
        %v12216 = vtanh.pop %v12184
        %v12217 = vtanh.pop %v12185
        %v12218 = vtanh.pop %v12186
        %v12219 = vtanh.pop %v12187
        %v12220 = vtanh.pop %v12188
        %v12221 = vtanh.pop %v12189
        %v12222 = vtanh.pop %v12190
        %v12223 = vtanh.pop %v12191
        %v12224 = vtanh.pop %v12192
        %v12225 = vtanh.pop %v12193
        %v12226 = vtanh.pop %v12194
        %v12227 = vtanh.pop %v12195
        %v12228 = vtanh.pop %v12196
        %v12229 = vtanh.pop %v12197
        %v12230 = vtanh.pop %v12198
        %v12231 = vtanh.pop %v12199
        %v12232 = vtanh.pop %v12200
        %v12233 = vtanh.pop %v12201
        %v12234 = vtanh.pop %v12202
        %v12235 = vtanh.pop %v12203
        %v12236 = vtanh.pop %v12204
        %v12237 = vtanh.pop %v12205
        %v12238 = vtanh.pop %v12206
        %v12239 = vtanh.pop %v12207
        %v12240 = vtanh.pop %v12208
        %v12241 = vtanh.pop %v12209
        %v12242 = vtanh.pop %v12210
        %v12243 = vtanh.pop %v12211
        %v12244 = vtanh.pop %v12212
        %v12245 = vtanh.pop %v12213
        %v12246 = vtanh.pop %v12214
        %v12247 = vadd.f32 %v12215, 1.0
        %v12248 = vadd.f32 %v12216, 1.0
        %v12249 = vadd.f32 %v12217, 1.0
        %v12250 = vadd.f32 %v12218, 1.0
        %v12251 = vadd.f32 %v12219, 1.0
        %v12252 = vadd.f32 %v12220, 1.0
        %v12253 = vadd.f32 %v12221, 1.0
        %v12254 = vadd.f32 %v12222, 1.0
        %v12255 = vadd.f32 %v12223, 1.0
        %v12256 = vadd.f32 %v12224, 1.0
        %v12257 = vadd.f32 %v12225, 1.0
        %v12258 = vadd.f32 %v12226, 1.0
        %v12259 = vadd.f32 %v12227, 1.0
        %v12260 = vadd.f32 %v12228, 1.0
        %v12261 = vadd.f32 %v12229, 1.0
        %v12262 = vadd.f32 %v12230, 1.0
        %v12263 = vadd.f32 %v12231, 1.0
        %v12264 = vadd.f32 %v12232, 1.0
        %v12265 = vadd.f32 %v12233, 1.0
        %v12266 = vadd.f32 %v12234, 1.0
        %v12267 = vadd.f32 %v12235, 1.0
        %v12268 = vadd.f32 %v12236, 1.0
        %v12269 = vadd.f32 %v12237, 1.0
        %v12270 = vadd.f32 %v12238, 1.0
        %v12271 = vadd.f32 %v12239, 1.0
        %v12272 = vadd.f32 %v12240, 1.0
        %v12273 = vadd.f32 %v12241, 1.0
        %v12274 = vadd.f32 %v12242, 1.0
        %v12275 = vadd.f32 %v12243, 1.0
        %v12276 = vadd.f32 %v12244, 1.0
        %v12277 = vadd.f32 %v12245, 1.0
        %v12278 = vadd.f32 %v12246, 1.0
        %v12279 = vmul.f32 %v12247, 0.5
        %v12280 = vmul.f32 %v12248, 0.5
        %v12281 = vmul.f32 %v12249, 0.5
        %v12282 = vmul.f32 %v12250, 0.5
        %v12283 = vmul.f32 %v12251, 0.5
        %v12284 = vmul.f32 %v12252, 0.5
        %v12285 = vmul.f32 %v12253, 0.5
        %v12286 = vmul.f32 %v12254, 0.5
        %v12287 = vmul.f32 %v12255, 0.5
        %v12288 = vmul.f32 %v12256, 0.5
        %v12289 = vmul.f32 %v12257, 0.5
        %v12290 = vmul.f32 %v12258, 0.5
        %v12291 = vmul.f32 %v12259, 0.5
        %v12292 = vmul.f32 %v12260, 0.5
        %v12293 = vmul.f32 %v12261, 0.5
        %v12294 = vmul.f32 %v12262, 0.5
        %v12295 = vmul.f32 %v12263, 0.5
        %v12296 = vmul.f32 %v12264, 0.5
        %v12297 = vmul.f32 %v12265, 0.5
        %v12298 = vmul.f32 %v12266, 0.5
        %v12299 = vmul.f32 %v12267, 0.5
        %v12300 = vmul.f32 %v12268, 0.5
        %v12301 = vmul.f32 %v12269, 0.5
        %v12302 = vmul.f32 %v12270, 0.5
        %v12303 = vmul.f32 %v12271, 0.5
        %v12304 = vmul.f32 %v12272, 0.5
        %v12305 = vmul.f32 %v12273, 0.5
        %v12306 = vmul.f32 %v12274, 0.5
        %v12307 = vmul.f32 %v12275, 0.5
        %v12308 = vmul.f32 %v12276, 0.5
        %v12309 = vmul.f32 %v12277, 0.5
        %v12310 = vmul.f32 %v12278, 0.5
        %v12311 = vmul.f32 %v11897, %v12279
        %v12312 = vmul.f32 %v11902, %v12280
        %v12313 = vmul.f32 %v11907, %v12281
        %v12314 = vmul.f32 %v11912, %v12282
        %v12315 = vmul.f32 %v11917, %v12283
        %v12316 = vmul.f32 %v11922, %v12284
        %v12317 = vmul.f32 %v11927, %v12285
        %v12318 = vmul.f32 %v11932, %v12286
        %v12319 = vmul.f32 %v11937, %v12287
        %v12320 = vmul.f32 %v11942, %v12288
        %v12321 = vmul.f32 %v11947, %v12289
        %v12322 = vmul.f32 %v11952, %v12290
        %v12323 = vmul.f32 %v11957, %v12291
        %v12324 = vmul.f32 %v11962, %v12292
        %v12325 = vmul.f32 %v11967, %v12293
        %v12326 = vmul.f32 %v11972, %v12294
        %v12327 = vmul.f32 %v11977, %v12295
        %v12328 = vmul.f32 %v11982, %v12296
        %v12329 = vmul.f32 %v11987, %v12297
        %v12330 = vmul.f32 %v11992, %v12298
        %v12331 = vmul.f32 %v11997, %v12299
        %v12332 = vmul.f32 %v12002, %v12300
        %v12333 = vmul.f32 %v12007, %v12301
        %v12334 = vmul.f32 %v12012, %v12302
        %v12335 = vmul.f32 %v12017, %v12303
        %v12336 = vmul.f32 %v12022, %v12304
        %v12337 = vmul.f32 %v12027, %v12305
        %v12338 = vmul.f32 %v12032, %v12306
        %v12339 = vmul.f32 %v12037, %v12307
        %v12340 = vmul.f32 %v12042, %v12308
        %v12341 = vmul.f32 %v12047, %v12309
        %v12342 = vmul.f32 %v12052, %v12310
        %v12343 = vmul.f32 %v12311, %v12311
        %v12344 = vmul.f32 %v12312, %v12312
        %v12345 = vmul.f32 %v12313, %v12313
        %v12346 = vmul.f32 %v12314, %v12314
        %v12347 = vmul.f32 %v12315, %v12315
        %v12348 = vmul.f32 %v12316, %v12316
        %v12349 = vmul.f32 %v12317, %v12317
        %v12350 = vmul.f32 %v12318, %v12318
        %v12351 = vmul.f32 %v12319, %v12319
        %v12352 = vmul.f32 %v12320, %v12320
        %v12353 = vmul.f32 %v12321, %v12321
        %v12354 = vmul.f32 %v12322, %v12322
        %v12355 = vmul.f32 %v12323, %v12323
        %v12356 = vmul.f32 %v12324, %v12324
        %v12357 = vmul.f32 %v12325, %v12325
        %v12358 = vmul.f32 %v12326, %v12326
        %v12359 = vmul.f32 %v12327, %v12327
        %v12360 = vmul.f32 %v12328, %v12328
        %v12361 = vmul.f32 %v12329, %v12329
        %v12362 = vmul.f32 %v12330, %v12330
        %v12363 = vmul.f32 %v12331, %v12331
        %v12364 = vmul.f32 %v12332, %v12332
        %v12365 = vmul.f32 %v12333, %v12333
        %v12366 = vmul.f32 %v12334, %v12334
        %v12367 = vmul.f32 %v12335, %v12335
        %v12368 = vmul.f32 %v12336, %v12336
        %v12369 = vmul.f32 %v12337, %v12337
        %v12370 = vmul.f32 %v12338, %v12338
        %v12371 = vmul.f32 %v12339, %v12339
        %v12372 = vmul.f32 %v12340, %v12340
        %v12373 = vmul.f32 %v12341, %v12341
        %v12374 = vmul.f32 %v12342, %v12342
        %v12375 = vadd.f32 %v12343, %v12344
        %v12376 = vadd.f32 %v12375, %v12345
        %v12377 = vadd.f32 %v12376, %v12346
        %v12378 = vadd.f32 %v12377, %v12347
        %v12379 = vadd.f32 %v12378, %v12348
        %v12380 = vadd.f32 %v12379, %v12349
        %v12381 = vadd.f32 %v12380, %v12350
        %v12382 = vadd.f32 %v12381, %v12351
        %v12383 = vadd.f32 %v12382, %v12352
        %v12384 = vadd.f32 %v12383, %v12353
        %v12385 = vadd.f32 %v12384, %v12354
        %v12386 = vadd.f32 %v12385, %v12355
        %v12387 = vadd.f32 %v12386, %v12356
        %v12388 = vadd.f32 %v12387, %v12357
        %v12389 = vadd.f32 %v12388, %v12358
        %v12390 = vadd.f32 %v12389, %v12359
        %v12391 = vadd.f32 %v12390, %v12360
        %v12392 = vadd.f32 %v12391, %v12361
        %v12393 = vadd.f32 %v12392, %v12362
        %v12394 = vadd.f32 %v12393, %v12363
        %v12395 = vadd.f32 %v12394, %v12364
        %v12396 = vadd.f32 %v12395, %v12365
        %v12397 = vadd.f32 %v12396, %v12366
        %v12398 = vadd.f32 %v12397, %v12367
        %v12399 = vadd.f32 %v12398, %v12368
        %v12400 = vadd.f32 %v12399, %v12369
        %v12401 = vadd.f32 %v12400, %v12370
        %v12402 = vadd.f32 %v12401, %v12371
        %v12403 = vadd.f32 %v12402, %v12372
        %v12404 = vadd.f32 %v12403, %v12373
        %v12405 = vadd.f32 %v12404, %v12374
        %v12406 = vrot.slane %v12405, 4
        %v12407 = vadd.f32 %v12405, %v12406
        %v12408 = vrot.slane %v12407, 2
        %v12409 = vadd.f32 %v12407, %v12408
        %v12410 = vrot.slane %v12409, 1
        %v12411 = vadd.f32 %v12409, %v12410
        %v12412 = vrsqrt.pop %v12411
        %v12413 = vmul.f32 %v12411, %v12412
        %vm12414 = vcmp.eq.f32.partialorder %v12411, inf
        %v12415 = vsel %vm12414, %v12411, %v12413
        %vm12416 = vcmp.eq.f32.partialorder %v12411, 0.0
        %v12417 = vand.u32 %v12411, 2147483648
        %v12418 = vsel %vm12416, %v12417, %v12415
        %12419 = vadd.xlane.f32.xlu0 %v12418
        %v12420 = vpop.xlane.xlu0 %12419
        %v12421 = vrcp.pop 128.0
        %v12422 = vmul.f32 %v12420, %v12421
        %v12423 = vadd.f32 %v12422, 1e-06
        %v12424 = vrcp.pop %v12423
        %v12425 = vmul.f32 %v12418, %v12424
        %v12426 = vld [vmem:[%s7] sm:$0x1]
        %v12427 = vmul.f32 %v12311, %v12425
        %v12428 = vmul.f32 %v12312, %v12425
        %v12429 = vmul.f32 %v12313, %v12425
        %v12430 = vmul.f32 %v12314, %v12425
        %v12431 = vmul.f32 %v12315, %v12425
        %v12432 = vmul.f32 %v12316, %v12425
        %v12433 = vmul.f32 %v12317, %v12425
        %v12434 = vmul.f32 %v12318, %v12425
        %v12435 = vmul.f32 %v12319, %v12425
        %v12436 = vmul.f32 %v12320, %v12425
        %v12437 = vmul.f32 %v12321, %v12425
        %v12438 = vmul.f32 %v12322, %v12425
        %v12439 = vmul.f32 %v12323, %v12425
        %v12440 = vmul.f32 %v12324, %v12425
        %v12441 = vmul.f32 %v12325, %v12425
        %v12442 = vmul.f32 %v12326, %v12425
        %v12443 = vmul.f32 %v12327, %v12425
        %v12444 = vmul.f32 %v12328, %v12425
        %v12445 = vmul.f32 %v12329, %v12425
        %v12446 = vmul.f32 %v12330, %v12425
        %v12447 = vmul.f32 %v12331, %v12425
        %v12448 = vmul.f32 %v12332, %v12425
        %v12449 = vmul.f32 %v12333, %v12425
        %v12450 = vmul.f32 %v12334, %v12425
        %v12451 = vmul.f32 %v12335, %v12425
        %v12452 = vmul.f32 %v12336, %v12425
        %v12453 = vmul.f32 %v12337, %v12425
        %v12454 = vmul.f32 %v12338, %v12425
        %v12455 = vmul.f32 %v12339, %v12425
        %v12456 = vmul.f32 %v12340, %v12425
        %v12457 = vmul.f32 %v12341, %v12425
        %v12458 = vmul.f32 %v12342, %v12425
        %v12460 = vlaneseq
        %v12461 = vshrl.u32 %v12460, 7
        %v12462 = vsub.s32 0, %v12461
        %v12463 = vrot.slane %v12426, %v12462
        %v12465 = vmul.f32 %v12463, %v12427
        %v12466 = vmul.f32 %v12463, %v12428
        %v12467 = vmul.f32 %v12463, %v12429
        %v12468 = vmul.f32 %v12463, %v12430
        %v12469 = vmul.f32 %v12463, %v12431
        %v12470 = vmul.f32 %v12463, %v12432
        %v12471 = vmul.f32 %v12463, %v12433
        %v12472 = vmul.f32 %v12463, %v12434
        %v12473 = vmul.f32 %v12463, %v12435
        %v12474 = vmul.f32 %v12463, %v12436
        %v12475 = vmul.f32 %v12463, %v12437
        %v12476 = vmul.f32 %v12463, %v12438
        %v12477 = vmul.f32 %v12463, %v12439
        %v12478 = vmul.f32 %v12463, %v12440
        %v12479 = vmul.f32 %v12463, %v12441
        %v12480 = vmul.f32 %v12463, %v12442
        %v12481 = vmul.f32 %v12463, %v12443
        %v12482 = vmul.f32 %v12463, %v12444
        %v12483 = vmul.f32 %v12463, %v12445
        %v12484 = vmul.f32 %v12463, %v12446
        %v12485 = vmul.f32 %v12463, %v12447
        %v12486 = vmul.f32 %v12463, %v12448
        %v12487 = vmul.f32 %v12463, %v12449
        %v12488 = vmul.f32 %v12463, %v12450
        %v12489 = vmul.f32 %v12463, %v12451
        %v12490 = vmul.f32 %v12463, %v12452
        %v12491 = vmul.f32 %v12463, %v12453
        %v12492 = vmul.f32 %v12463, %v12454
        %v12493 = vmul.f32 %v12463, %v12455
        %v12494 = vmul.f32 %v12463, %v12456
        %v12495 = vmul.f32 %v12463, %v12457
        %v12496 = vmul.f32 %v12463, %v12458
        %v12497 = vld [vmem:[%s8] sm:$0x1]
        %v12499 = vlaneseq
        %v12500 = vshrl.u32 %v12499, 7
        %v12501 = vsub.s32 0, %v12500
        %v12502 = vrot.slane %v12497, %v12501
        %v12504 = vadd.f32 %v12465, %v12502
        %v12505 = vadd.f32 %v12466, %v12502
        %v12506 = vadd.f32 %v12467, %v12502
        %v12507 = vadd.f32 %v12468, %v12502
        %v12508 = vadd.f32 %v12469, %v12502
        %v12509 = vadd.f32 %v12470, %v12502
        %v12510 = vadd.f32 %v12471, %v12502
        %v12511 = vadd.f32 %v12472, %v12502
        %v12512 = vadd.f32 %v12473, %v12502
        %v12513 = vadd.f32 %v12474, %v12502
        %v12514 = vadd.f32 %v12475, %v12502
        %v12515 = vadd.f32 %v12476, %v12502
        %v12516 = vadd.f32 %v12477, %v12502
        %v12517 = vadd.f32 %v12478, %v12502
        %v12518 = vadd.f32 %v12479, %v12502
        %v12519 = vadd.f32 %v12480, %v12502
        %v12520 = vadd.f32 %v12481, %v12502
        %v12521 = vadd.f32 %v12482, %v12502
        %v12522 = vadd.f32 %v12483, %v12502
        %v12523 = vadd.f32 %v12484, %v12502
        %v12524 = vadd.f32 %v12485, %v12502
        %v12525 = vadd.f32 %v12486, %v12502
        %v12526 = vadd.f32 %v12487, %v12502
        %v12527 = vadd.f32 %v12488, %v12502
        %v12528 = vadd.f32 %v12489, %v12502
        %v12529 = vadd.f32 %v12490, %v12502
        %v12530 = vadd.f32 %v12491, %v12502
        %v12531 = vadd.f32 %v12492, %v12502
        %v12532 = vadd.f32 %v12493, %v12502
        %v12533 = vadd.f32 %v12494, %v12502
        %v12534 = vadd.f32 %v12495, %v12502
        %v12535 = vadd.f32 %v12496, %v12502
        %v12536 = vadd.f32 %v12504, %v12311
        %v12537 = vadd.f32 %v12505, %v12312
        %v12538 = vadd.f32 %v12506, %v12313
        %v12539 = vadd.f32 %v12507, %v12314
        %v12540 = vadd.f32 %v12508, %v12315
        %v12541 = vadd.f32 %v12509, %v12316
        %v12542 = vadd.f32 %v12510, %v12317
        %v12543 = vadd.f32 %v12511, %v12318
        %v12544 = vadd.f32 %v12512, %v12319
        %v12545 = vadd.f32 %v12513, %v12320
        %v12546 = vadd.f32 %v12514, %v12321
        %v12547 = vadd.f32 %v12515, %v12322
        %v12548 = vadd.f32 %v12516, %v12323
        %v12549 = vadd.f32 %v12517, %v12324
        %v12550 = vadd.f32 %v12518, %v12325
        %v12551 = vadd.f32 %v12519, %v12326
        %v12552 = vadd.f32 %v12520, %v12327
        %v12553 = vadd.f32 %v12521, %v12328
        %v12554 = vadd.f32 %v12522, %v12329
        %v12555 = vadd.f32 %v12523, %v12330
        %v12556 = vadd.f32 %v12524, %v12331
        %v12557 = vadd.f32 %v12525, %v12332
        %v12558 = vadd.f32 %v12526, %v12333
        %v12559 = vadd.f32 %v12527, %v12334
        %v12560 = vadd.f32 %v12528, %v12335
        %v12561 = vadd.f32 %v12529, %v12336
        %v12562 = vadd.f32 %v12530, %v12337
        %v12563 = vadd.f32 %v12531, %v12338
        %v12564 = vadd.f32 %v12532, %v12339
        %v12565 = vadd.f32 %v12533, %v12340
        %v12566 = vadd.f32 %v12534, %v12341
        %v12567 = vadd.f32 %v12535, %v12342
        %v12568 = vld [vmem:[%s9] sm:$0xff]
        %v12569 = vld [vmem:[%s9 + $0x8] sm:$0xff]
        %v12570 = vld [vmem:[%s9 + $0x10] sm:$0xff]
        %v12571 = vld [vmem:[%s9 + $0x18] sm:$0xff]
        %v12572 = vld [vmem:[%s9 + $0x20] sm:$0xff]
        %v12573 = vld [vmem:[%s9 + $0x28] sm:$0xff]
        %v12574 = vld [vmem:[%s9 + $0x30] sm:$0xff]
        %v12575 = vld [vmem:[%s9 + $0x38] sm:$0xff]
        %v12576 = vld [vmem:[%s9 + $0x40] sm:$0xff]
        %v12577 = vld [vmem:[%s9 + $0x48] sm:$0xff]
        %v12578 = vld [vmem:[%s9 + $0x50] sm:$0xff]
        %v12579 = vld [vmem:[%s9 + $0x58] sm:$0xff]
        %v12580 = vld [vmem:[%s9 + $0x60] sm:$0xff]
        %v12581 = vld [vmem:[%s9 + $0x68] sm:$0xff]
        %v12582 = vld [vmem:[%s9 + $0x70] sm:$0xff]
        %v12583 = vld [vmem:[%s9 + $0x78] sm:$0xff]
        %v12584 = vld [vmem:[%s10] sm:$0x1]
        %v12586 = vlaneseq
        %v12587 = vshrl.u32 %v12586, 7
        %v12588 = vsub.s32 0, %v12587
        %v12589 = vrot.slane %v12584, %v12588
        %12591 = vmatprep.subr.mxu0 0.0
        %12592 = vmatpush1.msra.mxu0 %v12568
        %12593 = vmatprep.subr.mxu0 0.0
        %12594 = vmatpush1.msra.mxu0 %v12569
        %12595 = vmatprep.subr.mxu0 0.0
        %12596 = vmatpush1.msra.mxu0 %v12570
        %12597 = vmatprep.subr.mxu0 0.0
        %12598 = vmatpush1.msra.mxu0 %v12571
        %12599 = vmatprep.subr.mxu0 0.0
        %12600 = vmatpush1.msra.mxu0 %v12572
        %12601 = vmatprep.subr.mxu0 0.0
        %12602 = vmatpush1.msra.mxu0 %v12573
        %12603 = vmatprep.subr.mxu0 0.0
        %12604 = vmatpush1.msra.mxu0 %v12574
        %12605 = vmatprep.subr.mxu0 0.0
        %12606 = vmatpush1.msra.mxu0 %v12575
        %12607 = vmatprep.subr.mxu0 0.0
        %12608 = vmatpush1.msra.mxu0 %v12576
        %12609 = vmatprep.subr.mxu0 0.0
        %12610 = vmatpush1.msra.mxu0 %v12577
        %12611 = vmatprep.subr.mxu0 0.0
        %12612 = vmatpush1.msra.mxu0 %v12578
        %12613 = vmatprep.subr.mxu0 0.0
        %12614 = vmatpush1.msra.mxu0 %v12579
        %12615 = vmatprep.subr.mxu0 0.0
        %12616 = vmatpush1.msra.mxu0 %v12580
        %12617 = vmatprep.subr.mxu0 0.0
        %12618 = vmatpush1.msra.mxu0 %v12581
        %12619 = vmatprep.subr.mxu0 0.0
        %12620 = vmatpush1.msra.mxu0 %v12582
        %12621 = vmatprep.subr.mxu0 0.0
        %12622 = vmatpush1.msra.mxu0 %v12583
        %12623 = vmatprep.subr.mxu0 0.0
        %12624 = vmatpush1.msra.mxu0 0.0
        %12625 = vmatprep.subr.mxu0 0.0
        %12626 = vmatpush1.msra.mxu0 0.0
        %12627 = vmatprep.subr.mxu0 0.0
        %12628 = vmatpush1.msra.mxu0 0.0
        %12629 = vmatprep.subr.mxu0 0.0
        %12630 = vmatpush1.msra.mxu0 0.0
        %12631 = vmatprep.subr.mxu0 0.0
        %12632 = vmatpush1.msra.mxu0 0.0
        %12633 = vmatprep.subr.mxu0 0.0
        %12634 = vmatpush1.msra.mxu0 0.0
        %12635 = vmatprep.subr.mxu0 0.0
        %12636 = vmatpush1.msra.mxu0 0.0
        %12637 = vmatprep.subr.mxu0 0.0
        %12638 = vmatpush1.msra.mxu0 0.0
        %12639 = vmatprep.subr.mxu0 0.0
        %12640 = vmatpush1.msra.mxu0 0.0
        %12641 = vmatprep.subr.mxu0 0.0
        %12642 = vmatpush1.msra.mxu0 0.0
        %12643 = vmatprep.subr.mxu0 0.0
        %12644 = vmatpush1.msra.mxu0 0.0
        %12645 = vmatprep.subr.mxu0 0.0
        %12646 = vmatpush1.msra.mxu0 0.0
        %12647 = vmatprep.subr.mxu0 0.0
        %12648 = vmatpush1.msra.mxu0 0.0
        %12649 = vmatprep.subr.mxu0 0.0
        %12650 = vmatpush1.msra.mxu0 0.0
        %12651 = vmatprep.subr.mxu0 0.0
        %12652 = vmatpush1.msra.mxu0 0.0
        %12653 = vmatprep.subr.mxu0 0.0
        %12654 = vmatpush1.msra.mxu0 0.0
        %12655 = vmatprep.mubr.f32.mxu0 0.0
        %12656 = vmatmul.mubr.f32.gmra.mrb[0].mxu0 %v12536
        %v12657 = vpop.f32.mrb[0].mxu0
        %v12658 = vadd.f32 %v12589, %v12657
        %v12659 = vpop.f32.mrb[0].mxu0
        %12660 = vmatprep.mubr.f32.mxu0 0.0
        %12661 = vmatmul.mubr.f32.gmra.mrb[0].mxu0 %v12537
        %v12662 = vpop.f32.mrb[0].mxu0
        %v12663 = vadd.f32 %v12589, %v12662
        %v12664 = vpop.f32.mrb[0].mxu0
        %12665 = vmatprep.mubr.f32.mxu0 0.0
        %12666 = vmatmul.mubr.f32.gmra.mrb[0].mxu0 %v12538
        %v12667 = vpop.f32.mrb[0].mxu0
        %v12668 = vadd.f32 %v12589, %v12667
        %v12669 = vpop.f32.mrb[0].mxu0
        %12670 = vmatprep.mubr.f32.mxu0 0.0
        %12671 = vmatmul.mubr.f32.gmra.mrb[0].mxu0 %v12539
        %v12672 = vpop.f32.mrb[0].mxu0
        %v12673 = vadd.f32 %v12589, %v12672
        %v12674 = vpop.f32.mrb[0].mxu0
        %12675 = vmatprep.mubr.f32.mxu0 0.0
        %12676 = vmatmul.mubr.f32.gmra.mrb[0].mxu0 %v12540
        %v12677 = vpop.f32.mrb[0].mxu0
        %v12678 = vadd.f32 %v12589, %v12677
        %v12679 = vpop.f32.mrb[0].mxu0
        %12680 = vmatprep.mubr.f32.mxu0 0.0
        %12681 = vmatmul.mubr.f32.gmra.mrb[0].mxu0 %v12541
        %v12682 = vpop.f32.mrb[0].mxu0
        %v12683 = vadd.f32 %v12589, %v12682
        %v12684 = vpop.f32.mrb[0].mxu0
        %12685 = vmatprep.mubr.f32.mxu0 0.0
        %12686 = vmatmul.mubr.f32.gmra.mrb[0].mxu0 %v12542
        %v12687 = vpop.f32.mrb[0].mxu0
        %v12688 = vadd.f32 %v12589, %v12687
        %v12689 = vpop.f32.mrb[0].mxu0
        %12690 = vmatprep.mubr.f32.mxu0 0.0
        %12691 = vmatmul.mubr.f32.gmra.mrb[0].mxu0 %v12543
        %v12692 = vpop.f32.mrb[0].mxu0
        %v12693 = vadd.f32 %v12589, %v12692
        %v12694 = vpop.f32.mrb[0].mxu0
        %12695 = vmatprep.mubr.f32.mxu0 0.0
        %12696 = vmatmul.mubr.f32.gmra.mrb[0].mxu0 %v12544
        %v12697 = vpop.f32.mrb[0].mxu0
        %v12698 = vadd.f32 %v12589, %v12697
        %v12699 = vpop.f32.mrb[0].mxu0
        %12700 = vmatprep.mubr.f32.mxu0 0.0
        %12701 = vmatmul.mubr.f32.gmra.mrb[0].mxu0 %v12545
        %v12702 = vpop.f32.mrb[0].mxu0
        %v12703 = vadd.f32 %v12589, %v12702
        %v12704 = vpop.f32.mrb[0].mxu0
        %12705 = vmatprep.mubr.f32.mxu0 0.0
        %12706 = vmatmul.mubr.f32.gmra.mrb[0].mxu0 %v12546
        %v12707 = vpop.f32.mrb[0].mxu0
        %v12708 = vadd.f32 %v12589, %v12707
        %v12709 = vpop.f32.mrb[0].mxu0
        %12710 = vmatprep.mubr.f32.mxu0 0.0
        %12711 = vmatmul.mubr.f32.gmra.mrb[0].mxu0 %v12547
        %v12712 = vpop.f32.mrb[0].mxu0
        %v12713 = vadd.f32 %v12589, %v12712
        %v12714 = vpop.f32.mrb[0].mxu0
        %12715 = vmatprep.mubr.f32.mxu0 0.0
        %12716 = vmatmul.mubr.f32.gmra.mrb[0].mxu0 %v12548
        %v12717 = vpop.f32.mrb[0].mxu0
        %v12718 = vadd.f32 %v12589, %v12717
        %v12719 = vpop.f32.mrb[0].mxu0
        %12720 = vmatprep.mubr.f32.mxu0 0.0
        %12721 = vmatmul.mubr.f32.gmra.mrb[0].mxu0 %v12549
        %v12722 = vpop.f32.mrb[0].mxu0
        %v12723 = vadd.f32 %v12589, %v12722
        %v12724 = vpop.f32.mrb[0].mxu0
        %12725 = vmatprep.mubr.f32.mxu0 0.0
        %12726 = vmatmul.mubr.f32.gmra.mrb[0].mxu0 %v12550
        %v12727 = vpop.f32.mrb[0].mxu0
        %v12728 = vadd.f32 %v12589, %v12727
        %v12729 = vpop.f32.mrb[0].mxu0
        %12730 = vmatprep.mubr.f32.mxu0 0.0
        %12731 = vmatmul.mubr.f32.gmra.mrb[0].mxu0 %v12551
        %v12732 = vpop.f32.mrb[0].mxu0
        %v12733 = vadd.f32 %v12589, %v12732
        %v12734 = vpop.f32.mrb[0].mxu0
        %12735 = vmatprep.mubr.f32.mxu0 0.0
        %12736 = vmatmul.mubr.f32.gmra.mrb[0].mxu0 %v12552
        %v12737 = vpop.f32.mrb[0].mxu0
        %v12738 = vadd.f32 %v12589, %v12737
        %v12739 = vpop.f32.mrb[0].mxu0
        %12740 = vmatprep.mubr.f32.mxu0 0.0
        %12741 = vmatmul.mubr.f32.gmra.mrb[0].mxu0 %v12553
        %v12742 = vpop.f32.mrb[0].mxu0
        %v12743 = vadd.f32 %v12589, %v12742
        %v12744 = vpop.f32.mrb[0].mxu0
        %12745 = vmatprep.mubr.f32.mxu0 0.0
        %12746 = vmatmul.mubr.f32.gmra.mrb[0].mxu0 %v12554
        %v12747 = vpop.f32.mrb[0].mxu0
        %v12748 = vadd.f32 %v12589, %v12747
        %v12749 = vpop.f32.mrb[0].mxu0
        %12750 = vmatprep.mubr.f32.mxu0 0.0
        %12751 = vmatmul.mubr.f32.gmra.mrb[0].mxu0 %v12555
        %v12752 = vpop.f32.mrb[0].mxu0
        %v12753 = vadd.f32 %v12589, %v12752
        %v12754 = vpop.f32.mrb[0].mxu0
        %12755 = vmatprep.mubr.f32.mxu0 0.0
        %12756 = vmatmul.mubr.f32.gmra.mrb[0].mxu0 %v12556
        %v12757 = vpop.f32.mrb[0].mxu0
        %v12758 = vadd.f32 %v12589, %v12757
        %v12759 = vpop.f32.mrb[0].mxu0
        %12760 = vmatprep.mubr.f32.mxu0 0.0
        %12761 = vmatmul.mubr.f32.gmra.mrb[0].mxu0 %v12557
        %v12762 = vpop.f32.mrb[0].mxu0
        %v12763 = vadd.f32 %v12589, %v12762
        %v12764 = vpop.f32.mrb[0].mxu0
        %12765 = vmatprep.mubr.f32.mxu0 0.0
        %12766 = vmatmul.mubr.f32.gmra.mrb[0].mxu0 %v12558
        %v12767 = vpop.f32.mrb[0].mxu0
        %v12768 = vadd.f32 %v12589, %v12767
        %v12769 = vpop.f32.mrb[0].mxu0
        %12770 = vmatprep.mubr.f32.mxu0 0.0
        %12771 = vmatmul.mubr.f32.gmra.mrb[0].mxu0 %v12559
        %v12772 = vpop.f32.mrb[0].mxu0
        %v12773 = vadd.f32 %v12589, %v12772
        %v12774 = vpop.f32.mrb[0].mxu0
        %12775 = vmatprep.mubr.f32.mxu0 0.0
        %12776 = vmatmul.mubr.f32.gmra.mrb[0].mxu0 %v12560
        %v12777 = vpop.f32.mrb[0].mxu0
        %v12778 = vadd.f32 %v12589, %v12777
        %v12779 = vpop.f32.mrb[0].mxu0
        %12780 = vmatprep.mubr.f32.mxu0 0.0
        %12781 = vmatmul.mubr.f32.gmra.mrb[0].mxu0 %v12561
        %v12782 = vpop.f32.mrb[0].mxu0
        %v12783 = vadd.f32 %v12589, %v12782
        %v12784 = vpop.f32.mrb[0].mxu0
        %12785 = vmatprep.mubr.f32.mxu0 0.0
        %12786 = vmatmul.mubr.f32.gmra.mrb[0].mxu0 %v12562
        %v12787 = vpop.f32.mrb[0].mxu0
        %v12788 = vadd.f32 %v12589, %v12787
        %v12789 = vpop.f32.mrb[0].mxu0
        %12790 = vmatprep.mubr.f32.mxu0 0.0
        %12791 = vmatmul.mubr.f32.gmra.mrb[0].mxu0 %v12563
        %v12792 = vpop.f32.mrb[0].mxu0
        %v12793 = vadd.f32 %v12589, %v12792
        %v12794 = vpop.f32.mrb[0].mxu0
        %12795 = vmatprep.mubr.f32.mxu0 0.0
        %12796 = vmatmul.mubr.f32.gmra.mrb[0].mxu0 %v12564
        %v12797 = vpop.f32.mrb[0].mxu0
        %v12798 = vadd.f32 %v12589, %v12797
        %v12799 = vpop.f32.mrb[0].mxu0
        %12800 = vmatprep.mubr.f32.mxu0 0.0
        %12801 = vmatmul.mubr.f32.gmra.mrb[0].mxu0 %v12565
        %v12802 = vpop.f32.mrb[0].mxu0
        %v12803 = vadd.f32 %v12589, %v12802
        %v12804 = vpop.f32.mrb[0].mxu0
        %12805 = vmatprep.mubr.f32.mxu0 0.0
        %12806 = vmatmul.mubr.f32.gmra.mrb[0].mxu0 %v12566
        %v12807 = vpop.f32.mrb[0].mxu0
        %v12808 = vadd.f32 %v12589, %v12807
        %v12809 = vpop.f32.mrb[0].mxu0
        %12810 = vmatprep.mubr.f32.mxu0 0.0
        %12811 = vmatmul.mubr.f32.gmra.mrb[0].mxu0 %v12567
        %v12812 = vpop.f32.mrb[0].mxu0
        %v12813 = vadd.f32 %v12589, %v12812
        %v12814 = vpop.f32.mrb[0].mxu0
        %12815 = vdwg.mxu0
        %v12848 = vrot.slane %v12658, 5
        %v12849 = vrot.slane %v12663, 5
        %v12850 = vsel %vm1606, %v12848, %v12849
        %v12851 = vrot.slane %v12668, 5
        %v12852 = vrot.slane %v12673, 5
        %v12853 = vsel %vm1606, %v12851, %v12852
        %v12854 = vrot.slane %v12678, 5
        %v12855 = vrot.slane %v12683, 5
        %v12856 = vsel %vm1606, %v12854, %v12855
        %v12857 = vrot.slane %v12688, 5
        %v12858 = vrot.slane %v12693, 5
        %v12859 = vsel %vm1606, %v12857, %v12858
        %v12860 = vrot.slane %v12698, 5
        %v12861 = vrot.slane %v12703, 5
        %v12862 = vsel %vm1606, %v12860, %v12861
        %v12863 = vrot.slane %v12708, 5
        %v12864 = vrot.slane %v12713, 5
        %v12865 = vsel %vm1606, %v12863, %v12864
        %v12866 = vrot.slane %v12718, 5
        %v12867 = vrot.slane %v12723, 5
        %v12868 = vsel %vm1606, %v12866, %v12867
        %v12869 = vrot.slane %v12728, 5
        %v12870 = vrot.slane %v12733, 5
        %v12871 = vsel %vm1606, %v12869, %v12870
        %v12872 = vrot.slane %v12738, 5
        %v12873 = vrot.slane %v12743, 5
        %v12874 = vsel %vm1606, %v12872, %v12873
        %v12875 = vrot.slane %v12748, 5
        %v12876 = vrot.slane %v12753, 5
        %v12877 = vsel %vm1606, %v12875, %v12876
        %v12878 = vrot.slane %v12758, 5
        %v12879 = vrot.slane %v12763, 5
        %v12880 = vsel %vm1606, %v12878, %v12879
        %v12881 = vrot.slane %v12768, 5
        %v12882 = vrot.slane %v12773, 5
        %v12883 = vsel %vm1606, %v12881, %v12882
        %v12884 = vrot.slane %v12778, 5
        %v12885 = vrot.slane %v12783, 5
        %v12886 = vsel %vm1606, %v12884, %v12885
        %v12887 = vrot.slane %v12788, 5
        %v12888 = vrot.slane %v12793, 5
        %v12889 = vsel %vm1606, %v12887, %v12888
        %v12890 = vrot.slane %v12798, 5
        %v12891 = vrot.slane %v12803, 5
        %v12892 = vsel %vm1606, %v12890, %v12891
        %v12893 = vrot.slane %v12808, 5
        %v12894 = vrot.slane %v12813, 5
        %v12895 = vsel %vm1606, %v12893, %v12894
        %v12944 = vadd.f32 %v394, %v12848
        %v12945 = vadd.f32 %v395, %v12850
        %v12946 = vadd.f32 %v396, %v12849
        %v12947 = vadd.f32 %v397, %v12851
        %v12948 = vadd.f32 %v398, %v12853
        %v12949 = vadd.f32 %v399, %v12852
        %v12950 = vadd.f32 %v400, %v12854
        %v12951 = vadd.f32 %v401, %v12856
        %v12952 = vadd.f32 %v402, %v12855
        %v12953 = vadd.f32 %v403, %v12857
        %v12954 = vadd.f32 %v404, %v12859
        %v12955 = vadd.f32 %v405, %v12858
        %v12956 = vadd.f32 %v406, %v12860
        %v12957 = vadd.f32 %v407, %v12862
        %v12958 = vadd.f32 %v408, %v12861
        %v12959 = vadd.f32 %v409, %v12863
        %v12960 = vadd.f32 %v410, %v12865
        %v12961 = vadd.f32 %v411, %v12864
        %v12962 = vadd.f32 %v412, %v12866
        %v12963 = vadd.f32 %v413, %v12868
        %v12964 = vadd.f32 %v414, %v12867
        %v12965 = vadd.f32 %v415, %v12869
        %v12966 = vadd.f32 %v416, %v12871
        %v12967 = vadd.f32 %v417, %v12870
        %v12968 = vadd.f32 %v418, %v12872
        %v12969 = vadd.f32 %v419, %v12874
        %v12970 = vadd.f32 %v420, %v12873
        %v12971 = vadd.f32 %v421, %v12875
        %v12972 = vadd.f32 %v422, %v12877
        %v12973 = vadd.f32 %v423, %v12876
        %v12974 = vadd.f32 %v424, %v12878
        %v12975 = vadd.f32 %v425, %v12880
        %v12976 = vadd.f32 %v426, %v12879
        %v12977 = vadd.f32 %v427, %v12881
        %v12978 = vadd.f32 %v428, %v12883
        %v12979 = vadd.f32 %v429, %v12882
        %v12980 = vadd.f32 %v430, %v12884
        %v12981 = vadd.f32 %v431, %v12886
        %v12982 = vadd.f32 %v432, %v12885
        %v12983 = vadd.f32 %v433, %v12887
        %v12984 = vadd.f32 %v434, %v12889
        %v12985 = vadd.f32 %v435, %v12888
        %v12986 = vadd.f32 %v436, %v12890
        %v12987 = vadd.f32 %v437, %v12892
        %v12988 = vadd.f32 %v438, %v12891
        %v12989 = vadd.f32 %v439, %v12893
        %v12990 = vadd.f32 %v440, %v12895
        %v12991 = vadd.f32 %v441, %v12894
        %vm12992 = vcmask 261123
        %12993 = vst.msk [vmem:[%s379 - $0x3] sm:$0xf8] %vm12992, %v12944
        %12994 = vst.msk [vmem:[%s379 + $0x5] sm:$0xff] %vm11227, %v12945
        %vm12995 = vcmask 256000
        %12996 = vst.msk [vmem:[%s379 + $0xd] sm:$0x7] %vm12995, %v12946
        %12997 = vst.msk [vmem:[%s379 + $0xd] sm:$0xf8] %vm12992, %v12947
        %12998 = vst.msk [vmem:[%s379 + $0x15] sm:$0xff] %vm11227, %v12948
        %12999 = vst.msk [vmem:[%s379 + $0x1d] sm:$0x7] %vm12995, %v12949
        %13000 = vst.msk [vmem:[%s379 + $0x1d] sm:$0xf8] %vm12992, %v12950
        %13001 = vst.msk [vmem:[%s379 + $0x25] sm:$0xff] %vm11227, %v12951
        %13002 = vst.msk [vmem:[%s379 + $0x2d] sm:$0x7] %vm12995, %v12952
        %13003 = vst.msk [vmem:[%s379 + $0x2d] sm:$0xf8] %vm12992, %v12953
        %13004 = vst.msk [vmem:[%s379 + $0x35] sm:$0xff] %vm11227, %v12954
        %13005 = vst.msk [vmem:[%s379 + $0x3d] sm:$0x7] %vm12995, %v12955
        %13006 = vst.msk [vmem:[%s379 + $0x3d] sm:$0xf8] %vm12992, %v12956
        %13007 = vst.msk [vmem:[%s379 + $0x45] sm:$0xff] %vm11227, %v12957
        %13008 = vst.msk [vmem:[%s379 + $0x4d] sm:$0x7] %vm12995, %v12958
        %13009 = vst.msk [vmem:[%s379 + $0x4d] sm:$0xf8] %vm12992, %v12959
        %13010 = vst.msk [vmem:[%s379 + $0x55] sm:$0xff] %vm11227, %v12960
        %13011 = vst.msk [vmem:[%s379 + $0x5d] sm:$0x7] %vm12995, %v12961
        %13012 = vst.msk [vmem:[%s379 + $0x5d] sm:$0xf8] %vm12992, %v12962
        %13013 = vst.msk [vmem:[%s379 + $0x65] sm:$0xff] %vm11227, %v12963
        %13014 = vst.msk [vmem:[%s379 + $0x6d] sm:$0x7] %vm12995, %v12964
        %13015 = vst.msk [vmem:[%s379 + $0x6d] sm:$0xf8] %vm12992, %v12965
        %13016 = vst.msk [vmem:[%s379 + $0x75] sm:$0xff] %vm11227, %v12966
        %13017 = vst.msk [vmem:[%s379 + $0x7d] sm:$0x7] %vm12995, %v12967
        %13018 = vst.msk [vmem:[%s379 + $0x7d] sm:$0xf8] %vm12992, %v12968
        %13019 = vst.msk [vmem:[%s379 + $0x85] sm:$0xff] %vm11227, %v12969
        %13020 = vst.msk [vmem:[%s379 + $0x8d] sm:$0x7] %vm12995, %v12970
        %13021 = vst.msk [vmem:[%s379 + $0x8d] sm:$0xf8] %vm12992, %v12971
        %13022 = vst.msk [vmem:[%s379 + $0x95] sm:$0xff] %vm11227, %v12972
        %13023 = vst.msk [vmem:[%s379 + $0x9d] sm:$0x7] %vm12995, %v12973
        %13024 = vst.msk [vmem:[%s379 + $0x9d] sm:$0xf8] %vm12992, %v12974
        %13025 = vst.msk [vmem:[%s379 + $0xa5] sm:$0xff] %vm11227, %v12975
        %13026 = vst.msk [vmem:[%s379 + $0xad] sm:$0x7] %vm12995, %v12976
        %13027 = vst.msk [vmem:[%s379 + $0xad] sm:$0xf8] %vm12992, %v12977
        %13028 = vst.msk [vmem:[%s379 + $0xb5] sm:$0xff] %vm11227, %v12978
        %13029 = vst.msk [vmem:[%s379 + $0xbd] sm:$0x7] %vm12995, %v12979
        %13030 = vst.msk [vmem:[%s379 + $0xbd] sm:$0xf8] %vm12992, %v12980
        %13031 = vst.msk [vmem:[%s379 + $0xc5] sm:$0xff] %vm11227, %v12981
        %13032 = vst.msk [vmem:[%s379 + $0xcd] sm:$0x7] %vm12995, %v12982
        %13033 = vst.msk [vmem:[%s379 + $0xcd] sm:$0xf8] %vm12992, %v12983
        %13034 = vst.msk [vmem:[%s379 + $0xd5] sm:$0xff] %vm11227, %v12984
        %13035 = vst.msk [vmem:[%s379 + $0xdd] sm:$0x7] %vm12995, %v12985
        %13036 = vst.msk [vmem:[%s379 + $0xdd] sm:$0xf8] %vm12992, %v12986
        %13037 = vst.msk [vmem:[%s379 + $0xe5] sm:$0xff] %vm11227, %v12987
        %13038 = vst.msk [vmem:[%s379 + $0xed] sm:$0x7] %vm12995, %v12988
        %13039 = vst.msk [vmem:[%s379 + $0xed] sm:$0xf8] %vm12992, %v12989
        %13040 = vst.msk [vmem:[%s379 + $0xf5] sm:$0xff] %vm11227, %v12990
        %13041 = vst.msk [vmem:[%s379 + $0xfd] sm:$0x7] %vm12995, %v12991
        %s13042 = sand.u32 %s269, 1
        %s13043 = scalar_lea.sflag [#allocation3], %s13042
        %s13044 = sand.u32 %s269, 1
        %s13045 = smul.addr %s13044, 256
        %s13046 = scalar_lea.vmem [#allocation2], %s13045
        // Predicated region
        $region65: #{tpu_custom_call.1} parent=63 // pred_check
          %p13047 = pneg %p279
        $region66: #{tpu_custom_call.1} parent=63 // pred_check_branch
          %13049 = sbr.rel (%p13047) target = $region68
        $region67: #{tpu_custom_call.1} parent=63 // pred_region
          %s13051 = ssub.s32 4096, 4096
          %13052 = vsyncadd %s13043, %s13051
          %s13053 = smul.addr %s25, 32
          %s13054 = smul.addr %s13053, 128
          %s13055 = scalar_lea.hbm %s11, %s13054
          %s13056 = sshll.u32 %s13046, 4
          %s13057 = int_to_ptr.vmem [resolvable:$true] %s13056
          %13062 = dma.vmem_to_hbm [thread:$0]  %s13057, 4096, %s13055, %s13043, 128, 128, 8
        $region68: #{tpu_custom_call.1} parent=63 // pred_fallthru
          _
      $region64: #{tpu_custom_call.1} parent=5 // pred_fallthru
        _
      %p13063 = scmp.le.s32.totalorder 2, %s20
      // Predicated region
      $region69: #{tpu_custom_call.1} parent=5 // pred_check
        %p13064 = pneg %p13063
      $region70: #{tpu_custom_call.1} parent=5 // pred_check_branch
        %13066 = sbr.rel (%p13064) target = $region72
      $region71: #{tpu_custom_call.1} parent=5 // pred_region
        %s13067 = ssub.s32 %s20, 2
        // Predicated region
        $region73: #{tpu_custom_call.1} parent=71 // pred_check
          %p13068 = pneg %p285
        $region74: #{tpu_custom_call.1} parent=71 // pred_check_branch
          %13070 = sbr.rel (%p13068) target = $region76
        $region75: #{tpu_custom_call.1} parent=71 // pred_region
          %s13071 = sand.u32 %s270, 1
          %s13072 = scalar_lea.sflag [#allocation3], %s13071
          %s13073 = sand.u32 %s270, 1
          %s13074 = smul.addr %s13073, 256
          %s13075 = scalar_lea.vmem [#allocation2], %s13074
          %13076 = dma.done %s13072, 4096
        $region76: #{tpu_custom_call.1} parent=71 // pred_fallthru
          _
      $region72: #{tpu_custom_call.1} parent=5 // pred_fallthru
        _
    $region6: #{tpu_custom_call.1} parent=1 // loop_footer
      %s24 = sadd.s32 1, %s20
    $region7: #{tpu_custom_call.1} parent=1 // loop_footer_branch
      %19 = sbr.rel target = $region3
    $region8: #{tpu_custom_call.1} parent=1 // loop_exit
      _
    %13077 = vsyncpa [#allocation3], 1
    %s13078 = scalar_lea.sflag [#allocation3], 1
    %13079 = vsyncpa %s13078, 1

</llo_original>
